<compile_context>
chip_gen: v6e
topology: v6e:2x2x1
jax: 0.10.0
libtpu: 0.0.40
codegen_flags: <defaults>
</compile_context>

<pallas_src>
import functools

import jax
import jax.numpy as jnp
from jax.experimental import pallas as pl
from jax.experimental.pallas import tpu as pltpu


# ----------------------------------------------------------------------------
# Pallas kernels
# ----------------------------------------------------------------------------
def _mm_single_kernel(a_ref, b_ref, sh_ref, *rest, act, has_res):
    """Single-K-tile fused matmul: out = act(A @ B + shift [+ residual])."""
    if has_res:
        r_ref, o_ref = rest
    else:
        (o_ref,) = rest
    y = jnp.dot(a_ref[...], b_ref[...], preferred_element_type=jnp.float32)
    y = y + sh_ref[...]
    if has_res:
        y = y + r_ref[...].astype(jnp.float32)
    if act == "relu":
        y = jnp.maximum(y, 0.0)
    elif act == "leaky":
        y = jnp.where(y >= 0.0, y, 0.01 * y)   # nn.LeakyReLU default slope
    o_ref[...] = y.astype(o_ref.dtype)


def _mm_acc_kernel(a_ref, b_ref, sh_ref, *rest, act, nk, has_res):
    """K-split fused matmul with f32 VMEM accumulator (used only for the FC)."""
    if has_res:
        r_ref, o_ref, acc_ref = rest
    else:
        o_ref, acc_ref = rest

    k = pl.program_id(2)

    @pl.when(k == 0)
    def _():
        acc_ref[...] = jnp.zeros_like(acc_ref)

    acc_ref[...] += jnp.dot(a_ref[...], b_ref[...],
                            preferred_element_type=jnp.float32)

    @pl.when(k == nk - 1)
    def _():
        y = acc_ref[...] + sh_ref[...]
        if has_res:
            y = y + r_ref[...].astype(jnp.float32)
        if act == "relu":
            y = jnp.maximum(y, 0.0)
        elif act == "leaky":
            y = jnp.where(y >= 0.0, y, 0.01 * y)
        o_ref[...] = y.astype(o_ref.dtype)


def _maxpool_kernel(x_ref, o_ref):
    """x_ref: (9, tm, C) stacked 3x3 windows -> elementwise max over axis 0."""
    o_ref[...] = jnp.max(x_ref[...], axis=0)


# ----------------------------------------------------------------------------
# Pallas-call builders (lru_cache => one builder per unique shape/config)
# ----------------------------------------------------------------------------
_VMEM_LIMIT = 32 * 1024 * 1024   # safe on v5e/v6e/v7x; biggest working set ~9 MiB


def _rup(x, m):
    return ((x + m - 1) // m) * m


@functools.lru_cache(maxsize=None)
def _build_matmul(Mp, Kp, Np, tm, tk, tn, act, has_res, out_dtype):
    out_dtype = jnp.dtype(out_dtype)
    nk = Kp // tk
    if nk == 1:
        kernel = functools.partial(_mm_single_kernel, act=act, has_res=has_res)
        in_specs = [
            pl.BlockSpec((tm, tk), lambda i, j: (i, 0)),
            pl.BlockSpec((tk, tn), lambda i, j: (0, j)),
            pl.BlockSpec((1, tn), lambda i, j: (0, j)),
        ]
        if has_res:
            in_specs.append(pl.BlockSpec((tm, tn), lambda i, j: (i, j)))
        return pl.pallas_call(
            kernel,
            out_shape=jax.ShapeDtypeStruct((Mp, Np), out_dtype),
            grid_spec=pltpu.PrefetchScalarGridSpec(
                num_scalar_prefetch=0,
                grid=(Mp // tm, Np // tn),
                in_specs=in_specs,
                out_specs=pl.BlockSpec((tm, tn), lambda i, j: (i, j)),
            ),
            compiler_params=pltpu.CompilerParams(
                dimension_semantics=("parallel", "parallel"),
                vmem_limit_bytes=_VMEM_LIMIT),
        )

    kernel = functools.partial(_mm_acc_kernel, act=act, nk=nk, has_res=has_res)
    in_specs = [
        pl.BlockSpec((tm, tk), lambda i, j, k: (i, k)),
        pl.BlockSpec((tk, tn), lambda i, j, k: (k, j)),
        pl.BlockSpec((1, tn), lambda i, j, k: (0, j)),
    ]
    if has_res:
        in_specs.append(pl.BlockSpec((tm, tn), lambda i, j, k: (i, j)))
    return pl.pallas_call(
        kernel,
        out_shape=jax.ShapeDtypeStruct((Mp, Np), out_dtype),
        grid_spec=pltpu.PrefetchScalarGridSpec(
            num_scalar_prefetch=0,
            grid=(Mp // tm, Np // tn, nk),
            in_specs=in_specs,
            out_specs=pl.BlockSpec((tm, tn), lambda i, j, k: (i, j)),
            scratch_shapes=[pltpu.VMEM((tm, tn), jnp.float32)],
        ),
        compiler_params=pltpu.CompilerParams(
            dimension_semantics=("parallel", "parallel", "arbitrary"),
            vmem_limit_bytes=_VMEM_LIMIT),
    )


@functools.lru_cache(maxsize=None)
def _build_maxpool(Mp, tm, C):
    return pl.pallas_call(
        _maxpool_kernel,
        out_shape=jax.ShapeDtypeStruct((Mp, C), jnp.bfloat16),
        grid_spec=pltpu.PrefetchScalarGridSpec(
            num_scalar_prefetch=0,
            grid=(Mp // tm,),
            in_specs=[pl.BlockSpec((9, tm, C), lambda i: (0, i, 0))],
            out_specs=pl.BlockSpec((tm, C), lambda i: (i, 0)),
        ),
        compiler_params=pltpu.CompilerParams(
            dimension_semantics=("parallel",),
            vmem_limit_bytes=_VMEM_LIMIT),
    )


# ----------------------------------------------------------------------------
# Tiling policy
# ----------------------------------------------------------------------------
def _pick_tm(M):
    if M % 256 == 0 or M >= 2048:
        return 256                       # MXU-matched tile, negligible padding
    if M <= 512:
        return _rup(M, 8)                # single M tile, no wasted rows
    return 128


def _pick_tiles(M, K, N):
    Kp = _rup(K, 128)
    Np = _rup(N, 128)
    if Kp <= 4608:
        # conv path: single K tile -> no k grid axis / accumulator
        tk = Kp
        tm = _pick_tm(M)
        tn = min(Np, 256)
    else:
        # FC path (K = 100352): split K, keep whole N so fc_w streams once,
        # tiny M tile so no garbage rows for batch 2.
        tk = 2048
        Kp = _rup(K, tk)
        tm = _rup(min(M, 128), 8)
        tn = min(Np, 1024)
    Mp = _rup(M, tm)
    Np = _rup(N, tn)
    return tm, tk, tn, Mp, Kp, Np


# ----------------------------------------------------------------------------
# Glue: fused matmul, im2col, conv+BN, maxpool (data movement only; compute in Pallas)
# ----------------------------------------------------------------------------
def fused_matmul(A, B, shift, act="none", residual=None, out_dtype=jnp.bfloat16):
    M, K = A.shape
    _, N = B.shape
    tm, tk, tn, Mp, Kp, Np = _pick_tiles(M, K, N)

    A = A.astype(jnp.bfloat16)
    B = B.astype(jnp.bfloat16)
    if (Mp, Kp) != (M, K):
        A = jnp.pad(A, ((0, Mp - M), (0, Kp - K)))
    if (Kp, Np) != (K, N):
        B = jnp.pad(B, ((0, Kp - K), (0, Np - N)))
    sh = shift.astype(jnp.float32)
    if Np != N:
        sh = jnp.pad(sh, (0, Np - N))
    sh = sh.reshape(1, Np)

    args = [A, B, sh]
    if residual is not None:
        r = residual.astype(jnp.bfloat16)
        if (Mp, Np) != (M, N):
            r = jnp.pad(r, ((0, Mp - M), (0, Np - N)))
        args.append(r)

    fn = _build_matmul(Mp, Kp, Np, tm, tk, tn, act, residual is not None,
                       jnp.dtype(out_dtype).name)
    out = fn(*args)
    if (Mp, Np) != (M, N):
        out = out[:M, :N]
    return out


def im2col(x, kh, kw, stride, pad):
    # TODO(synk): im2col is materialized (jit fuses the pads/stacks but the
    #             kh*kw-expanded matrix still exists); an in-kernel shifted-slice
    #             accumulation would remove the remaining read amplification.
    N, H, W, C = x.shape
    xp = jnp.pad(x, ((0, 0), (pad, pad), (pad, pad), (0, 0)))
    OH = (H + 2 * pad - kh) // stride + 1
    OW = (W + 2 * pad - kw) // stride + 1
    cols = []
    for di in range(kh):
        for dj in range(kw):
            cols.append(jax.lax.slice(
                xp, (0, di, dj, 0),
                (N, di + (OH - 1) * stride + 1, dj + (OW - 1) * stride + 1, C),
                (1, stride, stride, 1)))
    patches = jnp.stack(cols, axis=3)              # (N, OH, OW, kh*kw, C)
    return patches.reshape(N * OH * OW, kh * kw * C), OH, OW


def conv_bn(x, w, shift, stride, pad, act="none", residual=None):
    kh, kw, cin, cout = w.shape
    N = x.shape[0]
    if kh == 1 and kw == 1:
        xs = x if stride == 1 else x[:, ::stride, ::stride, :]
        OH, OW = xs.shape[1], xs.shape[2]
        A = xs.reshape(N * OH * OW, cin)
    else:
        A, OH, OW = im2col(x, kh, kw, stride, pad)
    B = w.reshape(kh * kw * cin, cout)
    R = None if residual is None else residual.reshape(N * OH * OW, cout)
    out = fused_matmul(A, B, shift, act=act, residual=R, out_dtype=jnp.bfloat16)
    return out.reshape(N, OH, OW, cout)


def maxpool_3x3_s2_p1(x):
    N, H, W, C = x.shape
    OH = (H + 2 - 3) // 2 + 1
    OW = (W + 2 - 3) // 2 + 1
    xp = jnp.pad(x, ((0, 0), (1, 1), (1, 1), (0, 0)), constant_values=-jnp.inf)
    wins = []
    for di in range(3):
        for dj in range(3):
            wins.append(jax.lax.slice(
                xp, (0, di, dj, 0),
                (N, di + (OH - 1) * 2 + 1, dj + (OW - 1) * 2 + 1, C),
                (1, 2, 2, 1)))
    M = N * OH * OW
    w9 = jnp.stack(wins, axis=0).reshape(9, M, C)

    # Lane-dense trick: C=64 is half a lane; fold pairs of rows into 128 lanes
    # so the Pallas stores are full (unmasked) vst.
    Ml, Cl = M, C
    if C < 128 and 128 % C == 0 and M % (128 // C) == 0:
        f = 128 // C
        Ml, Cl = M // f, C * f
        w9 = w9.reshape(9, Ml, Cl)

    tm = 512 if Ml >= 512 else _rup(Ml, 8)
    Mp = _rup(Ml, tm)
    if Mp != Ml:
        w9 = jnp.pad(w9, ((0, 0), (0, Mp - Ml), (0, 0)),
                     constant_values=-jnp.inf)
    out = _build_maxpool(Mp, tm, Cl)(w9)
    if Mp != Ml:
        out = out[:Ml]
    return out.reshape(N, OH, OW, C)


# ----------------------------------------------------------------------------
# Deterministic synthetic parameters (shapes match torchvision resnet101 + Linear)
# ----------------------------------------------------------------------------
_KEY = jax.random.PRNGKey(0)
_COUNTER = [0]
_STAGES = ((64, 3, 1), (128, 4, 2), (256, 23, 2), (512, 3, 2))   # resnet101


def _next_key():
    _COUNTER[0] += 1
    return jax.random.fold_in(_KEY, _COUNTER[0])


def _conv_weight(kh, kw, cin, cout):
    std = (2.0 / (kh * kw * cin)) ** 0.5
    return std * jax.random.normal(_next_key(), (kh, kw, cin, cout), jnp.float32)


def _bn_fold(cout):
    # gamma/beta/running stats folded to per-channel scale & shift (eval mode)
    gamma = 1.0 + 0.02 * jax.random.normal(_next_key(), (cout,), jnp.float32)
    beta = 0.02 * jax.random.normal(_next_key(), (cout,), jnp.float32)
    mean = 0.02 * jax.random.normal(_next_key(), (cout,), jnp.float32)
    var = 1.0 + 0.1 * jnp.abs(jax.random.normal(_next_key(), (cout,), jnp.float32))
    scale = gamma / jnp.sqrt(var + 1e-5)
    shift = beta - mean * scale
    return scale, shift


def _make_conv_bn(kh, kw, cin, cout):
    w = _conv_weight(kh, kw, cin, cout)
    scale, shift = _bn_fold(cout)
    # fold BN scale into the conv weight (per output channel); store in bf16.
    w = (w * scale).astype(jnp.bfloat16)
    return w, shift


def build_params():
    w, sh = _make_conv_bn(7, 7, 3, 64)
    p = {"conv1_w": w, "conv1_sh": sh}
    inplanes = 64
    layers = []
    for planes, nblocks, stride in _STAGES:
        blocks = []
        for bi in range(nblocks):
            s = stride if bi == 0 else 1
            blk = {}
            blk["w1"], blk["b1"] = _make_conv_bn(1, 1, inplanes, planes)
            blk["w2"], blk["b2"] = _make_conv_bn(3, 3, planes, planes)
            blk["w3"], blk["b3"] = _make_conv_bn(1, 1, planes, planes * 4)
            if s != 1 or inplanes != planes * 4:
                blk["dw"], blk["db"] = _make_conv_bn(1, 1, inplanes, planes * 4)
            blocks.append(blk)
            inplanes = planes * 4
        layers.append(blocks)
    p["layers"] = layers
    p["fc_w"] = (1e-3 * jax.random.normal(
        _next_key(), (7 * 7 * 2048, 1024), jnp.float32)).astype(jnp.bfloat16)
    p["fc_b"] = 1e-3 * jax.random.normal(_next_key(), (1024,), jnp.float32)
    return p


# ----------------------------------------------------------------------------
# Forward pass (matches resnet_modified_large.forward, eval mode)
# ----------------------------------------------------------------------------
@jax.jit
def _stem(x_nchw, w, sh):
    # NCHW (PyTorch) -> NHWC (TPU lane = channels), bf16 activations
    x = jnp.transpose(x_nchw, (0, 2, 3, 1)).astype(jnp.bfloat16)
    x = conv_bn(x, w, sh, stride=2, pad=3, act="relu")
    return maxpool_3x3_s2_p1(x)


@functools.partial(jax.jit, static_argnums=(2,))
def _bottleneck(x, blk, stride):
    identity = x
    out = conv_bn(x, blk["w1"], blk["b1"], 1, 0, act="relu")
    out = conv_bn(out, blk["w2"], blk["b2"], stride, 1, act="relu")
    if "dw" in blk:
        identity = conv_bn(x, blk["dw"], blk["db"], stride, 0, act="none")
    return conv_bn(out, blk["w3"], blk["b3"], 1, 0, act="relu",
                   residual=identity)


@jax.jit
def _head(x, fc_w, fc_b):
    # flatten in PyTorch's (C, H, W) order: x.view(-1, 7*7*2048)
    N = x.shape[0]
    feat = jnp.transpose(x, (0, 3, 1, 2)).reshape(N, -1)
    return fused_matmul(feat, fc_w, fc_b, act="leaky", out_dtype=jnp.float32)


def forward(params, x_nchw):
    x = _stem(x_nchw, params["conv1_w"], params["conv1_sh"])
    for si, (_, nblocks, stride) in enumerate(_STAGES):
        for bi in range(nblocks):
            s = stride if bi == 0 else 1
            x = _bottleneck(x, params["layers"][si][bi], s)
    # dropout2d / dropout: eval -> identity
    return _head(x, params["fc_w"], params["fc_b"])


if __name__ == "__main__":
    params = build_params()
    x = jax.random.normal(jax.random.PRNGKey(0), (2, 3, 224, 224), jnp.float32)
    out = forward(params, x)
    out = jax.block_until_ready(out)
    assert out.shape == (2, 1024), out.shape
    assert bool(jnp.all(jnp.isfinite(out)))
    print("KERNEL_OK")
</pallas_src>

<mosaic_0001>
module attributes {stable_mosaic.version = 11 : i64} {
  func.func @_mm_single_kernel(%arg0: i32, %arg1: i32, %arg2: memref<256x256xbf16, #tpu.memory_space<vmem>>, %arg3: memref<256x128xbf16, #tpu.memory_space<vmem>>, %arg4: memref<1x128xf32, #tpu.memory_space<vmem>>, %arg5: memref<256x128xbf16, #tpu.memory_space<vmem>>) attributes {dimension_semantics = [#tpu.dimension_semantics<parallel>, #tpu.dimension_semantics<parallel>], iteration_bounds = array<i64: 98, 1>, scalar_prefetch = 0 : i64, scratch_operands = 0 : i64, tpu.core_type = #tpu.core_type<tc>, window_params = [{transform_indices = @transform_0, window_bounds = array<i64: 256, 256>}, {transform_indices = @transform_1, window_bounds = array<i64: 256, 128>}, {transform_indices = @transform_2, window_bounds = array<i64: 1, 128>}, {transform_indices = @transform_3, window_bounds = array<i64: 256, 128>}]} {
    %c0 = arith.constant 0 : index
    %c0_0 = arith.constant 0 : index
    %0 = vector.load %arg2[%c0, %c0_0] : memref<256x256xbf16, #tpu.memory_space<vmem>>, vector<256x256xbf16>
    %c0_1 = arith.constant 0 : index
    %c0_2 = arith.constant 0 : index
    %1 = vector.load %arg3[%c0_1, %c0_2] : memref<256x128xbf16, #tpu.memory_space<vmem>>, vector<256x128xbf16>
    %cst = arith.constant dense<0.000000e+00> : vector<256x128xf32>
    %2 = tpu.matmul %0, %1, %cst {dimension_numbers = #tpu.dot_dimension_numbers<[1], [0], [0], [1], [0, 0, 1, 1], [], []>} : vector<256x256xbf16>, vector<256x128xbf16>, vector<256x128xf32> -> vector<256x128xf32>
    %c0_3 = arith.constant 0 : index
    %c0_4 = arith.constant 0 : index
    %3 = vector.load %arg4[%c0_3, %c0_4] : memref<1x128xf32, #tpu.memory_space<vmem>>, vector<1x128xf32>
    %4 = vector.broadcast %3 : vector<1x128xf32> to vector<256x128xf32>
    %5 = arith.addf %2, %4 : vector<256x128xf32>
    %cst_5 = arith.constant 0.000000e+00 : f32
    %6 = vector.broadcast %cst_5 : f32 to vector<256x128xf32>
    %7 = arith.maximumf %5, %6 : vector<256x128xf32>
    %8 = arith.truncf %7 : vector<256x128xf32> to vector<256x128xbf16>
    %c0_6 = arith.constant 0 : index
    %c0_7 = arith.constant 0 : index
    %9 = vector.load %arg5[%c0_6, %c0_7] : memref<256x128xbf16, #tpu.memory_space<vmem>>, vector<256x128xbf16>
    tpu.vector_store %arg5[%c0_6, %c0_7], %8 {strides = array<i32>} : memref<256x128xbf16, #tpu.memory_space<vmem>>, vector<256x128xbf16>,
    return
  }
  func.func @transform_0(%arg0: i32, %arg1: i32) -> (i32, i32) {
    %c0_i32 = arith.constant 0 : i32
    %c0_i32_0 = arith.constant 0 : i32
    return %arg0, %c0_i32 : i32, i32
  }
  func.func @transform_1(%arg0: i32, %arg1: i32) -> (i32, i32) {
    %c0_i32 = arith.constant 0 : i32
    %c0_i32_0 = arith.constant 0 : i32
    return %c0_i32, %arg1 : i32, i32
  }
  func.func @transform_2(%arg0: i32, %arg1: i32) -> (i32, i32) {
    %c0_i32 = arith.constant 0 : i32
    %c0_i32_0 = arith.constant 0 : i32
    return %c0_i32, %arg1 : i32, i32
  }
  func.func @transform_3(%arg0: i32, %arg1: i32) -> (i32, i32) {
    %c0_i32 = arith.constant 0 : i32
    return %arg0, %arg1 : i32, i32
  }
}

module attributes {stable_mosaic.version = 11 : i64} {
  func.func @_maxpool_kernel(%arg0: i32, %arg1: memref<9x512x128xbf16, #tpu.memory_space<vmem>>, %arg2: memref<512x128xbf16, #tpu.memory_space<vmem>>) attributes {dimension_semantics = [#tpu.dimension_semantics<parallel>], iteration_bounds = array<i64: 7>, scalar_prefetch = 0 : i64, scratch_operands = 0 : i64, tpu.core_type = #tpu.core_type<tc>, window_params = [{transform_indices = @transform_0, window_bounds = array<i64: 9, 512, 128>}, {transform_indices = @transform_1, window_bounds = array<i64: 512, 128>}]} {
    %c0 = arith.constant 0 : index
    %c0_0 = arith.constant 0 : index
    %c0_1 = arith.constant 0 : index
    %0 = vector.load %arg1[%c0, %c0_0, %c0_1] : memref<9x512x128xbf16, #tpu.memory_space<vmem>>, vector<9x512x128xbf16>
    %cst = arith.constant dense<0xFF80> : vector<512x128xbf16>
    %1 = vector.multi_reduction <maximumf>, %0, %cst [0] : vector<9x512x128xbf16> to vector<512x128xbf16>
    %c0_2 = arith.constant 0 : index
    %c0_3 = arith.constant 0 : index
    %2 = vector.load %arg2[%c0_2, %c0_3] : memref<512x128xbf16, #tpu.memory_space<vmem>>, vector<512x128xbf16>
    tpu.vector_store %arg2[%c0_2, %c0_3], %1 {strides = array<i32>} : memref<512x128xbf16, #tpu.memory_space<vmem>>, vector<512x128xbf16>,
    return
  }
  func.func @transform_0(%arg0: i32) -> (i32, i32, i32) {
    %c0_i32 = arith.constant 0 : i32
    %c0_i32_0 = arith.constant 0 : i32
    %c0_i32_1 = arith.constant 0 : i32
    return %c0_i32, %arg0, %c0_i32_0 : i32, i32, i32
  }
  func.func @transform_1(%arg0: i32) -> (i32, i32) {
    %c0_i32 = arith.constant 0 : i32
    %c0_i32_0 = arith.constant 0 : i32
    return %arg0, %c0_i32 : i32, i32
  }
}

</mosaic_0001>

<llo_original>
// kernel: _stem.2
$region0: #{_stem.2}
  #allocation0 [shape = 'u32[]', space=smem, size = 0x4, offset = 0x4, fixed_abs, tag = 'smem constant byte address 0x4 - core index']
  #allocation1 [shape = 'u32[144,128]{1,0:T(1,128)}', space=vmem, size = 0x12000, scoped, tag = 'internal scratch']
  %s0 = inlined_call_operand.vmem [shape: bf16[25088,256], index: 0, kind: input, shape index: {}]
  %s1 = inlined_call_operand.vmem [shape: bf16[256,128], index: 1, kind: input, shape index: {}]
  %s2 = inlined_call_operand.vmem [shape: f32[1,128], index: 2, kind: input, shape index: {}]
  %s3 = inlined_call_operand.vmem [shape: bf16[25088,128], index: 3, kind: output, shape index: {}]
  %s4 = sld [smem:[#allocation0]]
  $region45: #{_stem.2} parent=0
    _
  %s6 = ssub.s32 1, %s4
  %s7 = scalar_select 0, %s6, %s4
  loop: start=0, step=1, limit=100
  $region2: #{_stem.2} parent=0 // loop_pre_header
    _
  $region3: #{_stem.2} parent=0 // loop_header
    %s9 = sphi 0, %s13
    %p10 = scmp.ge.s32.totalorder %s9, 100
    %s16 = sphi 0, %s28
    %s17 = sphi 0, %s24
    %s18 = sphi 0, %s16
    %s19 = sphi 0, %s17
    %s20 = sphi 0, %s18
    %s21 = sphi 0, %s19
    %s31 = sphi 0, %s33
    %s34 = sphi 0, %s31
    %s35 = sphi 0, %s34
    %s51 = sphi 0, %s35
    %s57 = sphi 0, %s59
    %s60 = sphi 0, %s57
    %s61 = sphi 0, %s60
    %s77 = sphi 0, %s61
    %s83 = sphi 0, %s85
    %s86 = sphi 0, %s83
    %s87 = sphi 0, %s86
    %s103 = sphi 0, %s87
    %s111 = sphi 0, %s113
    %s114 = sphi 0, %s111
    %s115 = sphi 0, %s114
    %s131 = sphi 0, %s115
  $region4: #{_stem.2} parent=0 // loop_header_branch
    %12 = sbr.rel (%p10) target = $region8
  $region5: #{_stem.2} parent=0 // loop_body
    %s14 = ssub.s32 %s9, 1
    %s15 = ssub.s32 %s9, 2
    %s22 = sadd.s32 1, %s17
    %p23 = scmp.ge.s32.totalorder %s22, 1
    %s24 = scalar_select %p23, 0, %s22
    %s25 = sadd.s32 1, %s16
    %s26 = scalar_select %p23, %s25, %s16
    %p27 = scmp.ge.s32.totalorder %s26, 98
    %s28 = scalar_select %p27, 0, %s26
    %s29 = ssub.s32 %s16, %s28
    %p30 = scmp.eq.s32.totalorder %s29, 0
    %s32 = sadd.s32 %s31, 1
    %s33 = scalar_select %p30, %s31, %s32
    %p36 = pneg %p30
    %p37 = scmp.eq.s32.totalorder %s9, 97
    %p38 = por %p36, %p37
    %p39 = scmp.ne.s32.totalorder %s31, %s34
    %p40 = scmp.eq.s32.totalorder %s9, 0
    %p41 = por %p39, %p40
    %p42 = scmp.ne.s32.totalorder %s31, %s34
    %p43 = scmp.eq.s32.totalorder %s14, 97
    %p44 = por %p42, %p43
    %p45 = scmp.ne.s32.totalorder %s34, %s35
    %p46 = scmp.eq.s32.totalorder %s14, 0
    %p47 = por %p45, %p46
    %p48 = scmp.ne.s32.totalorder %s34, %s35
    %p49 = scmp.eq.s32.totalorder %s15, 97
    %p50 = por %p48, %p49
    %p52 = scmp.ne.s32.totalorder %s35, %s51
    %p53 = scmp.eq.s32.totalorder %s15, 0
    %p54 = por %p52, %p53
    %s55 = ssub.s32 %s17, %s24
    %p56 = scmp.eq.s32.totalorder %s55, 0
    %s58 = sadd.s32 %s57, 1
    %s59 = scalar_select %p56, %s57, %s58
    %p62 = pneg %p56
    %p63 = scmp.eq.s32.totalorder %s9, 97
    %p64 = por %p62, %p63
    %p65 = scmp.ne.s32.totalorder %s57, %s60
    %p66 = scmp.eq.s32.totalorder %s9, 0
    %p67 = por %p65, %p66
    %p68 = scmp.ne.s32.totalorder %s57, %s60
    %p69 = scmp.eq.s32.totalorder %s14, 97
    %p70 = por %p68, %p69
    %p71 = scmp.ne.s32.totalorder %s60, %s61
    %p72 = scmp.eq.s32.totalorder %s14, 0
    %p73 = por %p71, %p72
    %p74 = scmp.ne.s32.totalorder %s60, %s61
    %p75 = scmp.eq.s32.totalorder %s15, 97
    %p76 = por %p74, %p75
    %p78 = scmp.ne.s32.totalorder %s61, %s77
    %p79 = scmp.eq.s32.totalorder %s15, 0
    %p80 = por %p78, %p79
    %s81 = ssub.s32 %s17, %s24
    %p82 = scmp.eq.s32.totalorder %s81, 0
    %s84 = sadd.s32 %s83, 1
    %s85 = scalar_select %p82, %s83, %s84
    %p88 = pneg %p82
    %p89 = scmp.eq.s32.totalorder %s9, 97
    %p90 = por %p88, %p89
    %p91 = scmp.ne.s32.totalorder %s83, %s86
    %p92 = scmp.eq.s32.totalorder %s9, 0
    %p93 = por %p91, %p92
    %p94 = scmp.ne.s32.totalorder %s83, %s86
    %p95 = scmp.eq.s32.totalorder %s14, 97
    %p96 = por %p94, %p95
    %p97 = scmp.ne.s32.totalorder %s86, %s87
    %p98 = scmp.eq.s32.totalorder %s14, 0
    %p99 = por %p97, %p98
    %p100 = scmp.ne.s32.totalorder %s86, %s87
    %p101 = scmp.eq.s32.totalorder %s15, 97
    %p102 = por %p100, %p101
    %p104 = scmp.ne.s32.totalorder %s87, %s103
    %p105 = scmp.eq.s32.totalorder %s15, 0
    %p106 = por %p104, %p105
    %s107 = ssub.s32 %s16, %s28
    %s108 = ssub.s32 %s17, %s24
    %s109 = sor.u32 %s107, %s108
    %p110 = scmp.eq.s32.totalorder %s109, 0
    %s112 = sadd.s32 %s111, 1
    %s113 = scalar_select %p110, %s111, %s112
    %p116 = pneg %p110
    %p117 = scmp.eq.s32.totalorder %s9, 97
    %p118 = por %p116, %p117
    %p119 = scmp.ne.s32.totalorder %s111, %s114
    %p120 = scmp.eq.s32.totalorder %s9, 0
    %p121 = por %p119, %p120
    %p122 = scmp.ne.s32.totalorder %s111, %s114
    %p123 = scmp.eq.s32.totalorder %s14, 97
    %p124 = por %p122, %p123
    %p125 = scmp.ne.s32.totalorder %s114, %s115
    %p126 = scmp.eq.s32.totalorder %s14, 0
    %p127 = por %p125, %p126
    %p128 = scmp.ne.s32.totalorder %s114, %s115
    %p129 = scmp.eq.s32.totalorder %s15, 97
    %p130 = por %p128, %p129
    %p132 = scmp.ne.s32.totalorder %s115, %s131
    %p133 = scmp.eq.s32.totalorder %s15, 0
    %p134 = por %p132, %p133
    %p135 = scmp.le.s32.totalorder 1, %s9
    %p136 = scmp.lt.s32.totalorder %s9, 99
    %p137 = pnand %p135, %p136
    %p138 = pneg %p137
    // Predicated region
    $region9: #{_stem.2} parent=5 // pred_check
      _
    $region10: #{_stem.2} parent=5 // pred_check_branch
      %140 = sbr.rel (%p137) target = $region12
    $region11: #{_stem.2} parent=5 // pred_region
      %s141 = ssub.s32 %s9, 1
      // Predicated region
      $region13: #{_stem.2} parent=11 // pred_check
        %p142 = pneg %p73
      $region14: #{_stem.2} parent=11 // pred_check_branch
        %144 = sbr.rel (%p142) target = $region16
      $region15: #{_stem.2} parent=11 // pred_region
        %p145 = scmp.lt.s32.totalorder %s19, 0
        %s146 = scalar_select %p145, %s19, 0
        %s147 = smul.addr %s146, 4
        %s148 = scalar_lea.vmem %s1, %s147
      $region16: #{_stem.2} parent=11 // pred_fallthru
        _
      // Predicated region
      $region17: #{_stem.2} parent=11 // pred_check
        %p149 = pneg %p99
      $region18: #{_stem.2} parent=11 // pred_check_branch
        %151 = sbr.rel (%p149) target = $region20
      $region19: #{_stem.2} parent=11 // pred_region
        %p152 = scmp.lt.s32.totalorder %s19, 0
        %s153 = scalar_select %p152, %s19, 0
        %s154 = scalar_lea.vmem %s2, %s153
      $region20: #{_stem.2} parent=11 // pred_fallthru
        _
    $region12: #{_stem.2} parent=5 // pred_fallthru
      _
    %p155 = scmp.lt.s32.totalorder %s9, 98
    // Predicated region
    $region21: #{_stem.2} parent=5 // pred_check
      %p156 = pneg %p155
    $region22: #{_stem.2} parent=5 // pred_check_branch
      %158 = sbr.rel (%p156) target = $region24
    $region23: #{_stem.2} parent=5 // pred_region
      // Predicated region
      $region25: #{_stem.2} parent=23 // pred_check
        %p159 = pneg %p41
      $region26: #{_stem.2} parent=23 // pred_check_branch
        %161 = sbr.rel (%p159) target = $region28
      $region27: #{_stem.2} parent=23 // pred_region
        %s162 = smul.u32 32, %s16
        %p163 = scmp.lt.s32.totalorder %s162, 3135
        %s164 = scalar_select %p163, %s162, 3135
        %s165 = smul.addr %s164, 2
        %s166 = smul.addr %s165, 4
        %s167 = scalar_lea.vmem %s0, %s166
        %s168 = smul.u32 32, %s16
      $region28: #{_stem.2} parent=23 // pred_fallthru
        _
    $region24: #{_stem.2} parent=5 // pred_fallthru
      _
    %p169 = scmp.le.s32.totalorder 1, %s9
    %p170 = scmp.lt.s32.totalorder %s9, 99
    %p171 = pnand %p169, %p170
    %p172 = pneg %p171
    // Predicated region
    $region29: #{_stem.2} parent=5 // pred_check
      _
    $region30: #{_stem.2} parent=5 // pred_check_branch
      %174 = sbr.rel (%p171) target = $region32
    $region31: #{_stem.2} parent=5 // pred_region
      %s175 = ssub.s32 %s9, 1
      %s176 = smul.u32 32, %s18
      %p177 = scmp.lt.s32.totalorder %s176, 3135
      %s178 = scalar_select %p177, %s176, 3135
      %s179 = smul.addr %s178, 2
      %s180 = smul.addr %s179, 4
      %s181 = scalar_lea.vmem %s0, %s180
      %p182 = pneg %p47
      %p183 = pneg %p44
      %p184 = scmp.lt.s32.totalorder %s19, 0
      %s185 = scalar_select %p184, %s19, 0
      %s186 = smul.addr %s185, 4
      %s187 = scalar_lea.vmem %s1, %s186
      %p188 = pneg %p73
      %p189 = pneg %p70
      %p190 = scmp.lt.s32.totalorder %s19, 0
      %s191 = scalar_select %p190, %s19, 0
      %s192 = scalar_lea.vmem %s2, %s191
      %p193 = pneg %p99
      %p194 = pneg %p96
      %p195 = pneg %p127
      %p196 = pneg %p124
      %s197 = smul.u32 32, %s18
      %p198 = scmp.lt.s32.totalorder %s197, 3135
      %s199 = scalar_select %p198, %s197, 3135
      %p200 = scmp.lt.s32.totalorder %s19, 0
      %s201 = scalar_select %p200, %s19, 0
      %s202 = sadd.s32 %s201, %s199
      %s203 = smul.addr %s202, 4
      %s204 = scalar_lea.vmem %s3, %s203
      %s205 = smul.u32 32, %s18
      %p206 = scmp.lt.s32.totalorder %s205, 3135
      %s207 = scalar_select %p206, %s205, 3135
      %s208 = smul.addr %s207, 2
      %s209 = smul.addr %s208, 4
      %s210 = scalar_lea.vmem %s0, %s209
      %s211 = smul.u32 32, %s18
      %p212 = scmp.lt.s32.totalorder %s19, 0
      %s213 = scalar_select %p212, %s19, 0
      %s214 = smul.addr %s213, 4
      %s215 = scalar_lea.vmem %s1, %s214
      %p216 = scmp.lt.s32.totalorder %s19, 0
      %s217 = scalar_select %p216, %s19, 0
      %s218 = scalar_lea.vmem %s2, %s217
      %s219 = smul.u32 32, %s18
      %p220 = scmp.lt.s32.totalorder %s219, 3135
      %s221 = scalar_select %p220, %s219, 3135
      %p222 = scmp.lt.s32.totalorder %s19, 0
      %s223 = scalar_select %p222, %s19, 0
      %s224 = sadd.s32 %s223, %s221
      %s225 = smul.addr %s224, 4
      %s226 = scalar_lea.vmem %s3, %s225
      %s227 = smul.u32 32, %s18
      %v229 = vld [vmem:[%s210] sm:$0xff]
      %v230 = vld [vmem:[%s210 + $0x8] sm:$0xff]
      %v231 = vld [vmem:[%s210 + $0x10] sm:$0xff]
      %v232 = vld [vmem:[%s210 + $0x18] sm:$0xff]
      %v233 = vld [vmem:[%s210 + $0x20] sm:$0xff]
      %v234 = vld [vmem:[%s210 + $0x28] sm:$0xff]
      %v235 = vld [vmem:[%s210 + $0x30] sm:$0xff]
      %v236 = vld [vmem:[%s210 + $0x38] sm:$0xff]
      %v237 = vld [vmem:[%s210 + $0x40] sm:$0xff]
      %v238 = vld [vmem:[%s210 + $0x48] sm:$0xff]
      %v239 = vld [vmem:[%s210 + $0x50] sm:$0xff]
      %v240 = vld [vmem:[%s210 + $0x58] sm:$0xff]
      %v241 = vld [vmem:[%s210 + $0x60] sm:$0xff]
      %v242 = vld [vmem:[%s210 + $0x68] sm:$0xff]
      %v243 = vld [vmem:[%s210 + $0x70] sm:$0xff]
      %v244 = vld [vmem:[%s210 + $0x78] sm:$0xff]
      %v245 = vld [vmem:[%s210 + $0x80] sm:$0xff]
      %v246 = vld [vmem:[%s210 + $0x88] sm:$0xff]
      %v247 = vld [vmem:[%s210 + $0x90] sm:$0xff]
      %v248 = vld [vmem:[%s210 + $0x98] sm:$0xff]
      %v249 = vld [vmem:[%s210 + $0xa0] sm:$0xff]
      %v250 = vld [vmem:[%s210 + $0xa8] sm:$0xff]
      %v251 = vld [vmem:[%s210 + $0xb0] sm:$0xff]
      %v252 = vld [vmem:[%s210 + $0xb8] sm:$0xff]
      %v253 = vld [vmem:[%s210 + $0xc0] sm:$0xff]
      %v254 = vld [vmem:[%s210 + $0xc8] sm:$0xff]
      %v255 = vld [vmem:[%s210 + $0xd0] sm:$0xff]
      %v256 = vld [vmem:[%s210 + $0xd8] sm:$0xff]
      %v257 = vld [vmem:[%s210 + $0xe0] sm:$0xff]
      %v258 = vld [vmem:[%s210 + $0xe8] sm:$0xff]
      %v259 = vld [vmem:[%s210 + $0xf0] sm:$0xff]
      %v260 = vld [vmem:[%s210 + $0xf8] sm:$0xff]
      %v261 = vld [vmem:[%s215] sm:$0xf]
      %v262 = vld [vmem:[%s215 + $0x4] sm:$0xf]
      %v263 = vld [vmem:[%s215 + $0x8] sm:$0xf]
      %v264 = vld [vmem:[%s215 + $0xc] sm:$0xf]
      %v265 = vld [vmem:[%s215 + $0x10] sm:$0xf]
      %v266 = vld [vmem:[%s215 + $0x14] sm:$0xf]
      %v267 = vld [vmem:[%s215 + $0x18] sm:$0xf]
      %v268 = vld [vmem:[%s215 + $0x1c] sm:$0xf]
      %v269 = vld [vmem:[%s215 + $0x20] sm:$0xf]
      %v270 = vld [vmem:[%s215 + $0x24] sm:$0xf]
      %v271 = vld [vmem:[%s215 + $0x28] sm:$0xf]
      %v272 = vld [vmem:[%s215 + $0x2c] sm:$0xf]
      %v273 = vld [vmem:[%s215 + $0x30] sm:$0xf]
      %v274 = vld [vmem:[%s215 + $0x34] sm:$0xf]
      %v275 = vld [vmem:[%s215 + $0x38] sm:$0xf]
      %v276 = vld [vmem:[%s215 + $0x3c] sm:$0xf]
      %v277 = vld [vmem:[%s215 + $0x40] sm:$0xf]
      %v278 = vld [vmem:[%s215 + $0x44] sm:$0xf]
      %v279 = vld [vmem:[%s215 + $0x48] sm:$0xf]
      %v280 = vld [vmem:[%s215 + $0x4c] sm:$0xf]
      %v281 = vld [vmem:[%s215 + $0x50] sm:$0xf]
      %v282 = vld [vmem:[%s215 + $0x54] sm:$0xf]
      %v283 = vld [vmem:[%s215 + $0x58] sm:$0xf]
      %v284 = vld [vmem:[%s215 + $0x5c] sm:$0xf]
      %v285 = vld [vmem:[%s215 + $0x60] sm:$0xf]
      %v286 = vld [vmem:[%s215 + $0x64] sm:$0xf]
      %v287 = vld [vmem:[%s215 + $0x68] sm:$0xf]
      %v288 = vld [vmem:[%s215 + $0x6c] sm:$0xf]
      %v289 = vld [vmem:[%s215 + $0x70] sm:$0xf]
      %v290 = vld [vmem:[%s215 + $0x74] sm:$0xf]
      %v291 = vld [vmem:[%s215 + $0x78] sm:$0xf]
      %v292 = vld [vmem:[%s215 + $0x7c] sm:$0xf]
      %v293 = vld [vmem:[%s218] sm:$0x1]
      %v295 = vlaneseq
      %v296 = vshrl.u32 %v295, 7
      %v297 = vsub.s32 0, %v296
      %v298 = vrot.slane %v293, %v297
      %v332 = vunpack.c.l.b16 %v229
      %v333 = vunpack.c.h.b16 %v229
      %v334 = vunpack.c.l.b16 %v230
      %v335 = vunpack.c.h.b16 %v230
      %v336 = vunpack.c.l.b16 %v231
      %v337 = vunpack.c.h.b16 %v231
      %v338 = vunpack.c.l.b16 %v232
      %v339 = vunpack.c.h.b16 %v232
      %v340 = vunpack.c.l.b16 %v233
      %v341 = vunpack.c.h.b16 %v233
      %v342 = vunpack.c.l.b16 %v234
      %v343 = vunpack.c.h.b16 %v234
      %v344 = vunpack.c.l.b16 %v235
      %v345 = vunpack.c.h.b16 %v235
      %v346 = vunpack.c.l.b16 %v236
      %v347 = vunpack.c.h.b16 %v236
      %v348 = vunpack.c.l.b16 %v237
      %v349 = vunpack.c.h.b16 %v237
      %v350 = vunpack.c.l.b16 %v238
      %v351 = vunpack.c.h.b16 %v238
      %v352 = vunpack.c.l.b16 %v239
      %v353 = vunpack.c.h.b16 %v239
      %v354 = vunpack.c.l.b16 %v240
      %v355 = vunpack.c.h.b16 %v240
      %v356 = vunpack.c.l.b16 %v241
      %v357 = vunpack.c.h.b16 %v241
      %v358 = vunpack.c.l.b16 %v242
      %v359 = vunpack.c.h.b16 %v242
      %v360 = vunpack.c.l.b16 %v243
      %v361 = vunpack.c.h.b16 %v243
      %v362 = vunpack.c.l.b16 %v244
      %v363 = vunpack.c.h.b16 %v244
      %v364 = vunpack.c.l.b16 %v245
      %v365 = vunpack.c.h.b16 %v245
      %v366 = vunpack.c.l.b16 %v246
      %v367 = vunpack.c.h.b16 %v246
      %v368 = vunpack.c.l.b16 %v247
      %v369 = vunpack.c.h.b16 %v247
      %v370 = vunpack.c.l.b16 %v248
      %v371 = vunpack.c.h.b16 %v248
      %v372 = vunpack.c.l.b16 %v249
      %v373 = vunpack.c.h.b16 %v249
      %v374 = vunpack.c.l.b16 %v250
      %v375 = vunpack.c.h.b16 %v250
      %v376 = vunpack.c.l.b16 %v251
      %v377 = vunpack.c.h.b16 %v251
      %v378 = vunpack.c.l.b16 %v252
      %v379 = vunpack.c.h.b16 %v252
      %v380 = vunpack.c.l.b16 %v253
      %v381 = vunpack.c.h.b16 %v253
      %v382 = vunpack.c.l.b16 %v254
      %v383 = vunpack.c.h.b16 %v254
      %v384 = vunpack.c.l.b16 %v255
      %v385 = vunpack.c.h.b16 %v255
      %v386 = vunpack.c.l.b16 %v256
      %v387 = vunpack.c.h.b16 %v256
      %v388 = vunpack.c.l.b16 %v257
      %v389 = vunpack.c.h.b16 %v257
      %v390 = vunpack.c.l.b16 %v258
      %v391 = vunpack.c.h.b16 %v258
      %v392 = vunpack.c.l.b16 %v259
      %v393 = vunpack.c.h.b16 %v259
      %v394 = vunpack.c.l.b16 %v260
      %v395 = vunpack.c.h.b16 %v260
      %v396 = vpack.c.b16 %v334, %v332
      %v397 = vpack.c.b16 %v335, %v333
      %v398 = vpack.c.b16 %v338, %v336
      %v399 = vpack.c.b16 %v339, %v337
      %v400 = vpack.c.b16 %v342, %v340
      %v401 = vpack.c.b16 %v343, %v341
      %v402 = vpack.c.b16 %v346, %v344
      %v403 = vpack.c.b16 %v347, %v345
      %v404 = vpack.c.b16 %v350, %v348
      %v405 = vpack.c.b16 %v351, %v349
      %v406 = vpack.c.b16 %v354, %v352
      %v407 = vpack.c.b16 %v355, %v353
      %v408 = vpack.c.b16 %v358, %v356
      %v409 = vpack.c.b16 %v359, %v357
      %v410 = vpack.c.b16 %v362, %v360
      %v411 = vpack.c.b16 %v363, %v361
      %v412 = vpack.c.b16 %v366, %v364
      %v413 = vpack.c.b16 %v367, %v365
      %v414 = vpack.c.b16 %v370, %v368
      %v415 = vpack.c.b16 %v371, %v369
      %v416 = vpack.c.b16 %v374, %v372
      %v417 = vpack.c.b16 %v375, %v373
      %v418 = vpack.c.b16 %v378, %v376
      %v419 = vpack.c.b16 %v379, %v377
      %v420 = vpack.c.b16 %v382, %v380
      %v421 = vpack.c.b16 %v383, %v381
      %v422 = vpack.c.b16 %v386, %v384
      %v423 = vpack.c.b16 %v387, %v385
      %v424 = vpack.c.b16 %v390, %v388
      %v425 = vpack.c.b16 %v391, %v389
      %v426 = vpack.c.b16 %v394, %v392
      %v427 = vpack.c.b16 %v395, %v393
      %v492 = vunpack.c.l.b16 %v261
      %v493 = vunpack.c.l.b16 %v262
      %v494 = vunpack.c.l.b16 %v263
      %v495 = vunpack.c.l.b16 %v264
      %v496 = vunpack.c.l.b16 %v265
      %v497 = vunpack.c.l.b16 %v266
      %v498 = vunpack.c.l.b16 %v267
      %v499 = vunpack.c.l.b16 %v268
      %v500 = vunpack.c.l.b16 %v269
      %v501 = vunpack.c.l.b16 %v270
      %v502 = vunpack.c.l.b16 %v271
      %v503 = vunpack.c.l.b16 %v272
      %v504 = vunpack.c.l.b16 %v273
      %v505 = vunpack.c.l.b16 %v274
      %v506 = vunpack.c.l.b16 %v275
      %v507 = vunpack.c.l.b16 %v276
      %v508 = vunpack.c.l.b16 %v277
      %v509 = vunpack.c.l.b16 %v278
      %v510 = vunpack.c.l.b16 %v279
      %v511 = vunpack.c.l.b16 %v280
      %v512 = vunpack.c.l.b16 %v281
      %v513 = vunpack.c.l.b16 %v282
      %v514 = vunpack.c.l.b16 %v283
      %v515 = vunpack.c.l.b16 %v284
      %v516 = vunpack.c.l.b16 %v285
      %v517 = vunpack.c.l.b16 %v286
      %v518 = vunpack.c.l.b16 %v287
      %v519 = vunpack.c.l.b16 %v288
      %v520 = vunpack.c.l.b16 %v289
      %v521 = vunpack.c.l.b16 %v290
      %v522 = vunpack.c.l.b16 %v291
      %v523 = vunpack.c.l.b16 %v292
      %v524 = vpack.c.b16 %v493, %v492
      %v525 = vpack.c.b16 %v495, %v494
      %v526 = vpack.c.b16 %v497, %v496
      %v527 = vpack.c.b16 %v499, %v498
      %v528 = vpack.c.b16 %v501, %v500
      %v529 = vpack.c.b16 %v503, %v502
      %v530 = vpack.c.b16 %v505, %v504
      %v531 = vpack.c.b16 %v507, %v506
      %v532 = vpack.c.b16 %v509, %v508
      %v533 = vpack.c.b16 %v511, %v510
      %v534 = vpack.c.b16 %v513, %v512
      %v535 = vpack.c.b16 %v515, %v514
      %v536 = vpack.c.b16 %v517, %v516
      %v537 = vpack.c.b16 %v519, %v518
      %v538 = vpack.c.b16 %v521, %v520
      %v539 = vpack.c.b16 %v523, %v522
      %556 = vmatprep.subr.bf16.mxu0 0
      %557 = vmatpush1.bf16.msra.mxu0 %v531
      %558 = vmatprep.subr.bf16.mxu0 0
      %559 = vmatpush1.bf16.msra.mxu0 %v530
      %560 = vmatprep.subr.bf16.mxu0 0
      %561 = vmatpush1.bf16.msra.mxu0 %v529
      %562 = vmatprep.subr.bf16.mxu0 0
      %563 = vmatpush1.bf16.msra.mxu0 %v528
      %564 = vmatprep.subr.bf16.mxu0 0
      %565 = vmatpush1.bf16.msra.mxu0 %v527
      %566 = vmatprep.subr.bf16.mxu0 0
      %567 = vmatpush1.bf16.msra.mxu0 %v526
      %568 = vmatprep.subr.bf16.mxu0 0
      %569 = vmatpush1.bf16.msra.mxu0 %v525
      %570 = vmatprep.subr.bf16.mxu0 0
      %571 = vmatpush1.bf16.msra.mxu0 %v524
      %572 = vmatprep.subr.bf16.mxu0 0
      %573 = vmatpush2.bf16.msra.mxu0 %v539
      %574 = vmatprep.subr.bf16.mxu0 0
      %575 = vmatpush2.bf16.msra.mxu0 %v538
      %576 = vmatprep.subr.bf16.mxu0 0
      %577 = vmatpush2.bf16.msra.mxu0 %v537
      %578 = vmatprep.subr.bf16.mxu0 0
      %579 = vmatpush2.bf16.msra.mxu0 %v536
      %580 = vmatprep.subr.bf16.mxu0 0
      %581 = vmatpush2.bf16.msra.mxu0 %v535
      %582 = vmatprep.subr.bf16.mxu0 0
      %583 = vmatpush2.bf16.msra.mxu0 %v534
      %584 = vmatprep.subr.bf16.mxu0 0
      %585 = vmatpush2.bf16.msra.mxu0 %v533
      %586 = vmatprep.subr.bf16.mxu0 0
      %587 = vmatpush2.bf16.msra.mxu0 %v532
      %588 = vmatprep.mubr.bf16.mxu0 %v397
      %589 = vmatmul.mubr.bf16.gmra.mxu0 %v396
      %v590 = vpop.f32.mrf.mxu0
      %v591 = vadd.f32 %v298, %v590
      %v592 = vpop.f32.mrf.mxu0
      %v593 = vpop.f32.mrf.mxu0
      %v594 = vadd.f32 %v298, %v593
      %v595 = vpop.f32.mrf.mxu0
      %596 = vmatprep.mubr.bf16.mxu0 %v399
      %597 = vmatmul.mubr.bf16.gmra.mxu0 %v398
      %v598 = vpop.f32.mrf.mxu0
      %v599 = vadd.f32 %v298, %v598
      %v600 = vpop.f32.mrf.mxu0
      %v601 = vpop.f32.mrf.mxu0
      %v602 = vadd.f32 %v298, %v601
      %v603 = vpop.f32.mrf.mxu0
      %604 = vmatprep.mubr.bf16.mxu0 %v401
      %605 = vmatmul.mubr.bf16.gmra.mxu0 %v400
      %v606 = vpop.f32.mrf.mxu0
      %v607 = vadd.f32 %v298, %v606
      %v608 = vpop.f32.mrf.mxu0
      %v609 = vpop.f32.mrf.mxu0
      %v610 = vadd.f32 %v298, %v609
      %v611 = vpop.f32.mrf.mxu0
      %612 = vmatprep.mubr.bf16.mxu0 %v403
      %613 = vmatmul.mubr.bf16.gmra.mxu0 %v402
      %v614 = vpop.f32.mrf.mxu0
      %v615 = vadd.f32 %v298, %v614
      %v616 = vpop.f32.mrf.mxu0
      %v617 = vpop.f32.mrf.mxu0
      %v618 = vadd.f32 %v298, %v617
      %v619 = vpop.f32.mrf.mxu0
      %620 = vmatprep.mubr.bf16.mxu0 %v405
      %621 = vmatmul.mubr.bf16.gmra.mxu0 %v404
      %v622 = vpop.f32.mrf.mxu0
      %v623 = vadd.f32 %v298, %v622
      %v624 = vpop.f32.mrf.mxu0
      %v625 = vpop.f32.mrf.mxu0
      %v626 = vadd.f32 %v298, %v625
      %v627 = vpop.f32.mrf.mxu0
      %628 = vmatprep.mubr.bf16.mxu0 %v407
      %629 = vmatmul.mubr.bf16.gmra.mxu0 %v406
      %v630 = vpop.f32.mrf.mxu0
      %v631 = vadd.f32 %v298, %v630
      %v632 = vpop.f32.mrf.mxu0
      %v633 = vpop.f32.mrf.mxu0
      %v634 = vadd.f32 %v298, %v633
      %v635 = vpop.f32.mrf.mxu0
      %636 = vmatprep.mubr.bf16.mxu0 %v409
      %637 = vmatmul.mubr.bf16.gmra.mxu0 %v408
      %v638 = vpop.f32.mrf.mxu0
      %v639 = vadd.f32 %v298, %v638
      %v640 = vpop.f32.mrf.mxu0
      %v641 = vpop.f32.mrf.mxu0
      %v642 = vadd.f32 %v298, %v641
      %v643 = vpop.f32.mrf.mxu0
      %644 = vmatprep.mubr.bf16.mxu0 %v411
      %645 = vmatmul.mubr.bf16.gmra.mxu0 %v410
      %v646 = vpop.f32.mrf.mxu0
      %v647 = vadd.f32 %v298, %v646
      %v648 = vpop.f32.mrf.mxu0
      %v649 = vpop.f32.mrf.mxu0
      %v650 = vadd.f32 %v298, %v649
      %v651 = vpop.f32.mrf.mxu0
      %652 = vmatprep.mubr.bf16.mxu0 %v413
      %653 = vmatmul.mubr.bf16.gmra.mxu0 %v412
      %v654 = vpop.f32.mrf.mxu0
      %v655 = vadd.f32 %v298, %v654
      %v656 = vpop.f32.mrf.mxu0
      %v657 = vpop.f32.mrf.mxu0
      %v658 = vadd.f32 %v298, %v657
      %v659 = vpop.f32.mrf.mxu0
      %660 = vmatprep.mubr.bf16.mxu0 %v415
      %661 = vmatmul.mubr.bf16.gmra.mxu0 %v414
      %v662 = vpop.f32.mrf.mxu0
      %v663 = vadd.f32 %v298, %v662
      %v664 = vpop.f32.mrf.mxu0
      %v665 = vpop.f32.mrf.mxu0
      %v666 = vadd.f32 %v298, %v665
      %v667 = vpop.f32.mrf.mxu0
      %668 = vmatprep.mubr.bf16.mxu0 %v417
      %669 = vmatmul.mubr.bf16.gmra.mxu0 %v416
      %v670 = vpop.f32.mrf.mxu0
      %v671 = vadd.f32 %v298, %v670
      %v672 = vpop.f32.mrf.mxu0
      %v673 = vpop.f32.mrf.mxu0
      %v674 = vadd.f32 %v298, %v673
      %v675 = vpop.f32.mrf.mxu0
      %676 = vmatprep.mubr.bf16.mxu0 %v419
      %677 = vmatmul.mubr.bf16.gmra.mxu0 %v418
      %v678 = vpop.f32.mrf.mxu0
      %v679 = vadd.f32 %v298, %v678
      %v680 = vpop.f32.mrf.mxu0
      %v681 = vpop.f32.mrf.mxu0
      %v682 = vadd.f32 %v298, %v681
      %v683 = vpop.f32.mrf.mxu0
      %684 = vmatprep.mubr.bf16.mxu0 %v421
      %685 = vmatmul.mubr.bf16.gmra.mxu0 %v420
      %v686 = vpop.f32.mrf.mxu0
      %v687 = vadd.f32 %v298, %v686
      %v688 = vpop.f32.mrf.mxu0
      %v689 = vpop.f32.mrf.mxu0
      %v690 = vadd.f32 %v298, %v689
      %v691 = vpop.f32.mrf.mxu0
      %692 = vmatprep.mubr.bf16.mxu0 %v423
      %693 = vmatmul.mubr.bf16.gmra.mxu0 %v422
      %v694 = vpop.f32.mrf.mxu0
      %v695 = vadd.f32 %v298, %v694
      %v696 = vpop.f32.mrf.mxu0
      %v697 = vpop.f32.mrf.mxu0
      %v698 = vadd.f32 %v298, %v697
      %v699 = vpop.f32.mrf.mxu0
      %700 = vmatprep.mubr.bf16.mxu0 %v425
      %701 = vmatmul.mubr.bf16.gmra.mxu0 %v424
      %v702 = vpop.f32.mrf.mxu0
      %v703 = vadd.f32 %v298, %v702
      %v704 = vpop.f32.mrf.mxu0
      %v705 = vpop.f32.mrf.mxu0
      %v706 = vadd.f32 %v298, %v705
      %v707 = vpop.f32.mrf.mxu0
      %708 = vmatprep.mubr.bf16.mxu0 %v427
      %709 = vmatmul.mubr.bf16.gmra.mxu0 %v426
      %v710 = vpop.f32.mrf.mxu0
      %v711 = vadd.f32 %v298, %v710
      %v712 = vpop.f32.mrf.mxu0
      %v713 = vpop.f32.mrf.mxu0
      %v714 = vadd.f32 %v298, %v713
      %v715 = vpop.f32.mrf.mxu0
      %716 = vdwg.mxu0
      %v717 = vmax.f32 %v591, 0.0
      %v718 = vmax.f32 %v594, 0.0
      %v719 = vmax.f32 %v599, 0.0
      %v720 = vmax.f32 %v602, 0.0
      %v721 = vmax.f32 %v607, 0.0
      %v722 = vmax.f32 %v610, 0.0
      %v723 = vmax.f32 %v615, 0.0
      %v724 = vmax.f32 %v618, 0.0
      %v725 = vmax.f32 %v623, 0.0
      %v726 = vmax.f32 %v626, 0.0
      %v727 = vmax.f32 %v631, 0.0
      %v728 = vmax.f32 %v634, 0.0
      %v729 = vmax.f32 %v639, 0.0
      %v730 = vmax.f32 %v642, 0.0
      %v731 = vmax.f32 %v647, 0.0
      %v732 = vmax.f32 %v650, 0.0
      %v733 = vmax.f32 %v655, 0.0
      %v734 = vmax.f32 %v658, 0.0
      %v735 = vmax.f32 %v663, 0.0
      %v736 = vmax.f32 %v666, 0.0
      %v737 = vmax.f32 %v671, 0.0
      %v738 = vmax.f32 %v674, 0.0
      %v739 = vmax.f32 %v679, 0.0
      %v740 = vmax.f32 %v682, 0.0
      %v741 = vmax.f32 %v687, 0.0
      %v742 = vmax.f32 %v690, 0.0
      %v743 = vmax.f32 %v695, 0.0
      %v744 = vmax.f32 %v698, 0.0
      %v745 = vmax.f32 %v703, 0.0
      %v746 = vmax.f32 %v706, 0.0
      %v747 = vmax.f32 %v711, 0.0
      %v748 = vmax.f32 %v714, 0.0
      %v749 = vpack.c.bf16 %v718, %v717
      %v750 = vpack.c.bf16 %v720, %v719
      %v751 = vpack.c.bf16 %v722, %v721
      %v752 = vpack.c.bf16 %v724, %v723
      %v753 = vpack.c.bf16 %v726, %v725
      %v754 = vpack.c.bf16 %v728, %v727
      %v755 = vpack.c.bf16 %v730, %v729
      %v756 = vpack.c.bf16 %v732, %v731
      %v757 = vpack.c.bf16 %v734, %v733
      %v758 = vpack.c.bf16 %v736, %v735
      %v759 = vpack.c.bf16 %v738, %v737
      %v760 = vpack.c.bf16 %v740, %v739
      %v761 = vpack.c.bf16 %v742, %v741
      %v762 = vpack.c.bf16 %v744, %v743
      %v763 = vpack.c.bf16 %v746, %v745
      %v764 = vpack.c.bf16 %v748, %v747
      %v781 = vunpack.c.l.b16 %v749
      %v782 = vunpack.c.h.b16 %v749
      %v783 = vunpack.c.l.b16 %v750
      %v784 = vunpack.c.h.b16 %v750
      %v785 = vunpack.c.l.b16 %v751
      %v786 = vunpack.c.h.b16 %v751
      %v787 = vunpack.c.l.b16 %v752
      %v788 = vunpack.c.h.b16 %v752
      %v789 = vunpack.c.l.b16 %v753
      %v790 = vunpack.c.h.b16 %v753
      %v791 = vunpack.c.l.b16 %v754
      %v792 = vunpack.c.h.b16 %v754
      %v793 = vunpack.c.l.b16 %v755
      %v794 = vunpack.c.h.b16 %v755
      %v795 = vunpack.c.l.b16 %v756
      %v796 = vunpack.c.h.b16 %v756
      %v797 = vunpack.c.l.b16 %v757
      %v798 = vunpack.c.h.b16 %v757
      %v799 = vunpack.c.l.b16 %v758
      %v800 = vunpack.c.h.b16 %v758
      %v801 = vunpack.c.l.b16 %v759
      %v802 = vunpack.c.h.b16 %v759
      %v803 = vunpack.c.l.b16 %v760
      %v804 = vunpack.c.h.b16 %v760
      %v805 = vunpack.c.l.b16 %v761
      %v806 = vunpack.c.h.b16 %v761
      %v807 = vunpack.c.l.b16 %v762
      %v808 = vunpack.c.h.b16 %v762
      %v809 = vunpack.c.l.b16 %v763
      %v810 = vunpack.c.h.b16 %v763
      %v811 = vunpack.c.l.b16 %v764
      %v812 = vunpack.c.h.b16 %v764
      %v813 = vpack.c.b16 %v781, %v781
      %v814 = vpack.c.b16 %v782, %v782
      %v815 = vpack.c.b16 %v783, %v783
      %v816 = vpack.c.b16 %v784, %v784
      %v817 = vpack.c.b16 %v785, %v785
      %v818 = vpack.c.b16 %v786, %v786
      %v819 = vpack.c.b16 %v787, %v787
      %v820 = vpack.c.b16 %v788, %v788
      %v821 = vpack.c.b16 %v789, %v789
      %v822 = vpack.c.b16 %v790, %v790
      %v823 = vpack.c.b16 %v791, %v791
      %v824 = vpack.c.b16 %v792, %v792
      %v825 = vpack.c.b16 %v793, %v793
      %v826 = vpack.c.b16 %v794, %v794
      %v827 = vpack.c.b16 %v795, %v795
      %v828 = vpack.c.b16 %v796, %v796
      %v829 = vpack.c.b16 %v797, %v797
      %v830 = vpack.c.b16 %v798, %v798
      %v831 = vpack.c.b16 %v799, %v799
      %v832 = vpack.c.b16 %v800, %v800
      %v833 = vpack.c.b16 %v801, %v801
      %v834 = vpack.c.b16 %v802, %v802
      %v835 = vpack.c.b16 %v803, %v803
      %v836 = vpack.c.b16 %v804, %v804
      %v837 = vpack.c.b16 %v805, %v805
      %v838 = vpack.c.b16 %v806, %v806
      %v839 = vpack.c.b16 %v807, %v807
      %v840 = vpack.c.b16 %v808, %v808
      %v841 = vpack.c.b16 %v809, %v809
      %v842 = vpack.c.b16 %v810, %v810
      %v843 = vpack.c.b16 %v811, %v811
      %v844 = vpack.c.b16 %v812, %v812
      %877 = vst [vmem:[%s226] sm:$0xf] %v813
      %878 = vst [vmem:[%s226 + $0x4] sm:$0xf] %v814
      %879 = vst [vmem:[%s226 + $0x8] sm:$0xf] %v815
      %880 = vst [vmem:[%s226 + $0xc] sm:$0xf] %v816
      %881 = vst [vmem:[%s226 + $0x10] sm:$0xf] %v817
      %882 = vst [vmem:[%s226 + $0x14] sm:$0xf] %v818
      %883 = vst [vmem:[%s226 + $0x18] sm:$0xf] %v819
      %884 = vst [vmem:[%s226 + $0x1c] sm:$0xf] %v820
      %885 = vst [vmem:[%s226 + $0x20] sm:$0xf] %v821
      %886 = vst [vmem:[%s226 + $0x24] sm:$0xf] %v822
      %887 = vst [vmem:[%s226 + $0x28] sm:$0xf] %v823
      %888 = vst [vmem:[%s226 + $0x2c] sm:$0xf] %v824
      %889 = vst [vmem:[%s226 + $0x30] sm:$0xf] %v825
      %890 = vst [vmem:[%s226 + $0x34] sm:$0xf] %v826
      %891 = vst [vmem:[%s226 + $0x38] sm:$0xf] %v827
      %892 = vst [vmem:[%s226 + $0x3c] sm:$0xf] %v828
      %893 = vst [vmem:[%s226 + $0x40] sm:$0xf] %v829
      %894 = vst [vmem:[%s226 + $0x44] sm:$0xf] %v830
      %895 = vst [vmem:[%s226 + $0x48] sm:$0xf] %v831
      %896 = vst [vmem:[%s226 + $0x4c] sm:$0xf] %v832
      %897 = vst [vmem:[%s226 + $0x50] sm:$0xf] %v833
      %898 = vst [vmem:[%s226 + $0x54] sm:$0xf] %v834
      %899 = vst [vmem:[%s226 + $0x58] sm:$0xf] %v835
      %900 = vst [vmem:[%s226 + $0x5c] sm:$0xf] %v836
      %901 = vst [vmem:[%s226 + $0x60] sm:$0xf] %v837
      %902 = vst [vmem:[%s226 + $0x64] sm:$0xf] %v838
      %903 = vst [vmem:[%s226 + $0x68] sm:$0xf] %v839
      %904 = vst [vmem:[%s226 + $0x6c] sm:$0xf] %v840
      %905 = vst [vmem:[%s226 + $0x70] sm:$0xf] %v841
      %906 = vst [vmem:[%s226 + $0x74] sm:$0xf] %v842
      %907 = vst [vmem:[%s226 + $0x78] sm:$0xf] %v843
      %908 = vst [vmem:[%s226 + $0x7c] sm:$0xf] %v844
      %s909 = smul.u32 32, %s18
      %p910 = scmp.lt.s32.totalorder %s909, 3135
      %s911 = scalar_select %p910, %s909, 3135
      %p912 = scmp.lt.s32.totalorder %s19, 0
      %s913 = scalar_select %p912, %s19, 0
      %s914 = sadd.s32 %s913, %s911
      %s915 = smul.addr %s914, 4
      %s916 = scalar_lea.vmem %s3, %s915
      // Predicated region
      $region33: #{_stem.2} parent=31 // pred_check
        %p917 = pneg %p124
      $region34: #{_stem.2} parent=31 // pred_check_branch
        %919 = sbr.rel (%p917) target = $region36
      $region35: #{_stem.2} parent=31 // pred_region
        %s920 = smul.u32 32, %s18
      $region36: #{_stem.2} parent=31 // pred_fallthru
        _
    $region32: #{_stem.2} parent=5 // pred_fallthru
      _
    %p921 = scmp.le.s32.totalorder 2, %s9
    // Predicated region
    $region37: #{_stem.2} parent=5 // pred_check
      %p922 = pneg %p921
    $region38: #{_stem.2} parent=5 // pred_check_branch
      %924 = sbr.rel (%p922) target = $region40
    $region39: #{_stem.2} parent=5 // pred_region
      %s925 = ssub.s32 %s9, 2
      // Predicated region
      $region41: #{_stem.2} parent=39 // pred_check
        %p926 = pneg %p130
      $region42: #{_stem.2} parent=39 // pred_check_branch
        %928 = sbr.rel (%p926) target = $region44
      $region43: #{_stem.2} parent=39 // pred_region
        %s929 = smul.u32 32, %s20
        %p930 = scmp.lt.s32.totalorder %s929, 3135
        %s931 = scalar_select %p930, %s929, 3135
        %p932 = scmp.lt.s32.totalorder %s21, 0
        %s933 = scalar_select %p932, %s21, 0
        %s934 = sadd.s32 %s933, %s931
        %s935 = smul.addr %s934, 4
        %s936 = scalar_lea.vmem %s3, %s935
      $region44: #{_stem.2} parent=39 // pred_fallthru
        _
    $region40: #{_stem.2} parent=5 // pred_fallthru
      _
  $region6: #{_stem.2} parent=0 // loop_footer
    %s13 = sadd.s32 1, %s9
  $region7: #{_stem.2} parent=0 // loop_footer_branch
    %8 = sbr.rel target = $region3
  $region8: #{_stem.2} parent=0 // loop_exit
    _

// kernel: _stem.3
$region0: #{_stem.3}
  #allocation0 [shape = 'u32[]', space=smem, size = 0x4, offset = 0x4, fixed_abs, tag = 'smem constant byte address 0x4 - core index']
  #allocation1 [shape = 'u32[144,128]{1,0:T(1,128)}', space=vmem, size = 0x12000, scoped, tag = 'internal scratch']
  %s0 = inlined_call_operand.vmem [shape: bf16[9,3584,128], index: 0, kind: input, shape index: {}]
  %s1 = inlined_call_operand.vmem [shape: bf16[3584,128], index: 1, kind: output, shape index: {}]
  %s2 = sld [smem:[#allocation0]]
  $region89: #{_stem.3} parent=0
    _
  %s4 = ssub.s32 1, %s2
  %s5 = scalar_select 0, %s4, %s2
  $region1: #{_stem.3} parent=0
    #allocation2 [shape = 'u8[2359296]{0}', space=vmem, size = 0x240000, scoped, tag = 'input window, operand 0']
    loop: start=0, step=1, limit=9
    $region2: #{_stem.3} parent=1 // loop_pre_header
      _
    $region3: #{_stem.3} parent=1 // loop_header
      %s7 = sphi 0, %s11
      %p8 = scmp.ge.s32.totalorder %s7, 9
      %s17 = sphi 0, %s19
      %s20 = sphi 0, %s17
      %s21 = sphi 0, %s20
      %s37 = sphi 0, %s21
      %s43 = sphi 0, %s45
      %s46 = sphi 0, %s43
      %s47 = sphi 0, %s46
      %s63 = sphi 0, %s47
    $region4: #{_stem.3} parent=1 // loop_header_branch
      %10 = sbr.rel (%p8) target = $region8
    $region5: #{_stem.3} parent=1 // loop_body
      %s12 = ssub.s32 %s7, 1
      %s13 = ssub.s32 %s7, 2
      %s14 = sadd.s32 %s7, 1
      %s15 = ssub.s32 %s7, %s14
      %p16 = scmp.eq.s32.totalorder %s15, 0
      %s18 = sadd.s32 %s17, 1
      %s19 = scalar_select %p16, %s17, %s18
      %p22 = pneg %p16
      %p23 = scmp.eq.s32.totalorder %s7, 6
      %p24 = por %p22, %p23
      %p25 = scmp.ne.s32.totalorder %s17, %s20
      %p26 = scmp.eq.s32.totalorder %s7, 0
      %p27 = por %p25, %p26
      %p28 = scmp.ne.s32.totalorder %s17, %s20
      %p29 = scmp.eq.s32.totalorder %s12, 6
      %p30 = por %p28, %p29
      %p31 = scmp.ne.s32.totalorder %s20, %s21
      %p32 = scmp.eq.s32.totalorder %s12, 0
      %p33 = por %p31, %p32
      %p34 = scmp.ne.s32.totalorder %s20, %s21
      %p35 = scmp.eq.s32.totalorder %s13, 6
      %p36 = por %p34, %p35
      %p38 = scmp.ne.s32.totalorder %s21, %s37
      %p39 = scmp.eq.s32.totalorder %s13, 0
      %p40 = por %p38, %p39
      %s41 = ssub.s32 %s7, %s14
      %p42 = scmp.eq.s32.totalorder %s41, 0
      %s44 = sadd.s32 %s43, 1
      %s45 = scalar_select %p42, %s43, %s44
      %p48 = pneg %p42
      %p49 = scmp.eq.s32.totalorder %s7, 6
      %p50 = por %p48, %p49
      %p51 = scmp.ne.s32.totalorder %s43, %s46
      %p52 = scmp.eq.s32.totalorder %s7, 0
      %p53 = por %p51, %p52
      %p54 = scmp.ne.s32.totalorder %s43, %s46
      %p55 = scmp.eq.s32.totalorder %s12, 6
      %p56 = por %p54, %p55
      %p57 = scmp.ne.s32.totalorder %s46, %s47
      %p58 = scmp.eq.s32.totalorder %s12, 0
      %p59 = por %p57, %p58
      %p60 = scmp.ne.s32.totalorder %s46, %s47
      %p61 = scmp.eq.s32.totalorder %s13, 6
      %p62 = por %p60, %p61
      %p64 = scmp.ne.s32.totalorder %s47, %s63
      %p65 = scmp.eq.s32.totalorder %s13, 0
      %p66 = por %p64, %p65
      %p67 = scmp.le.s32.totalorder 1, %s7
      %p68 = scmp.lt.s32.totalorder %s7, 8
      %p69 = pnand %p67, %p68
      %p70 = pneg %p69
      // Predicated region
      $region9: #{_stem.3} parent=5 // pred_check
        _
      $region10: #{_stem.3} parent=5 // pred_check_branch
        %72 = sbr.rel (%p69) target = $region12
      $region11: #{_stem.3} parent=5 // pred_region
        %s73 = ssub.s32 %s7, 1
      $region12: #{_stem.3} parent=5 // pred_fallthru
        _
      %p74 = scmp.lt.s32.totalorder %s7, 7
      // Predicated region
      $region13: #{_stem.3} parent=5 // pred_check
        %p75 = pneg %p74
      $region14: #{_stem.3} parent=5 // pred_check_branch
        %77 = sbr.rel (%p75) target = $region16
      $region15: #{_stem.3} parent=5 // pred_region
        // Predicated region
        $region17: #{_stem.3} parent=15 // pred_check
          %p78 = pneg %p27
        $region18: #{_stem.3} parent=15 // pred_check_branch
          %80 = sbr.rel (%p78) target = $region20
        $region19: #{_stem.3} parent=15 // pred_region
          %s81 = sand.u32 %s17, 1
          %s82 = sand.u32 %s17, 1
          %s83 = smul.addr %s82, 2304
          %s84 = scalar_lea.vmem [#allocation2], %s83
          %s85 = smul.u32 64, %s7
          %s86 = smul.addr %s85, 4
          %s87 = scalar_lea.vmem %s0, %s86
          // Predicated region
          $region21: #{_stem.3} parent=19 // pred_check
            _
          $region22: #{_stem.3} parent=19 // pred_check_branch
            %89 = sbr.rel (0) target = $region24
          $region23: #{_stem.3} parent=19 // pred_region
            // Predicated region
            $region25: #{_stem.3} parent=23 // pred_check
              _
            $region26: #{_stem.3} parent=23 // pred_check_branch
              %91 = sbr.rel target = $region28
            $region27: #{_stem.3} parent=23 // pred_region
              // Predicated region
              $region40: #{_stem.3} parent=27 // pred_check
                _
              $region41: #{_stem.3} parent=27 // pred_check_branch
                %1257 = sbr.rel target = $region43
              $region42: #{_stem.3} parent=27 // pred_region
                loop: start=0, step=1, limit=0
                $region44: #{_stem.3} parent=42 // loop_pre_header
                  _
                $region45: #{_stem.3} parent=42 // loop_header
                  %s1261 = sphi 0, %s1265
                  %p1262 = scmp.ge.s32.totalorder %s1261, 0
                  %s1266 = sphi 0, %s2423
                  %s1267 = sphi %s87, %s2426
                  %s1268 = sphi %s84, %s2427
                $region46: #{_stem.3} parent=42 // loop_header_branch
                  %1264 = sbr.rel (%p1262) target = $region50
                $region47: #{_stem.3} parent=42 // loop_body
                  %v1269 = vld [vmem:[%s1267] sm:$0xff]
                  %1270 = vst [vmem:[%s1268] sm:$0xff] %v1269
                  %v1271 = vld [vmem:[%s1267 + $0x4] sm:$0xff]
                  %1272 = vst [vmem:[%s1268 + $0x4] sm:$0xff] %v1271
                  %v1273 = vld [vmem:[%s1267 + $0x8] sm:$0xff]
                  %1274 = vst [vmem:[%s1268 + $0x8] sm:$0xff] %v1273
                  %v1275 = vld [vmem:[%s1267 + $0xc] sm:$0xff]
                  %1276 = vst [vmem:[%s1268 + $0xc] sm:$0xff] %v1275
                  %v1277 = vld [vmem:[%s1267 + $0x10] sm:$0xff]
                  %1278 = vst [vmem:[%s1268 + $0x10] sm:$0xff] %v1277
                  %v1279 = vld [vmem:[%s1267 + $0x14] sm:$0xff]
                  %1280 = vst [vmem:[%s1268 + $0x14] sm:$0xff] %v1279
                  %v1281 = vld [vmem:[%s1267 + $0x18] sm:$0xff]
                  %1282 = vst [vmem:[%s1268 + $0x18] sm:$0xff] %v1281
                  %v1283 = vld [vmem:[%s1267 + $0x1c] sm:$0xff]
                  %1284 = vst [vmem:[%s1268 + $0x1c] sm:$0xff] %v1283
                  %v1285 = vld [vmem:[%s1267 + $0x20] sm:$0xff]
                  %1286 = vst [vmem:[%s1268 + $0x20] sm:$0xff] %v1285
                  %v1287 = vld [vmem:[%s1267 + $0x24] sm:$0xff]
                  %1288 = vst [vmem:[%s1268 + $0x24] sm:$0xff] %v1287
                  %v1289 = vld [vmem:[%s1267 + $0x28] sm:$0xff]
                  %1290 = vst [vmem:[%s1268 + $0x28] sm:$0xff] %v1289
                  %v1291 = vld [vmem:[%s1267 + $0x2c] sm:$0xff]
                  %1292 = vst [vmem:[%s1268 + $0x2c] sm:$0xff] %v1291
                  %v1293 = vld [vmem:[%s1267 + $0x30] sm:$0xff]
                  %1294 = vst [vmem:[%s1268 + $0x30] sm:$0xff] %v1293
                  %v1295 = vld [vmem:[%s1267 + $0x34] sm:$0xff]
                  %1296 = vst [vmem:[%s1268 + $0x34] sm:$0xff] %v1295
                  %v1297 = vld [vmem:[%s1267 + $0x38] sm:$0xff]
                  %1298 = vst [vmem:[%s1268 + $0x38] sm:$0xff] %v1297
                  %v1299 = vld [vmem:[%s1267 + $0x3c] sm:$0xff]
                  %1300 = vst [vmem:[%s1268 + $0x3c] sm:$0xff] %v1299
                  %v1301 = vld [vmem:[%s1267 + $0x40] sm:$0xff]
                  %1302 = vst [vmem:[%s1268 + $0x40] sm:$0xff] %v1301
                  %v1303 = vld [vmem:[%s1267 + $0x44] sm:$0xff]
                  %1304 = vst [vmem:[%s1268 + $0x44] sm:$0xff] %v1303
                  %v1305 = vld [vmem:[%s1267 + $0x48] sm:$0xff]
                  %1306 = vst [vmem:[%s1268 + $0x48] sm:$0xff] %v1305
                  %v1307 = vld [vmem:[%s1267 + $0x4c] sm:$0xff]
                  %1308 = vst [vmem:[%s1268 + $0x4c] sm:$0xff] %v1307
                  %v1309 = vld [vmem:[%s1267 + $0x50] sm:$0xff]
                  %1310 = vst [vmem:[%s1268 + $0x50] sm:$0xff] %v1309
                  %v1311 = vld [vmem:[%s1267 + $0x54] sm:$0xff]
                  %1312 = vst [vmem:[%s1268 + $0x54] sm:$0xff] %v1311
                  %v1313 = vld [vmem:[%s1267 + $0x58] sm:$0xff]
                  %1314 = vst [vmem:[%s1268 + $0x58] sm:$0xff] %v1313
                  %v1315 = vld [vmem:[%s1267 + $0x5c] sm:$0xff]
                  %1316 = vst [vmem:[%s1268 + $0x5c] sm:$0xff] %v1315
                  %v1317 = vld [vmem:[%s1267 + $0x60] sm:$0xff]
                  %1318 = vst [vmem:[%s1268 + $0x60] sm:$0xff] %v1317
                  %v1319 = vld [vmem:[%s1267 + $0x64] sm:$0xff]
                  %1320 = vst [vmem:[%s1268 + $0x64] sm:$0xff] %v1319
                  %v1321 = vld [vmem:[%s1267 + $0x68] sm:$0xff]
                  %1322 = vst [vmem:[%s1268 + $0x68] sm:$0xff] %v1321
                  %v1323 = vld [vmem:[%s1267 + $0x6c] sm:$0xff]
                  %1324 = vst [vmem:[%s1268 + $0x6c] sm:$0xff] %v1323
                  %v1325 = vld [vmem:[%s1267 + $0x70] sm:$0xff]
                  %1326 = vst [vmem:[%s1268 + $0x70] sm:$0xff] %v1325
                  %v1327 = vld [vmem:[%s1267 + $0x74] sm:$0xff]
                  %1328 = vst [vmem:[%s1268 + $0x74] sm:$0xff] %v1327
                  %v1329 = vld [vmem:[%s1267 + $0x78] sm:$0xff]
                  %1330 = vst [vmem:[%s1268 + $0x78] sm:$0xff] %v1329
                  %v1331 = vld [vmem:[%s1267 + $0x7c] sm:$0xff]
                  %1332 = vst [vmem:[%s1268 + $0x7c] sm:$0xff] %v1331
                  %v1333 = vld [vmem:[%s1267 + $0x80] sm:$0xff]
                  %1334 = vst [vmem:[%s1268 + $0x80] sm:$0xff] %v1333
                  %v1335 = vld [vmem:[%s1267 + $0x84] sm:$0xff]
                  %1336 = vst [vmem:[%s1268 + $0x84] sm:$0xff] %v1335
                  %v1337 = vld [vmem:[%s1267 + $0x88] sm:$0xff]
                  %1338 = vst [vmem:[%s1268 + $0x88] sm:$0xff] %v1337
                  %v1339 = vld [vmem:[%s1267 + $0x8c] sm:$0xff]
                  %1340 = vst [vmem:[%s1268 + $0x8c] sm:$0xff] %v1339
                  %v1341 = vld [vmem:[%s1267 + $0x90] sm:$0xff]
                  %1342 = vst [vmem:[%s1268 + $0x90] sm:$0xff] %v1341
                  %v1343 = vld [vmem:[%s1267 + $0x94] sm:$0xff]
                  %1344 = vst [vmem:[%s1268 + $0x94] sm:$0xff] %v1343
                  %v1345 = vld [vmem:[%s1267 + $0x98] sm:$0xff]
                  %1346 = vst [vmem:[%s1268 + $0x98] sm:$0xff] %v1345
                  %v1347 = vld [vmem:[%s1267 + $0x9c] sm:$0xff]
                  %1348 = vst [vmem:[%s1268 + $0x9c] sm:$0xff] %v1347
                  %v1349 = vld [vmem:[%s1267 + $0xa0] sm:$0xff]
                  %1350 = vst [vmem:[%s1268 + $0xa0] sm:$0xff] %v1349
                  %v1351 = vld [vmem:[%s1267 + $0xa4] sm:$0xff]
                  %1352 = vst [vmem:[%s1268 + $0xa4] sm:$0xff] %v1351
                  %v1353 = vld [vmem:[%s1267 + $0xa8] sm:$0xff]
                  %1354 = vst [vmem:[%s1268 + $0xa8] sm:$0xff] %v1353
                  %v1355 = vld [vmem:[%s1267 + $0xac] sm:$0xff]
                  %1356 = vst [vmem:[%s1268 + $0xac] sm:$0xff] %v1355
                  %v1357 = vld [vmem:[%s1267 + $0xb0] sm:$0xff]
                  %1358 = vst [vmem:[%s1268 + $0xb0] sm:$0xff] %v1357
                  %v1359 = vld [vmem:[%s1267 + $0xb4] sm:$0xff]
                  %1360 = vst [vmem:[%s1268 + $0xb4] sm:$0xff] %v1359
                  %v1361 = vld [vmem:[%s1267 + $0xb8] sm:$0xff]
                  %1362 = vst [vmem:[%s1268 + $0xb8] sm:$0xff] %v1361
                  %v1363 = vld [vmem:[%s1267 + $0xbc] sm:$0xff]
                  %1364 = vst [vmem:[%s1268 + $0xbc] sm:$0xff] %v1363
                  %v1365 = vld [vmem:[%s1267 + $0xc0] sm:$0xff]
                  %1366 = vst [vmem:[%s1268 + $0xc0] sm:$0xff] %v1365
                  %v1367 = vld [vmem:[%s1267 + $0xc4] sm:$0xff]
                  %1368 = vst [vmem:[%s1268 + $0xc4] sm:$0xff] %v1367
                  %v1369 = vld [vmem:[%s1267 + $0xc8] sm:$0xff]
                  %1370 = vst [vmem:[%s1268 + $0xc8] sm:$0xff] %v1369
                  %v1371 = vld [vmem:[%s1267 + $0xcc] sm:$0xff]
                  %1372 = vst [vmem:[%s1268 + $0xcc] sm:$0xff] %v1371
                  %v1373 = vld [vmem:[%s1267 + $0xd0] sm:$0xff]
                  %1374 = vst [vmem:[%s1268 + $0xd0] sm:$0xff] %v1373
                  %v1375 = vld [vmem:[%s1267 + $0xd4] sm:$0xff]
                  %1376 = vst [vmem:[%s1268 + $0xd4] sm:$0xff] %v1375
                  %v1377 = vld [vmem:[%s1267 + $0xd8] sm:$0xff]
                  %1378 = vst [vmem:[%s1268 + $0xd8] sm:$0xff] %v1377
                  %v1379 = vld [vmem:[%s1267 + $0xdc] sm:$0xff]
                  %1380 = vst [vmem:[%s1268 + $0xdc] sm:$0xff] %v1379
                  %v1381 = vld [vmem:[%s1267 + $0xe0] sm:$0xff]
                  %1382 = vst [vmem:[%s1268 + $0xe0] sm:$0xff] %v1381
                  %v1383 = vld [vmem:[%s1267 + $0xe4] sm:$0xff]
                  %1384 = vst [vmem:[%s1268 + $0xe4] sm:$0xff] %v1383
                  %v1385 = vld [vmem:[%s1267 + $0xe8] sm:$0xff]
                  %1386 = vst [vmem:[%s1268 + $0xe8] sm:$0xff] %v1385
                  %v1387 = vld [vmem:[%s1267 + $0xec] sm:$0xff]
                  %1388 = vst [vmem:[%s1268 + $0xec] sm:$0xff] %v1387
                  %v1389 = vld [vmem:[%s1267 + $0xf0] sm:$0xff]
                  %1390 = vst [vmem:[%s1268 + $0xf0] sm:$0xff] %v1389
                  %v1391 = vld [vmem:[%s1267 + $0xf4] sm:$0xff]
                  %1392 = vst [vmem:[%s1268 + $0xf4] sm:$0xff] %v1391
                  %v1393 = vld [vmem:[%s1267 + $0xf8] sm:$0xff]
                  %1394 = vst [vmem:[%s1268 + $0xf8] sm:$0xff] %v1393
                  %v1395 = vld [vmem:[%s1267 + $0xfc] sm:$0xff]
                  %1396 = vst [vmem:[%s1268 + $0xfc] sm:$0xff] %v1395
                  %v1397 = vld [vmem:[%s1267 + $0x700] sm:$0xff]
                  %1398 = vst [vmem:[%s1268 + $0x100] sm:$0xff] %v1397
                  %v1399 = vld [vmem:[%s1267 + $0x704] sm:$0xff]
                  %1400 = vst [vmem:[%s1268 + $0x104] sm:$0xff] %v1399
                  %v1401 = vld [vmem:[%s1267 + $0x708] sm:$0xff]
                  %1402 = vst [vmem:[%s1268 + $0x108] sm:$0xff] %v1401
                  %v1403 = vld [vmem:[%s1267 + $0x70c] sm:$0xff]
                  %1404 = vst [vmem:[%s1268 + $0x10c] sm:$0xff] %v1403
                  %v1405 = vld [vmem:[%s1267 + $0x710] sm:$0xff]
                  %1406 = vst [vmem:[%s1268 + $0x110] sm:$0xff] %v1405
                  %v1407 = vld [vmem:[%s1267 + $0x714] sm:$0xff]
                  %1408 = vst [vmem:[%s1268 + $0x114] sm:$0xff] %v1407
                  %v1409 = vld [vmem:[%s1267 + $0x718] sm:$0xff]
                  %1410 = vst [vmem:[%s1268 + $0x118] sm:$0xff] %v1409
                  %v1411 = vld [vmem:[%s1267 + $0x71c] sm:$0xff]
                  %1412 = vst [vmem:[%s1268 + $0x11c] sm:$0xff] %v1411
                  %v1413 = vld [vmem:[%s1267 + $0x720] sm:$0xff]
                  %1414 = vst [vmem:[%s1268 + $0x120] sm:$0xff] %v1413
                  %v1415 = vld [vmem:[%s1267 + $0x724] sm:$0xff]
                  %1416 = vst [vmem:[%s1268 + $0x124] sm:$0xff] %v1415
                  %v1417 = vld [vmem:[%s1267 + $0x728] sm:$0xff]
                  %1418 = vst [vmem:[%s1268 + $0x128] sm:$0xff] %v1417
                  %v1419 = vld [vmem:[%s1267 + $0x72c] sm:$0xff]
                  %1420 = vst [vmem:[%s1268 + $0x12c] sm:$0xff] %v1419
                  %v1421 = vld [vmem:[%s1267 + $0x730] sm:$0xff]
                  %1422 = vst [vmem:[%s1268 + $0x130] sm:$0xff] %v1421
                  %v1423 = vld [vmem:[%s1267 + $0x734] sm:$0xff]
                  %1424 = vst [vmem:[%s1268 + $0x134] sm:$0xff] %v1423
                  %v1425 = vld [vmem:[%s1267 + $0x738] sm:$0xff]
                  %1426 = vst [vmem:[%s1268 + $0x138] sm:$0xff] %v1425
                  %v1427 = vld [vmem:[%s1267 + $0x73c] sm:$0xff]
                  %1428 = vst [vmem:[%s1268 + $0x13c] sm:$0xff] %v1427
                  %v1429 = vld [vmem:[%s1267 + $0x740] sm:$0xff]
                  %1430 = vst [vmem:[%s1268 + $0x140] sm:$0xff] %v1429
                  %v1431 = vld [vmem:[%s1267 + $0x744] sm:$0xff]
                  %1432 = vst [vmem:[%s1268 + $0x144] sm:$0xff] %v1431
                  %v1433 = vld [vmem:[%s1267 + $0x748] sm:$0xff]
                  %1434 = vst [vmem:[%s1268 + $0x148] sm:$0xff] %v1433
                  %v1435 = vld [vmem:[%s1267 + $0x74c] sm:$0xff]
                  %1436 = vst [vmem:[%s1268 + $0x14c] sm:$0xff] %v1435
                  %v1437 = vld [vmem:[%s1267 + $0x750] sm:$0xff]
                  %1438 = vst [vmem:[%s1268 + $0x150] sm:$0xff] %v1437
                  %v1439 = vld [vmem:[%s1267 + $0x754] sm:$0xff]
                  %1440 = vst [vmem:[%s1268 + $0x154] sm:$0xff] %v1439
                  %v1441 = vld [vmem:[%s1267 + $0x758] sm:$0xff]
                  %1442 = vst [vmem:[%s1268 + $0x158] sm:$0xff] %v1441
                  %v1443 = vld [vmem:[%s1267 + $0x75c] sm:$0xff]
                  %1444 = vst [vmem:[%s1268 + $0x15c] sm:$0xff] %v1443
                  %v1445 = vld [vmem:[%s1267 + $0x760] sm:$0xff]
                  %1446 = vst [vmem:[%s1268 + $0x160] sm:$0xff] %v1445
                  %v1447 = vld [vmem:[%s1267 + $0x764] sm:$0xff]
                  %1448 = vst [vmem:[%s1268 + $0x164] sm:$0xff] %v1447
                  %v1449 = vld [vmem:[%s1267 + $0x768] sm:$0xff]
                  %1450 = vst [vmem:[%s1268 + $0x168] sm:$0xff] %v1449
                  %v1451 = vld [vmem:[%s1267 + $0x76c] sm:$0xff]
                  %1452 = vst [vmem:[%s1268 + $0x16c] sm:$0xff] %v1451
                  %v1453 = vld [vmem:[%s1267 + $0x770] sm:$0xff]
                  %1454 = vst [vmem:[%s1268 + $0x170] sm:$0xff] %v1453
                  %v1455 = vld [vmem:[%s1267 + $0x774] sm:$0xff]
                  %1456 = vst [vmem:[%s1268 + $0x174] sm:$0xff] %v1455
                  %v1457 = vld [vmem:[%s1267 + $0x778] sm:$0xff]
                  %1458 = vst [vmem:[%s1268 + $0x178] sm:$0xff] %v1457
                  %v1459 = vld [vmem:[%s1267 + $0x77c] sm:$0xff]
                  %1460 = vst [vmem:[%s1268 + $0x17c] sm:$0xff] %v1459
                  %v1461 = vld [vmem:[%s1267 + $0x780] sm:$0xff]
                  %1462 = vst [vmem:[%s1268 + $0x180] sm:$0xff] %v1461
                  %v1463 = vld [vmem:[%s1267 + $0x784] sm:$0xff]
                  %1464 = vst [vmem:[%s1268 + $0x184] sm:$0xff] %v1463
                  %v1465 = vld [vmem:[%s1267 + $0x788] sm:$0xff]
                  %1466 = vst [vmem:[%s1268 + $0x188] sm:$0xff] %v1465
                  %v1467 = vld [vmem:[%s1267 + $0x78c] sm:$0xff]
                  %1468 = vst [vmem:[%s1268 + $0x18c] sm:$0xff] %v1467
                  %v1469 = vld [vmem:[%s1267 + $0x790] sm:$0xff]
                  %1470 = vst [vmem:[%s1268 + $0x190] sm:$0xff] %v1469
                  %v1471 = vld [vmem:[%s1267 + $0x794] sm:$0xff]
                  %1472 = vst [vmem:[%s1268 + $0x194] sm:$0xff] %v1471
                  %v1473 = vld [vmem:[%s1267 + $0x798] sm:$0xff]
                  %1474 = vst [vmem:[%s1268 + $0x198] sm:$0xff] %v1473
                  %v1475 = vld [vmem:[%s1267 + $0x79c] sm:$0xff]
                  %1476 = vst [vmem:[%s1268 + $0x19c] sm:$0xff] %v1475
                  %v1477 = vld [vmem:[%s1267 + $0x7a0] sm:$0xff]
                  %1478 = vst [vmem:[%s1268 + $0x1a0] sm:$0xff] %v1477
                  %v1479 = vld [vmem:[%s1267 + $0x7a4] sm:$0xff]
                  %1480 = vst [vmem:[%s1268 + $0x1a4] sm:$0xff] %v1479
                  %v1481 = vld [vmem:[%s1267 + $0x7a8] sm:$0xff]
                  %1482 = vst [vmem:[%s1268 + $0x1a8] sm:$0xff] %v1481
                  %v1483 = vld [vmem:[%s1267 + $0x7ac] sm:$0xff]
                  %1484 = vst [vmem:[%s1268 + $0x1ac] sm:$0xff] %v1483
                  %v1485 = vld [vmem:[%s1267 + $0x7b0] sm:$0xff]
                  %1486 = vst [vmem:[%s1268 + $0x1b0] sm:$0xff] %v1485
                  %v1487 = vld [vmem:[%s1267 + $0x7b4] sm:$0xff]
                  %1488 = vst [vmem:[%s1268 + $0x1b4] sm:$0xff] %v1487
                  %v1489 = vld [vmem:[%s1267 + $0x7b8] sm:$0xff]
                  %1490 = vst [vmem:[%s1268 + $0x1b8] sm:$0xff] %v1489
                  %v1491 = vld [vmem:[%s1267 + $0x7bc] sm:$0xff]
                  %1492 = vst [vmem:[%s1268 + $0x1bc] sm:$0xff] %v1491
                  %v1493 = vld [vmem:[%s1267 + $0x7c0] sm:$0xff]
                  %1494 = vst [vmem:[%s1268 + $0x1c0] sm:$0xff] %v1493
                  %v1495 = vld [vmem:[%s1267 + $0x7c4] sm:$0xff]
                  %1496 = vst [vmem:[%s1268 + $0x1c4] sm:$0xff] %v1495
                  %v1497 = vld [vmem:[%s1267 + $0x7c8] sm:$0xff]
                  %1498 = vst [vmem:[%s1268 + $0x1c8] sm:$0xff] %v1497
                  %v1499 = vld [vmem:[%s1267 + $0x7cc] sm:$0xff]
                  %1500 = vst [vmem:[%s1268 + $0x1cc] sm:$0xff] %v1499
                  %v1501 = vld [vmem:[%s1267 + $0x7d0] sm:$0xff]
                  %1502 = vst [vmem:[%s1268 + $0x1d0] sm:$0xff] %v1501
                  %v1503 = vld [vmem:[%s1267 + $0x7d4] sm:$0xff]
                  %1504 = vst [vmem:[%s1268 + $0x1d4] sm:$0xff] %v1503
                  %v1505 = vld [vmem:[%s1267 + $0x7d8] sm:$0xff]
                  %1506 = vst [vmem:[%s1268 + $0x1d8] sm:$0xff] %v1505
                  %v1507 = vld [vmem:[%s1267 + $0x7dc] sm:$0xff]
                  %1508 = vst [vmem:[%s1268 + $0x1dc] sm:$0xff] %v1507
                  %v1509 = vld [vmem:[%s1267 + $0x7e0] sm:$0xff]
                  %1510 = vst [vmem:[%s1268 + $0x1e0] sm:$0xff] %v1509
                  %v1511 = vld [vmem:[%s1267 + $0x7e4] sm:$0xff]
                  %1512 = vst [vmem:[%s1268 + $0x1e4] sm:$0xff] %v1511
                  %v1513 = vld [vmem:[%s1267 + $0x7e8] sm:$0xff]
                  %1514 = vst [vmem:[%s1268 + $0x1e8] sm:$0xff] %v1513
                  %v1515 = vld [vmem:[%s1267 + $0x7ec] sm:$0xff]
                  %1516 = vst [vmem:[%s1268 + $0x1ec] sm:$0xff] %v1515
                  %v1517 = vld [vmem:[%s1267 + $0x7f0] sm:$0xff]
                  %1518 = vst [vmem:[%s1268 + $0x1f0] sm:$0xff] %v1517
                  %v1519 = vld [vmem:[%s1267 + $0x7f4] sm:$0xff]
                  %1520 = vst [vmem:[%s1268 + $0x1f4] sm:$0xff] %v1519
                  %v1521 = vld [vmem:[%s1267 + $0x7f8] sm:$0xff]
                  %1522 = vst [vmem:[%s1268 + $0x1f8] sm:$0xff] %v1521
                  %v1523 = vld [vmem:[%s1267 + $0x7fc] sm:$0xff]
                  %1524 = vst [vmem:[%s1268 + $0x1fc] sm:$0xff] %v1523
                  %v1525 = vld [vmem:[%s1267 + $0xe00] sm:$0xff]
                  %1526 = vst [vmem:[%s1268 + $0x200] sm:$0xff] %v1525
                  %v1527 = vld [vmem:[%s1267 + $0xe04] sm:$0xff]
                  %1528 = vst [vmem:[%s1268 + $0x204] sm:$0xff] %v1527
                  %v1529 = vld [vmem:[%s1267 + $0xe08] sm:$0xff]
                  %1530 = vst [vmem:[%s1268 + $0x208] sm:$0xff] %v1529
                  %v1531 = vld [vmem:[%s1267 + $0xe0c] sm:$0xff]
                  %1532 = vst [vmem:[%s1268 + $0x20c] sm:$0xff] %v1531
                  %v1533 = vld [vmem:[%s1267 + $0xe10] sm:$0xff]
                  %1534 = vst [vmem:[%s1268 + $0x210] sm:$0xff] %v1533
                  %v1535 = vld [vmem:[%s1267 + $0xe14] sm:$0xff]
                  %1536 = vst [vmem:[%s1268 + $0x214] sm:$0xff] %v1535
                  %v1537 = vld [vmem:[%s1267 + $0xe18] sm:$0xff]
                  %1538 = vst [vmem:[%s1268 + $0x218] sm:$0xff] %v1537
                  %v1539 = vld [vmem:[%s1267 + $0xe1c] sm:$0xff]
                  %1540 = vst [vmem:[%s1268 + $0x21c] sm:$0xff] %v1539
                  %v1541 = vld [vmem:[%s1267 + $0xe20] sm:$0xff]
                  %1542 = vst [vmem:[%s1268 + $0x220] sm:$0xff] %v1541
                  %v1543 = vld [vmem:[%s1267 + $0xe24] sm:$0xff]
                  %1544 = vst [vmem:[%s1268 + $0x224] sm:$0xff] %v1543
                  %v1545 = vld [vmem:[%s1267 + $0xe28] sm:$0xff]
                  %1546 = vst [vmem:[%s1268 + $0x228] sm:$0xff] %v1545
                  %v1547 = vld [vmem:[%s1267 + $0xe2c] sm:$0xff]
                  %1548 = vst [vmem:[%s1268 + $0x22c] sm:$0xff] %v1547
                  %v1549 = vld [vmem:[%s1267 + $0xe30] sm:$0xff]
                  %1550 = vst [vmem:[%s1268 + $0x230] sm:$0xff] %v1549
                  %v1551 = vld [vmem:[%s1267 + $0xe34] sm:$0xff]
                  %1552 = vst [vmem:[%s1268 + $0x234] sm:$0xff] %v1551
                  %v1553 = vld [vmem:[%s1267 + $0xe38] sm:$0xff]
                  %1554 = vst [vmem:[%s1268 + $0x238] sm:$0xff] %v1553
                  %v1555 = vld [vmem:[%s1267 + $0xe3c] sm:$0xff]
                  %1556 = vst [vmem:[%s1268 + $0x23c] sm:$0xff] %v1555
                  %v1557 = vld [vmem:[%s1267 + $0xe40] sm:$0xff]
                  %1558 = vst [vmem:[%s1268 + $0x240] sm:$0xff] %v1557
                  %v1559 = vld [vmem:[%s1267 + $0xe44] sm:$0xff]
                  %1560 = vst [vmem:[%s1268 + $0x244] sm:$0xff] %v1559
                  %v1561 = vld [vmem:[%s1267 + $0xe48] sm:$0xff]
                  %1562 = vst [vmem:[%s1268 + $0x248] sm:$0xff] %v1561
                  %v1563 = vld [vmem:[%s1267 + $0xe4c] sm:$0xff]
                  %1564 = vst [vmem:[%s1268 + $0x24c] sm:$0xff] %v1563
                  %v1565 = vld [vmem:[%s1267 + $0xe50] sm:$0xff]
                  %1566 = vst [vmem:[%s1268 + $0x250] sm:$0xff] %v1565
                  %v1567 = vld [vmem:[%s1267 + $0xe54] sm:$0xff]
                  %1568 = vst [vmem:[%s1268 + $0x254] sm:$0xff] %v1567
                  %v1569 = vld [vmem:[%s1267 + $0xe58] sm:$0xff]
                  %1570 = vst [vmem:[%s1268 + $0x258] sm:$0xff] %v1569
                  %v1571 = vld [vmem:[%s1267 + $0xe5c] sm:$0xff]
                  %1572 = vst [vmem:[%s1268 + $0x25c] sm:$0xff] %v1571
                  %v1573 = vld [vmem:[%s1267 + $0xe60] sm:$0xff]
                  %1574 = vst [vmem:[%s1268 + $0x260] sm:$0xff] %v1573
                  %v1575 = vld [vmem:[%s1267 + $0xe64] sm:$0xff]
                  %1576 = vst [vmem:[%s1268 + $0x264] sm:$0xff] %v1575
                  %v1577 = vld [vmem:[%s1267 + $0xe68] sm:$0xff]
                  %1578 = vst [vmem:[%s1268 + $0x268] sm:$0xff] %v1577
                  %v1579 = vld [vmem:[%s1267 + $0xe6c] sm:$0xff]
                  %1580 = vst [vmem:[%s1268 + $0x26c] sm:$0xff] %v1579
                  %v1581 = vld [vmem:[%s1267 + $0xe70] sm:$0xff]
                  %1582 = vst [vmem:[%s1268 + $0x270] sm:$0xff] %v1581
                  %v1583 = vld [vmem:[%s1267 + $0xe74] sm:$0xff]
                  %1584 = vst [vmem:[%s1268 + $0x274] sm:$0xff] %v1583
                  %v1585 = vld [vmem:[%s1267 + $0xe78] sm:$0xff]
                  %1586 = vst [vmem:[%s1268 + $0x278] sm:$0xff] %v1585
                  %v1587 = vld [vmem:[%s1267 + $0xe7c] sm:$0xff]
                  %1588 = vst [vmem:[%s1268 + $0x27c] sm:$0xff] %v1587
                  %v1589 = vld [vmem:[%s1267 + $0xe80] sm:$0xff]
                  %1590 = vst [vmem:[%s1268 + $0x280] sm:$0xff] %v1589
                  %v1591 = vld [vmem:[%s1267 + $0xe84] sm:$0xff]
                  %1592 = vst [vmem:[%s1268 + $0x284] sm:$0xff] %v1591
                  %v1593 = vld [vmem:[%s1267 + $0xe88] sm:$0xff]
                  %1594 = vst [vmem:[%s1268 + $0x288] sm:$0xff] %v1593
                  %v1595 = vld [vmem:[%s1267 + $0xe8c] sm:$0xff]
                  %1596 = vst [vmem:[%s1268 + $0x28c] sm:$0xff] %v1595
                  %v1597 = vld [vmem:[%s1267 + $0xe90] sm:$0xff]
                  %1598 = vst [vmem:[%s1268 + $0x290] sm:$0xff] %v1597
                  %v1599 = vld [vmem:[%s1267 + $0xe94] sm:$0xff]
                  %1600 = vst [vmem:[%s1268 + $0x294] sm:$0xff] %v1599
                  %v1601 = vld [vmem:[%s1267 + $0xe98] sm:$0xff]
                  %1602 = vst [vmem:[%s1268 + $0x298] sm:$0xff] %v1601
                  %v1603 = vld [vmem:[%s1267 + $0xe9c] sm:$0xff]
                  %1604 = vst [vmem:[%s1268 + $0x29c] sm:$0xff] %v1603
                  %v1605 = vld [vmem:[%s1267 + $0xea0] sm:$0xff]
                  %1606 = vst [vmem:[%s1268 + $0x2a0] sm:$0xff] %v1605
                  %v1607 = vld [vmem:[%s1267 + $0xea4] sm:$0xff]
                  %1608 = vst [vmem:[%s1268 + $0x2a4] sm:$0xff] %v1607
                  %v1609 = vld [vmem:[%s1267 + $0xea8] sm:$0xff]
                  %1610 = vst [vmem:[%s1268 + $0x2a8] sm:$0xff] %v1609
                  %v1611 = vld [vmem:[%s1267 + $0xeac] sm:$0xff]
                  %1612 = vst [vmem:[%s1268 + $0x2ac] sm:$0xff] %v1611
                  %v1613 = vld [vmem:[%s1267 + $0xeb0] sm:$0xff]
                  %1614 = vst [vmem:[%s1268 + $0x2b0] sm:$0xff] %v1613
                  %v1615 = vld [vmem:[%s1267 + $0xeb4] sm:$0xff]
                  %1616 = vst [vmem:[%s1268 + $0x2b4] sm:$0xff] %v1615
                  %v1617 = vld [vmem:[%s1267 + $0xeb8] sm:$0xff]
                  %1618 = vst [vmem:[%s1268 + $0x2b8] sm:$0xff] %v1617
                  %v1619 = vld [vmem:[%s1267 + $0xebc] sm:$0xff]
                  %1620 = vst [vmem:[%s1268 + $0x2bc] sm:$0xff] %v1619
                  %v1621 = vld [vmem:[%s1267 + $0xec0] sm:$0xff]
                  %1622 = vst [vmem:[%s1268 + $0x2c0] sm:$0xff] %v1621
                  %v1623 = vld [vmem:[%s1267 + $0xec4] sm:$0xff]
                  %1624 = vst [vmem:[%s1268 + $0x2c4] sm:$0xff] %v1623
                  %v1625 = vld [vmem:[%s1267 + $0xec8] sm:$0xff]
                  %1626 = vst [vmem:[%s1268 + $0x2c8] sm:$0xff] %v1625
                  %v1627 = vld [vmem:[%s1267 + $0xecc] sm:$0xff]
                  %1628 = vst [vmem:[%s1268 + $0x2cc] sm:$0xff] %v1627
                  %v1629 = vld [vmem:[%s1267 + $0xed0] sm:$0xff]
                  %1630 = vst [vmem:[%s1268 + $0x2d0] sm:$0xff] %v1629
                  %v1631 = vld [vmem:[%s1267 + $0xed4] sm:$0xff]
                  %1632 = vst [vmem:[%s1268 + $0x2d4] sm:$0xff] %v1631
                  %v1633 = vld [vmem:[%s1267 + $0xed8] sm:$0xff]
                  %1634 = vst [vmem:[%s1268 + $0x2d8] sm:$0xff] %v1633
                  %v1635 = vld [vmem:[%s1267 + $0xedc] sm:$0xff]
                  %1636 = vst [vmem:[%s1268 + $0x2dc] sm:$0xff] %v1635
                  %v1637 = vld [vmem:[%s1267 + $0xee0] sm:$0xff]
                  %1638 = vst [vmem:[%s1268 + $0x2e0] sm:$0xff] %v1637
                  %v1639 = vld [vmem:[%s1267 + $0xee4] sm:$0xff]
                  %1640 = vst [vmem:[%s1268 + $0x2e4] sm:$0xff] %v1639
                  %v1641 = vld [vmem:[%s1267 + $0xee8] sm:$0xff]
                  %1642 = vst [vmem:[%s1268 + $0x2e8] sm:$0xff] %v1641
                  %v1643 = vld [vmem:[%s1267 + $0xeec] sm:$0xff]
                  %1644 = vst [vmem:[%s1268 + $0x2ec] sm:$0xff] %v1643
                  %v1645 = vld [vmem:[%s1267 + $0xef0] sm:$0xff]
                  %1646 = vst [vmem:[%s1268 + $0x2f0] sm:$0xff] %v1645
                  %v1647 = vld [vmem:[%s1267 + $0xef4] sm:$0xff]
                  %1648 = vst [vmem:[%s1268 + $0x2f4] sm:$0xff] %v1647
                  %v1649 = vld [vmem:[%s1267 + $0xef8] sm:$0xff]
                  %1650 = vst [vmem:[%s1268 + $0x2f8] sm:$0xff] %v1649
                  %v1651 = vld [vmem:[%s1267 + $0xefc] sm:$0xff]
                  %1652 = vst [vmem:[%s1268 + $0x2fc] sm:$0xff] %v1651
                  %v1653 = vld [vmem:[%s1267 + $0x1500] sm:$0xff]
                  %1654 = vst [vmem:[%s1268 + $0x300] sm:$0xff] %v1653
                  %v1655 = vld [vmem:[%s1267 + $0x1504] sm:$0xff]
                  %1656 = vst [vmem:[%s1268 + $0x304] sm:$0xff] %v1655
                  %v1657 = vld [vmem:[%s1267 + $0x1508] sm:$0xff]
                  %1658 = vst [vmem:[%s1268 + $0x308] sm:$0xff] %v1657
                  %v1659 = vld [vmem:[%s1267 + $0x150c] sm:$0xff]
                  %1660 = vst [vmem:[%s1268 + $0x30c] sm:$0xff] %v1659
                  %v1661 = vld [vmem:[%s1267 + $0x1510] sm:$0xff]
                  %1662 = vst [vmem:[%s1268 + $0x310] sm:$0xff] %v1661
                  %v1663 = vld [vmem:[%s1267 + $0x1514] sm:$0xff]
                  %1664 = vst [vmem:[%s1268 + $0x314] sm:$0xff] %v1663
                  %v1665 = vld [vmem:[%s1267 + $0x1518] sm:$0xff]
                  %1666 = vst [vmem:[%s1268 + $0x318] sm:$0xff] %v1665
                  %v1667 = vld [vmem:[%s1267 + $0x151c] sm:$0xff]
                  %1668 = vst [vmem:[%s1268 + $0x31c] sm:$0xff] %v1667
                  %v1669 = vld [vmem:[%s1267 + $0x1520] sm:$0xff]
                  %1670 = vst [vmem:[%s1268 + $0x320] sm:$0xff] %v1669
                  %v1671 = vld [vmem:[%s1267 + $0x1524] sm:$0xff]
                  %1672 = vst [vmem:[%s1268 + $0x324] sm:$0xff] %v1671
                  %v1673 = vld [vmem:[%s1267 + $0x1528] sm:$0xff]
                  %1674 = vst [vmem:[%s1268 + $0x328] sm:$0xff] %v1673
                  %v1675 = vld [vmem:[%s1267 + $0x152c] sm:$0xff]
                  %1676 = vst [vmem:[%s1268 + $0x32c] sm:$0xff] %v1675
                  %v1677 = vld [vmem:[%s1267 + $0x1530] sm:$0xff]
                  %1678 = vst [vmem:[%s1268 + $0x330] sm:$0xff] %v1677
                  %v1679 = vld [vmem:[%s1267 + $0x1534] sm:$0xff]
                  %1680 = vst [vmem:[%s1268 + $0x334] sm:$0xff] %v1679
                  %v1681 = vld [vmem:[%s1267 + $0x1538] sm:$0xff]
                  %1682 = vst [vmem:[%s1268 + $0x338] sm:$0xff] %v1681
                  %v1683 = vld [vmem:[%s1267 + $0x153c] sm:$0xff]
                  %1684 = vst [vmem:[%s1268 + $0x33c] sm:$0xff] %v1683
                  %v1685 = vld [vmem:[%s1267 + $0x1540] sm:$0xff]
                  %1686 = vst [vmem:[%s1268 + $0x340] sm:$0xff] %v1685
                  %v1687 = vld [vmem:[%s1267 + $0x1544] sm:$0xff]
                  %1688 = vst [vmem:[%s1268 + $0x344] sm:$0xff] %v1687
                  %v1689 = vld [vmem:[%s1267 + $0x1548] sm:$0xff]
                  %1690 = vst [vmem:[%s1268 + $0x348] sm:$0xff] %v1689
                  %v1691 = vld [vmem:[%s1267 + $0x154c] sm:$0xff]
                  %1692 = vst [vmem:[%s1268 + $0x34c] sm:$0xff] %v1691
                  %v1693 = vld [vmem:[%s1267 + $0x1550] sm:$0xff]
                  %1694 = vst [vmem:[%s1268 + $0x350] sm:$0xff] %v1693
                  %v1695 = vld [vmem:[%s1267 + $0x1554] sm:$0xff]
                  %1696 = vst [vmem:[%s1268 + $0x354] sm:$0xff] %v1695
                  %v1697 = vld [vmem:[%s1267 + $0x1558] sm:$0xff]
                  %1698 = vst [vmem:[%s1268 + $0x358] sm:$0xff] %v1697
                  %v1699 = vld [vmem:[%s1267 + $0x155c] sm:$0xff]
                  %1700 = vst [vmem:[%s1268 + $0x35c] sm:$0xff] %v1699
                  %v1701 = vld [vmem:[%s1267 + $0x1560] sm:$0xff]
                  %1702 = vst [vmem:[%s1268 + $0x360] sm:$0xff] %v1701
                  %v1703 = vld [vmem:[%s1267 + $0x1564] sm:$0xff]
                  %1704 = vst [vmem:[%s1268 + $0x364] sm:$0xff] %v1703
                  %v1705 = vld [vmem:[%s1267 + $0x1568] sm:$0xff]
                  %1706 = vst [vmem:[%s1268 + $0x368] sm:$0xff] %v1705
                  %v1707 = vld [vmem:[%s1267 + $0x156c] sm:$0xff]
                  %1708 = vst [vmem:[%s1268 + $0x36c] sm:$0xff] %v1707
                  %v1709 = vld [vmem:[%s1267 + $0x1570] sm:$0xff]
                  %1710 = vst [vmem:[%s1268 + $0x370] sm:$0xff] %v1709
                  %v1711 = vld [vmem:[%s1267 + $0x1574] sm:$0xff]
                  %1712 = vst [vmem:[%s1268 + $0x374] sm:$0xff] %v1711
                  %v1713 = vld [vmem:[%s1267 + $0x1578] sm:$0xff]
                  %1714 = vst [vmem:[%s1268 + $0x378] sm:$0xff] %v1713
                  %v1715 = vld [vmem:[%s1267 + $0x157c] sm:$0xff]
                  %1716 = vst [vmem:[%s1268 + $0x37c] sm:$0xff] %v1715
                  %v1717 = vld [vmem:[%s1267 + $0x1580] sm:$0xff]
                  %1718 = vst [vmem:[%s1268 + $0x380] sm:$0xff] %v1717
                  %v1719 = vld [vmem:[%s1267 + $0x1584] sm:$0xff]
                  %1720 = vst [vmem:[%s1268 + $0x384] sm:$0xff] %v1719
                  %v1721 = vld [vmem:[%s1267 + $0x1588] sm:$0xff]
                  %1722 = vst [vmem:[%s1268 + $0x388] sm:$0xff] %v1721
                  %v1723 = vld [vmem:[%s1267 + $0x158c] sm:$0xff]
                  %1724 = vst [vmem:[%s1268 + $0x38c] sm:$0xff] %v1723
                  %v1725 = vld [vmem:[%s1267 + $0x1590] sm:$0xff]
                  %1726 = vst [vmem:[%s1268 + $0x390] sm:$0xff] %v1725
                  %v1727 = vld [vmem:[%s1267 + $0x1594] sm:$0xff]
                  %1728 = vst [vmem:[%s1268 + $0x394] sm:$0xff] %v1727
                  %v1729 = vld [vmem:[%s1267 + $0x1598] sm:$0xff]
                  %1730 = vst [vmem:[%s1268 + $0x398] sm:$0xff] %v1729
                  %v1731 = vld [vmem:[%s1267 + $0x159c] sm:$0xff]
                  %1732 = vst [vmem:[%s1268 + $0x39c] sm:$0xff] %v1731
                  %v1733 = vld [vmem:[%s1267 + $0x15a0] sm:$0xff]
                  %1734 = vst [vmem:[%s1268 + $0x3a0] sm:$0xff] %v1733
                  %v1735 = vld [vmem:[%s1267 + $0x15a4] sm:$0xff]
                  %1736 = vst [vmem:[%s1268 + $0x3a4] sm:$0xff] %v1735
                  %v1737 = vld [vmem:[%s1267 + $0x15a8] sm:$0xff]
                  %1738 = vst [vmem:[%s1268 + $0x3a8] sm:$0xff] %v1737
                  %v1739 = vld [vmem:[%s1267 + $0x15ac] sm:$0xff]
                  %1740 = vst [vmem:[%s1268 + $0x3ac] sm:$0xff] %v1739
                  %v1741 = vld [vmem:[%s1267 + $0x15b0] sm:$0xff]
                  %1742 = vst [vmem:[%s1268 + $0x3b0] sm:$0xff] %v1741
                  %v1743 = vld [vmem:[%s1267 + $0x15b4] sm:$0xff]
                  %1744 = vst [vmem:[%s1268 + $0x3b4] sm:$0xff] %v1743
                  %v1745 = vld [vmem:[%s1267 + $0x15b8] sm:$0xff]
                  %1746 = vst [vmem:[%s1268 + $0x3b8] sm:$0xff] %v1745
                  %v1747 = vld [vmem:[%s1267 + $0x15bc] sm:$0xff]
                  %1748 = vst [vmem:[%s1268 + $0x3bc] sm:$0xff] %v1747
                  %v1749 = vld [vmem:[%s1267 + $0x15c0] sm:$0xff]
                  %1750 = vst [vmem:[%s1268 + $0x3c0] sm:$0xff] %v1749
                  %v1751 = vld [vmem:[%s1267 + $0x15c4] sm:$0xff]
                  %1752 = vst [vmem:[%s1268 + $0x3c4] sm:$0xff] %v1751
                  %v1753 = vld [vmem:[%s1267 + $0x15c8] sm:$0xff]
                  %1754 = vst [vmem:[%s1268 + $0x3c8] sm:$0xff] %v1753
                  %v1755 = vld [vmem:[%s1267 + $0x15cc] sm:$0xff]
                  %1756 = vst [vmem:[%s1268 + $0x3cc] sm:$0xff] %v1755
                  %v1757 = vld [vmem:[%s1267 + $0x15d0] sm:$0xff]
                  %1758 = vst [vmem:[%s1268 + $0x3d0] sm:$0xff] %v1757
                  %v1759 = vld [vmem:[%s1267 + $0x15d4] sm:$0xff]
                  %1760 = vst [vmem:[%s1268 + $0x3d4] sm:$0xff] %v1759
                  %v1761 = vld [vmem:[%s1267 + $0x15d8] sm:$0xff]
                  %1762 = vst [vmem:[%s1268 + $0x3d8] sm:$0xff] %v1761
                  %v1763 = vld [vmem:[%s1267 + $0x15dc] sm:$0xff]
                  %1764 = vst [vmem:[%s1268 + $0x3dc] sm:$0xff] %v1763
                  %v1765 = vld [vmem:[%s1267 + $0x15e0] sm:$0xff]
                  %1766 = vst [vmem:[%s1268 + $0x3e0] sm:$0xff] %v1765
                  %v1767 = vld [vmem:[%s1267 + $0x15e4] sm:$0xff]
                  %1768 = vst [vmem:[%s1268 + $0x3e4] sm:$0xff] %v1767
                  %v1769 = vld [vmem:[%s1267 + $0x15e8] sm:$0xff]
                  %1770 = vst [vmem:[%s1268 + $0x3e8] sm:$0xff] %v1769
                  %v1771 = vld [vmem:[%s1267 + $0x15ec] sm:$0xff]
                  %1772 = vst [vmem:[%s1268 + $0x3ec] sm:$0xff] %v1771
                  %v1773 = vld [vmem:[%s1267 + $0x15f0] sm:$0xff]
                  %1774 = vst [vmem:[%s1268 + $0x3f0] sm:$0xff] %v1773
                  %v1775 = vld [vmem:[%s1267 + $0x15f4] sm:$0xff]
                  %1776 = vst [vmem:[%s1268 + $0x3f4] sm:$0xff] %v1775
                  %v1777 = vld [vmem:[%s1267 + $0x15f8] sm:$0xff]
                  %1778 = vst [vmem:[%s1268 + $0x3f8] sm:$0xff] %v1777
                  %v1779 = vld [vmem:[%s1267 + $0x15fc] sm:$0xff]
                  %1780 = vst [vmem:[%s1268 + $0x3fc] sm:$0xff] %v1779
                  %v1781 = vld [vmem:[%s1267 + $0x1c00] sm:$0xff]
                  %1782 = vst [vmem:[%s1268 + $0x400] sm:$0xff] %v1781
                  %v1783 = vld [vmem:[%s1267 + $0x1c04] sm:$0xff]
                  %1784 = vst [vmem:[%s1268 + $0x404] sm:$0xff] %v1783
                  %v1785 = vld [vmem:[%s1267 + $0x1c08] sm:$0xff]
                  %1786 = vst [vmem:[%s1268 + $0x408] sm:$0xff] %v1785
                  %v1787 = vld [vmem:[%s1267 + $0x1c0c] sm:$0xff]
                  %1788 = vst [vmem:[%s1268 + $0x40c] sm:$0xff] %v1787
                  %v1789 = vld [vmem:[%s1267 + $0x1c10] sm:$0xff]
                  %1790 = vst [vmem:[%s1268 + $0x410] sm:$0xff] %v1789
                  %v1791 = vld [vmem:[%s1267 + $0x1c14] sm:$0xff]
                  %1792 = vst [vmem:[%s1268 + $0x414] sm:$0xff] %v1791
                  %v1793 = vld [vmem:[%s1267 + $0x1c18] sm:$0xff]
                  %1794 = vst [vmem:[%s1268 + $0x418] sm:$0xff] %v1793
                  %v1795 = vld [vmem:[%s1267 + $0x1c1c] sm:$0xff]
                  %1796 = vst [vmem:[%s1268 + $0x41c] sm:$0xff] %v1795
                  %v1797 = vld [vmem:[%s1267 + $0x1c20] sm:$0xff]
                  %1798 = vst [vmem:[%s1268 + $0x420] sm:$0xff] %v1797
                  %v1799 = vld [vmem:[%s1267 + $0x1c24] sm:$0xff]
                  %1800 = vst [vmem:[%s1268 + $0x424] sm:$0xff] %v1799
                  %v1801 = vld [vmem:[%s1267 + $0x1c28] sm:$0xff]
                  %1802 = vst [vmem:[%s1268 + $0x428] sm:$0xff] %v1801
                  %v1803 = vld [vmem:[%s1267 + $0x1c2c] sm:$0xff]
                  %1804 = vst [vmem:[%s1268 + $0x42c] sm:$0xff] %v1803
                  %v1805 = vld [vmem:[%s1267 + $0x1c30] sm:$0xff]
                  %1806 = vst [vmem:[%s1268 + $0x430] sm:$0xff] %v1805
                  %v1807 = vld [vmem:[%s1267 + $0x1c34] sm:$0xff]
                  %1808 = vst [vmem:[%s1268 + $0x434] sm:$0xff] %v1807
                  %v1809 = vld [vmem:[%s1267 + $0x1c38] sm:$0xff]
                  %1810 = vst [vmem:[%s1268 + $0x438] sm:$0xff] %v1809
                  %v1811 = vld [vmem:[%s1267 + $0x1c3c] sm:$0xff]
                  %1812 = vst [vmem:[%s1268 + $0x43c] sm:$0xff] %v1811
                  %v1813 = vld [vmem:[%s1267 + $0x1c40] sm:$0xff]
                  %1814 = vst [vmem:[%s1268 + $0x440] sm:$0xff] %v1813
                  %v1815 = vld [vmem:[%s1267 + $0x1c44] sm:$0xff]
                  %1816 = vst [vmem:[%s1268 + $0x444] sm:$0xff] %v1815
                  %v1817 = vld [vmem:[%s1267 + $0x1c48] sm:$0xff]
                  %1818 = vst [vmem:[%s1268 + $0x448] sm:$0xff] %v1817
                  %v1819 = vld [vmem:[%s1267 + $0x1c4c] sm:$0xff]
                  %1820 = vst [vmem:[%s1268 + $0x44c] sm:$0xff] %v1819
                  %v1821 = vld [vmem:[%s1267 + $0x1c50] sm:$0xff]
                  %1822 = vst [vmem:[%s1268 + $0x450] sm:$0xff] %v1821
                  %v1823 = vld [vmem:[%s1267 + $0x1c54] sm:$0xff]
                  %1824 = vst [vmem:[%s1268 + $0x454] sm:$0xff] %v1823
                  %v1825 = vld [vmem:[%s1267 + $0x1c58] sm:$0xff]
                  %1826 = vst [vmem:[%s1268 + $0x458] sm:$0xff] %v1825
                  %v1827 = vld [vmem:[%s1267 + $0x1c5c] sm:$0xff]
                  %1828 = vst [vmem:[%s1268 + $0x45c] sm:$0xff] %v1827
                  %v1829 = vld [vmem:[%s1267 + $0x1c60] sm:$0xff]
                  %1830 = vst [vmem:[%s1268 + $0x460] sm:$0xff] %v1829
                  %v1831 = vld [vmem:[%s1267 + $0x1c64] sm:$0xff]
                  %1832 = vst [vmem:[%s1268 + $0x464] sm:$0xff] %v1831
                  %v1833 = vld [vmem:[%s1267 + $0x1c68] sm:$0xff]
                  %1834 = vst [vmem:[%s1268 + $0x468] sm:$0xff] %v1833
                  %v1835 = vld [vmem:[%s1267 + $0x1c6c] sm:$0xff]
                  %1836 = vst [vmem:[%s1268 + $0x46c] sm:$0xff] %v1835
                  %v1837 = vld [vmem:[%s1267 + $0x1c70] sm:$0xff]
                  %1838 = vst [vmem:[%s1268 + $0x470] sm:$0xff] %v1837
                  %v1839 = vld [vmem:[%s1267 + $0x1c74] sm:$0xff]
                  %1840 = vst [vmem:[%s1268 + $0x474] sm:$0xff] %v1839
                  %v1841 = vld [vmem:[%s1267 + $0x1c78] sm:$0xff]
                  %1842 = vst [vmem:[%s1268 + $0x478] sm:$0xff] %v1841
                  %v1843 = vld [vmem:[%s1267 + $0x1c7c] sm:$0xff]
                  %1844 = vst [vmem:[%s1268 + $0x47c] sm:$0xff] %v1843
                  %v1845 = vld [vmem:[%s1267 + $0x1c80] sm:$0xff]
                  %1846 = vst [vmem:[%s1268 + $0x480] sm:$0xff] %v1845
                  %v1847 = vld [vmem:[%s1267 + $0x1c84] sm:$0xff]
                  %1848 = vst [vmem:[%s1268 + $0x484] sm:$0xff] %v1847
                  %v1849 = vld [vmem:[%s1267 + $0x1c88] sm:$0xff]
                  %1850 = vst [vmem:[%s1268 + $0x488] sm:$0xff] %v1849
                  %v1851 = vld [vmem:[%s1267 + $0x1c8c] sm:$0xff]
                  %1852 = vst [vmem:[%s1268 + $0x48c] sm:$0xff] %v1851
                  %v1853 = vld [vmem:[%s1267 + $0x1c90] sm:$0xff]
                  %1854 = vst [vmem:[%s1268 + $0x490] sm:$0xff] %v1853
                  %v1855 = vld [vmem:[%s1267 + $0x1c94] sm:$0xff]
                  %1856 = vst [vmem:[%s1268 + $0x494] sm:$0xff] %v1855
                  %v1857 = vld [vmem:[%s1267 + $0x1c98] sm:$0xff]
                  %1858 = vst [vmem:[%s1268 + $0x498] sm:$0xff] %v1857
                  %v1859 = vld [vmem:[%s1267 + $0x1c9c] sm:$0xff]
                  %1860 = vst [vmem:[%s1268 + $0x49c] sm:$0xff] %v1859
                  %v1861 = vld [vmem:[%s1267 + $0x1ca0] sm:$0xff]
                  %1862 = vst [vmem:[%s1268 + $0x4a0] sm:$0xff] %v1861
                  %v1863 = vld [vmem:[%s1267 + $0x1ca4] sm:$0xff]
                  %1864 = vst [vmem:[%s1268 + $0x4a4] sm:$0xff] %v1863
                  %v1865 = vld [vmem:[%s1267 + $0x1ca8] sm:$0xff]
                  %1866 = vst [vmem:[%s1268 + $0x4a8] sm:$0xff] %v1865
                  %v1867 = vld [vmem:[%s1267 + $0x1cac] sm:$0xff]
                  %1868 = vst [vmem:[%s1268 + $0x4ac] sm:$0xff] %v1867
                  %v1869 = vld [vmem:[%s1267 + $0x1cb0] sm:$0xff]
                  %1870 = vst [vmem:[%s1268 + $0x4b0] sm:$0xff] %v1869
                  %v1871 = vld [vmem:[%s1267 + $0x1cb4] sm:$0xff]
                  %1872 = vst [vmem:[%s1268 + $0x4b4] sm:$0xff] %v1871
                  %v1873 = vld [vmem:[%s1267 + $0x1cb8] sm:$0xff]
                  %1874 = vst [vmem:[%s1268 + $0x4b8] sm:$0xff] %v1873
                  %v1875 = vld [vmem:[%s1267 + $0x1cbc] sm:$0xff]
                  %1876 = vst [vmem:[%s1268 + $0x4bc] sm:$0xff] %v1875
                  %v1877 = vld [vmem:[%s1267 + $0x1cc0] sm:$0xff]
                  %1878 = vst [vmem:[%s1268 + $0x4c0] sm:$0xff] %v1877
                  %v1879 = vld [vmem:[%s1267 + $0x1cc4] sm:$0xff]
                  %1880 = vst [vmem:[%s1268 + $0x4c4] sm:$0xff] %v1879
                  %v1881 = vld [vmem:[%s1267 + $0x1cc8] sm:$0xff]
                  %1882 = vst [vmem:[%s1268 + $0x4c8] sm:$0xff] %v1881
                  %v1883 = vld [vmem:[%s1267 + $0x1ccc] sm:$0xff]
                  %1884 = vst [vmem:[%s1268 + $0x4cc] sm:$0xff] %v1883
                  %v1885 = vld [vmem:[%s1267 + $0x1cd0] sm:$0xff]
                  %1886 = vst [vmem:[%s1268 + $0x4d0] sm:$0xff] %v1885
                  %v1887 = vld [vmem:[%s1267 + $0x1cd4] sm:$0xff]
                  %1888 = vst [vmem:[%s1268 + $0x4d4] sm:$0xff] %v1887
                  %v1889 = vld [vmem:[%s1267 + $0x1cd8] sm:$0xff]
                  %1890 = vst [vmem:[%s1268 + $0x4d8] sm:$0xff] %v1889
                  %v1891 = vld [vmem:[%s1267 + $0x1cdc] sm:$0xff]
                  %1892 = vst [vmem:[%s1268 + $0x4dc] sm:$0xff] %v1891
                  %v1893 = vld [vmem:[%s1267 + $0x1ce0] sm:$0xff]
                  %1894 = vst [vmem:[%s1268 + $0x4e0] sm:$0xff] %v1893
                  %v1895 = vld [vmem:[%s1267 + $0x1ce4] sm:$0xff]
                  %1896 = vst [vmem:[%s1268 + $0x4e4] sm:$0xff] %v1895
                  %v1897 = vld [vmem:[%s1267 + $0x1ce8] sm:$0xff]
                  %1898 = vst [vmem:[%s1268 + $0x4e8] sm:$0xff] %v1897
                  %v1899 = vld [vmem:[%s1267 + $0x1cec] sm:$0xff]
                  %1900 = vst [vmem:[%s1268 + $0x4ec] sm:$0xff] %v1899
                  %v1901 = vld [vmem:[%s1267 + $0x1cf0] sm:$0xff]
                  %1902 = vst [vmem:[%s1268 + $0x4f0] sm:$0xff] %v1901
                  %v1903 = vld [vmem:[%s1267 + $0x1cf4] sm:$0xff]
                  %1904 = vst [vmem:[%s1268 + $0x4f4] sm:$0xff] %v1903
                  %v1905 = vld [vmem:[%s1267 + $0x1cf8] sm:$0xff]
                  %1906 = vst [vmem:[%s1268 + $0x4f8] sm:$0xff] %v1905
                  %v1907 = vld [vmem:[%s1267 + $0x1cfc] sm:$0xff]
                  %1908 = vst [vmem:[%s1268 + $0x4fc] sm:$0xff] %v1907
                  %v1909 = vld [vmem:[%s1267 + $0x2300] sm:$0xff]
                  %1910 = vst [vmem:[%s1268 + $0x500] sm:$0xff] %v1909
                  %v1911 = vld [vmem:[%s1267 + $0x2304] sm:$0xff]
                  %1912 = vst [vmem:[%s1268 + $0x504] sm:$0xff] %v1911
                  %v1913 = vld [vmem:[%s1267 + $0x2308] sm:$0xff]
                  %1914 = vst [vmem:[%s1268 + $0x508] sm:$0xff] %v1913
                  %v1915 = vld [vmem:[%s1267 + $0x230c] sm:$0xff]
                  %1916 = vst [vmem:[%s1268 + $0x50c] sm:$0xff] %v1915
                  %v1917 = vld [vmem:[%s1267 + $0x2310] sm:$0xff]
                  %1918 = vst [vmem:[%s1268 + $0x510] sm:$0xff] %v1917
                  %v1919 = vld [vmem:[%s1267 + $0x2314] sm:$0xff]
                  %1920 = vst [vmem:[%s1268 + $0x514] sm:$0xff] %v1919
                  %v1921 = vld [vmem:[%s1267 + $0x2318] sm:$0xff]
                  %1922 = vst [vmem:[%s1268 + $0x518] sm:$0xff] %v1921
                  %v1923 = vld [vmem:[%s1267 + $0x231c] sm:$0xff]
                  %1924 = vst [vmem:[%s1268 + $0x51c] sm:$0xff] %v1923
                  %v1925 = vld [vmem:[%s1267 + $0x2320] sm:$0xff]
                  %1926 = vst [vmem:[%s1268 + $0x520] sm:$0xff] %v1925
                  %v1927 = vld [vmem:[%s1267 + $0x2324] sm:$0xff]
                  %1928 = vst [vmem:[%s1268 + $0x524] sm:$0xff] %v1927
                  %v1929 = vld [vmem:[%s1267 + $0x2328] sm:$0xff]
                  %1930 = vst [vmem:[%s1268 + $0x528] sm:$0xff] %v1929
                  %v1931 = vld [vmem:[%s1267 + $0x232c] sm:$0xff]
                  %1932 = vst [vmem:[%s1268 + $0x52c] sm:$0xff] %v1931
                  %v1933 = vld [vmem:[%s1267 + $0x2330] sm:$0xff]
                  %1934 = vst [vmem:[%s1268 + $0x530] sm:$0xff] %v1933
                  %v1935 = vld [vmem:[%s1267 + $0x2334] sm:$0xff]
                  %1936 = vst [vmem:[%s1268 + $0x534] sm:$0xff] %v1935
                  %v1937 = vld [vmem:[%s1267 + $0x2338] sm:$0xff]
                  %1938 = vst [vmem:[%s1268 + $0x538] sm:$0xff] %v1937
                  %v1939 = vld [vmem:[%s1267 + $0x233c] sm:$0xff]
                  %1940 = vst [vmem:[%s1268 + $0x53c] sm:$0xff] %v1939
                  %v1941 = vld [vmem:[%s1267 + $0x2340] sm:$0xff]
                  %1942 = vst [vmem:[%s1268 + $0x540] sm:$0xff] %v1941
                  %v1943 = vld [vmem:[%s1267 + $0x2344] sm:$0xff]
                  %1944 = vst [vmem:[%s1268 + $0x544] sm:$0xff] %v1943
                  %v1945 = vld [vmem:[%s1267 + $0x2348] sm:$0xff]
                  %1946 = vst [vmem:[%s1268 + $0x548] sm:$0xff] %v1945
                  %v1947 = vld [vmem:[%s1267 + $0x234c] sm:$0xff]
                  %1948 = vst [vmem:[%s1268 + $0x54c] sm:$0xff] %v1947
                  %v1949 = vld [vmem:[%s1267 + $0x2350] sm:$0xff]
                  %1950 = vst [vmem:[%s1268 + $0x550] sm:$0xff] %v1949
                  %v1951 = vld [vmem:[%s1267 + $0x2354] sm:$0xff]
                  %1952 = vst [vmem:[%s1268 + $0x554] sm:$0xff] %v1951
                  %v1953 = vld [vmem:[%s1267 + $0x2358] sm:$0xff]
                  %1954 = vst [vmem:[%s1268 + $0x558] sm:$0xff] %v1953
                  %v1955 = vld [vmem:[%s1267 + $0x235c] sm:$0xff]
                  %1956 = vst [vmem:[%s1268 + $0x55c] sm:$0xff] %v1955
                  %v1957 = vld [vmem:[%s1267 + $0x2360] sm:$0xff]
                  %1958 = vst [vmem:[%s1268 + $0x560] sm:$0xff] %v1957
                  %v1959 = vld [vmem:[%s1267 + $0x2364] sm:$0xff]
                  %1960 = vst [vmem:[%s1268 + $0x564] sm:$0xff] %v1959
                  %v1961 = vld [vmem:[%s1267 + $0x2368] sm:$0xff]
                  %1962 = vst [vmem:[%s1268 + $0x568] sm:$0xff] %v1961
                  %v1963 = vld [vmem:[%s1267 + $0x236c] sm:$0xff]
                  %1964 = vst [vmem:[%s1268 + $0x56c] sm:$0xff] %v1963
                  %v1965 = vld [vmem:[%s1267 + $0x2370] sm:$0xff]
                  %1966 = vst [vmem:[%s1268 + $0x570] sm:$0xff] %v1965
                  %v1967 = vld [vmem:[%s1267 + $0x2374] sm:$0xff]
                  %1968 = vst [vmem:[%s1268 + $0x574] sm:$0xff] %v1967
                  %v1969 = vld [vmem:[%s1267 + $0x2378] sm:$0xff]
                  %1970 = vst [vmem:[%s1268 + $0x578] sm:$0xff] %v1969
                  %v1971 = vld [vmem:[%s1267 + $0x237c] sm:$0xff]
                  %1972 = vst [vmem:[%s1268 + $0x57c] sm:$0xff] %v1971
                  %v1973 = vld [vmem:[%s1267 + $0x2380] sm:$0xff]
                  %1974 = vst [vmem:[%s1268 + $0x580] sm:$0xff] %v1973
                  %v1975 = vld [vmem:[%s1267 + $0x2384] sm:$0xff]
                  %1976 = vst [vmem:[%s1268 + $0x584] sm:$0xff] %v1975
                  %v1977 = vld [vmem:[%s1267 + $0x2388] sm:$0xff]
                  %1978 = vst [vmem:[%s1268 + $0x588] sm:$0xff] %v1977
                  %v1979 = vld [vmem:[%s1267 + $0x238c] sm:$0xff]
                  %1980 = vst [vmem:[%s1268 + $0x58c] sm:$0xff] %v1979
                  %v1981 = vld [vmem:[%s1267 + $0x2390] sm:$0xff]
                  %1982 = vst [vmem:[%s1268 + $0x590] sm:$0xff] %v1981
                  %v1983 = vld [vmem:[%s1267 + $0x2394] sm:$0xff]
                  %1984 = vst [vmem:[%s1268 + $0x594] sm:$0xff] %v1983
                  %v1985 = vld [vmem:[%s1267 + $0x2398] sm:$0xff]
                  %1986 = vst [vmem:[%s1268 + $0x598] sm:$0xff] %v1985
                  %v1987 = vld [vmem:[%s1267 + $0x239c] sm:$0xff]
                  %1988 = vst [vmem:[%s1268 + $0x59c] sm:$0xff] %v1987
                  %v1989 = vld [vmem:[%s1267 + $0x23a0] sm:$0xff]
                  %1990 = vst [vmem:[%s1268 + $0x5a0] sm:$0xff] %v1989
                  %v1991 = vld [vmem:[%s1267 + $0x23a4] sm:$0xff]
                  %1992 = vst [vmem:[%s1268 + $0x5a4] sm:$0xff] %v1991
                  %v1993 = vld [vmem:[%s1267 + $0x23a8] sm:$0xff]
                  %1994 = vst [vmem:[%s1268 + $0x5a8] sm:$0xff] %v1993
                  %v1995 = vld [vmem:[%s1267 + $0x23ac] sm:$0xff]
                  %1996 = vst [vmem:[%s1268 + $0x5ac] sm:$0xff] %v1995
                  %v1997 = vld [vmem:[%s1267 + $0x23b0] sm:$0xff]
                  %1998 = vst [vmem:[%s1268 + $0x5b0] sm:$0xff] %v1997
                  %v1999 = vld [vmem:[%s1267 + $0x23b4] sm:$0xff]
                  %2000 = vst [vmem:[%s1268 + $0x5b4] sm:$0xff] %v1999
                  %v2001 = vld [vmem:[%s1267 + $0x23b8] sm:$0xff]
                  %2002 = vst [vmem:[%s1268 + $0x5b8] sm:$0xff] %v2001
                  %v2003 = vld [vmem:[%s1267 + $0x23bc] sm:$0xff]
                  %2004 = vst [vmem:[%s1268 + $0x5bc] sm:$0xff] %v2003
                  %v2005 = vld [vmem:[%s1267 + $0x23c0] sm:$0xff]
                  %2006 = vst [vmem:[%s1268 + $0x5c0] sm:$0xff] %v2005
                  %v2007 = vld [vmem:[%s1267 + $0x23c4] sm:$0xff]
                  %2008 = vst [vmem:[%s1268 + $0x5c4] sm:$0xff] %v2007
                  %v2009 = vld [vmem:[%s1267 + $0x23c8] sm:$0xff]
                  %2010 = vst [vmem:[%s1268 + $0x5c8] sm:$0xff] %v2009
                  %v2011 = vld [vmem:[%s1267 + $0x23cc] sm:$0xff]
                  %2012 = vst [vmem:[%s1268 + $0x5cc] sm:$0xff] %v2011
                  %v2013 = vld [vmem:[%s1267 + $0x23d0] sm:$0xff]
                  %2014 = vst [vmem:[%s1268 + $0x5d0] sm:$0xff] %v2013
                  %v2015 = vld [vmem:[%s1267 + $0x23d4] sm:$0xff]
                  %2016 = vst [vmem:[%s1268 + $0x5d4] sm:$0xff] %v2015
                  %v2017 = vld [vmem:[%s1267 + $0x23d8] sm:$0xff]
                  %2018 = vst [vmem:[%s1268 + $0x5d8] sm:$0xff] %v2017
                  %v2019 = vld [vmem:[%s1267 + $0x23dc] sm:$0xff]
                  %2020 = vst [vmem:[%s1268 + $0x5dc] sm:$0xff] %v2019
                  %v2021 = vld [vmem:[%s1267 + $0x23e0] sm:$0xff]
                  %2022 = vst [vmem:[%s1268 + $0x5e0] sm:$0xff] %v2021
                  %v2023 = vld [vmem:[%s1267 + $0x23e4] sm:$0xff]
                  %2024 = vst [vmem:[%s1268 + $0x5e4] sm:$0xff] %v2023
                  %v2025 = vld [vmem:[%s1267 + $0x23e8] sm:$0xff]
                  %2026 = vst [vmem:[%s1268 + $0x5e8] sm:$0xff] %v2025
                  %v2027 = vld [vmem:[%s1267 + $0x23ec] sm:$0xff]
                  %2028 = vst [vmem:[%s1268 + $0x5ec] sm:$0xff] %v2027
                  %v2029 = vld [vmem:[%s1267 + $0x23f0] sm:$0xff]
                  %2030 = vst [vmem:[%s1268 + $0x5f0] sm:$0xff] %v2029
                  %v2031 = vld [vmem:[%s1267 + $0x23f4] sm:$0xff]
                  %2032 = vst [vmem:[%s1268 + $0x5f4] sm:$0xff] %v2031
                  %v2033 = vld [vmem:[%s1267 + $0x23f8] sm:$0xff]
                  %2034 = vst [vmem:[%s1268 + $0x5f8] sm:$0xff] %v2033
                  %v2035 = vld [vmem:[%s1267 + $0x23fc] sm:$0xff]
                  %2036 = vst [vmem:[%s1268 + $0x5fc] sm:$0xff] %v2035
                  %v2037 = vld [vmem:[%s1267 + $0x2a00] sm:$0xff]
                  %2038 = vst [vmem:[%s1268 + $0x600] sm:$0xff] %v2037
                  %v2039 = vld [vmem:[%s1267 + $0x2a04] sm:$0xff]
                  %2040 = vst [vmem:[%s1268 + $0x604] sm:$0xff] %v2039
                  %v2041 = vld [vmem:[%s1267 + $0x2a08] sm:$0xff]
                  %2042 = vst [vmem:[%s1268 + $0x608] sm:$0xff] %v2041
                  %v2043 = vld [vmem:[%s1267 + $0x2a0c] sm:$0xff]
                  %2044 = vst [vmem:[%s1268 + $0x60c] sm:$0xff] %v2043
                  %v2045 = vld [vmem:[%s1267 + $0x2a10] sm:$0xff]
                  %2046 = vst [vmem:[%s1268 + $0x610] sm:$0xff] %v2045
                  %v2047 = vld [vmem:[%s1267 + $0x2a14] sm:$0xff]
                  %2048 = vst [vmem:[%s1268 + $0x614] sm:$0xff] %v2047
                  %v2049 = vld [vmem:[%s1267 + $0x2a18] sm:$0xff]
                  %2050 = vst [vmem:[%s1268 + $0x618] sm:$0xff] %v2049
                  %v2051 = vld [vmem:[%s1267 + $0x2a1c] sm:$0xff]
                  %2052 = vst [vmem:[%s1268 + $0x61c] sm:$0xff] %v2051
                  %v2053 = vld [vmem:[%s1267 + $0x2a20] sm:$0xff]
                  %2054 = vst [vmem:[%s1268 + $0x620] sm:$0xff] %v2053
                  %v2055 = vld [vmem:[%s1267 + $0x2a24] sm:$0xff]
                  %2056 = vst [vmem:[%s1268 + $0x624] sm:$0xff] %v2055
                  %v2057 = vld [vmem:[%s1267 + $0x2a28] sm:$0xff]
                  %2058 = vst [vmem:[%s1268 + $0x628] sm:$0xff] %v2057
                  %v2059 = vld [vmem:[%s1267 + $0x2a2c] sm:$0xff]
                  %2060 = vst [vmem:[%s1268 + $0x62c] sm:$0xff] %v2059
                  %v2061 = vld [vmem:[%s1267 + $0x2a30] sm:$0xff]
                  %2062 = vst [vmem:[%s1268 + $0x630] sm:$0xff] %v2061
                  %v2063 = vld [vmem:[%s1267 + $0x2a34] sm:$0xff]
                  %2064 = vst [vmem:[%s1268 + $0x634] sm:$0xff] %v2063
                  %v2065 = vld [vmem:[%s1267 + $0x2a38] sm:$0xff]
                  %2066 = vst [vmem:[%s1268 + $0x638] sm:$0xff] %v2065
                  %v2067 = vld [vmem:[%s1267 + $0x2a3c] sm:$0xff]
                  %2068 = vst [vmem:[%s1268 + $0x63c] sm:$0xff] %v2067
                  %v2069 = vld [vmem:[%s1267 + $0x2a40] sm:$0xff]
                  %2070 = vst [vmem:[%s1268 + $0x640] sm:$0xff] %v2069
                  %v2071 = vld [vmem:[%s1267 + $0x2a44] sm:$0xff]
                  %2072 = vst [vmem:[%s1268 + $0x644] sm:$0xff] %v2071
                  %v2073 = vld [vmem:[%s1267 + $0x2a48] sm:$0xff]
                  %2074 = vst [vmem:[%s1268 + $0x648] sm:$0xff] %v2073
                  %v2075 = vld [vmem:[%s1267 + $0x2a4c] sm:$0xff]
                  %2076 = vst [vmem:[%s1268 + $0x64c] sm:$0xff] %v2075
                  %v2077 = vld [vmem:[%s1267 + $0x2a50] sm:$0xff]
                  %2078 = vst [vmem:[%s1268 + $0x650] sm:$0xff] %v2077
                  %v2079 = vld [vmem:[%s1267 + $0x2a54] sm:$0xff]
                  %2080 = vst [vmem:[%s1268 + $0x654] sm:$0xff] %v2079
                  %v2081 = vld [vmem:[%s1267 + $0x2a58] sm:$0xff]
                  %2082 = vst [vmem:[%s1268 + $0x658] sm:$0xff] %v2081
                  %v2083 = vld [vmem:[%s1267 + $0x2a5c] sm:$0xff]
                  %2084 = vst [vmem:[%s1268 + $0x65c] sm:$0xff] %v2083
                  %v2085 = vld [vmem:[%s1267 + $0x2a60] sm:$0xff]
                  %2086 = vst [vmem:[%s1268 + $0x660] sm:$0xff] %v2085
                  %v2087 = vld [vmem:[%s1267 + $0x2a64] sm:$0xff]
                  %2088 = vst [vmem:[%s1268 + $0x664] sm:$0xff] %v2087
                  %v2089 = vld [vmem:[%s1267 + $0x2a68] sm:$0xff]
                  %2090 = vst [vmem:[%s1268 + $0x668] sm:$0xff] %v2089
                  %v2091 = vld [vmem:[%s1267 + $0x2a6c] sm:$0xff]
                  %2092 = vst [vmem:[%s1268 + $0x66c] sm:$0xff] %v2091
                  %v2093 = vld [vmem:[%s1267 + $0x2a70] sm:$0xff]
                  %2094 = vst [vmem:[%s1268 + $0x670] sm:$0xff] %v2093
                  %v2095 = vld [vmem:[%s1267 + $0x2a74] sm:$0xff]
                  %2096 = vst [vmem:[%s1268 + $0x674] sm:$0xff] %v2095
                  %v2097 = vld [vmem:[%s1267 + $0x2a78] sm:$0xff]
                  %2098 = vst [vmem:[%s1268 + $0x678] sm:$0xff] %v2097
                  %v2099 = vld [vmem:[%s1267 + $0x2a7c] sm:$0xff]
                  %2100 = vst [vmem:[%s1268 + $0x67c] sm:$0xff] %v2099
                  %v2101 = vld [vmem:[%s1267 + $0x2a80] sm:$0xff]
                  %2102 = vst [vmem:[%s1268 + $0x680] sm:$0xff] %v2101
                  %v2103 = vld [vmem:[%s1267 + $0x2a84] sm:$0xff]
                  %2104 = vst [vmem:[%s1268 + $0x684] sm:$0xff] %v2103
                  %v2105 = vld [vmem:[%s1267 + $0x2a88] sm:$0xff]
                  %2106 = vst [vmem:[%s1268 + $0x688] sm:$0xff] %v2105
                  %v2107 = vld [vmem:[%s1267 + $0x2a8c] sm:$0xff]
                  %2108 = vst [vmem:[%s1268 + $0x68c] sm:$0xff] %v2107
                  %v2109 = vld [vmem:[%s1267 + $0x2a90] sm:$0xff]
                  %2110 = vst [vmem:[%s1268 + $0x690] sm:$0xff] %v2109
                  %v2111 = vld [vmem:[%s1267 + $0x2a94] sm:$0xff]
                  %2112 = vst [vmem:[%s1268 + $0x694] sm:$0xff] %v2111
                  %v2113 = vld [vmem:[%s1267 + $0x2a98] sm:$0xff]
                  %2114 = vst [vmem:[%s1268 + $0x698] sm:$0xff] %v2113
                  %v2115 = vld [vmem:[%s1267 + $0x2a9c] sm:$0xff]
                  %2116 = vst [vmem:[%s1268 + $0x69c] sm:$0xff] %v2115
                  %v2117 = vld [vmem:[%s1267 + $0x2aa0] sm:$0xff]
                  %2118 = vst [vmem:[%s1268 + $0x6a0] sm:$0xff] %v2117
                  %v2119 = vld [vmem:[%s1267 + $0x2aa4] sm:$0xff]
                  %2120 = vst [vmem:[%s1268 + $0x6a4] sm:$0xff] %v2119
                  %v2121 = vld [vmem:[%s1267 + $0x2aa8] sm:$0xff]
                  %2122 = vst [vmem:[%s1268 + $0x6a8] sm:$0xff] %v2121
                  %v2123 = vld [vmem:[%s1267 + $0x2aac] sm:$0xff]
                  %2124 = vst [vmem:[%s1268 + $0x6ac] sm:$0xff] %v2123
                  %v2125 = vld [vmem:[%s1267 + $0x2ab0] sm:$0xff]
                  %2126 = vst [vmem:[%s1268 + $0x6b0] sm:$0xff] %v2125
                  %v2127 = vld [vmem:[%s1267 + $0x2ab4] sm:$0xff]
                  %2128 = vst [vmem:[%s1268 + $0x6b4] sm:$0xff] %v2127
                  %v2129 = vld [vmem:[%s1267 + $0x2ab8] sm:$0xff]
                  %2130 = vst [vmem:[%s1268 + $0x6b8] sm:$0xff] %v2129
                  %v2131 = vld [vmem:[%s1267 + $0x2abc] sm:$0xff]
                  %2132 = vst [vmem:[%s1268 + $0x6bc] sm:$0xff] %v2131
                  %v2133 = vld [vmem:[%s1267 + $0x2ac0] sm:$0xff]
                  %2134 = vst [vmem:[%s1268 + $0x6c0] sm:$0xff] %v2133
                  %v2135 = vld [vmem:[%s1267 + $0x2ac4] sm:$0xff]
                  %2136 = vst [vmem:[%s1268 + $0x6c4] sm:$0xff] %v2135
                  %v2137 = vld [vmem:[%s1267 + $0x2ac8] sm:$0xff]
                  %2138 = vst [vmem:[%s1268 + $0x6c8] sm:$0xff] %v2137
                  %v2139 = vld [vmem:[%s1267 + $0x2acc] sm:$0xff]
                  %2140 = vst [vmem:[%s1268 + $0x6cc] sm:$0xff] %v2139
                  %v2141 = vld [vmem:[%s1267 + $0x2ad0] sm:$0xff]
                  %2142 = vst [vmem:[%s1268 + $0x6d0] sm:$0xff] %v2141
                  %v2143 = vld [vmem:[%s1267 + $0x2ad4] sm:$0xff]
                  %2144 = vst [vmem:[%s1268 + $0x6d4] sm:$0xff] %v2143
                  %v2145 = vld [vmem:[%s1267 + $0x2ad8] sm:$0xff]
                  %2146 = vst [vmem:[%s1268 + $0x6d8] sm:$0xff] %v2145
                  %v2147 = vld [vmem:[%s1267 + $0x2adc] sm:$0xff]
                  %2148 = vst [vmem:[%s1268 + $0x6dc] sm:$0xff] %v2147
                  %v2149 = vld [vmem:[%s1267 + $0x2ae0] sm:$0xff]
                  %2150 = vst [vmem:[%s1268 + $0x6e0] sm:$0xff] %v2149
                  %v2151 = vld [vmem:[%s1267 + $0x2ae4] sm:$0xff]
                  %2152 = vst [vmem:[%s1268 + $0x6e4] sm:$0xff] %v2151
                  %v2153 = vld [vmem:[%s1267 + $0x2ae8] sm:$0xff]
                  %2154 = vst [vmem:[%s1268 + $0x6e8] sm:$0xff] %v2153
                  %v2155 = vld [vmem:[%s1267 + $0x2aec] sm:$0xff]
                  %2156 = vst [vmem:[%s1268 + $0x6ec] sm:$0xff] %v2155
                  %v2157 = vld [vmem:[%s1267 + $0x2af0] sm:$0xff]
                  %2158 = vst [vmem:[%s1268 + $0x6f0] sm:$0xff] %v2157
                  %v2159 = vld [vmem:[%s1267 + $0x2af4] sm:$0xff]
                  %2160 = vst [vmem:[%s1268 + $0x6f4] sm:$0xff] %v2159
                  %v2161 = vld [vmem:[%s1267 + $0x2af8] sm:$0xff]
                  %2162 = vst [vmem:[%s1268 + $0x6f8] sm:$0xff] %v2161
                  %v2163 = vld [vmem:[%s1267 + $0x2afc] sm:$0xff]
                  %2164 = vst [vmem:[%s1268 + $0x6fc] sm:$0xff] %v2163
                  %v2165 = vld [vmem:[%s1267 + $0x3100] sm:$0xff]
                  %2166 = vst [vmem:[%s1268 + $0x700] sm:$0xff] %v2165
                  %v2167 = vld [vmem:[%s1267 + $0x3104] sm:$0xff]
                  %2168 = vst [vmem:[%s1268 + $0x704] sm:$0xff] %v2167
                  %v2169 = vld [vmem:[%s1267 + $0x3108] sm:$0xff]
                  %2170 = vst [vmem:[%s1268 + $0x708] sm:$0xff] %v2169
                  %v2171 = vld [vmem:[%s1267 + $0x310c] sm:$0xff]
                  %2172 = vst [vmem:[%s1268 + $0x70c] sm:$0xff] %v2171
                  %v2173 = vld [vmem:[%s1267 + $0x3110] sm:$0xff]
                  %2174 = vst [vmem:[%s1268 + $0x710] sm:$0xff] %v2173
                  %v2175 = vld [vmem:[%s1267 + $0x3114] sm:$0xff]
                  %2176 = vst [vmem:[%s1268 + $0x714] sm:$0xff] %v2175
                  %v2177 = vld [vmem:[%s1267 + $0x3118] sm:$0xff]
                  %2178 = vst [vmem:[%s1268 + $0x718] sm:$0xff] %v2177
                  %v2179 = vld [vmem:[%s1267 + $0x311c] sm:$0xff]
                  %2180 = vst [vmem:[%s1268 + $0x71c] sm:$0xff] %v2179
                  %v2181 = vld [vmem:[%s1267 + $0x3120] sm:$0xff]
                  %2182 = vst [vmem:[%s1268 + $0x720] sm:$0xff] %v2181
                  %v2183 = vld [vmem:[%s1267 + $0x3124] sm:$0xff]
                  %2184 = vst [vmem:[%s1268 + $0x724] sm:$0xff] %v2183
                  %v2185 = vld [vmem:[%s1267 + $0x3128] sm:$0xff]
                  %2186 = vst [vmem:[%s1268 + $0x728] sm:$0xff] %v2185
                  %v2187 = vld [vmem:[%s1267 + $0x312c] sm:$0xff]
                  %2188 = vst [vmem:[%s1268 + $0x72c] sm:$0xff] %v2187
                  %v2189 = vld [vmem:[%s1267 + $0x3130] sm:$0xff]
                  %2190 = vst [vmem:[%s1268 + $0x730] sm:$0xff] %v2189
                  %v2191 = vld [vmem:[%s1267 + $0x3134] sm:$0xff]
                  %2192 = vst [vmem:[%s1268 + $0x734] sm:$0xff] %v2191
                  %v2193 = vld [vmem:[%s1267 + $0x3138] sm:$0xff]
                  %2194 = vst [vmem:[%s1268 + $0x738] sm:$0xff] %v2193
                  %v2195 = vld [vmem:[%s1267 + $0x313c] sm:$0xff]
                  %2196 = vst [vmem:[%s1268 + $0x73c] sm:$0xff] %v2195
                  %v2197 = vld [vmem:[%s1267 + $0x3140] sm:$0xff]
                  %2198 = vst [vmem:[%s1268 + $0x740] sm:$0xff] %v2197
                  %v2199 = vld [vmem:[%s1267 + $0x3144] sm:$0xff]
                  %2200 = vst [vmem:[%s1268 + $0x744] sm:$0xff] %v2199
                  %v2201 = vld [vmem:[%s1267 + $0x3148] sm:$0xff]
                  %2202 = vst [vmem:[%s1268 + $0x748] sm:$0xff] %v2201
                  %v2203 = vld [vmem:[%s1267 + $0x314c] sm:$0xff]
                  %2204 = vst [vmem:[%s1268 + $0x74c] sm:$0xff] %v2203
                  %v2205 = vld [vmem:[%s1267 + $0x3150] sm:$0xff]
                  %2206 = vst [vmem:[%s1268 + $0x750] sm:$0xff] %v2205
                  %v2207 = vld [vmem:[%s1267 + $0x3154] sm:$0xff]
                  %2208 = vst [vmem:[%s1268 + $0x754] sm:$0xff] %v2207
                  %v2209 = vld [vmem:[%s1267 + $0x3158] sm:$0xff]
                  %2210 = vst [vmem:[%s1268 + $0x758] sm:$0xff] %v2209
                  %v2211 = vld [vmem:[%s1267 + $0x315c] sm:$0xff]
                  %2212 = vst [vmem:[%s1268 + $0x75c] sm:$0xff] %v2211
                  %v2213 = vld [vmem:[%s1267 + $0x3160] sm:$0xff]
                  %2214 = vst [vmem:[%s1268 + $0x760] sm:$0xff] %v2213
                  %v2215 = vld [vmem:[%s1267 + $0x3164] sm:$0xff]
                  %2216 = vst [vmem:[%s1268 + $0x764] sm:$0xff] %v2215
                  %v2217 = vld [vmem:[%s1267 + $0x3168] sm:$0xff]
                  %2218 = vst [vmem:[%s1268 + $0x768] sm:$0xff] %v2217
                  %v2219 = vld [vmem:[%s1267 + $0x316c] sm:$0xff]
                  %2220 = vst [vmem:[%s1268 + $0x76c] sm:$0xff] %v2219
                  %v2221 = vld [vmem:[%s1267 + $0x3170] sm:$0xff]
                  %2222 = vst [vmem:[%s1268 + $0x770] sm:$0xff] %v2221
                  %v2223 = vld [vmem:[%s1267 + $0x3174] sm:$0xff]
                  %2224 = vst [vmem:[%s1268 + $0x774] sm:$0xff] %v2223
                  %v2225 = vld [vmem:[%s1267 + $0x3178] sm:$0xff]
                  %2226 = vst [vmem:[%s1268 + $0x778] sm:$0xff] %v2225
                  %v2227 = vld [vmem:[%s1267 + $0x317c] sm:$0xff]
                  %2228 = vst [vmem:[%s1268 + $0x77c] sm:$0xff] %v2227
                  %v2229 = vld [vmem:[%s1267 + $0x3180] sm:$0xff]
                  %2230 = vst [vmem:[%s1268 + $0x780] sm:$0xff] %v2229
                  %v2231 = vld [vmem:[%s1267 + $0x3184] sm:$0xff]
                  %2232 = vst [vmem:[%s1268 + $0x784] sm:$0xff] %v2231
                  %v2233 = vld [vmem:[%s1267 + $0x3188] sm:$0xff]
                  %2234 = vst [vmem:[%s1268 + $0x788] sm:$0xff] %v2233
                  %v2235 = vld [vmem:[%s1267 + $0x318c] sm:$0xff]
                  %2236 = vst [vmem:[%s1268 + $0x78c] sm:$0xff] %v2235
                  %v2237 = vld [vmem:[%s1267 + $0x3190] sm:$0xff]
                  %2238 = vst [vmem:[%s1268 + $0x790] sm:$0xff] %v2237
                  %v2239 = vld [vmem:[%s1267 + $0x3194] sm:$0xff]
                  %2240 = vst [vmem:[%s1268 + $0x794] sm:$0xff] %v2239
                  %v2241 = vld [vmem:[%s1267 + $0x3198] sm:$0xff]
                  %2242 = vst [vmem:[%s1268 + $0x798] sm:$0xff] %v2241
                  %v2243 = vld [vmem:[%s1267 + $0x319c] sm:$0xff]
                  %2244 = vst [vmem:[%s1268 + $0x79c] sm:$0xff] %v2243
                  %v2245 = vld [vmem:[%s1267 + $0x31a0] sm:$0xff]
                  %2246 = vst [vmem:[%s1268 + $0x7a0] sm:$0xff] %v2245
                  %v2247 = vld [vmem:[%s1267 + $0x31a4] sm:$0xff]
                  %2248 = vst [vmem:[%s1268 + $0x7a4] sm:$0xff] %v2247
                  %v2249 = vld [vmem:[%s1267 + $0x31a8] sm:$0xff]
                  %2250 = vst [vmem:[%s1268 + $0x7a8] sm:$0xff] %v2249
                  %v2251 = vld [vmem:[%s1267 + $0x31ac] sm:$0xff]
                  %2252 = vst [vmem:[%s1268 + $0x7ac] sm:$0xff] %v2251
                  %v2253 = vld [vmem:[%s1267 + $0x31b0] sm:$0xff]
                  %2254 = vst [vmem:[%s1268 + $0x7b0] sm:$0xff] %v2253
                  %v2255 = vld [vmem:[%s1267 + $0x31b4] sm:$0xff]
                  %2256 = vst [vmem:[%s1268 + $0x7b4] sm:$0xff] %v2255
                  %v2257 = vld [vmem:[%s1267 + $0x31b8] sm:$0xff]
                  %2258 = vst [vmem:[%s1268 + $0x7b8] sm:$0xff] %v2257
                  %v2259 = vld [vmem:[%s1267 + $0x31bc] sm:$0xff]
                  %2260 = vst [vmem:[%s1268 + $0x7bc] sm:$0xff] %v2259
                  %v2261 = vld [vmem:[%s1267 + $0x31c0] sm:$0xff]
                  %2262 = vst [vmem:[%s1268 + $0x7c0] sm:$0xff] %v2261
                  %v2263 = vld [vmem:[%s1267 + $0x31c4] sm:$0xff]
                  %2264 = vst [vmem:[%s1268 + $0x7c4] sm:$0xff] %v2263
                  %v2265 = vld [vmem:[%s1267 + $0x31c8] sm:$0xff]
                  %2266 = vst [vmem:[%s1268 + $0x7c8] sm:$0xff] %v2265
                  %v2267 = vld [vmem:[%s1267 + $0x31cc] sm:$0xff]
                  %2268 = vst [vmem:[%s1268 + $0x7cc] sm:$0xff] %v2267
                  %v2269 = vld [vmem:[%s1267 + $0x31d0] sm:$0xff]
                  %2270 = vst [vmem:[%s1268 + $0x7d0] sm:$0xff] %v2269
                  %v2271 = vld [vmem:[%s1267 + $0x31d4] sm:$0xff]
                  %2272 = vst [vmem:[%s1268 + $0x7d4] sm:$0xff] %v2271
                  %v2273 = vld [vmem:[%s1267 + $0x31d8] sm:$0xff]
                  %2274 = vst [vmem:[%s1268 + $0x7d8] sm:$0xff] %v2273
                  %v2275 = vld [vmem:[%s1267 + $0x31dc] sm:$0xff]
                  %2276 = vst [vmem:[%s1268 + $0x7dc] sm:$0xff] %v2275
                  %v2277 = vld [vmem:[%s1267 + $0x31e0] sm:$0xff]
                  %2278 = vst [vmem:[%s1268 + $0x7e0] sm:$0xff] %v2277
                  %v2279 = vld [vmem:[%s1267 + $0x31e4] sm:$0xff]
                  %2280 = vst [vmem:[%s1268 + $0x7e4] sm:$0xff] %v2279
                  %v2281 = vld [vmem:[%s1267 + $0x31e8] sm:$0xff]
                  %2282 = vst [vmem:[%s1268 + $0x7e8] sm:$0xff] %v2281
                  %v2283 = vld [vmem:[%s1267 + $0x31ec] sm:$0xff]
                  %2284 = vst [vmem:[%s1268 + $0x7ec] sm:$0xff] %v2283
                  %v2285 = vld [vmem:[%s1267 + $0x31f0] sm:$0xff]
                  %2286 = vst [vmem:[%s1268 + $0x7f0] sm:$0xff] %v2285
                  %v2287 = vld [vmem:[%s1267 + $0x31f4] sm:$0xff]
                  %2288 = vst [vmem:[%s1268 + $0x7f4] sm:$0xff] %v2287
                  %v2289 = vld [vmem:[%s1267 + $0x31f8] sm:$0xff]
                  %2290 = vst [vmem:[%s1268 + $0x7f8] sm:$0xff] %v2289
                  %v2291 = vld [vmem:[%s1267 + $0x31fc] sm:$0xff]
                  %2292 = vst [vmem:[%s1268 + $0x7fc] sm:$0xff] %v2291
                  %v2293 = vld [vmem:[%s1267 + $0x3800] sm:$0xff]
                  %2294 = vst [vmem:[%s1268 + $0x800] sm:$0xff] %v2293
                  %v2295 = vld [vmem:[%s1267 + $0x3804] sm:$0xff]
                  %2296 = vst [vmem:[%s1268 + $0x804] sm:$0xff] %v2295
                  %v2297 = vld [vmem:[%s1267 + $0x3808] sm:$0xff]
                  %2298 = vst [vmem:[%s1268 + $0x808] sm:$0xff] %v2297
                  %v2299 = vld [vmem:[%s1267 + $0x380c] sm:$0xff]
                  %2300 = vst [vmem:[%s1268 + $0x80c] sm:$0xff] %v2299
                  %v2301 = vld [vmem:[%s1267 + $0x3810] sm:$0xff]
                  %2302 = vst [vmem:[%s1268 + $0x810] sm:$0xff] %v2301
                  %v2303 = vld [vmem:[%s1267 + $0x3814] sm:$0xff]
                  %2304 = vst [vmem:[%s1268 + $0x814] sm:$0xff] %v2303
                  %v2305 = vld [vmem:[%s1267 + $0x3818] sm:$0xff]
                  %2306 = vst [vmem:[%s1268 + $0x818] sm:$0xff] %v2305
                  %v2307 = vld [vmem:[%s1267 + $0x381c] sm:$0xff]
                  %2308 = vst [vmem:[%s1268 + $0x81c] sm:$0xff] %v2307
                  %v2309 = vld [vmem:[%s1267 + $0x3820] sm:$0xff]
                  %2310 = vst [vmem:[%s1268 + $0x820] sm:$0xff] %v2309
                  %v2311 = vld [vmem:[%s1267 + $0x3824] sm:$0xff]
                  %2312 = vst [vmem:[%s1268 + $0x824] sm:$0xff] %v2311
                  %v2313 = vld [vmem:[%s1267 + $0x3828] sm:$0xff]
                  %2314 = vst [vmem:[%s1268 + $0x828] sm:$0xff] %v2313
                  %v2315 = vld [vmem:[%s1267 + $0x382c] sm:$0xff]
                  %2316 = vst [vmem:[%s1268 + $0x82c] sm:$0xff] %v2315
                  %v2317 = vld [vmem:[%s1267 + $0x3830] sm:$0xff]
                  %2318 = vst [vmem:[%s1268 + $0x830] sm:$0xff] %v2317
                  %v2319 = vld [vmem:[%s1267 + $0x3834] sm:$0xff]
                  %2320 = vst [vmem:[%s1268 + $0x834] sm:$0xff] %v2319
                  %v2321 = vld [vmem:[%s1267 + $0x3838] sm:$0xff]
                  %2322 = vst [vmem:[%s1268 + $0x838] sm:$0xff] %v2321
                  %v2323 = vld [vmem:[%s1267 + $0x383c] sm:$0xff]
                  %2324 = vst [vmem:[%s1268 + $0x83c] sm:$0xff] %v2323
                  %v2325 = vld [vmem:[%s1267 + $0x3840] sm:$0xff]
                  %2326 = vst [vmem:[%s1268 + $0x840] sm:$0xff] %v2325
                  %v2327 = vld [vmem:[%s1267 + $0x3844] sm:$0xff]
                  %2328 = vst [vmem:[%s1268 + $0x844] sm:$0xff] %v2327
                  %v2329 = vld [vmem:[%s1267 + $0x3848] sm:$0xff]
                  %2330 = vst [vmem:[%s1268 + $0x848] sm:$0xff] %v2329
                  %v2331 = vld [vmem:[%s1267 + $0x384c] sm:$0xff]
                  %2332 = vst [vmem:[%s1268 + $0x84c] sm:$0xff] %v2331
                  %v2333 = vld [vmem:[%s1267 + $0x3850] sm:$0xff]
                  %2334 = vst [vmem:[%s1268 + $0x850] sm:$0xff] %v2333
                  %v2335 = vld [vmem:[%s1267 + $0x3854] sm:$0xff]
                  %2336 = vst [vmem:[%s1268 + $0x854] sm:$0xff] %v2335
                  %v2337 = vld [vmem:[%s1267 + $0x3858] sm:$0xff]
                  %2338 = vst [vmem:[%s1268 + $0x858] sm:$0xff] %v2337
                  %v2339 = vld [vmem:[%s1267 + $0x385c] sm:$0xff]
                  %2340 = vst [vmem:[%s1268 + $0x85c] sm:$0xff] %v2339
                  %v2341 = vld [vmem:[%s1267 + $0x3860] sm:$0xff]
                  %2342 = vst [vmem:[%s1268 + $0x860] sm:$0xff] %v2341
                  %v2343 = vld [vmem:[%s1267 + $0x3864] sm:$0xff]
                  %2344 = vst [vmem:[%s1268 + $0x864] sm:$0xff] %v2343
                  %v2345 = vld [vmem:[%s1267 + $0x3868] sm:$0xff]
                  %2346 = vst [vmem:[%s1268 + $0x868] sm:$0xff] %v2345
                  %v2347 = vld [vmem:[%s1267 + $0x386c] sm:$0xff]
                  %2348 = vst [vmem:[%s1268 + $0x86c] sm:$0xff] %v2347
                  %v2349 = vld [vmem:[%s1267 + $0x3870] sm:$0xff]
                  %2350 = vst [vmem:[%s1268 + $0x870] sm:$0xff] %v2349
                  %v2351 = vld [vmem:[%s1267 + $0x3874] sm:$0xff]
                  %2352 = vst [vmem:[%s1268 + $0x874] sm:$0xff] %v2351
                  %v2353 = vld [vmem:[%s1267 + $0x3878] sm:$0xff]
                  %2354 = vst [vmem:[%s1268 + $0x878] sm:$0xff] %v2353
                  %v2355 = vld [vmem:[%s1267 + $0x387c] sm:$0xff]
                  %2356 = vst [vmem:[%s1268 + $0x87c] sm:$0xff] %v2355
                  %v2357 = vld [vmem:[%s1267 + $0x3880] sm:$0xff]
                  %2358 = vst [vmem:[%s1268 + $0x880] sm:$0xff] %v2357
                  %v2359 = vld [vmem:[%s1267 + $0x3884] sm:$0xff]
                  %2360 = vst [vmem:[%s1268 + $0x884] sm:$0xff] %v2359
                  %v2361 = vld [vmem:[%s1267 + $0x3888] sm:$0xff]
                  %2362 = vst [vmem:[%s1268 + $0x888] sm:$0xff] %v2361
                  %v2363 = vld [vmem:[%s1267 + $0x388c] sm:$0xff]
                  %2364 = vst [vmem:[%s1268 + $0x88c] sm:$0xff] %v2363
                  %v2365 = vld [vmem:[%s1267 + $0x3890] sm:$0xff]
                  %2366 = vst [vmem:[%s1268 + $0x890] sm:$0xff] %v2365
                  %v2367 = vld [vmem:[%s1267 + $0x3894] sm:$0xff]
                  %2368 = vst [vmem:[%s1268 + $0x894] sm:$0xff] %v2367
                  %v2369 = vld [vmem:[%s1267 + $0x3898] sm:$0xff]
                  %2370 = vst [vmem:[%s1268 + $0x898] sm:$0xff] %v2369
                  %v2371 = vld [vmem:[%s1267 + $0x389c] sm:$0xff]
                  %2372 = vst [vmem:[%s1268 + $0x89c] sm:$0xff] %v2371
                  %v2373 = vld [vmem:[%s1267 + $0x38a0] sm:$0xff]
                  %2374 = vst [vmem:[%s1268 + $0x8a0] sm:$0xff] %v2373
                  %v2375 = vld [vmem:[%s1267 + $0x38a4] sm:$0xff]
                  %2376 = vst [vmem:[%s1268 + $0x8a4] sm:$0xff] %v2375
                  %v2377 = vld [vmem:[%s1267 + $0x38a8] sm:$0xff]
                  %2378 = vst [vmem:[%s1268 + $0x8a8] sm:$0xff] %v2377
                  %v2379 = vld [vmem:[%s1267 + $0x38ac] sm:$0xff]
                  %2380 = vst [vmem:[%s1268 + $0x8ac] sm:$0xff] %v2379
                  %v2381 = vld [vmem:[%s1267 + $0x38b0] sm:$0xff]
                  %2382 = vst [vmem:[%s1268 + $0x8b0] sm:$0xff] %v2381
                  %v2383 = vld [vmem:[%s1267 + $0x38b4] sm:$0xff]
                  %2384 = vst [vmem:[%s1268 + $0x8b4] sm:$0xff] %v2383
                  %v2385 = vld [vmem:[%s1267 + $0x38b8] sm:$0xff]
                  %2386 = vst [vmem:[%s1268 + $0x8b8] sm:$0xff] %v2385
                  %v2387 = vld [vmem:[%s1267 + $0x38bc] sm:$0xff]
                  %2388 = vst [vmem:[%s1268 + $0x8bc] sm:$0xff] %v2387
                  %v2389 = vld [vmem:[%s1267 + $0x38c0] sm:$0xff]
                  %2390 = vst [vmem:[%s1268 + $0x8c0] sm:$0xff] %v2389
                  %v2391 = vld [vmem:[%s1267 + $0x38c4] sm:$0xff]
                  %2392 = vst [vmem:[%s1268 + $0x8c4] sm:$0xff] %v2391
                  %v2393 = vld [vmem:[%s1267 + $0x38c8] sm:$0xff]
                  %2394 = vst [vmem:[%s1268 + $0x8c8] sm:$0xff] %v2393
                  %v2395 = vld [vmem:[%s1267 + $0x38cc] sm:$0xff]
                  %2396 = vst [vmem:[%s1268 + $0x8cc] sm:$0xff] %v2395
                  %v2397 = vld [vmem:[%s1267 + $0x38d0] sm:$0xff]
                  %2398 = vst [vmem:[%s1268 + $0x8d0] sm:$0xff] %v2397
                  %v2399 = vld [vmem:[%s1267 + $0x38d4] sm:$0xff]
                  %2400 = vst [vmem:[%s1268 + $0x8d4] sm:$0xff] %v2399
                  %v2401 = vld [vmem:[%s1267 + $0x38d8] sm:$0xff]
                  %2402 = vst [vmem:[%s1268 + $0x8d8] sm:$0xff] %v2401
                  %v2403 = vld [vmem:[%s1267 + $0x38dc] sm:$0xff]
                  %2404 = vst [vmem:[%s1268 + $0x8dc] sm:$0xff] %v2403
                  %v2405 = vld [vmem:[%s1267 + $0x38e0] sm:$0xff]
                  %2406 = vst [vmem:[%s1268 + $0x8e0] sm:$0xff] %v2405
                  %v2407 = vld [vmem:[%s1267 + $0x38e4] sm:$0xff]
                  %2408 = vst [vmem:[%s1268 + $0x8e4] sm:$0xff] %v2407
                  %v2409 = vld [vmem:[%s1267 + $0x38e8] sm:$0xff]
                  %2410 = vst [vmem:[%s1268 + $0x8e8] sm:$0xff] %v2409
                  %v2411 = vld [vmem:[%s1267 + $0x38ec] sm:$0xff]
                  %2412 = vst [vmem:[%s1268 + $0x8ec] sm:$0xff] %v2411
                  %v2413 = vld [vmem:[%s1267 + $0x38f0] sm:$0xff]
                  %2414 = vst [vmem:[%s1268 + $0x8f0] sm:$0xff] %v2413
                  %v2415 = vld [vmem:[%s1267 + $0x38f4] sm:$0xff]
                  %2416 = vst [vmem:[%s1268 + $0x8f4] sm:$0xff] %v2415
                  %v2417 = vld [vmem:[%s1267 + $0x38f8] sm:$0xff]
                  %2418 = vst [vmem:[%s1268 + $0x8f8] sm:$0xff] %v2417
                  %v2419 = vld [vmem:[%s1267 + $0x38fc] sm:$0xff]
                  %2420 = vst [vmem:[%s1268 + $0x8fc] sm:$0xff] %v2419
                  %s2421 = sadd.s32 1, %s1266
                  %p2422 = scmp.ge.s32.totalorder %s2421, 0
                  %s2423 = scalar_select %p2422, 0, %s2421
                  %s2424 = smul.u32 %s2423, 8
                  %s2425 = smul.u32 %s2423, 8
                  %s2426 = scalar_lea.vmem %s87, %s2424
                  %s2427 = scalar_lea.vmem %s84, %s2425 [#allocation2]
                $region48: #{_stem.3} parent=42 // loop_footer
                  %s1265 = sadd.s32 1, %s1261
                $region49: #{_stem.3} parent=42 // loop_footer_branch
                  %1260 = sbr.rel target = $region45
                $region50: #{_stem.3} parent=42 // loop_exit
                  _
              $region43: #{_stem.3} parent=27 // pred_fallthru
                _
              // Predicated region
              $region51: #{_stem.3} parent=27 // pred_check
                _
              $region52: #{_stem.3} parent=27 // pred_check_branch
                %2429 = sbr.rel (0) target = $region54
              $region53: #{_stem.3} parent=27 // pred_region
                loop: start=0, step=1, limit=0
                $region55: #{_stem.3} parent=53 // loop_pre_header
                  _
                $region56: #{_stem.3} parent=53 // loop_header
                  %s2433 = sphi 0, %s2437
                  %p2434 = scmp.ge.s32.totalorder %s2433, 0
                  %s2438 = sphi 0, %s3595
                  %s2439 = sphi %s87, %s3598
                  %s2440 = sphi %s84, %s3599
                $region57: #{_stem.3} parent=53 // loop_header_branch
                  %2436 = sbr.rel (%p2434) target = $region61
                $region58: #{_stem.3} parent=53 // loop_body
                  %v2441 = vld [vmem:[%s2439] sm:$0xff]
                  %2442 = vst [vmem:[%s2440] sm:$0xff] %v2441
                  %v2443 = vld [vmem:[%s2439 + $0x4] sm:$0xff]
                  %2444 = vst [vmem:[%s2440 + $0x4] sm:$0xff] %v2443
                  %v2445 = vld [vmem:[%s2439 + $0x8] sm:$0xff]
                  %2446 = vst [vmem:[%s2440 + $0x8] sm:$0xff] %v2445
                  %v2447 = vld [vmem:[%s2439 + $0xc] sm:$0xff]
                  %2448 = vst [vmem:[%s2440 + $0xc] sm:$0xff] %v2447
                  %v2449 = vld [vmem:[%s2439 + $0x10] sm:$0xff]
                  %2450 = vst [vmem:[%s2440 + $0x10] sm:$0xff] %v2449
                  %v2451 = vld [vmem:[%s2439 + $0x14] sm:$0xff]
                  %2452 = vst [vmem:[%s2440 + $0x14] sm:$0xff] %v2451
                  %v2453 = vld [vmem:[%s2439 + $0x18] sm:$0xff]
                  %2454 = vst [vmem:[%s2440 + $0x18] sm:$0xff] %v2453
                  %v2455 = vld [vmem:[%s2439 + $0x1c] sm:$0xff]
                  %2456 = vst [vmem:[%s2440 + $0x1c] sm:$0xff] %v2455
                  %v2457 = vld [vmem:[%s2439 + $0x20] sm:$0xff]
                  %2458 = vst [vmem:[%s2440 + $0x20] sm:$0xff] %v2457
                  %v2459 = vld [vmem:[%s2439 + $0x24] sm:$0xff]
                  %2460 = vst [vmem:[%s2440 + $0x24] sm:$0xff] %v2459
                  %v2461 = vld [vmem:[%s2439 + $0x28] sm:$0xff]
                  %2462 = vst [vmem:[%s2440 + $0x28] sm:$0xff] %v2461
                  %v2463 = vld [vmem:[%s2439 + $0x2c] sm:$0xff]
                  %2464 = vst [vmem:[%s2440 + $0x2c] sm:$0xff] %v2463
                  %v2465 = vld [vmem:[%s2439 + $0x30] sm:$0xff]
                  %2466 = vst [vmem:[%s2440 + $0x30] sm:$0xff] %v2465
                  %v2467 = vld [vmem:[%s2439 + $0x34] sm:$0xff]
                  %2468 = vst [vmem:[%s2440 + $0x34] sm:$0xff] %v2467
                  %v2469 = vld [vmem:[%s2439 + $0x38] sm:$0xff]
                  %2470 = vst [vmem:[%s2440 + $0x38] sm:$0xff] %v2469
                  %v2471 = vld [vmem:[%s2439 + $0x3c] sm:$0xff]
                  %2472 = vst [vmem:[%s2440 + $0x3c] sm:$0xff] %v2471
                  %v2473 = vld [vmem:[%s2439 + $0x40] sm:$0xff]
                  %2474 = vst [vmem:[%s2440 + $0x40] sm:$0xff] %v2473
                  %v2475 = vld [vmem:[%s2439 + $0x44] sm:$0xff]
                  %2476 = vst [vmem:[%s2440 + $0x44] sm:$0xff] %v2475
                  %v2477 = vld [vmem:[%s2439 + $0x48] sm:$0xff]
                  %2478 = vst [vmem:[%s2440 + $0x48] sm:$0xff] %v2477
                  %v2479 = vld [vmem:[%s2439 + $0x4c] sm:$0xff]
                  %2480 = vst [vmem:[%s2440 + $0x4c] sm:$0xff] %v2479
                  %v2481 = vld [vmem:[%s2439 + $0x50] sm:$0xff]
                  %2482 = vst [vmem:[%s2440 + $0x50] sm:$0xff] %v2481
                  %v2483 = vld [vmem:[%s2439 + $0x54] sm:$0xff]
                  %2484 = vst [vmem:[%s2440 + $0x54] sm:$0xff] %v2483
                  %v2485 = vld [vmem:[%s2439 + $0x58] sm:$0xff]
                  %2486 = vst [vmem:[%s2440 + $0x58] sm:$0xff] %v2485
                  %v2487 = vld [vmem:[%s2439 + $0x5c] sm:$0xff]
                  %2488 = vst [vmem:[%s2440 + $0x5c] sm:$0xff] %v2487
                  %v2489 = vld [vmem:[%s2439 + $0x60] sm:$0xff]
                  %2490 = vst [vmem:[%s2440 + $0x60] sm:$0xff] %v2489
                  %v2491 = vld [vmem:[%s2439 + $0x64] sm:$0xff]
                  %2492 = vst [vmem:[%s2440 + $0x64] sm:$0xff] %v2491
                  %v2493 = vld [vmem:[%s2439 + $0x68] sm:$0xff]
                  %2494 = vst [vmem:[%s2440 + $0x68] sm:$0xff] %v2493
                  %v2495 = vld [vmem:[%s2439 + $0x6c] sm:$0xff]
                  %2496 = vst [vmem:[%s2440 + $0x6c] sm:$0xff] %v2495
                  %v2497 = vld [vmem:[%s2439 + $0x70] sm:$0xff]
                  %2498 = vst [vmem:[%s2440 + $0x70] sm:$0xff] %v2497
                  %v2499 = vld [vmem:[%s2439 + $0x74] sm:$0xff]
                  %2500 = vst [vmem:[%s2440 + $0x74] sm:$0xff] %v2499
                  %v2501 = vld [vmem:[%s2439 + $0x78] sm:$0xff]
                  %2502 = vst [vmem:[%s2440 + $0x78] sm:$0xff] %v2501
                  %v2503 = vld [vmem:[%s2439 + $0x7c] sm:$0xff]
                  %2504 = vst [vmem:[%s2440 + $0x7c] sm:$0xff] %v2503
                  %v2505 = vld [vmem:[%s2439 + $0x80] sm:$0xff]
                  %2506 = vst [vmem:[%s2440 + $0x80] sm:$0xff] %v2505
                  %v2507 = vld [vmem:[%s2439 + $0x84] sm:$0xff]
                  %2508 = vst [vmem:[%s2440 + $0x84] sm:$0xff] %v2507
                  %v2509 = vld [vmem:[%s2439 + $0x88] sm:$0xff]
                  %2510 = vst [vmem:[%s2440 + $0x88] sm:$0xff] %v2509
                  %v2511 = vld [vmem:[%s2439 + $0x8c] sm:$0xff]
                  %2512 = vst [vmem:[%s2440 + $0x8c] sm:$0xff] %v2511
                  %v2513 = vld [vmem:[%s2439 + $0x90] sm:$0xff]
                  %2514 = vst [vmem:[%s2440 + $0x90] sm:$0xff] %v2513
                  %v2515 = vld [vmem:[%s2439 + $0x94] sm:$0xff]
                  %2516 = vst [vmem:[%s2440 + $0x94] sm:$0xff] %v2515
                  %v2517 = vld [vmem:[%s2439 + $0x98] sm:$0xff]
                  %2518 = vst [vmem:[%s2440 + $0x98] sm:$0xff] %v2517
                  %v2519 = vld [vmem:[%s2439 + $0x9c] sm:$0xff]
                  %2520 = vst [vmem:[%s2440 + $0x9c] sm:$0xff] %v2519
                  %v2521 = vld [vmem:[%s2439 + $0xa0] sm:$0xff]
                  %2522 = vst [vmem:[%s2440 + $0xa0] sm:$0xff] %v2521
                  %v2523 = vld [vmem:[%s2439 + $0xa4] sm:$0xff]
                  %2524 = vst [vmem:[%s2440 + $0xa4] sm:$0xff] %v2523
                  %v2525 = vld [vmem:[%s2439 + $0xa8] sm:$0xff]
                  %2526 = vst [vmem:[%s2440 + $0xa8] sm:$0xff] %v2525
                  %v2527 = vld [vmem:[%s2439 + $0xac] sm:$0xff]
                  %2528 = vst [vmem:[%s2440 + $0xac] sm:$0xff] %v2527
                  %v2529 = vld [vmem:[%s2439 + $0xb0] sm:$0xff]
                  %2530 = vst [vmem:[%s2440 + $0xb0] sm:$0xff] %v2529
                  %v2531 = vld [vmem:[%s2439 + $0xb4] sm:$0xff]
                  %2532 = vst [vmem:[%s2440 + $0xb4] sm:$0xff] %v2531
                  %v2533 = vld [vmem:[%s2439 + $0xb8] sm:$0xff]
                  %2534 = vst [vmem:[%s2440 + $0xb8] sm:$0xff] %v2533
                  %v2535 = vld [vmem:[%s2439 + $0xbc] sm:$0xff]
                  %2536 = vst [vmem:[%s2440 + $0xbc] sm:$0xff] %v2535
                  %v2537 = vld [vmem:[%s2439 + $0xc0] sm:$0xff]
                  %2538 = vst [vmem:[%s2440 + $0xc0] sm:$0xff] %v2537
                  %v2539 = vld [vmem:[%s2439 + $0xc4] sm:$0xff]
                  %2540 = vst [vmem:[%s2440 + $0xc4] sm:$0xff] %v2539
                  %v2541 = vld [vmem:[%s2439 + $0xc8] sm:$0xff]
                  %2542 = vst [vmem:[%s2440 + $0xc8] sm:$0xff] %v2541
                  %v2543 = vld [vmem:[%s2439 + $0xcc] sm:$0xff]
                  %2544 = vst [vmem:[%s2440 + $0xcc] sm:$0xff] %v2543
                  %v2545 = vld [vmem:[%s2439 + $0xd0] sm:$0xff]
                  %2546 = vst [vmem:[%s2440 + $0xd0] sm:$0xff] %v2545
                  %v2547 = vld [vmem:[%s2439 + $0xd4] sm:$0xff]
                  %2548 = vst [vmem:[%s2440 + $0xd4] sm:$0xff] %v2547
                  %v2549 = vld [vmem:[%s2439 + $0xd8] sm:$0xff]
                  %2550 = vst [vmem:[%s2440 + $0xd8] sm:$0xff] %v2549
                  %v2551 = vld [vmem:[%s2439 + $0xdc] sm:$0xff]
                  %2552 = vst [vmem:[%s2440 + $0xdc] sm:$0xff] %v2551
                  %v2553 = vld [vmem:[%s2439 + $0xe0] sm:$0xff]
                  %2554 = vst [vmem:[%s2440 + $0xe0] sm:$0xff] %v2553
                  %v2555 = vld [vmem:[%s2439 + $0xe4] sm:$0xff]
                  %2556 = vst [vmem:[%s2440 + $0xe4] sm:$0xff] %v2555
                  %v2557 = vld [vmem:[%s2439 + $0xe8] sm:$0xff]
                  %2558 = vst [vmem:[%s2440 + $0xe8] sm:$0xff] %v2557
                  %v2559 = vld [vmem:[%s2439 + $0xec] sm:$0xff]
                  %2560 = vst [vmem:[%s2440 + $0xec] sm:$0xff] %v2559
                  %v2561 = vld [vmem:[%s2439 + $0xf0] sm:$0xff]
                  %2562 = vst [vmem:[%s2440 + $0xf0] sm:$0xff] %v2561
                  %v2563 = vld [vmem:[%s2439 + $0xf4] sm:$0xff]
                  %2564 = vst [vmem:[%s2440 + $0xf4] sm:$0xff] %v2563
                  %v2565 = vld [vmem:[%s2439 + $0xf8] sm:$0xff]
                  %2566 = vst [vmem:[%s2440 + $0xf8] sm:$0xff] %v2565
                  %v2567 = vld [vmem:[%s2439 + $0xfc] sm:$0xff]
                  %2568 = vst [vmem:[%s2440 + $0xfc] sm:$0xff] %v2567
                  %v2569 = vld [vmem:[%s2439 + $0x700] sm:$0xff]
                  %2570 = vst [vmem:[%s2440 + $0x100] sm:$0xff] %v2569
                  %v2571 = vld [vmem:[%s2439 + $0x704] sm:$0xff]
                  %2572 = vst [vmem:[%s2440 + $0x104] sm:$0xff] %v2571
                  %v2573 = vld [vmem:[%s2439 + $0x708] sm:$0xff]
                  %2574 = vst [vmem:[%s2440 + $0x108] sm:$0xff] %v2573
                  %v2575 = vld [vmem:[%s2439 + $0x70c] sm:$0xff]
                  %2576 = vst [vmem:[%s2440 + $0x10c] sm:$0xff] %v2575
                  %v2577 = vld [vmem:[%s2439 + $0x710] sm:$0xff]
                  %2578 = vst [vmem:[%s2440 + $0x110] sm:$0xff] %v2577
                  %v2579 = vld [vmem:[%s2439 + $0x714] sm:$0xff]
                  %2580 = vst [vmem:[%s2440 + $0x114] sm:$0xff] %v2579
                  %v2581 = vld [vmem:[%s2439 + $0x718] sm:$0xff]
                  %2582 = vst [vmem:[%s2440 + $0x118] sm:$0xff] %v2581
                  %v2583 = vld [vmem:[%s2439 + $0x71c] sm:$0xff]
                  %2584 = vst [vmem:[%s2440 + $0x11c] sm:$0xff] %v2583
                  %v2585 = vld [vmem:[%s2439 + $0x720] sm:$0xff]
                  %2586 = vst [vmem:[%s2440 + $0x120] sm:$0xff] %v2585
                  %v2587 = vld [vmem:[%s2439 + $0x724] sm:$0xff]
                  %2588 = vst [vmem:[%s2440 + $0x124] sm:$0xff] %v2587
                  %v2589 = vld [vmem:[%s2439 + $0x728] sm:$0xff]
                  %2590 = vst [vmem:[%s2440 + $0x128] sm:$0xff] %v2589
                  %v2591 = vld [vmem:[%s2439 + $0x72c] sm:$0xff]
                  %2592 = vst [vmem:[%s2440 + $0x12c] sm:$0xff] %v2591
                  %v2593 = vld [vmem:[%s2439 + $0x730] sm:$0xff]
                  %2594 = vst [vmem:[%s2440 + $0x130] sm:$0xff] %v2593
                  %v2595 = vld [vmem:[%s2439 + $0x734] sm:$0xff]
                  %2596 = vst [vmem:[%s2440 + $0x134] sm:$0xff] %v2595
                  %v2597 = vld [vmem:[%s2439 + $0x738] sm:$0xff]
                  %2598 = vst [vmem:[%s2440 + $0x138] sm:$0xff] %v2597
                  %v2599 = vld [vmem:[%s2439 + $0x73c] sm:$0xff]
                  %2600 = vst [vmem:[%s2440 + $0x13c] sm:$0xff] %v2599
                  %v2601 = vld [vmem:[%s2439 + $0x740] sm:$0xff]
                  %2602 = vst [vmem:[%s2440 + $0x140] sm:$0xff] %v2601
                  %v2603 = vld [vmem:[%s2439 + $0x744] sm:$0xff]
                  %2604 = vst [vmem:[%s2440 + $0x144] sm:$0xff] %v2603
                  %v2605 = vld [vmem:[%s2439 + $0x748] sm:$0xff]
                  %2606 = vst [vmem:[%s2440 + $0x148] sm:$0xff] %v2605
                  %v2607 = vld [vmem:[%s2439 + $0x74c] sm:$0xff]
                  %2608 = vst [vmem:[%s2440 + $0x14c] sm:$0xff] %v2607
                  %v2609 = vld [vmem:[%s2439 + $0x750] sm:$0xff]
                  %2610 = vst [vmem:[%s2440 + $0x150] sm:$0xff] %v2609
                  %v2611 = vld [vmem:[%s2439 + $0x754] sm:$0xff]
                  %2612 = vst [vmem:[%s2440 + $0x154] sm:$0xff] %v2611
                  %v2613 = vld [vmem:[%s2439 + $0x758] sm:$0xff]
                  %2614 = vst [vmem:[%s2440 + $0x158] sm:$0xff] %v2613
                  %v2615 = vld [vmem:[%s2439 + $0x75c] sm:$0xff]
                  %2616 = vst [vmem:[%s2440 + $0x15c] sm:$0xff] %v2615
                  %v2617 = vld [vmem:[%s2439 + $0x760] sm:$0xff]
                  %2618 = vst [vmem:[%s2440 + $0x160] sm:$0xff] %v2617
                  %v2619 = vld [vmem:[%s2439 + $0x764] sm:$0xff]
                  %2620 = vst [vmem:[%s2440 + $0x164] sm:$0xff] %v2619
                  %v2621 = vld [vmem:[%s2439 + $0x768] sm:$0xff]
                  %2622 = vst [vmem:[%s2440 + $0x168] sm:$0xff] %v2621
                  %v2623 = vld [vmem:[%s2439 + $0x76c] sm:$0xff]
                  %2624 = vst [vmem:[%s2440 + $0x16c] sm:$0xff] %v2623
                  %v2625 = vld [vmem:[%s2439 + $0x770] sm:$0xff]
                  %2626 = vst [vmem:[%s2440 + $0x170] sm:$0xff] %v2625
                  %v2627 = vld [vmem:[%s2439 + $0x774] sm:$0xff]
                  %2628 = vst [vmem:[%s2440 + $0x174] sm:$0xff] %v2627
                  %v2629 = vld [vmem:[%s2439 + $0x778] sm:$0xff]
                  %2630 = vst [vmem:[%s2440 + $0x178] sm:$0xff] %v2629
                  %v2631 = vld [vmem:[%s2439 + $0x77c] sm:$0xff]
                  %2632 = vst [vmem:[%s2440 + $0x17c] sm:$0xff] %v2631
                  %v2633 = vld [vmem:[%s2439 + $0x780] sm:$0xff]
                  %2634 = vst [vmem:[%s2440 + $0x180] sm:$0xff] %v2633
                  %v2635 = vld [vmem:[%s2439 + $0x784] sm:$0xff]
                  %2636 = vst [vmem:[%s2440 + $0x184] sm:$0xff] %v2635
                  %v2637 = vld [vmem:[%s2439 + $0x788] sm:$0xff]
                  %2638 = vst [vmem:[%s2440 + $0x188] sm:$0xff] %v2637
                  %v2639 = vld [vmem:[%s2439 + $0x78c] sm:$0xff]
                  %2640 = vst [vmem:[%s2440 + $0x18c] sm:$0xff] %v2639
                  %v2641 = vld [vmem:[%s2439 + $0x790] sm:$0xff]
                  %2642 = vst [vmem:[%s2440 + $0x190] sm:$0xff] %v2641
                  %v2643 = vld [vmem:[%s2439 + $0x794] sm:$0xff]
                  %2644 = vst [vmem:[%s2440 + $0x194] sm:$0xff] %v2643
                  %v2645 = vld [vmem:[%s2439 + $0x798] sm:$0xff]
                  %2646 = vst [vmem:[%s2440 + $0x198] sm:$0xff] %v2645
                  %v2647 = vld [vmem:[%s2439 + $0x79c] sm:$0xff]
                  %2648 = vst [vmem:[%s2440 + $0x19c] sm:$0xff] %v2647
                  %v2649 = vld [vmem:[%s2439 + $0x7a0] sm:$0xff]
                  %2650 = vst [vmem:[%s2440 + $0x1a0] sm:$0xff] %v2649
                  %v2651 = vld [vmem:[%s2439 + $0x7a4] sm:$0xff]
                  %2652 = vst [vmem:[%s2440 + $0x1a4] sm:$0xff] %v2651
                  %v2653 = vld [vmem:[%s2439 + $0x7a8] sm:$0xff]
                  %2654 = vst [vmem:[%s2440 + $0x1a8] sm:$0xff] %v2653
                  %v2655 = vld [vmem:[%s2439 + $0x7ac] sm:$0xff]
                  %2656 = vst [vmem:[%s2440 + $0x1ac] sm:$0xff] %v2655
                  %v2657 = vld [vmem:[%s2439 + $0x7b0] sm:$0xff]
                  %2658 = vst [vmem:[%s2440 + $0x1b0] sm:$0xff] %v2657
                  %v2659 = vld [vmem:[%s2439 + $0x7b4] sm:$0xff]
                  %2660 = vst [vmem:[%s2440 + $0x1b4] sm:$0xff] %v2659
                  %v2661 = vld [vmem:[%s2439 + $0x7b8] sm:$0xff]
                  %2662 = vst [vmem:[%s2440 + $0x1b8] sm:$0xff] %v2661
                  %v2663 = vld [vmem:[%s2439 + $0x7bc] sm:$0xff]
                  %2664 = vst [vmem:[%s2440 + $0x1bc] sm:$0xff] %v2663
                  %v2665 = vld [vmem:[%s2439 + $0x7c0] sm:$0xff]
                  %2666 = vst [vmem:[%s2440 + $0x1c0] sm:$0xff] %v2665
                  %v2667 = vld [vmem:[%s2439 + $0x7c4] sm:$0xff]
                  %2668 = vst [vmem:[%s2440 + $0x1c4] sm:$0xff] %v2667
                  %v2669 = vld [vmem:[%s2439 + $0x7c8] sm:$0xff]
                  %2670 = vst [vmem:[%s2440 + $0x1c8] sm:$0xff] %v2669
                  %v2671 = vld [vmem:[%s2439 + $0x7cc] sm:$0xff]
                  %2672 = vst [vmem:[%s2440 + $0x1cc] sm:$0xff] %v2671
                  %v2673 = vld [vmem:[%s2439 + $0x7d0] sm:$0xff]
                  %2674 = vst [vmem:[%s2440 + $0x1d0] sm:$0xff] %v2673
                  %v2675 = vld [vmem:[%s2439 + $0x7d4] sm:$0xff]
                  %2676 = vst [vmem:[%s2440 + $0x1d4] sm:$0xff] %v2675
                  %v2677 = vld [vmem:[%s2439 + $0x7d8] sm:$0xff]
                  %2678 = vst [vmem:[%s2440 + $0x1d8] sm:$0xff] %v2677
                  %v2679 = vld [vmem:[%s2439 + $0x7dc] sm:$0xff]
                  %2680 = vst [vmem:[%s2440 + $0x1dc] sm:$0xff] %v2679
                  %v2681 = vld [vmem:[%s2439 + $0x7e0] sm:$0xff]
                  %2682 = vst [vmem:[%s2440 + $0x1e0] sm:$0xff] %v2681
                  %v2683 = vld [vmem:[%s2439 + $0x7e4] sm:$0xff]
                  %2684 = vst [vmem:[%s2440 + $0x1e4] sm:$0xff] %v2683
                  %v2685 = vld [vmem:[%s2439 + $0x7e8] sm:$0xff]
                  %2686 = vst [vmem:[%s2440 + $0x1e8] sm:$0xff] %v2685
                  %v2687 = vld [vmem:[%s2439 + $0x7ec] sm:$0xff]
                  %2688 = vst [vmem:[%s2440 + $0x1ec] sm:$0xff] %v2687
                  %v2689 = vld [vmem:[%s2439 + $0x7f0] sm:$0xff]
                  %2690 = vst [vmem:[%s2440 + $0x1f0] sm:$0xff] %v2689
                  %v2691 = vld [vmem:[%s2439 + $0x7f4] sm:$0xff]
                  %2692 = vst [vmem:[%s2440 + $0x1f4] sm:$0xff] %v2691
                  %v2693 = vld [vmem:[%s2439 + $0x7f8] sm:$0xff]
                  %2694 = vst [vmem:[%s2440 + $0x1f8] sm:$0xff] %v2693
                  %v2695 = vld [vmem:[%s2439 + $0x7fc] sm:$0xff]
                  %2696 = vst [vmem:[%s2440 + $0x1fc] sm:$0xff] %v2695
                  %v2697 = vld [vmem:[%s2439 + $0xe00] sm:$0xff]
                  %2698 = vst [vmem:[%s2440 + $0x200] sm:$0xff] %v2697
                  %v2699 = vld [vmem:[%s2439 + $0xe04] sm:$0xff]
                  %2700 = vst [vmem:[%s2440 + $0x204] sm:$0xff] %v2699
                  %v2701 = vld [vmem:[%s2439 + $0xe08] sm:$0xff]
                  %2702 = vst [vmem:[%s2440 + $0x208] sm:$0xff] %v2701
                  %v2703 = vld [vmem:[%s2439 + $0xe0c] sm:$0xff]
                  %2704 = vst [vmem:[%s2440 + $0x20c] sm:$0xff] %v2703
                  %v2705 = vld [vmem:[%s2439 + $0xe10] sm:$0xff]
                  %2706 = vst [vmem:[%s2440 + $0x210] sm:$0xff] %v2705
                  %v2707 = vld [vmem:[%s2439 + $0xe14] sm:$0xff]
                  %2708 = vst [vmem:[%s2440 + $0x214] sm:$0xff] %v2707
                  %v2709 = vld [vmem:[%s2439 + $0xe18] sm:$0xff]
                  %2710 = vst [vmem:[%s2440 + $0x218] sm:$0xff] %v2709
                  %v2711 = vld [vmem:[%s2439 + $0xe1c] sm:$0xff]
                  %2712 = vst [vmem:[%s2440 + $0x21c] sm:$0xff] %v2711
                  %v2713 = vld [vmem:[%s2439 + $0xe20] sm:$0xff]
                  %2714 = vst [vmem:[%s2440 + $0x220] sm:$0xff] %v2713
                  %v2715 = vld [vmem:[%s2439 + $0xe24] sm:$0xff]
                  %2716 = vst [vmem:[%s2440 + $0x224] sm:$0xff] %v2715
                  %v2717 = vld [vmem:[%s2439 + $0xe28] sm:$0xff]
                  %2718 = vst [vmem:[%s2440 + $0x228] sm:$0xff] %v2717
                  %v2719 = vld [vmem:[%s2439 + $0xe2c] sm:$0xff]
                  %2720 = vst [vmem:[%s2440 + $0x22c] sm:$0xff] %v2719
                  %v2721 = vld [vmem:[%s2439 + $0xe30] sm:$0xff]
                  %2722 = vst [vmem:[%s2440 + $0x230] sm:$0xff] %v2721
                  %v2723 = vld [vmem:[%s2439 + $0xe34] sm:$0xff]
                  %2724 = vst [vmem:[%s2440 + $0x234] sm:$0xff] %v2723
                  %v2725 = vld [vmem:[%s2439 + $0xe38] sm:$0xff]
                  %2726 = vst [vmem:[%s2440 + $0x238] sm:$0xff] %v2725
                  %v2727 = vld [vmem:[%s2439 + $0xe3c] sm:$0xff]
                  %2728 = vst [vmem:[%s2440 + $0x23c] sm:$0xff] %v2727
                  %v2729 = vld [vmem:[%s2439 + $0xe40] sm:$0xff]
                  %2730 = vst [vmem:[%s2440 + $0x240] sm:$0xff] %v2729
                  %v2731 = vld [vmem:[%s2439 + $0xe44] sm:$0xff]
                  %2732 = vst [vmem:[%s2440 + $0x244] sm:$0xff] %v2731
                  %v2733 = vld [vmem:[%s2439 + $0xe48] sm:$0xff]
                  %2734 = vst [vmem:[%s2440 + $0x248] sm:$0xff] %v2733
                  %v2735 = vld [vmem:[%s2439 + $0xe4c] sm:$0xff]
                  %2736 = vst [vmem:[%s2440 + $0x24c] sm:$0xff] %v2735
                  %v2737 = vld [vmem:[%s2439 + $0xe50] sm:$0xff]
                  %2738 = vst [vmem:[%s2440 + $0x250] sm:$0xff] %v2737
                  %v2739 = vld [vmem:[%s2439 + $0xe54] sm:$0xff]
                  %2740 = vst [vmem:[%s2440 + $0x254] sm:$0xff] %v2739
                  %v2741 = vld [vmem:[%s2439 + $0xe58] sm:$0xff]
                  %2742 = vst [vmem:[%s2440 + $0x258] sm:$0xff] %v2741
                  %v2743 = vld [vmem:[%s2439 + $0xe5c] sm:$0xff]
                  %2744 = vst [vmem:[%s2440 + $0x25c] sm:$0xff] %v2743
                  %v2745 = vld [vmem:[%s2439 + $0xe60] sm:$0xff]
                  %2746 = vst [vmem:[%s2440 + $0x260] sm:$0xff] %v2745
                  %v2747 = vld [vmem:[%s2439 + $0xe64] sm:$0xff]
                  %2748 = vst [vmem:[%s2440 + $0x264] sm:$0xff] %v2747
                  %v2749 = vld [vmem:[%s2439 + $0xe68] sm:$0xff]
                  %2750 = vst [vmem:[%s2440 + $0x268] sm:$0xff] %v2749
                  %v2751 = vld [vmem:[%s2439 + $0xe6c] sm:$0xff]
                  %2752 = vst [vmem:[%s2440 + $0x26c] sm:$0xff] %v2751
                  %v2753 = vld [vmem:[%s2439 + $0xe70] sm:$0xff]
                  %2754 = vst [vmem:[%s2440 + $0x270] sm:$0xff] %v2753
                  %v2755 = vld [vmem:[%s2439 + $0xe74] sm:$0xff]
                  %2756 = vst [vmem:[%s2440 + $0x274] sm:$0xff] %v2755
                  %v2757 = vld [vmem:[%s2439 + $0xe78] sm:$0xff]
                  %2758 = vst [vmem:[%s2440 + $0x278] sm:$0xff] %v2757
                  %v2759 = vld [vmem:[%s2439 + $0xe7c] sm:$0xff]
                  %2760 = vst [vmem:[%s2440 + $0x27c] sm:$0xff] %v2759
                  %v2761 = vld [vmem:[%s2439 + $0xe80] sm:$0xff]
                  %2762 = vst [vmem:[%s2440 + $0x280] sm:$0xff] %v2761
                  %v2763 = vld [vmem:[%s2439 + $0xe84] sm:$0xff]
                  %2764 = vst [vmem:[%s2440 + $0x284] sm:$0xff] %v2763
                  %v2765 = vld [vmem:[%s2439 + $0xe88] sm:$0xff]
                  %2766 = vst [vmem:[%s2440 + $0x288] sm:$0xff] %v2765
                  %v2767 = vld [vmem:[%s2439 + $0xe8c] sm:$0xff]
                  %2768 = vst [vmem:[%s2440 + $0x28c] sm:$0xff] %v2767
                  %v2769 = vld [vmem:[%s2439 + $0xe90] sm:$0xff]
                  %2770 = vst [vmem:[%s2440 + $0x290] sm:$0xff] %v2769
                  %v2771 = vld [vmem:[%s2439 + $0xe94] sm:$0xff]
                  %2772 = vst [vmem:[%s2440 + $0x294] sm:$0xff] %v2771
                  %v2773 = vld [vmem:[%s2439 + $0xe98] sm:$0xff]
                  %2774 = vst [vmem:[%s2440 + $0x298] sm:$0xff] %v2773
                  %v2775 = vld [vmem:[%s2439 + $0xe9c] sm:$0xff]
                  %2776 = vst [vmem:[%s2440 + $0x29c] sm:$0xff] %v2775
                  %v2777 = vld [vmem:[%s2439 + $0xea0] sm:$0xff]
                  %2778 = vst [vmem:[%s2440 + $0x2a0] sm:$0xff] %v2777
                  %v2779 = vld [vmem:[%s2439 + $0xea4] sm:$0xff]
                  %2780 = vst [vmem:[%s2440 + $0x2a4] sm:$0xff] %v2779
                  %v2781 = vld [vmem:[%s2439 + $0xea8] sm:$0xff]
                  %2782 = vst [vmem:[%s2440 + $0x2a8] sm:$0xff] %v2781
                  %v2783 = vld [vmem:[%s2439 + $0xeac] sm:$0xff]
                  %2784 = vst [vmem:[%s2440 + $0x2ac] sm:$0xff] %v2783
                  %v2785 = vld [vmem:[%s2439 + $0xeb0] sm:$0xff]
                  %2786 = vst [vmem:[%s2440 + $0x2b0] sm:$0xff] %v2785
                  %v2787 = vld [vmem:[%s2439 + $0xeb4] sm:$0xff]
                  %2788 = vst [vmem:[%s2440 + $0x2b4] sm:$0xff] %v2787
                  %v2789 = vld [vmem:[%s2439 + $0xeb8] sm:$0xff]
                  %2790 = vst [vmem:[%s2440 + $0x2b8] sm:$0xff] %v2789
                  %v2791 = vld [vmem:[%s2439 + $0xebc] sm:$0xff]
                  %2792 = vst [vmem:[%s2440 + $0x2bc] sm:$0xff] %v2791
                  %v2793 = vld [vmem:[%s2439 + $0xec0] sm:$0xff]
                  %2794 = vst [vmem:[%s2440 + $0x2c0] sm:$0xff] %v2793
                  %v2795 = vld [vmem:[%s2439 + $0xec4] sm:$0xff]
                  %2796 = vst [vmem:[%s2440 + $0x2c4] sm:$0xff] %v2795
                  %v2797 = vld [vmem:[%s2439 + $0xec8] sm:$0xff]
                  %2798 = vst [vmem:[%s2440 + $0x2c8] sm:$0xff] %v2797
                  %v2799 = vld [vmem:[%s2439 + $0xecc] sm:$0xff]
                  %2800 = vst [vmem:[%s2440 + $0x2cc] sm:$0xff] %v2799
                  %v2801 = vld [vmem:[%s2439 + $0xed0] sm:$0xff]
                  %2802 = vst [vmem:[%s2440 + $0x2d0] sm:$0xff] %v2801
                  %v2803 = vld [vmem:[%s2439 + $0xed4] sm:$0xff]
                  %2804 = vst [vmem:[%s2440 + $0x2d4] sm:$0xff] %v2803
                  %v2805 = vld [vmem:[%s2439 + $0xed8] sm:$0xff]
                  %2806 = vst [vmem:[%s2440 + $0x2d8] sm:$0xff] %v2805
                  %v2807 = vld [vmem:[%s2439 + $0xedc] sm:$0xff]
                  %2808 = vst [vmem:[%s2440 + $0x2dc] sm:$0xff] %v2807
                  %v2809 = vld [vmem:[%s2439 + $0xee0] sm:$0xff]
                  %2810 = vst [vmem:[%s2440 + $0x2e0] sm:$0xff] %v2809
                  %v2811 = vld [vmem:[%s2439 + $0xee4] sm:$0xff]
                  %2812 = vst [vmem:[%s2440 + $0x2e4] sm:$0xff] %v2811
                  %v2813 = vld [vmem:[%s2439 + $0xee8] sm:$0xff]
                  %2814 = vst [vmem:[%s2440 + $0x2e8] sm:$0xff] %v2813
                  %v2815 = vld [vmem:[%s2439 + $0xeec] sm:$0xff]
                  %2816 = vst [vmem:[%s2440 + $0x2ec] sm:$0xff] %v2815
                  %v2817 = vld [vmem:[%s2439 + $0xef0] sm:$0xff]
                  %2818 = vst [vmem:[%s2440 + $0x2f0] sm:$0xff] %v2817
                  %v2819 = vld [vmem:[%s2439 + $0xef4] sm:$0xff]
                  %2820 = vst [vmem:[%s2440 + $0x2f4] sm:$0xff] %v2819
                  %v2821 = vld [vmem:[%s2439 + $0xef8] sm:$0xff]
                  %2822 = vst [vmem:[%s2440 + $0x2f8] sm:$0xff] %v2821
                  %v2823 = vld [vmem:[%s2439 + $0xefc] sm:$0xff]
                  %2824 = vst [vmem:[%s2440 + $0x2fc] sm:$0xff] %v2823
                  %v2825 = vld [vmem:[%s2439 + $0x1500] sm:$0xff]
                  %2826 = vst [vmem:[%s2440 + $0x300] sm:$0xff] %v2825
                  %v2827 = vld [vmem:[%s2439 + $0x1504] sm:$0xff]
                  %2828 = vst [vmem:[%s2440 + $0x304] sm:$0xff] %v2827
                  %v2829 = vld [vmem:[%s2439 + $0x1508] sm:$0xff]
                  %2830 = vst [vmem:[%s2440 + $0x308] sm:$0xff] %v2829
                  %v2831 = vld [vmem:[%s2439 + $0x150c] sm:$0xff]
                  %2832 = vst [vmem:[%s2440 + $0x30c] sm:$0xff] %v2831
                  %v2833 = vld [vmem:[%s2439 + $0x1510] sm:$0xff]
                  %2834 = vst [vmem:[%s2440 + $0x310] sm:$0xff] %v2833
                  %v2835 = vld [vmem:[%s2439 + $0x1514] sm:$0xff]
                  %2836 = vst [vmem:[%s2440 + $0x314] sm:$0xff] %v2835
                  %v2837 = vld [vmem:[%s2439 + $0x1518] sm:$0xff]
                  %2838 = vst [vmem:[%s2440 + $0x318] sm:$0xff] %v2837
                  %v2839 = vld [vmem:[%s2439 + $0x151c] sm:$0xff]
                  %2840 = vst [vmem:[%s2440 + $0x31c] sm:$0xff] %v2839
                  %v2841 = vld [vmem:[%s2439 + $0x1520] sm:$0xff]
                  %2842 = vst [vmem:[%s2440 + $0x320] sm:$0xff] %v2841
                  %v2843 = vld [vmem:[%s2439 + $0x1524] sm:$0xff]
                  %2844 = vst [vmem:[%s2440 + $0x324] sm:$0xff] %v2843
                  %v2845 = vld [vmem:[%s2439 + $0x1528] sm:$0xff]
                  %2846 = vst [vmem:[%s2440 + $0x328] sm:$0xff] %v2845
                  %v2847 = vld [vmem:[%s2439 + $0x152c] sm:$0xff]
                  %2848 = vst [vmem:[%s2440 + $0x32c] sm:$0xff] %v2847
                  %v2849 = vld [vmem:[%s2439 + $0x1530] sm:$0xff]
                  %2850 = vst [vmem:[%s2440 + $0x330] sm:$0xff] %v2849
                  %v2851 = vld [vmem:[%s2439 + $0x1534] sm:$0xff]
                  %2852 = vst [vmem:[%s2440 + $0x334] sm:$0xff] %v2851
                  %v2853 = vld [vmem:[%s2439 + $0x1538] sm:$0xff]
                  %2854 = vst [vmem:[%s2440 + $0x338] sm:$0xff] %v2853
                  %v2855 = vld [vmem:[%s2439 + $0x153c] sm:$0xff]
                  %2856 = vst [vmem:[%s2440 + $0x33c] sm:$0xff] %v2855
                  %v2857 = vld [vmem:[%s2439 + $0x1540] sm:$0xff]
                  %2858 = vst [vmem:[%s2440 + $0x340] sm:$0xff] %v2857
                  %v2859 = vld [vmem:[%s2439 + $0x1544] sm:$0xff]
                  %2860 = vst [vmem:[%s2440 + $0x344] sm:$0xff] %v2859
                  %v2861 = vld [vmem:[%s2439 + $0x1548] sm:$0xff]
                  %2862 = vst [vmem:[%s2440 + $0x348] sm:$0xff] %v2861
                  %v2863 = vld [vmem:[%s2439 + $0x154c] sm:$0xff]
                  %2864 = vst [vmem:[%s2440 + $0x34c] sm:$0xff] %v2863
                  %v2865 = vld [vmem:[%s2439 + $0x1550] sm:$0xff]
                  %2866 = vst [vmem:[%s2440 + $0x350] sm:$0xff] %v2865
                  %v2867 = vld [vmem:[%s2439 + $0x1554] sm:$0xff]
                  %2868 = vst [vmem:[%s2440 + $0x354] sm:$0xff] %v2867
                  %v2869 = vld [vmem:[%s2439 + $0x1558] sm:$0xff]
                  %2870 = vst [vmem:[%s2440 + $0x358] sm:$0xff] %v2869
                  %v2871 = vld [vmem:[%s2439 + $0x155c] sm:$0xff]
                  %2872 = vst [vmem:[%s2440 + $0x35c] sm:$0xff] %v2871
                  %v2873 = vld [vmem:[%s2439 + $0x1560] sm:$0xff]
                  %2874 = vst [vmem:[%s2440 + $0x360] sm:$0xff] %v2873
                  %v2875 = vld [vmem:[%s2439 + $0x1564] sm:$0xff]
                  %2876 = vst [vmem:[%s2440 + $0x364] sm:$0xff] %v2875
                  %v2877 = vld [vmem:[%s2439 + $0x1568] sm:$0xff]
                  %2878 = vst [vmem:[%s2440 + $0x368] sm:$0xff] %v2877
                  %v2879 = vld [vmem:[%s2439 + $0x156c] sm:$0xff]
                  %2880 = vst [vmem:[%s2440 + $0x36c] sm:$0xff] %v2879
                  %v2881 = vld [vmem:[%s2439 + $0x1570] sm:$0xff]
                  %2882 = vst [vmem:[%s2440 + $0x370] sm:$0xff] %v2881
                  %v2883 = vld [vmem:[%s2439 + $0x1574] sm:$0xff]
                  %2884 = vst [vmem:[%s2440 + $0x374] sm:$0xff] %v2883
                  %v2885 = vld [vmem:[%s2439 + $0x1578] sm:$0xff]
                  %2886 = vst [vmem:[%s2440 + $0x378] sm:$0xff] %v2885
                  %v2887 = vld [vmem:[%s2439 + $0x157c] sm:$0xff]
                  %2888 = vst [vmem:[%s2440 + $0x37c] sm:$0xff] %v2887
                  %v2889 = vld [vmem:[%s2439 + $0x1580] sm:$0xff]
                  %2890 = vst [vmem:[%s2440 + $0x380] sm:$0xff] %v2889
                  %v2891 = vld [vmem:[%s2439 + $0x1584] sm:$0xff]
                  %2892 = vst [vmem:[%s2440 + $0x384] sm:$0xff] %v2891
                  %v2893 = vld [vmem:[%s2439 + $0x1588] sm:$0xff]
                  %2894 = vst [vmem:[%s2440 + $0x388] sm:$0xff] %v2893
                  %v2895 = vld [vmem:[%s2439 + $0x158c] sm:$0xff]
                  %2896 = vst [vmem:[%s2440 + $0x38c] sm:$0xff] %v2895
                  %v2897 = vld [vmem:[%s2439 + $0x1590] sm:$0xff]
                  %2898 = vst [vmem:[%s2440 + $0x390] sm:$0xff] %v2897
                  %v2899 = vld [vmem:[%s2439 + $0x1594] sm:$0xff]
                  %2900 = vst [vmem:[%s2440 + $0x394] sm:$0xff] %v2899
                  %v2901 = vld [vmem:[%s2439 + $0x1598] sm:$0xff]
                  %2902 = vst [vmem:[%s2440 + $0x398] sm:$0xff] %v2901
                  %v2903 = vld [vmem:[%s2439 + $0x159c] sm:$0xff]
                  %2904 = vst [vmem:[%s2440 + $0x39c] sm:$0xff] %v2903
                  %v2905 = vld [vmem:[%s2439 + $0x15a0] sm:$0xff]
                  %2906 = vst [vmem:[%s2440 + $0x3a0] sm:$0xff] %v2905
                  %v2907 = vld [vmem:[%s2439 + $0x15a4] sm:$0xff]
                  %2908 = vst [vmem:[%s2440 + $0x3a4] sm:$0xff] %v2907
                  %v2909 = vld [vmem:[%s2439 + $0x15a8] sm:$0xff]
                  %2910 = vst [vmem:[%s2440 + $0x3a8] sm:$0xff] %v2909
                  %v2911 = vld [vmem:[%s2439 + $0x15ac] sm:$0xff]
                  %2912 = vst [vmem:[%s2440 + $0x3ac] sm:$0xff] %v2911
                  %v2913 = vld [vmem:[%s2439 + $0x15b0] sm:$0xff]
                  %2914 = vst [vmem:[%s2440 + $0x3b0] sm:$0xff] %v2913
                  %v2915 = vld [vmem:[%s2439 + $0x15b4] sm:$0xff]
                  %2916 = vst [vmem:[%s2440 + $0x3b4] sm:$0xff] %v2915
                  %v2917 = vld [vmem:[%s2439 + $0x15b8] sm:$0xff]
                  %2918 = vst [vmem:[%s2440 + $0x3b8] sm:$0xff] %v2917
                  %v2919 = vld [vmem:[%s2439 + $0x15bc] sm:$0xff]
                  %2920 = vst [vmem:[%s2440 + $0x3bc] sm:$0xff] %v2919
                  %v2921 = vld [vmem:[%s2439 + $0x15c0] sm:$0xff]
                  %2922 = vst [vmem:[%s2440 + $0x3c0] sm:$0xff] %v2921
                  %v2923 = vld [vmem:[%s2439 + $0x15c4] sm:$0xff]
                  %2924 = vst [vmem:[%s2440 + $0x3c4] sm:$0xff] %v2923
                  %v2925 = vld [vmem:[%s2439 + $0x15c8] sm:$0xff]
                  %2926 = vst [vmem:[%s2440 + $0x3c8] sm:$0xff] %v2925
                  %v2927 = vld [vmem:[%s2439 + $0x15cc] sm:$0xff]
                  %2928 = vst [vmem:[%s2440 + $0x3cc] sm:$0xff] %v2927
                  %v2929 = vld [vmem:[%s2439 + $0x15d0] sm:$0xff]
                  %2930 = vst [vmem:[%s2440 + $0x3d0] sm:$0xff] %v2929
                  %v2931 = vld [vmem:[%s2439 + $0x15d4] sm:$0xff]
                  %2932 = vst [vmem:[%s2440 + $0x3d4] sm:$0xff] %v2931
                  %v2933 = vld [vmem:[%s2439 + $0x15d8] sm:$0xff]
                  %2934 = vst [vmem:[%s2440 + $0x3d8] sm:$0xff] %v2933
                  %v2935 = vld [vmem:[%s2439 + $0x15dc] sm:$0xff]
                  %2936 = vst [vmem:[%s2440 + $0x3dc] sm:$0xff] %v2935
                  %v2937 = vld [vmem:[%s2439 + $0x15e0] sm:$0xff]
                  %2938 = vst [vmem:[%s2440 + $0x3e0] sm:$0xff] %v2937
                  %v2939 = vld [vmem:[%s2439 + $0x15e4] sm:$0xff]
                  %2940 = vst [vmem:[%s2440 + $0x3e4] sm:$0xff] %v2939
                  %v2941 = vld [vmem:[%s2439 + $0x15e8] sm:$0xff]
                  %2942 = vst [vmem:[%s2440 + $0x3e8] sm:$0xff] %v2941
                  %v2943 = vld [vmem:[%s2439 + $0x15ec] sm:$0xff]
                  %2944 = vst [vmem:[%s2440 + $0x3ec] sm:$0xff] %v2943
                  %v2945 = vld [vmem:[%s2439 + $0x15f0] sm:$0xff]
                  %2946 = vst [vmem:[%s2440 + $0x3f0] sm:$0xff] %v2945
                  %v2947 = vld [vmem:[%s2439 + $0x15f4] sm:$0xff]
                  %2948 = vst [vmem:[%s2440 + $0x3f4] sm:$0xff] %v2947
                  %v2949 = vld [vmem:[%s2439 + $0x15f8] sm:$0xff]
                  %2950 = vst [vmem:[%s2440 + $0x3f8] sm:$0xff] %v2949
                  %v2951 = vld [vmem:[%s2439 + $0x15fc] sm:$0xff]
                  %2952 = vst [vmem:[%s2440 + $0x3fc] sm:$0xff] %v2951
                  %v2953 = vld [vmem:[%s2439 + $0x1c00] sm:$0xff]
                  %2954 = vst [vmem:[%s2440 + $0x400] sm:$0xff] %v2953
                  %v2955 = vld [vmem:[%s2439 + $0x1c04] sm:$0xff]
                  %2956 = vst [vmem:[%s2440 + $0x404] sm:$0xff] %v2955
                  %v2957 = vld [vmem:[%s2439 + $0x1c08] sm:$0xff]
                  %2958 = vst [vmem:[%s2440 + $0x408] sm:$0xff] %v2957
                  %v2959 = vld [vmem:[%s2439 + $0x1c0c] sm:$0xff]
                  %2960 = vst [vmem:[%s2440 + $0x40c] sm:$0xff] %v2959
                  %v2961 = vld [vmem:[%s2439 + $0x1c10] sm:$0xff]
                  %2962 = vst [vmem:[%s2440 + $0x410] sm:$0xff] %v2961
                  %v2963 = vld [vmem:[%s2439 + $0x1c14] sm:$0xff]
                  %2964 = vst [vmem:[%s2440 + $0x414] sm:$0xff] %v2963
                  %v2965 = vld [vmem:[%s2439 + $0x1c18] sm:$0xff]
                  %2966 = vst [vmem:[%s2440 + $0x418] sm:$0xff] %v2965
                  %v2967 = vld [vmem:[%s2439 + $0x1c1c] sm:$0xff]
                  %2968 = vst [vmem:[%s2440 + $0x41c] sm:$0xff] %v2967
                  %v2969 = vld [vmem:[%s2439 + $0x1c20] sm:$0xff]
                  %2970 = vst [vmem:[%s2440 + $0x420] sm:$0xff] %v2969
                  %v2971 = vld [vmem:[%s2439 + $0x1c24] sm:$0xff]
                  %2972 = vst [vmem:[%s2440 + $0x424] sm:$0xff] %v2971
                  %v2973 = vld [vmem:[%s2439 + $0x1c28] sm:$0xff]
                  %2974 = vst [vmem:[%s2440 + $0x428] sm:$0xff] %v2973
                  %v2975 = vld [vmem:[%s2439 + $0x1c2c] sm:$0xff]
                  %2976 = vst [vmem:[%s2440 + $0x42c] sm:$0xff] %v2975
                  %v2977 = vld [vmem:[%s2439 + $0x1c30] sm:$0xff]
                  %2978 = vst [vmem:[%s2440 + $0x430] sm:$0xff] %v2977
                  %v2979 = vld [vmem:[%s2439 + $0x1c34] sm:$0xff]
                  %2980 = vst [vmem:[%s2440 + $0x434] sm:$0xff] %v2979
                  %v2981 = vld [vmem:[%s2439 + $0x1c38] sm:$0xff]
                  %2982 = vst [vmem:[%s2440 + $0x438] sm:$0xff] %v2981
                  %v2983 = vld [vmem:[%s2439 + $0x1c3c] sm:$0xff]
                  %2984 = vst [vmem:[%s2440 + $0x43c] sm:$0xff] %v2983
                  %v2985 = vld [vmem:[%s2439 + $0x1c40] sm:$0xff]
                  %2986 = vst [vmem:[%s2440 + $0x440] sm:$0xff] %v2985
                  %v2987 = vld [vmem:[%s2439 + $0x1c44] sm:$0xff]
                  %2988 = vst [vmem:[%s2440 + $0x444] sm:$0xff] %v2987
                  %v2989 = vld [vmem:[%s2439 + $0x1c48] sm:$0xff]
                  %2990 = vst [vmem:[%s2440 + $0x448] sm:$0xff] %v2989
                  %v2991 = vld [vmem:[%s2439 + $0x1c4c] sm:$0xff]
                  %2992 = vst [vmem:[%s2440 + $0x44c] sm:$0xff] %v2991
                  %v2993 = vld [vmem:[%s2439 + $0x1c50] sm:$0xff]
                  %2994 = vst [vmem:[%s2440 + $0x450] sm:$0xff] %v2993
                  %v2995 = vld [vmem:[%s2439 + $0x1c54] sm:$0xff]
                  %2996 = vst [vmem:[%s2440 + $0x454] sm:$0xff] %v2995
                  %v2997 = vld [vmem:[%s2439 + $0x1c58] sm:$0xff]
                  %2998 = vst [vmem:[%s2440 + $0x458] sm:$0xff] %v2997
                  %v2999 = vld [vmem:[%s2439 + $0x1c5c] sm:$0xff]
                  %3000 = vst [vmem:[%s2440 + $0x45c] sm:$0xff] %v2999
                  %v3001 = vld [vmem:[%s2439 + $0x1c60] sm:$0xff]
                  %3002 = vst [vmem:[%s2440 + $0x460] sm:$0xff] %v3001
                  %v3003 = vld [vmem:[%s2439 + $0x1c64] sm:$0xff]
                  %3004 = vst [vmem:[%s2440 + $0x464] sm:$0xff] %v3003
                  %v3005 = vld [vmem:[%s2439 + $0x1c68] sm:$0xff]
                  %3006 = vst [vmem:[%s2440 + $0x468] sm:$0xff] %v3005
                  %v3007 = vld [vmem:[%s2439 + $0x1c6c] sm:$0xff]
                  %3008 = vst [vmem:[%s2440 + $0x46c] sm:$0xff] %v3007
                  %v3009 = vld [vmem:[%s2439 + $0x1c70] sm:$0xff]
                  %3010 = vst [vmem:[%s2440 + $0x470] sm:$0xff] %v3009
                  %v3011 = vld [vmem:[%s2439 + $0x1c74] sm:$0xff]
                  %3012 = vst [vmem:[%s2440 + $0x474] sm:$0xff] %v3011
                  %v3013 = vld [vmem:[%s2439 + $0x1c78] sm:$0xff]
                  %3014 = vst [vmem:[%s2440 + $0x478] sm:$0xff] %v3013
                  %v3015 = vld [vmem:[%s2439 + $0x1c7c] sm:$0xff]
                  %3016 = vst [vmem:[%s2440 + $0x47c] sm:$0xff] %v3015
                  %v3017 = vld [vmem:[%s2439 + $0x1c80] sm:$0xff]
                  %3018 = vst [vmem:[%s2440 + $0x480] sm:$0xff] %v3017
                  %v3019 = vld [vmem:[%s2439 + $0x1c84] sm:$0xff]
                  %3020 = vst [vmem:[%s2440 + $0x484] sm:$0xff] %v3019
                  %v3021 = vld [vmem:[%s2439 + $0x1c88] sm:$0xff]
                  %3022 = vst [vmem:[%s2440 + $0x488] sm:$0xff] %v3021
                  %v3023 = vld [vmem:[%s2439 + $0x1c8c] sm:$0xff]
                  %3024 = vst [vmem:[%s2440 + $0x48c] sm:$0xff] %v3023
                  %v3025 = vld [vmem:[%s2439 + $0x1c90] sm:$0xff]
                  %3026 = vst [vmem:[%s2440 + $0x490] sm:$0xff] %v3025
                  %v3027 = vld [vmem:[%s2439 + $0x1c94] sm:$0xff]
                  %3028 = vst [vmem:[%s2440 + $0x494] sm:$0xff] %v3027
                  %v3029 = vld [vmem:[%s2439 + $0x1c98] sm:$0xff]
                  %3030 = vst [vmem:[%s2440 + $0x498] sm:$0xff] %v3029
                  %v3031 = vld [vmem:[%s2439 + $0x1c9c] sm:$0xff]
                  %3032 = vst [vmem:[%s2440 + $0x49c] sm:$0xff] %v3031
                  %v3033 = vld [vmem:[%s2439 + $0x1ca0] sm:$0xff]
                  %3034 = vst [vmem:[%s2440 + $0x4a0] sm:$0xff] %v3033
                  %v3035 = vld [vmem:[%s2439 + $0x1ca4] sm:$0xff]
                  %3036 = vst [vmem:[%s2440 + $0x4a4] sm:$0xff] %v3035
                  %v3037 = vld [vmem:[%s2439 + $0x1ca8] sm:$0xff]
                  %3038 = vst [vmem:[%s2440 + $0x4a8] sm:$0xff] %v3037
                  %v3039 = vld [vmem:[%s2439 + $0x1cac] sm:$0xff]
                  %3040 = vst [vmem:[%s2440 + $0x4ac] sm:$0xff] %v3039
                  %v3041 = vld [vmem:[%s2439 + $0x1cb0] sm:$0xff]
                  %3042 = vst [vmem:[%s2440 + $0x4b0] sm:$0xff] %v3041
                  %v3043 = vld [vmem:[%s2439 + $0x1cb4] sm:$0xff]
                  %3044 = vst [vmem:[%s2440 + $0x4b4] sm:$0xff] %v3043
                  %v3045 = vld [vmem:[%s2439 + $0x1cb8] sm:$0xff]
                  %3046 = vst [vmem:[%s2440 + $0x4b8] sm:$0xff] %v3045
                  %v3047 = vld [vmem:[%s2439 + $0x1cbc] sm:$0xff]
                  %3048 = vst [vmem:[%s2440 + $0x4bc] sm:$0xff] %v3047
                  %v3049 = vld [vmem:[%s2439 + $0x1cc0] sm:$0xff]
                  %3050 = vst [vmem:[%s2440 + $0x4c0] sm:$0xff] %v3049
                  %v3051 = vld [vmem:[%s2439 + $0x1cc4] sm:$0xff]
                  %3052 = vst [vmem:[%s2440 + $0x4c4] sm:$0xff] %v3051
                  %v3053 = vld [vmem:[%s2439 + $0x1cc8] sm:$0xff]
                  %3054 = vst [vmem:[%s2440 + $0x4c8] sm:$0xff] %v3053
                  %v3055 = vld [vmem:[%s2439 + $0x1ccc] sm:$0xff]
                  %3056 = vst [vmem:[%s2440 + $0x4cc] sm:$0xff] %v3055
                  %v3057 = vld [vmem:[%s2439 + $0x1cd0] sm:$0xff]
                  %3058 = vst [vmem:[%s2440 + $0x4d0] sm:$0xff] %v3057
                  %v3059 = vld [vmem:[%s2439 + $0x1cd4] sm:$0xff]
                  %3060 = vst [vmem:[%s2440 + $0x4d4] sm:$0xff] %v3059
                  %v3061 = vld [vmem:[%s2439 + $0x1cd8] sm:$0xff]
                  %3062 = vst [vmem:[%s2440 + $0x4d8] sm:$0xff] %v3061
                  %v3063 = vld [vmem:[%s2439 + $0x1cdc] sm:$0xff]
                  %3064 = vst [vmem:[%s2440 + $0x4dc] sm:$0xff] %v3063
                  %v3065 = vld [vmem:[%s2439 + $0x1ce0] sm:$0xff]
                  %3066 = vst [vmem:[%s2440 + $0x4e0] sm:$0xff] %v3065
                  %v3067 = vld [vmem:[%s2439 + $0x1ce4] sm:$0xff]
                  %3068 = vst [vmem:[%s2440 + $0x4e4] sm:$0xff] %v3067
                  %v3069 = vld [vmem:[%s2439 + $0x1ce8] sm:$0xff]
                  %3070 = vst [vmem:[%s2440 + $0x4e8] sm:$0xff] %v3069
                  %v3071 = vld [vmem:[%s2439 + $0x1cec] sm:$0xff]
                  %3072 = vst [vmem:[%s2440 + $0x4ec] sm:$0xff] %v3071
                  %v3073 = vld [vmem:[%s2439 + $0x1cf0] sm:$0xff]
                  %3074 = vst [vmem:[%s2440 + $0x4f0] sm:$0xff] %v3073
                  %v3075 = vld [vmem:[%s2439 + $0x1cf4] sm:$0xff]
                  %3076 = vst [vmem:[%s2440 + $0x4f4] sm:$0xff] %v3075
                  %v3077 = vld [vmem:[%s2439 + $0x1cf8] sm:$0xff]
                  %3078 = vst [vmem:[%s2440 + $0x4f8] sm:$0xff] %v3077
                  %v3079 = vld [vmem:[%s2439 + $0x1cfc] sm:$0xff]
                  %3080 = vst [vmem:[%s2440 + $0x4fc] sm:$0xff] %v3079
                  %v3081 = vld [vmem:[%s2439 + $0x2300] sm:$0xff]
                  %3082 = vst [vmem:[%s2440 + $0x500] sm:$0xff] %v3081
                  %v3083 = vld [vmem:[%s2439 + $0x2304] sm:$0xff]
                  %3084 = vst [vmem:[%s2440 + $0x504] sm:$0xff] %v3083
                  %v3085 = vld [vmem:[%s2439 + $0x2308] sm:$0xff]
                  %3086 = vst [vmem:[%s2440 + $0x508] sm:$0xff] %v3085
                  %v3087 = vld [vmem:[%s2439 + $0x230c] sm:$0xff]
                  %3088 = vst [vmem:[%s2440 + $0x50c] sm:$0xff] %v3087
                  %v3089 = vld [vmem:[%s2439 + $0x2310] sm:$0xff]
                  %3090 = vst [vmem:[%s2440 + $0x510] sm:$0xff] %v3089
                  %v3091 = vld [vmem:[%s2439 + $0x2314] sm:$0xff]
                  %3092 = vst [vmem:[%s2440 + $0x514] sm:$0xff] %v3091
                  %v3093 = vld [vmem:[%s2439 + $0x2318] sm:$0xff]
                  %3094 = vst [vmem:[%s2440 + $0x518] sm:$0xff] %v3093
                  %v3095 = vld [vmem:[%s2439 + $0x231c] sm:$0xff]
                  %3096 = vst [vmem:[%s2440 + $0x51c] sm:$0xff] %v3095
                  %v3097 = vld [vmem:[%s2439 + $0x2320] sm:$0xff]
                  %3098 = vst [vmem:[%s2440 + $0x520] sm:$0xff] %v3097
                  %v3099 = vld [vmem:[%s2439 + $0x2324] sm:$0xff]
                  %3100 = vst [vmem:[%s2440 + $0x524] sm:$0xff] %v3099
                  %v3101 = vld [vmem:[%s2439 + $0x2328] sm:$0xff]
                  %3102 = vst [vmem:[%s2440 + $0x528] sm:$0xff] %v3101
                  %v3103 = vld [vmem:[%s2439 + $0x232c] sm:$0xff]
                  %3104 = vst [vmem:[%s2440 + $0x52c] sm:$0xff] %v3103
                  %v3105 = vld [vmem:[%s2439 + $0x2330] sm:$0xff]
                  %3106 = vst [vmem:[%s2440 + $0x530] sm:$0xff] %v3105
                  %v3107 = vld [vmem:[%s2439 + $0x2334] sm:$0xff]
                  %3108 = vst [vmem:[%s2440 + $0x534] sm:$0xff] %v3107
                  %v3109 = vld [vmem:[%s2439 + $0x2338] sm:$0xff]
                  %3110 = vst [vmem:[%s2440 + $0x538] sm:$0xff] %v3109
                  %v3111 = vld [vmem:[%s2439 + $0x233c] sm:$0xff]
                  %3112 = vst [vmem:[%s2440 + $0x53c] sm:$0xff] %v3111
                  %v3113 = vld [vmem:[%s2439 + $0x2340] sm:$0xff]
                  %3114 = vst [vmem:[%s2440 + $0x540] sm:$0xff] %v3113
                  %v3115 = vld [vmem:[%s2439 + $0x2344] sm:$0xff]
                  %3116 = vst [vmem:[%s2440 + $0x544] sm:$0xff] %v3115
                  %v3117 = vld [vmem:[%s2439 + $0x2348] sm:$0xff]
                  %3118 = vst [vmem:[%s2440 + $0x548] sm:$0xff] %v3117
                  %v3119 = vld [vmem:[%s2439 + $0x234c] sm:$0xff]
                  %3120 = vst [vmem:[%s2440 + $0x54c] sm:$0xff] %v3119
                  %v3121 = vld [vmem:[%s2439 + $0x2350] sm:$0xff]
                  %3122 = vst [vmem:[%s2440 + $0x550] sm:$0xff] %v3121
                  %v3123 = vld [vmem:[%s2439 + $0x2354] sm:$0xff]
                  %3124 = vst [vmem:[%s2440 + $0x554] sm:$0xff] %v3123
                  %v3125 = vld [vmem:[%s2439 + $0x2358] sm:$0xff]
                  %3126 = vst [vmem:[%s2440 + $0x558] sm:$0xff] %v3125
                  %v3127 = vld [vmem:[%s2439 + $0x235c] sm:$0xff]
                  %3128 = vst [vmem:[%s2440 + $0x55c] sm:$0xff] %v3127
                  %v3129 = vld [vmem:[%s2439 + $0x2360] sm:$0xff]
                  %3130 = vst [vmem:[%s2440 + $0x560] sm:$0xff] %v3129
                  %v3131 = vld [vmem:[%s2439 + $0x2364] sm:$0xff]
                  %3132 = vst [vmem:[%s2440 + $0x564] sm:$0xff] %v3131
                  %v3133 = vld [vmem:[%s2439 + $0x2368] sm:$0xff]
                  %3134 = vst [vmem:[%s2440 + $0x568] sm:$0xff] %v3133
                  %v3135 = vld [vmem:[%s2439 + $0x236c] sm:$0xff]
                  %3136 = vst [vmem:[%s2440 + $0x56c] sm:$0xff] %v3135
                  %v3137 = vld [vmem:[%s2439 + $0x2370] sm:$0xff]
                  %3138 = vst [vmem:[%s2440 + $0x570] sm:$0xff] %v3137
                  %v3139 = vld [vmem:[%s2439 + $0x2374] sm:$0xff]
                  %3140 = vst [vmem:[%s2440 + $0x574] sm:$0xff] %v3139
                  %v3141 = vld [vmem:[%s2439 + $0x2378] sm:$0xff]
                  %3142 = vst [vmem:[%s2440 + $0x578] sm:$0xff] %v3141
                  %v3143 = vld [vmem:[%s2439 + $0x237c] sm:$0xff]
                  %3144 = vst [vmem:[%s2440 + $0x57c] sm:$0xff] %v3143
                  %v3145 = vld [vmem:[%s2439 + $0x2380] sm:$0xff]
                  %3146 = vst [vmem:[%s2440 + $0x580] sm:$0xff] %v3145
                  %v3147 = vld [vmem:[%s2439 + $0x2384] sm:$0xff]
                  %3148 = vst [vmem:[%s2440 + $0x584] sm:$0xff] %v3147
                  %v3149 = vld [vmem:[%s2439 + $0x2388] sm:$0xff]
                  %3150 = vst [vmem:[%s2440 + $0x588] sm:$0xff] %v3149
                  %v3151 = vld [vmem:[%s2439 + $0x238c] sm:$0xff]
                  %3152 = vst [vmem:[%s2440 + $0x58c] sm:$0xff] %v3151
                  %v3153 = vld [vmem:[%s2439 + $0x2390] sm:$0xff]
                  %3154 = vst [vmem:[%s2440 + $0x590] sm:$0xff] %v3153
                  %v3155 = vld [vmem:[%s2439 + $0x2394] sm:$0xff]
                  %3156 = vst [vmem:[%s2440 + $0x594] sm:$0xff] %v3155
                  %v3157 = vld [vmem:[%s2439 + $0x2398] sm:$0xff]
                  %3158 = vst [vmem:[%s2440 + $0x598] sm:$0xff] %v3157
                  %v3159 = vld [vmem:[%s2439 + $0x239c] sm:$0xff]
                  %3160 = vst [vmem:[%s2440 + $0x59c] sm:$0xff] %v3159
                  %v3161 = vld [vmem:[%s2439 + $0x23a0] sm:$0xff]
                  %3162 = vst [vmem:[%s2440 + $0x5a0] sm:$0xff] %v3161
                  %v3163 = vld [vmem:[%s2439 + $0x23a4] sm:$0xff]
                  %3164 = vst [vmem:[%s2440 + $0x5a4] sm:$0xff] %v3163
                  %v3165 = vld [vmem:[%s2439 + $0x23a8] sm:$0xff]
                  %3166 = vst [vmem:[%s2440 + $0x5a8] sm:$0xff] %v3165
                  %v3167 = vld [vmem:[%s2439 + $0x23ac] sm:$0xff]
                  %3168 = vst [vmem:[%s2440 + $0x5ac] sm:$0xff] %v3167
                  %v3169 = vld [vmem:[%s2439 + $0x23b0] sm:$0xff]
                  %3170 = vst [vmem:[%s2440 + $0x5b0] sm:$0xff] %v3169
                  %v3171 = vld [vmem:[%s2439 + $0x23b4] sm:$0xff]
                  %3172 = vst [vmem:[%s2440 + $0x5b4] sm:$0xff] %v3171
                  %v3173 = vld [vmem:[%s2439 + $0x23b8] sm:$0xff]
                  %3174 = vst [vmem:[%s2440 + $0x5b8] sm:$0xff] %v3173
                  %v3175 = vld [vmem:[%s2439 + $0x23bc] sm:$0xff]
                  %3176 = vst [vmem:[%s2440 + $0x5bc] sm:$0xff] %v3175
                  %v3177 = vld [vmem:[%s2439 + $0x23c0] sm:$0xff]
                  %3178 = vst [vmem:[%s2440 + $0x5c0] sm:$0xff] %v3177
                  %v3179 = vld [vmem:[%s2439 + $0x23c4] sm:$0xff]
                  %3180 = vst [vmem:[%s2440 + $0x5c4] sm:$0xff] %v3179
                  %v3181 = vld [vmem:[%s2439 + $0x23c8] sm:$0xff]
                  %3182 = vst [vmem:[%s2440 + $0x5c8] sm:$0xff] %v3181
                  %v3183 = vld [vmem:[%s2439 + $0x23cc] sm:$0xff]
                  %3184 = vst [vmem:[%s2440 + $0x5cc] sm:$0xff] %v3183
                  %v3185 = vld [vmem:[%s2439 + $0x23d0] sm:$0xff]
                  %3186 = vst [vmem:[%s2440 + $0x5d0] sm:$0xff] %v3185
                  %v3187 = vld [vmem:[%s2439 + $0x23d4] sm:$0xff]
                  %3188 = vst [vmem:[%s2440 + $0x5d4] sm:$0xff] %v3187
                  %v3189 = vld [vmem:[%s2439 + $0x23d8] sm:$0xff]
                  %3190 = vst [vmem:[%s2440 + $0x5d8] sm:$0xff] %v3189
                  %v3191 = vld [vmem:[%s2439 + $0x23dc] sm:$0xff]
                  %3192 = vst [vmem:[%s2440 + $0x5dc] sm:$0xff] %v3191
                  %v3193 = vld [vmem:[%s2439 + $0x23e0] sm:$0xff]
                  %3194 = vst [vmem:[%s2440 + $0x5e0] sm:$0xff] %v3193
                  %v3195 = vld [vmem:[%s2439 + $0x23e4] sm:$0xff]
                  %3196 = vst [vmem:[%s2440 + $0x5e4] sm:$0xff] %v3195
                  %v3197 = vld [vmem:[%s2439 + $0x23e8] sm:$0xff]
                  %3198 = vst [vmem:[%s2440 + $0x5e8] sm:$0xff] %v3197
                  %v3199 = vld [vmem:[%s2439 + $0x23ec] sm:$0xff]
                  %3200 = vst [vmem:[%s2440 + $0x5ec] sm:$0xff] %v3199
                  %v3201 = vld [vmem:[%s2439 + $0x23f0] sm:$0xff]
                  %3202 = vst [vmem:[%s2440 + $0x5f0] sm:$0xff] %v3201
                  %v3203 = vld [vmem:[%s2439 + $0x23f4] sm:$0xff]
                  %3204 = vst [vmem:[%s2440 + $0x5f4] sm:$0xff] %v3203
                  %v3205 = vld [vmem:[%s2439 + $0x23f8] sm:$0xff]
                  %3206 = vst [vmem:[%s2440 + $0x5f8] sm:$0xff] %v3205
                  %v3207 = vld [vmem:[%s2439 + $0x23fc] sm:$0xff]
                  %3208 = vst [vmem:[%s2440 + $0x5fc] sm:$0xff] %v3207
                  %v3209 = vld [vmem:[%s2439 + $0x2a00] sm:$0xff]
                  %3210 = vst [vmem:[%s2440 + $0x600] sm:$0xff] %v3209
                  %v3211 = vld [vmem:[%s2439 + $0x2a04] sm:$0xff]
                  %3212 = vst [vmem:[%s2440 + $0x604] sm:$0xff] %v3211
                  %v3213 = vld [vmem:[%s2439 + $0x2a08] sm:$0xff]
                  %3214 = vst [vmem:[%s2440 + $0x608] sm:$0xff] %v3213
                  %v3215 = vld [vmem:[%s2439 + $0x2a0c] sm:$0xff]
                  %3216 = vst [vmem:[%s2440 + $0x60c] sm:$0xff] %v3215
                  %v3217 = vld [vmem:[%s2439 + $0x2a10] sm:$0xff]
                  %3218 = vst [vmem:[%s2440 + $0x610] sm:$0xff] %v3217
                  %v3219 = vld [vmem:[%s2439 + $0x2a14] sm:$0xff]
                  %3220 = vst [vmem:[%s2440 + $0x614] sm:$0xff] %v3219
                  %v3221 = vld [vmem:[%s2439 + $0x2a18] sm:$0xff]
                  %3222 = vst [vmem:[%s2440 + $0x618] sm:$0xff] %v3221
                  %v3223 = vld [vmem:[%s2439 + $0x2a1c] sm:$0xff]
                  %3224 = vst [vmem:[%s2440 + $0x61c] sm:$0xff] %v3223
                  %v3225 = vld [vmem:[%s2439 + $0x2a20] sm:$0xff]
                  %3226 = vst [vmem:[%s2440 + $0x620] sm:$0xff] %v3225
                  %v3227 = vld [vmem:[%s2439 + $0x2a24] sm:$0xff]
                  %3228 = vst [vmem:[%s2440 + $0x624] sm:$0xff] %v3227
                  %v3229 = vld [vmem:[%s2439 + $0x2a28] sm:$0xff]
                  %3230 = vst [vmem:[%s2440 + $0x628] sm:$0xff] %v3229
                  %v3231 = vld [vmem:[%s2439 + $0x2a2c] sm:$0xff]
                  %3232 = vst [vmem:[%s2440 + $0x62c] sm:$0xff] %v3231
                  %v3233 = vld [vmem:[%s2439 + $0x2a30] sm:$0xff]
                  %3234 = vst [vmem:[%s2440 + $0x630] sm:$0xff] %v3233
                  %v3235 = vld [vmem:[%s2439 + $0x2a34] sm:$0xff]
                  %3236 = vst [vmem:[%s2440 + $0x634] sm:$0xff] %v3235
                  %v3237 = vld [vmem:[%s2439 + $0x2a38] sm:$0xff]
                  %3238 = vst [vmem:[%s2440 + $0x638] sm:$0xff] %v3237
                  %v3239 = vld [vmem:[%s2439 + $0x2a3c] sm:$0xff]
                  %3240 = vst [vmem:[%s2440 + $0x63c] sm:$0xff] %v3239
                  %v3241 = vld [vmem:[%s2439 + $0x2a40] sm:$0xff]
                  %3242 = vst [vmem:[%s2440 + $0x640] sm:$0xff] %v3241
                  %v3243 = vld [vmem:[%s2439 + $0x2a44] sm:$0xff]
                  %3244 = vst [vmem:[%s2440 + $0x644] sm:$0xff] %v3243
                  %v3245 = vld [vmem:[%s2439 + $0x2a48] sm:$0xff]
                  %3246 = vst [vmem:[%s2440 + $0x648] sm:$0xff] %v3245
                  %v3247 = vld [vmem:[%s2439 + $0x2a4c] sm:$0xff]
                  %3248 = vst [vmem:[%s2440 + $0x64c] sm:$0xff] %v3247
                  %v3249 = vld [vmem:[%s2439 + $0x2a50] sm:$0xff]
                  %3250 = vst [vmem:[%s2440 + $0x650] sm:$0xff] %v3249
                  %v3251 = vld [vmem:[%s2439 + $0x2a54] sm:$0xff]
                  %3252 = vst [vmem:[%s2440 + $0x654] sm:$0xff] %v3251
                  %v3253 = vld [vmem:[%s2439 + $0x2a58] sm:$0xff]
                  %3254 = vst [vmem:[%s2440 + $0x658] sm:$0xff] %v3253
                  %v3255 = vld [vmem:[%s2439 + $0x2a5c] sm:$0xff]
                  %3256 = vst [vmem:[%s2440 + $0x65c] sm:$0xff] %v3255
                  %v3257 = vld [vmem:[%s2439 + $0x2a60] sm:$0xff]
                  %3258 = vst [vmem:[%s2440 + $0x660] sm:$0xff] %v3257
                  %v3259 = vld [vmem:[%s2439 + $0x2a64] sm:$0xff]
                  %3260 = vst [vmem:[%s2440 + $0x664] sm:$0xff] %v3259
                  %v3261 = vld [vmem:[%s2439 + $0x2a68] sm:$0xff]
                  %3262 = vst [vmem:[%s2440 + $0x668] sm:$0xff] %v3261
                  %v3263 = vld [vmem:[%s2439 + $0x2a6c] sm:$0xff]
                  %3264 = vst [vmem:[%s2440 + $0x66c] sm:$0xff] %v3263
                  %v3265 = vld [vmem:[%s2439 + $0x2a70] sm:$0xff]
                  %3266 = vst [vmem:[%s2440 + $0x670] sm:$0xff] %v3265
                  %v3267 = vld [vmem:[%s2439 + $0x2a74] sm:$0xff]
                  %3268 = vst [vmem:[%s2440 + $0x674] sm:$0xff] %v3267
                  %v3269 = vld [vmem:[%s2439 + $0x2a78] sm:$0xff]
                  %3270 = vst [vmem:[%s2440 + $0x678] sm:$0xff] %v3269
                  %v3271 = vld [vmem:[%s2439 + $0x2a7c] sm:$0xff]
                  %3272 = vst [vmem:[%s2440 + $0x67c] sm:$0xff] %v3271
                  %v3273 = vld [vmem:[%s2439 + $0x2a80] sm:$0xff]
                  %3274 = vst [vmem:[%s2440 + $0x680] sm:$0xff] %v3273
                  %v3275 = vld [vmem:[%s2439 + $0x2a84] sm:$0xff]
                  %3276 = vst [vmem:[%s2440 + $0x684] sm:$0xff] %v3275
                  %v3277 = vld [vmem:[%s2439 + $0x2a88] sm:$0xff]
                  %3278 = vst [vmem:[%s2440 + $0x688] sm:$0xff] %v3277
                  %v3279 = vld [vmem:[%s2439 + $0x2a8c] sm:$0xff]
                  %3280 = vst [vmem:[%s2440 + $0x68c] sm:$0xff] %v3279
                  %v3281 = vld [vmem:[%s2439 + $0x2a90] sm:$0xff]
                  %3282 = vst [vmem:[%s2440 + $0x690] sm:$0xff] %v3281
                  %v3283 = vld [vmem:[%s2439 + $0x2a94] sm:$0xff]
                  %3284 = vst [vmem:[%s2440 + $0x694] sm:$0xff] %v3283
                  %v3285 = vld [vmem:[%s2439 + $0x2a98] sm:$0xff]
                  %3286 = vst [vmem:[%s2440 + $0x698] sm:$0xff] %v3285
                  %v3287 = vld [vmem:[%s2439 + $0x2a9c] sm:$0xff]
                  %3288 = vst [vmem:[%s2440 + $0x69c] sm:$0xff] %v3287
                  %v3289 = vld [vmem:[%s2439 + $0x2aa0] sm:$0xff]
                  %3290 = vst [vmem:[%s2440 + $0x6a0] sm:$0xff] %v3289
                  %v3291 = vld [vmem:[%s2439 + $0x2aa4] sm:$0xff]
                  %3292 = vst [vmem:[%s2440 + $0x6a4] sm:$0xff] %v3291
                  %v3293 = vld [vmem:[%s2439 + $0x2aa8] sm:$0xff]
                  %3294 = vst [vmem:[%s2440 + $0x6a8] sm:$0xff] %v3293
                  %v3295 = vld [vmem:[%s2439 + $0x2aac] sm:$0xff]
                  %3296 = vst [vmem:[%s2440 + $0x6ac] sm:$0xff] %v3295
                  %v3297 = vld [vmem:[%s2439 + $0x2ab0] sm:$0xff]
                  %3298 = vst [vmem:[%s2440 + $0x6b0] sm:$0xff] %v3297
                  %v3299 = vld [vmem:[%s2439 + $0x2ab4] sm:$0xff]
                  %3300 = vst [vmem:[%s2440 + $0x6b4] sm:$0xff] %v3299
                  %v3301 = vld [vmem:[%s2439 + $0x2ab8] sm:$0xff]
                  %3302 = vst [vmem:[%s2440 + $0x6b8] sm:$0xff] %v3301
                  %v3303 = vld [vmem:[%s2439 + $0x2abc] sm:$0xff]
                  %3304 = vst [vmem:[%s2440 + $0x6bc] sm:$0xff] %v3303
                  %v3305 = vld [vmem:[%s2439 + $0x2ac0] sm:$0xff]
                  %3306 = vst [vmem:[%s2440 + $0x6c0] sm:$0xff] %v3305
                  %v3307 = vld [vmem:[%s2439 + $0x2ac4] sm:$0xff]
                  %3308 = vst [vmem:[%s2440 + $0x6c4] sm:$0xff] %v3307
                  %v3309 = vld [vmem:[%s2439 + $0x2ac8] sm:$0xff]
                  %3310 = vst [vmem:[%s2440 + $0x6c8] sm:$0xff] %v3309
                  %v3311 = vld [vmem:[%s2439 + $0x2acc] sm:$0xff]
                  %3312 = vst [vmem:[%s2440 + $0x6cc] sm:$0xff] %v3311
                  %v3313 = vld [vmem:[%s2439 + $0x2ad0] sm:$0xff]
                  %3314 = vst [vmem:[%s2440 + $0x6d0] sm:$0xff] %v3313
                  %v3315 = vld [vmem:[%s2439 + $0x2ad4] sm:$0xff]
                  %3316 = vst [vmem:[%s2440 + $0x6d4] sm:$0xff] %v3315
                  %v3317 = vld [vmem:[%s2439 + $0x2ad8] sm:$0xff]
                  %3318 = vst [vmem:[%s2440 + $0x6d8] sm:$0xff] %v3317
                  %v3319 = vld [vmem:[%s2439 + $0x2adc] sm:$0xff]
                  %3320 = vst [vmem:[%s2440 + $0x6dc] sm:$0xff] %v3319
                  %v3321 = vld [vmem:[%s2439 + $0x2ae0] sm:$0xff]
                  %3322 = vst [vmem:[%s2440 + $0x6e0] sm:$0xff] %v3321
                  %v3323 = vld [vmem:[%s2439 + $0x2ae4] sm:$0xff]
                  %3324 = vst [vmem:[%s2440 + $0x6e4] sm:$0xff] %v3323
                  %v3325 = vld [vmem:[%s2439 + $0x2ae8] sm:$0xff]
                  %3326 = vst [vmem:[%s2440 + $0x6e8] sm:$0xff] %v3325
                  %v3327 = vld [vmem:[%s2439 + $0x2aec] sm:$0xff]
                  %3328 = vst [vmem:[%s2440 + $0x6ec] sm:$0xff] %v3327
                  %v3329 = vld [vmem:[%s2439 + $0x2af0] sm:$0xff]
                  %3330 = vst [vmem:[%s2440 + $0x6f0] sm:$0xff] %v3329
                  %v3331 = vld [vmem:[%s2439 + $0x2af4] sm:$0xff]
                  %3332 = vst [vmem:[%s2440 + $0x6f4] sm:$0xff] %v3331
                  %v3333 = vld [vmem:[%s2439 + $0x2af8] sm:$0xff]
                  %3334 = vst [vmem:[%s2440 + $0x6f8] sm:$0xff] %v3333
                  %v3335 = vld [vmem:[%s2439 + $0x2afc] sm:$0xff]
                  %3336 = vst [vmem:[%s2440 + $0x6fc] sm:$0xff] %v3335
                  %v3337 = vld [vmem:[%s2439 + $0x3100] sm:$0xff]
                  %3338 = vst [vmem:[%s2440 + $0x700] sm:$0xff] %v3337
                  %v3339 = vld [vmem:[%s2439 + $0x3104] sm:$0xff]
                  %3340 = vst [vmem:[%s2440 + $0x704] sm:$0xff] %v3339
                  %v3341 = vld [vmem:[%s2439 + $0x3108] sm:$0xff]
                  %3342 = vst [vmem:[%s2440 + $0x708] sm:$0xff] %v3341
                  %v3343 = vld [vmem:[%s2439 + $0x310c] sm:$0xff]
                  %3344 = vst [vmem:[%s2440 + $0x70c] sm:$0xff] %v3343
                  %v3345 = vld [vmem:[%s2439 + $0x3110] sm:$0xff]
                  %3346 = vst [vmem:[%s2440 + $0x710] sm:$0xff] %v3345
                  %v3347 = vld [vmem:[%s2439 + $0x3114] sm:$0xff]
                  %3348 = vst [vmem:[%s2440 + $0x714] sm:$0xff] %v3347
                  %v3349 = vld [vmem:[%s2439 + $0x3118] sm:$0xff]
                  %3350 = vst [vmem:[%s2440 + $0x718] sm:$0xff] %v3349
                  %v3351 = vld [vmem:[%s2439 + $0x311c] sm:$0xff]
                  %3352 = vst [vmem:[%s2440 + $0x71c] sm:$0xff] %v3351
                  %v3353 = vld [vmem:[%s2439 + $0x3120] sm:$0xff]
                  %3354 = vst [vmem:[%s2440 + $0x720] sm:$0xff] %v3353
                  %v3355 = vld [vmem:[%s2439 + $0x3124] sm:$0xff]
                  %3356 = vst [vmem:[%s2440 + $0x724] sm:$0xff] %v3355
                  %v3357 = vld [vmem:[%s2439 + $0x3128] sm:$0xff]
                  %3358 = vst [vmem:[%s2440 + $0x728] sm:$0xff] %v3357
                  %v3359 = vld [vmem:[%s2439 + $0x312c] sm:$0xff]
                  %3360 = vst [vmem:[%s2440 + $0x72c] sm:$0xff] %v3359
                  %v3361 = vld [vmem:[%s2439 + $0x3130] sm:$0xff]
                  %3362 = vst [vmem:[%s2440 + $0x730] sm:$0xff] %v3361
                  %v3363 = vld [vmem:[%s2439 + $0x3134] sm:$0xff]
                  %3364 = vst [vmem:[%s2440 + $0x734] sm:$0xff] %v3363
                  %v3365 = vld [vmem:[%s2439 + $0x3138] sm:$0xff]
                  %3366 = vst [vmem:[%s2440 + $0x738] sm:$0xff] %v3365
                  %v3367 = vld [vmem:[%s2439 + $0x313c] sm:$0xff]
                  %3368 = vst [vmem:[%s2440 + $0x73c] sm:$0xff] %v3367
                  %v3369 = vld [vmem:[%s2439 + $0x3140] sm:$0xff]
                  %3370 = vst [vmem:[%s2440 + $0x740] sm:$0xff] %v3369
                  %v3371 = vld [vmem:[%s2439 + $0x3144] sm:$0xff]
                  %3372 = vst [vmem:[%s2440 + $0x744] sm:$0xff] %v3371
                  %v3373 = vld [vmem:[%s2439 + $0x3148] sm:$0xff]
                  %3374 = vst [vmem:[%s2440 + $0x748] sm:$0xff] %v3373
                  %v3375 = vld [vmem:[%s2439 + $0x314c] sm:$0xff]
                  %3376 = vst [vmem:[%s2440 + $0x74c] sm:$0xff] %v3375
                  %v3377 = vld [vmem:[%s2439 + $0x3150] sm:$0xff]
                  %3378 = vst [vmem:[%s2440 + $0x750] sm:$0xff] %v3377
                  %v3379 = vld [vmem:[%s2439 + $0x3154] sm:$0xff]
                  %3380 = vst [vmem:[%s2440 + $0x754] sm:$0xff] %v3379
                  %v3381 = vld [vmem:[%s2439 + $0x3158] sm:$0xff]
                  %3382 = vst [vmem:[%s2440 + $0x758] sm:$0xff] %v3381
                  %v3383 = vld [vmem:[%s2439 + $0x315c] sm:$0xff]
                  %3384 = vst [vmem:[%s2440 + $0x75c] sm:$0xff] %v3383
                  %v3385 = vld [vmem:[%s2439 + $0x3160] sm:$0xff]
                  %3386 = vst [vmem:[%s2440 + $0x760] sm:$0xff] %v3385
                  %v3387 = vld [vmem:[%s2439 + $0x3164] sm:$0xff]
                  %3388 = vst [vmem:[%s2440 + $0x764] sm:$0xff] %v3387
                  %v3389 = vld [vmem:[%s2439 + $0x3168] sm:$0xff]
                  %3390 = vst [vmem:[%s2440 + $0x768] sm:$0xff] %v3389
                  %v3391 = vld [vmem:[%s2439 + $0x316c] sm:$0xff]
                  %3392 = vst [vmem:[%s2440 + $0x76c] sm:$0xff] %v3391
                  %v3393 = vld [vmem:[%s2439 + $0x3170] sm:$0xff]
                  %3394 = vst [vmem:[%s2440 + $0x770] sm:$0xff] %v3393
                  %v3395 = vld [vmem:[%s2439 + $0x3174] sm:$0xff]
                  %3396 = vst [vmem:[%s2440 + $0x774] sm:$0xff] %v3395
                  %v3397 = vld [vmem:[%s2439 + $0x3178] sm:$0xff]
                  %3398 = vst [vmem:[%s2440 + $0x778] sm:$0xff] %v3397
                  %v3399 = vld [vmem:[%s2439 + $0x317c] sm:$0xff]
                  %3400 = vst [vmem:[%s2440 + $0x77c] sm:$0xff] %v3399
                  %v3401 = vld [vmem:[%s2439 + $0x3180] sm:$0xff]
                  %3402 = vst [vmem:[%s2440 + $0x780] sm:$0xff] %v3401
                  %v3403 = vld [vmem:[%s2439 + $0x3184] sm:$0xff]
                  %3404 = vst [vmem:[%s2440 + $0x784] sm:$0xff] %v3403
                  %v3405 = vld [vmem:[%s2439 + $0x3188] sm:$0xff]
                  %3406 = vst [vmem:[%s2440 + $0x788] sm:$0xff] %v3405
                  %v3407 = vld [vmem:[%s2439 + $0x318c] sm:$0xff]
                  %3408 = vst [vmem:[%s2440 + $0x78c] sm:$0xff] %v3407
                  %v3409 = vld [vmem:[%s2439 + $0x3190] sm:$0xff]
                  %3410 = vst [vmem:[%s2440 + $0x790] sm:$0xff] %v3409
                  %v3411 = vld [vmem:[%s2439 + $0x3194] sm:$0xff]
                  %3412 = vst [vmem:[%s2440 + $0x794] sm:$0xff] %v3411
                  %v3413 = vld [vmem:[%s2439 + $0x3198] sm:$0xff]
                  %3414 = vst [vmem:[%s2440 + $0x798] sm:$0xff] %v3413
                  %v3415 = vld [vmem:[%s2439 + $0x319c] sm:$0xff]
                  %3416 = vst [vmem:[%s2440 + $0x79c] sm:$0xff] %v3415
                  %v3417 = vld [vmem:[%s2439 + $0x31a0] sm:$0xff]
                  %3418 = vst [vmem:[%s2440 + $0x7a0] sm:$0xff] %v3417
                  %v3419 = vld [vmem:[%s2439 + $0x31a4] sm:$0xff]
                  %3420 = vst [vmem:[%s2440 + $0x7a4] sm:$0xff] %v3419
                  %v3421 = vld [vmem:[%s2439 + $0x31a8] sm:$0xff]
                  %3422 = vst [vmem:[%s2440 + $0x7a8] sm:$0xff] %v3421
                  %v3423 = vld [vmem:[%s2439 + $0x31ac] sm:$0xff]
                  %3424 = vst [vmem:[%s2440 + $0x7ac] sm:$0xff] %v3423
                  %v3425 = vld [vmem:[%s2439 + $0x31b0] sm:$0xff]
                  %3426 = vst [vmem:[%s2440 + $0x7b0] sm:$0xff] %v3425
                  %v3427 = vld [vmem:[%s2439 + $0x31b4] sm:$0xff]
                  %3428 = vst [vmem:[%s2440 + $0x7b4] sm:$0xff] %v3427
                  %v3429 = vld [vmem:[%s2439 + $0x31b8] sm:$0xff]
                  %3430 = vst [vmem:[%s2440 + $0x7b8] sm:$0xff] %v3429
                  %v3431 = vld [vmem:[%s2439 + $0x31bc] sm:$0xff]
                  %3432 = vst [vmem:[%s2440 + $0x7bc] sm:$0xff] %v3431
                  %v3433 = vld [vmem:[%s2439 + $0x31c0] sm:$0xff]
                  %3434 = vst [vmem:[%s2440 + $0x7c0] sm:$0xff] %v3433
                  %v3435 = vld [vmem:[%s2439 + $0x31c4] sm:$0xff]
                  %3436 = vst [vmem:[%s2440 + $0x7c4] sm:$0xff] %v3435
                  %v3437 = vld [vmem:[%s2439 + $0x31c8] sm:$0xff]
                  %3438 = vst [vmem:[%s2440 + $0x7c8] sm:$0xff] %v3437
                  %v3439 = vld [vmem:[%s2439 + $0x31cc] sm:$0xff]
                  %3440 = vst [vmem:[%s2440 + $0x7cc] sm:$0xff] %v3439
                  %v3441 = vld [vmem:[%s2439 + $0x31d0] sm:$0xff]
                  %3442 = vst [vmem:[%s2440 + $0x7d0] sm:$0xff] %v3441
                  %v3443 = vld [vmem:[%s2439 + $0x31d4] sm:$0xff]
                  %3444 = vst [vmem:[%s2440 + $0x7d4] sm:$0xff] %v3443
                  %v3445 = vld [vmem:[%s2439 + $0x31d8] sm:$0xff]
                  %3446 = vst [vmem:[%s2440 + $0x7d8] sm:$0xff] %v3445
                  %v3447 = vld [vmem:[%s2439 + $0x31dc] sm:$0xff]
                  %3448 = vst [vmem:[%s2440 + $0x7dc] sm:$0xff] %v3447
                  %v3449 = vld [vmem:[%s2439 + $0x31e0] sm:$0xff]
                  %3450 = vst [vmem:[%s2440 + $0x7e0] sm:$0xff] %v3449
                  %v3451 = vld [vmem:[%s2439 + $0x31e4] sm:$0xff]
                  %3452 = vst [vmem:[%s2440 + $0x7e4] sm:$0xff] %v3451
                  %v3453 = vld [vmem:[%s2439 + $0x31e8] sm:$0xff]
                  %3454 = vst [vmem:[%s2440 + $0x7e8] sm:$0xff] %v3453
                  %v3455 = vld [vmem:[%s2439 + $0x31ec] sm:$0xff]
                  %3456 = vst [vmem:[%s2440 + $0x7ec] sm:$0xff] %v3455
                  %v3457 = vld [vmem:[%s2439 + $0x31f0] sm:$0xff]
                  %3458 = vst [vmem:[%s2440 + $0x7f0] sm:$0xff] %v3457
                  %v3459 = vld [vmem:[%s2439 + $0x31f4] sm:$0xff]
                  %3460 = vst [vmem:[%s2440 + $0x7f4] sm:$0xff] %v3459
                  %v3461 = vld [vmem:[%s2439 + $0x31f8] sm:$0xff]
                  %3462 = vst [vmem:[%s2440 + $0x7f8] sm:$0xff] %v3461
                  %v3463 = vld [vmem:[%s2439 + $0x31fc] sm:$0xff]
                  %3464 = vst [vmem:[%s2440 + $0x7fc] sm:$0xff] %v3463
                  %v3465 = vld [vmem:[%s2439 + $0x3800] sm:$0xff]
                  %3466 = vst [vmem:[%s2440 + $0x800] sm:$0xff] %v3465
                  %v3467 = vld [vmem:[%s2439 + $0x3804] sm:$0xff]
                  %3468 = vst [vmem:[%s2440 + $0x804] sm:$0xff] %v3467
                  %v3469 = vld [vmem:[%s2439 + $0x3808] sm:$0xff]
                  %3470 = vst [vmem:[%s2440 + $0x808] sm:$0xff] %v3469
                  %v3471 = vld [vmem:[%s2439 + $0x380c] sm:$0xff]
                  %3472 = vst [vmem:[%s2440 + $0x80c] sm:$0xff] %v3471
                  %v3473 = vld [vmem:[%s2439 + $0x3810] sm:$0xff]
                  %3474 = vst [vmem:[%s2440 + $0x810] sm:$0xff] %v3473
                  %v3475 = vld [vmem:[%s2439 + $0x3814] sm:$0xff]
                  %3476 = vst [vmem:[%s2440 + $0x814] sm:$0xff] %v3475
                  %v3477 = vld [vmem:[%s2439 + $0x3818] sm:$0xff]
                  %3478 = vst [vmem:[%s2440 + $0x818] sm:$0xff] %v3477
                  %v3479 = vld [vmem:[%s2439 + $0x381c] sm:$0xff]
                  %3480 = vst [vmem:[%s2440 + $0x81c] sm:$0xff] %v3479
                  %v3481 = vld [vmem:[%s2439 + $0x3820] sm:$0xff]
                  %3482 = vst [vmem:[%s2440 + $0x820] sm:$0xff] %v3481
                  %v3483 = vld [vmem:[%s2439 + $0x3824] sm:$0xff]
                  %3484 = vst [vmem:[%s2440 + $0x824] sm:$0xff] %v3483
                  %v3485 = vld [vmem:[%s2439 + $0x3828] sm:$0xff]
                  %3486 = vst [vmem:[%s2440 + $0x828] sm:$0xff] %v3485
                  %v3487 = vld [vmem:[%s2439 + $0x382c] sm:$0xff]
                  %3488 = vst [vmem:[%s2440 + $0x82c] sm:$0xff] %v3487
                  %v3489 = vld [vmem:[%s2439 + $0x3830] sm:$0xff]
                  %3490 = vst [vmem:[%s2440 + $0x830] sm:$0xff] %v3489
                  %v3491 = vld [vmem:[%s2439 + $0x3834] sm:$0xff]
                  %3492 = vst [vmem:[%s2440 + $0x834] sm:$0xff] %v3491
                  %v3493 = vld [vmem:[%s2439 + $0x3838] sm:$0xff]
                  %3494 = vst [vmem:[%s2440 + $0x838] sm:$0xff] %v3493
                  %v3495 = vld [vmem:[%s2439 + $0x383c] sm:$0xff]
                  %3496 = vst [vmem:[%s2440 + $0x83c] sm:$0xff] %v3495
                  %v3497 = vld [vmem:[%s2439 + $0x3840] sm:$0xff]
                  %3498 = vst [vmem:[%s2440 + $0x840] sm:$0xff] %v3497
                  %v3499 = vld [vmem:[%s2439 + $0x3844] sm:$0xff]
                  %3500 = vst [vmem:[%s2440 + $0x844] sm:$0xff] %v3499
                  %v3501 = vld [vmem:[%s2439 + $0x3848] sm:$0xff]
                  %3502 = vst [vmem:[%s2440 + $0x848] sm:$0xff] %v3501
                  %v3503 = vld [vmem:[%s2439 + $0x384c] sm:$0xff]
                  %3504 = vst [vmem:[%s2440 + $0x84c] sm:$0xff] %v3503
                  %v3505 = vld [vmem:[%s2439 + $0x3850] sm:$0xff]
                  %3506 = vst [vmem:[%s2440 + $0x850] sm:$0xff] %v3505
                  %v3507 = vld [vmem:[%s2439 + $0x3854] sm:$0xff]
                  %3508 = vst [vmem:[%s2440 + $0x854] sm:$0xff] %v3507
                  %v3509 = vld [vmem:[%s2439 + $0x3858] sm:$0xff]
                  %3510 = vst [vmem:[%s2440 + $0x858] sm:$0xff] %v3509
                  %v3511 = vld [vmem:[%s2439 + $0x385c] sm:$0xff]
                  %3512 = vst [vmem:[%s2440 + $0x85c] sm:$0xff] %v3511
                  %v3513 = vld [vmem:[%s2439 + $0x3860] sm:$0xff]
                  %3514 = vst [vmem:[%s2440 + $0x860] sm:$0xff] %v3513
                  %v3515 = vld [vmem:[%s2439 + $0x3864] sm:$0xff]
                  %3516 = vst [vmem:[%s2440 + $0x864] sm:$0xff] %v3515
                  %v3517 = vld [vmem:[%s2439 + $0x3868] sm:$0xff]
                  %3518 = vst [vmem:[%s2440 + $0x868] sm:$0xff] %v3517
                  %v3519 = vld [vmem:[%s2439 + $0x386c] sm:$0xff]
                  %3520 = vst [vmem:[%s2440 + $0x86c] sm:$0xff] %v3519
                  %v3521 = vld [vmem:[%s2439 + $0x3870] sm:$0xff]
                  %3522 = vst [vmem:[%s2440 + $0x870] sm:$0xff] %v3521
                  %v3523 = vld [vmem:[%s2439 + $0x3874] sm:$0xff]
                  %3524 = vst [vmem:[%s2440 + $0x874] sm:$0xff] %v3523
                  %v3525 = vld [vmem:[%s2439 + $0x3878] sm:$0xff]
                  %3526 = vst [vmem:[%s2440 + $0x878] sm:$0xff] %v3525
                  %v3527 = vld [vmem:[%s2439 + $0x387c] sm:$0xff]
                  %3528 = vst [vmem:[%s2440 + $0x87c] sm:$0xff] %v3527
                  %v3529 = vld [vmem:[%s2439 + $0x3880] sm:$0xff]
                  %3530 = vst [vmem:[%s2440 + $0x880] sm:$0xff] %v3529
                  %v3531 = vld [vmem:[%s2439 + $0x3884] sm:$0xff]
                  %3532 = vst [vmem:[%s2440 + $0x884] sm:$0xff] %v3531
                  %v3533 = vld [vmem:[%s2439 + $0x3888] sm:$0xff]
                  %3534 = vst [vmem:[%s2440 + $0x888] sm:$0xff] %v3533
                  %v3535 = vld [vmem:[%s2439 + $0x388c] sm:$0xff]
                  %3536 = vst [vmem:[%s2440 + $0x88c] sm:$0xff] %v3535
                  %v3537 = vld [vmem:[%s2439 + $0x3890] sm:$0xff]
                  %3538 = vst [vmem:[%s2440 + $0x890] sm:$0xff] %v3537
                  %v3539 = vld [vmem:[%s2439 + $0x3894] sm:$0xff]
                  %3540 = vst [vmem:[%s2440 + $0x894] sm:$0xff] %v3539
                  %v3541 = vld [vmem:[%s2439 + $0x3898] sm:$0xff]
                  %3542 = vst [vmem:[%s2440 + $0x898] sm:$0xff] %v3541
                  %v3543 = vld [vmem:[%s2439 + $0x389c] sm:$0xff]
                  %3544 = vst [vmem:[%s2440 + $0x89c] sm:$0xff] %v3543
                  %v3545 = vld [vmem:[%s2439 + $0x38a0] sm:$0xff]
                  %3546 = vst [vmem:[%s2440 + $0x8a0] sm:$0xff] %v3545
                  %v3547 = vld [vmem:[%s2439 + $0x38a4] sm:$0xff]
                  %3548 = vst [vmem:[%s2440 + $0x8a4] sm:$0xff] %v3547
                  %v3549 = vld [vmem:[%s2439 + $0x38a8] sm:$0xff]
                  %3550 = vst [vmem:[%s2440 + $0x8a8] sm:$0xff] %v3549
                  %v3551 = vld [vmem:[%s2439 + $0x38ac] sm:$0xff]
                  %3552 = vst [vmem:[%s2440 + $0x8ac] sm:$0xff] %v3551
                  %v3553 = vld [vmem:[%s2439 + $0x38b0] sm:$0xff]
                  %3554 = vst [vmem:[%s2440 + $0x8b0] sm:$0xff] %v3553
                  %v3555 = vld [vmem:[%s2439 + $0x38b4] sm:$0xff]
                  %3556 = vst [vmem:[%s2440 + $0x8b4] sm:$0xff] %v3555
                  %v3557 = vld [vmem:[%s2439 + $0x38b8] sm:$0xff]
                  %3558 = vst [vmem:[%s2440 + $0x8b8] sm:$0xff] %v3557
                  %v3559 = vld [vmem:[%s2439 + $0x38bc] sm:$0xff]
                  %3560 = vst [vmem:[%s2440 + $0x8bc] sm:$0xff] %v3559
                  %v3561 = vld [vmem:[%s2439 + $0x38c0] sm:$0xff]
                  %3562 = vst [vmem:[%s2440 + $0x8c0] sm:$0xff] %v3561
                  %v3563 = vld [vmem:[%s2439 + $0x38c4] sm:$0xff]
                  %3564 = vst [vmem:[%s2440 + $0x8c4] sm:$0xff] %v3563
                  %v3565 = vld [vmem:[%s2439 + $0x38c8] sm:$0xff]
                  %3566 = vst [vmem:[%s2440 + $0x8c8] sm:$0xff] %v3565
                  %v3567 = vld [vmem:[%s2439 + $0x38cc] sm:$0xff]
                  %3568 = vst [vmem:[%s2440 + $0x8cc] sm:$0xff] %v3567
                  %v3569 = vld [vmem:[%s2439 + $0x38d0] sm:$0xff]
                  %3570 = vst [vmem:[%s2440 + $0x8d0] sm:$0xff] %v3569
                  %v3571 = vld [vmem:[%s2439 + $0x38d4] sm:$0xff]
                  %3572 = vst [vmem:[%s2440 + $0x8d4] sm:$0xff] %v3571
                  %v3573 = vld [vmem:[%s2439 + $0x38d8] sm:$0xff]
                  %3574 = vst [vmem:[%s2440 + $0x8d8] sm:$0xff] %v3573
                  %v3575 = vld [vmem:[%s2439 + $0x38dc] sm:$0xff]
                  %3576 = vst [vmem:[%s2440 + $0x8dc] sm:$0xff] %v3575
                  %v3577 = vld [vmem:[%s2439 + $0x38e0] sm:$0xff]
                  %3578 = vst [vmem:[%s2440 + $0x8e0] sm:$0xff] %v3577
                  %v3579 = vld [vmem:[%s2439 + $0x38e4] sm:$0xff]
                  %3580 = vst [vmem:[%s2440 + $0x8e4] sm:$0xff] %v3579
                  %v3581 = vld [vmem:[%s2439 + $0x38e8] sm:$0xff]
                  %3582 = vst [vmem:[%s2440 + $0x8e8] sm:$0xff] %v3581
                  %v3583 = vld [vmem:[%s2439 + $0x38ec] sm:$0xff]
                  %3584 = vst [vmem:[%s2440 + $0x8ec] sm:$0xff] %v3583
                  %v3585 = vld [vmem:[%s2439 + $0x38f0] sm:$0xff]
                  %3586 = vst [vmem:[%s2440 + $0x8f0] sm:$0xff] %v3585
                  %v3587 = vld [vmem:[%s2439 + $0x38f4] sm:$0xff]
                  %3588 = vst [vmem:[%s2440 + $0x8f4] sm:$0xff] %v3587
                  %v3589 = vld [vmem:[%s2439 + $0x38f8] sm:$0xff]
                  %3590 = vst [vmem:[%s2440 + $0x8f8] sm:$0xff] %v3589
                  %v3591 = vld [vmem:[%s2439 + $0x38fc] sm:$0xff]
                  %3592 = vst [vmem:[%s2440 + $0x8fc] sm:$0xff] %v3591
                  %s3593 = sadd.s32 1, %s2438
                  %p3594 = scmp.ge.s32.totalorder %s3593, 0
                  %s3595 = scalar_select %p3594, 0, %s3593
                  %s3596 = smul.u32 %s3595, 8
                  %s3597 = smul.u32 %s3595, 8
                  %s3598 = scalar_lea.vmem %s87, %s3596
                  %s3599 = scalar_lea.vmem %s84, %s3597 [#allocation2]
                $region59: #{_stem.3} parent=53 // loop_footer
                  %s2437 = sadd.s32 1, %s2433
                $region60: #{_stem.3} parent=53 // loop_footer_branch
                  %2432 = sbr.rel target = $region56
                $region61: #{_stem.3} parent=53 // loop_exit
                  _
                %s3601 = ssub.s32 16, 1
                loop: start=0, step=1, limit=1
                $region62: #{_stem.3} parent=53 // loop_pre_header
                  _
                $region63: #{_stem.3} parent=53 // loop_header
                  %s3603 = sphi 0, %s3607
                  %p3604 = scmp.ge.s32.totalorder %s3603, 1
                  %s3608 = sphi %s87, %s87
                  %s3609 = sphi %s84, %s84
                $region64: #{_stem.3} parent=53 // loop_header_branch
                  %3606 = sbr.rel (%p3604) target = $region68
                $region65: #{_stem.3} parent=53 // loop_body
                  %v3610 = vld [vmem:[%s3608] sm:%s3601]
                  %3611 = vst [vmem:[%s3609] sm:%s3601] %v3610
                  %v3612 = vld [vmem:[%s3608 + $0x4] sm:%s3601]
                  %3613 = vst [vmem:[%s3609 + $0x4] sm:%s3601] %v3612
                  %v3614 = vld [vmem:[%s3608 + $0x8] sm:%s3601]
                  %3615 = vst [vmem:[%s3609 + $0x8] sm:%s3601] %v3614
                  %v3616 = vld [vmem:[%s3608 + $0xc] sm:%s3601]
                  %3617 = vst [vmem:[%s3609 + $0xc] sm:%s3601] %v3616
                  %v3618 = vld [vmem:[%s3608 + $0x10] sm:%s3601]
                  %3619 = vst [vmem:[%s3609 + $0x10] sm:%s3601] %v3618
                  %v3620 = vld [vmem:[%s3608 + $0x14] sm:%s3601]
                  %3621 = vst [vmem:[%s3609 + $0x14] sm:%s3601] %v3620
                  %v3622 = vld [vmem:[%s3608 + $0x18] sm:%s3601]
                  %3623 = vst [vmem:[%s3609 + $0x18] sm:%s3601] %v3622
                  %v3624 = vld [vmem:[%s3608 + $0x1c] sm:%s3601]
                  %3625 = vst [vmem:[%s3609 + $0x1c] sm:%s3601] %v3624
                  %v3626 = vld [vmem:[%s3608 + $0x20] sm:%s3601]
                  %3627 = vst [vmem:[%s3609 + $0x20] sm:%s3601] %v3626
                  %v3628 = vld [vmem:[%s3608 + $0x24] sm:%s3601]
                  %3629 = vst [vmem:[%s3609 + $0x24] sm:%s3601] %v3628
                  %v3630 = vld [vmem:[%s3608 + $0x28] sm:%s3601]
                  %3631 = vst [vmem:[%s3609 + $0x28] sm:%s3601] %v3630
                  %v3632 = vld [vmem:[%s3608 + $0x2c] sm:%s3601]
                  %3633 = vst [vmem:[%s3609 + $0x2c] sm:%s3601] %v3632
                  %v3634 = vld [vmem:[%s3608 + $0x30] sm:%s3601]
                  %3635 = vst [vmem:[%s3609 + $0x30] sm:%s3601] %v3634
                  %v3636 = vld [vmem:[%s3608 + $0x34] sm:%s3601]
                  %3637 = vst [vmem:[%s3609 + $0x34] sm:%s3601] %v3636
                  %v3638 = vld [vmem:[%s3608 + $0x38] sm:%s3601]
                  %3639 = vst [vmem:[%s3609 + $0x38] sm:%s3601] %v3638
                  %v3640 = vld [vmem:[%s3608 + $0x3c] sm:%s3601]
                  %3641 = vst [vmem:[%s3609 + $0x3c] sm:%s3601] %v3640
                  %v3642 = vld [vmem:[%s3608 + $0x40] sm:%s3601]
                  %3643 = vst [vmem:[%s3609 + $0x40] sm:%s3601] %v3642
                  %v3644 = vld [vmem:[%s3608 + $0x44] sm:%s3601]
                  %3645 = vst [vmem:[%s3609 + $0x44] sm:%s3601] %v3644
                  %v3646 = vld [vmem:[%s3608 + $0x48] sm:%s3601]
                  %3647 = vst [vmem:[%s3609 + $0x48] sm:%s3601] %v3646
                  %v3648 = vld [vmem:[%s3608 + $0x4c] sm:%s3601]
                  %3649 = vst [vmem:[%s3609 + $0x4c] sm:%s3601] %v3648
                  %v3650 = vld [vmem:[%s3608 + $0x50] sm:%s3601]
                  %3651 = vst [vmem:[%s3609 + $0x50] sm:%s3601] %v3650
                  %v3652 = vld [vmem:[%s3608 + $0x54] sm:%s3601]
                  %3653 = vst [vmem:[%s3609 + $0x54] sm:%s3601] %v3652
                  %v3654 = vld [vmem:[%s3608 + $0x58] sm:%s3601]
                  %3655 = vst [vmem:[%s3609 + $0x58] sm:%s3601] %v3654
                  %v3656 = vld [vmem:[%s3608 + $0x5c] sm:%s3601]
                  %3657 = vst [vmem:[%s3609 + $0x5c] sm:%s3601] %v3656
                  %v3658 = vld [vmem:[%s3608 + $0x60] sm:%s3601]
                  %3659 = vst [vmem:[%s3609 + $0x60] sm:%s3601] %v3658
                  %v3660 = vld [vmem:[%s3608 + $0x64] sm:%s3601]
                  %3661 = vst [vmem:[%s3609 + $0x64] sm:%s3601] %v3660
                  %v3662 = vld [vmem:[%s3608 + $0x68] sm:%s3601]
                  %3663 = vst [vmem:[%s3609 + $0x68] sm:%s3601] %v3662
                  %v3664 = vld [vmem:[%s3608 + $0x6c] sm:%s3601]
                  %3665 = vst [vmem:[%s3609 + $0x6c] sm:%s3601] %v3664
                  %v3666 = vld [vmem:[%s3608 + $0x70] sm:%s3601]
                  %3667 = vst [vmem:[%s3609 + $0x70] sm:%s3601] %v3666
                  %v3668 = vld [vmem:[%s3608 + $0x74] sm:%s3601]
                  %3669 = vst [vmem:[%s3609 + $0x74] sm:%s3601] %v3668
                  %v3670 = vld [vmem:[%s3608 + $0x78] sm:%s3601]
                  %3671 = vst [vmem:[%s3609 + $0x78] sm:%s3601] %v3670
                  %v3672 = vld [vmem:[%s3608 + $0x7c] sm:%s3601]
                  %3673 = vst [vmem:[%s3609 + $0x7c] sm:%s3601] %v3672
                  %v3674 = vld [vmem:[%s3608 + $0x80] sm:%s3601]
                  %3675 = vst [vmem:[%s3609 + $0x80] sm:%s3601] %v3674
                  %v3676 = vld [vmem:[%s3608 + $0x84] sm:%s3601]
                  %3677 = vst [vmem:[%s3609 + $0x84] sm:%s3601] %v3676
                  %v3678 = vld [vmem:[%s3608 + $0x88] sm:%s3601]
                  %3679 = vst [vmem:[%s3609 + $0x88] sm:%s3601] %v3678
                  %v3680 = vld [vmem:[%s3608 + $0x8c] sm:%s3601]
                  %3681 = vst [vmem:[%s3609 + $0x8c] sm:%s3601] %v3680
                  %v3682 = vld [vmem:[%s3608 + $0x90] sm:%s3601]
                  %3683 = vst [vmem:[%s3609 + $0x90] sm:%s3601] %v3682
                  %v3684 = vld [vmem:[%s3608 + $0x94] sm:%s3601]
                  %3685 = vst [vmem:[%s3609 + $0x94] sm:%s3601] %v3684
                  %v3686 = vld [vmem:[%s3608 + $0x98] sm:%s3601]
                  %3687 = vst [vmem:[%s3609 + $0x98] sm:%s3601] %v3686
                  %v3688 = vld [vmem:[%s3608 + $0x9c] sm:%s3601]
                  %3689 = vst [vmem:[%s3609 + $0x9c] sm:%s3601] %v3688
                  %v3690 = vld [vmem:[%s3608 + $0xa0] sm:%s3601]
                  %3691 = vst [vmem:[%s3609 + $0xa0] sm:%s3601] %v3690
                  %v3692 = vld [vmem:[%s3608 + $0xa4] sm:%s3601]
                  %3693 = vst [vmem:[%s3609 + $0xa4] sm:%s3601] %v3692
                  %v3694 = vld [vmem:[%s3608 + $0xa8] sm:%s3601]
                  %3695 = vst [vmem:[%s3609 + $0xa8] sm:%s3601] %v3694
                  %v3696 = vld [vmem:[%s3608 + $0xac] sm:%s3601]
                  %3697 = vst [vmem:[%s3609 + $0xac] sm:%s3601] %v3696
                  %v3698 = vld [vmem:[%s3608 + $0xb0] sm:%s3601]
                  %3699 = vst [vmem:[%s3609 + $0xb0] sm:%s3601] %v3698
                  %v3700 = vld [vmem:[%s3608 + $0xb4] sm:%s3601]
                  %3701 = vst [vmem:[%s3609 + $0xb4] sm:%s3601] %v3700
                  %v3702 = vld [vmem:[%s3608 + $0xb8] sm:%s3601]
                  %3703 = vst [vmem:[%s3609 + $0xb8] sm:%s3601] %v3702
                  %v3704 = vld [vmem:[%s3608 + $0xbc] sm:%s3601]
                  %3705 = vst [vmem:[%s3609 + $0xbc] sm:%s3601] %v3704
                  %v3706 = vld [vmem:[%s3608 + $0xc0] sm:%s3601]
                  %3707 = vst [vmem:[%s3609 + $0xc0] sm:%s3601] %v3706
                  %v3708 = vld [vmem:[%s3608 + $0xc4] sm:%s3601]
                  %3709 = vst [vmem:[%s3609 + $0xc4] sm:%s3601] %v3708
                  %v3710 = vld [vmem:[%s3608 + $0xc8] sm:%s3601]
                  %3711 = vst [vmem:[%s3609 + $0xc8] sm:%s3601] %v3710
                  %v3712 = vld [vmem:[%s3608 + $0xcc] sm:%s3601]
                  %3713 = vst [vmem:[%s3609 + $0xcc] sm:%s3601] %v3712
                  %v3714 = vld [vmem:[%s3608 + $0xd0] sm:%s3601]
                  %3715 = vst [vmem:[%s3609 + $0xd0] sm:%s3601] %v3714
                  %v3716 = vld [vmem:[%s3608 + $0xd4] sm:%s3601]
                  %3717 = vst [vmem:[%s3609 + $0xd4] sm:%s3601] %v3716
                  %v3718 = vld [vmem:[%s3608 + $0xd8] sm:%s3601]
                  %3719 = vst [vmem:[%s3609 + $0xd8] sm:%s3601] %v3718
                  %v3720 = vld [vmem:[%s3608 + $0xdc] sm:%s3601]
                  %3721 = vst [vmem:[%s3609 + $0xdc] sm:%s3601] %v3720
                  %v3722 = vld [vmem:[%s3608 + $0xe0] sm:%s3601]
                  %3723 = vst [vmem:[%s3609 + $0xe0] sm:%s3601] %v3722
                  %v3724 = vld [vmem:[%s3608 + $0xe4] sm:%s3601]
                  %3725 = vst [vmem:[%s3609 + $0xe4] sm:%s3601] %v3724
                  %v3726 = vld [vmem:[%s3608 + $0xe8] sm:%s3601]
                  %3727 = vst [vmem:[%s3609 + $0xe8] sm:%s3601] %v3726
                  %v3728 = vld [vmem:[%s3608 + $0xec] sm:%s3601]
                  %3729 = vst [vmem:[%s3609 + $0xec] sm:%s3601] %v3728
                  %v3730 = vld [vmem:[%s3608 + $0xf0] sm:%s3601]
                  %3731 = vst [vmem:[%s3609 + $0xf0] sm:%s3601] %v3730
                  %v3732 = vld [vmem:[%s3608 + $0xf4] sm:%s3601]
                  %3733 = vst [vmem:[%s3609 + $0xf4] sm:%s3601] %v3732
                  %v3734 = vld [vmem:[%s3608 + $0xf8] sm:%s3601]
                  %3735 = vst [vmem:[%s3609 + $0xf8] sm:%s3601] %v3734
                  %v3736 = vld [vmem:[%s3608 + $0xfc] sm:%s3601]
                  %3737 = vst [vmem:[%s3609 + $0xfc] sm:%s3601] %v3736
                  %v3738 = vld [vmem:[%s3608 + $0x700] sm:%s3601]
                  %3739 = vst [vmem:[%s3609 + $0x100] sm:%s3601] %v3738
                  %v3740 = vld [vmem:[%s3608 + $0x704] sm:%s3601]
                  %3741 = vst [vmem:[%s3609 + $0x104] sm:%s3601] %v3740
                  %v3742 = vld [vmem:[%s3608 + $0x708] sm:%s3601]
                  %3743 = vst [vmem:[%s3609 + $0x108] sm:%s3601] %v3742
                  %v3744 = vld [vmem:[%s3608 + $0x70c] sm:%s3601]
                  %3745 = vst [vmem:[%s3609 + $0x10c] sm:%s3601] %v3744
                  %v3746 = vld [vmem:[%s3608 + $0x710] sm:%s3601]
                  %3747 = vst [vmem:[%s3609 + $0x110] sm:%s3601] %v3746
                  %v3748 = vld [vmem:[%s3608 + $0x714] sm:%s3601]
                  %3749 = vst [vmem:[%s3609 + $0x114] sm:%s3601] %v3748
                  %v3750 = vld [vmem:[%s3608 + $0x718] sm:%s3601]
                  %3751 = vst [vmem:[%s3609 + $0x118] sm:%s3601] %v3750
                  %v3752 = vld [vmem:[%s3608 + $0x71c] sm:%s3601]
                  %3753 = vst [vmem:[%s3609 + $0x11c] sm:%s3601] %v3752
                  %v3754 = vld [vmem:[%s3608 + $0x720] sm:%s3601]
                  %3755 = vst [vmem:[%s3609 + $0x120] sm:%s3601] %v3754
                  %v3756 = vld [vmem:[%s3608 + $0x724] sm:%s3601]
                  %3757 = vst [vmem:[%s3609 + $0x124] sm:%s3601] %v3756
                  %v3758 = vld [vmem:[%s3608 + $0x728] sm:%s3601]
                  %3759 = vst [vmem:[%s3609 + $0x128] sm:%s3601] %v3758
                  %v3760 = vld [vmem:[%s3608 + $0x72c] sm:%s3601]
                  %3761 = vst [vmem:[%s3609 + $0x12c] sm:%s3601] %v3760
                  %v3762 = vld [vmem:[%s3608 + $0x730] sm:%s3601]
                  %3763 = vst [vmem:[%s3609 + $0x130] sm:%s3601] %v3762
                  %v3764 = vld [vmem:[%s3608 + $0x734] sm:%s3601]
                  %3765 = vst [vmem:[%s3609 + $0x134] sm:%s3601] %v3764
                  %v3766 = vld [vmem:[%s3608 + $0x738] sm:%s3601]
                  %3767 = vst [vmem:[%s3609 + $0x138] sm:%s3601] %v3766
                  %v3768 = vld [vmem:[%s3608 + $0x73c] sm:%s3601]
                  %3769 = vst [vmem:[%s3609 + $0x13c] sm:%s3601] %v3768
                  %v3770 = vld [vmem:[%s3608 + $0x740] sm:%s3601]
                  %3771 = vst [vmem:[%s3609 + $0x140] sm:%s3601] %v3770
                  %v3772 = vld [vmem:[%s3608 + $0x744] sm:%s3601]
                  %3773 = vst [vmem:[%s3609 + $0x144] sm:%s3601] %v3772
                  %v3774 = vld [vmem:[%s3608 + $0x748] sm:%s3601]
                  %3775 = vst [vmem:[%s3609 + $0x148] sm:%s3601] %v3774
                  %v3776 = vld [vmem:[%s3608 + $0x74c] sm:%s3601]
                  %3777 = vst [vmem:[%s3609 + $0x14c] sm:%s3601] %v3776
                  %v3778 = vld [vmem:[%s3608 + $0x750] sm:%s3601]
                  %3779 = vst [vmem:[%s3609 + $0x150] sm:%s3601] %v3778
                  %v3780 = vld [vmem:[%s3608 + $0x754] sm:%s3601]
                  %3781 = vst [vmem:[%s3609 + $0x154] sm:%s3601] %v3780
                  %v3782 = vld [vmem:[%s3608 + $0x758] sm:%s3601]
                  %3783 = vst [vmem:[%s3609 + $0x158] sm:%s3601] %v3782
                  %v3784 = vld [vmem:[%s3608 + $0x75c] sm:%s3601]
                  %3785 = vst [vmem:[%s3609 + $0x15c] sm:%s3601] %v3784
                  %v3786 = vld [vmem:[%s3608 + $0x760] sm:%s3601]
                  %3787 = vst [vmem:[%s3609 + $0x160] sm:%s3601] %v3786
                  %v3788 = vld [vmem:[%s3608 + $0x764] sm:%s3601]
                  %3789 = vst [vmem:[%s3609 + $0x164] sm:%s3601] %v3788
                  %v3790 = vld [vmem:[%s3608 + $0x768] sm:%s3601]
                  %3791 = vst [vmem:[%s3609 + $0x168] sm:%s3601] %v3790
                  %v3792 = vld [vmem:[%s3608 + $0x76c] sm:%s3601]
                  %3793 = vst [vmem:[%s3609 + $0x16c] sm:%s3601] %v3792
                  %v3794 = vld [vmem:[%s3608 + $0x770] sm:%s3601]
                  %3795 = vst [vmem:[%s3609 + $0x170] sm:%s3601] %v3794
                  %v3796 = vld [vmem:[%s3608 + $0x774] sm:%s3601]
                  %3797 = vst [vmem:[%s3609 + $0x174] sm:%s3601] %v3796
                  %v3798 = vld [vmem:[%s3608 + $0x778] sm:%s3601]
                  %3799 = vst [vmem:[%s3609 + $0x178] sm:%s3601] %v3798
                  %v3800 = vld [vmem:[%s3608 + $0x77c] sm:%s3601]
                  %3801 = vst [vmem:[%s3609 + $0x17c] sm:%s3601] %v3800
                  %v3802 = vld [vmem:[%s3608 + $0x780] sm:%s3601]
                  %3803 = vst [vmem:[%s3609 + $0x180] sm:%s3601] %v3802
                  %v3804 = vld [vmem:[%s3608 + $0x784] sm:%s3601]
                  %3805 = vst [vmem:[%s3609 + $0x184] sm:%s3601] %v3804
                  %v3806 = vld [vmem:[%s3608 + $0x788] sm:%s3601]
                  %3807 = vst [vmem:[%s3609 + $0x188] sm:%s3601] %v3806
                  %v3808 = vld [vmem:[%s3608 + $0x78c] sm:%s3601]
                  %3809 = vst [vmem:[%s3609 + $0x18c] sm:%s3601] %v3808
                  %v3810 = vld [vmem:[%s3608 + $0x790] sm:%s3601]
                  %3811 = vst [vmem:[%s3609 + $0x190] sm:%s3601] %v3810
                  %v3812 = vld [vmem:[%s3608 + $0x794] sm:%s3601]
                  %3813 = vst [vmem:[%s3609 + $0x194] sm:%s3601] %v3812
                  %v3814 = vld [vmem:[%s3608 + $0x798] sm:%s3601]
                  %3815 = vst [vmem:[%s3609 + $0x198] sm:%s3601] %v3814
                  %v3816 = vld [vmem:[%s3608 + $0x79c] sm:%s3601]
                  %3817 = vst [vmem:[%s3609 + $0x19c] sm:%s3601] %v3816
                  %v3818 = vld [vmem:[%s3608 + $0x7a0] sm:%s3601]
                  %3819 = vst [vmem:[%s3609 + $0x1a0] sm:%s3601] %v3818
                  %v3820 = vld [vmem:[%s3608 + $0x7a4] sm:%s3601]
                  %3821 = vst [vmem:[%s3609 + $0x1a4] sm:%s3601] %v3820
                  %v3822 = vld [vmem:[%s3608 + $0x7a8] sm:%s3601]
                  %3823 = vst [vmem:[%s3609 + $0x1a8] sm:%s3601] %v3822
                  %v3824 = vld [vmem:[%s3608 + $0x7ac] sm:%s3601]
                  %3825 = vst [vmem:[%s3609 + $0x1ac] sm:%s3601] %v3824
                  %v3826 = vld [vmem:[%s3608 + $0x7b0] sm:%s3601]
                  %3827 = vst [vmem:[%s3609 + $0x1b0] sm:%s3601] %v3826
                  %v3828 = vld [vmem:[%s3608 + $0x7b4] sm:%s3601]
                  %3829 = vst [vmem:[%s3609 + $0x1b4] sm:%s3601] %v3828
                  %v3830 = vld [vmem:[%s3608 + $0x7b8] sm:%s3601]
                  %3831 = vst [vmem:[%s3609 + $0x1b8] sm:%s3601] %v3830
                  %v3832 = vld [vmem:[%s3608 + $0x7bc] sm:%s3601]
                  %3833 = vst [vmem:[%s3609 + $0x1bc] sm:%s3601] %v3832
                  %v3834 = vld [vmem:[%s3608 + $0x7c0] sm:%s3601]
                  %3835 = vst [vmem:[%s3609 + $0x1c0] sm:%s3601] %v3834
                  %v3836 = vld [vmem:[%s3608 + $0x7c4] sm:%s3601]
                  %3837 = vst [vmem:[%s3609 + $0x1c4] sm:%s3601] %v3836
                  %v3838 = vld [vmem:[%s3608 + $0x7c8] sm:%s3601]
                  %3839 = vst [vmem:[%s3609 + $0x1c8] sm:%s3601] %v3838
                  %v3840 = vld [vmem:[%s3608 + $0x7cc] sm:%s3601]
                  %3841 = vst [vmem:[%s3609 + $0x1cc] sm:%s3601] %v3840
                  %v3842 = vld [vmem:[%s3608 + $0x7d0] sm:%s3601]
                  %3843 = vst [vmem:[%s3609 + $0x1d0] sm:%s3601] %v3842
                  %v3844 = vld [vmem:[%s3608 + $0x7d4] sm:%s3601]
                  %3845 = vst [vmem:[%s3609 + $0x1d4] sm:%s3601] %v3844
                  %v3846 = vld [vmem:[%s3608 + $0x7d8] sm:%s3601]
                  %3847 = vst [vmem:[%s3609 + $0x1d8] sm:%s3601] %v3846
                  %v3848 = vld [vmem:[%s3608 + $0x7dc] sm:%s3601]
                  %3849 = vst [vmem:[%s3609 + $0x1dc] sm:%s3601] %v3848
                  %v3850 = vld [vmem:[%s3608 + $0x7e0] sm:%s3601]
                  %3851 = vst [vmem:[%s3609 + $0x1e0] sm:%s3601] %v3850
                  %v3852 = vld [vmem:[%s3608 + $0x7e4] sm:%s3601]
                  %3853 = vst [vmem:[%s3609 + $0x1e4] sm:%s3601] %v3852
                  %v3854 = vld [vmem:[%s3608 + $0x7e8] sm:%s3601]
                  %3855 = vst [vmem:[%s3609 + $0x1e8] sm:%s3601] %v3854
                  %v3856 = vld [vmem:[%s3608 + $0x7ec] sm:%s3601]
                  %3857 = vst [vmem:[%s3609 + $0x1ec] sm:%s3601] %v3856
                  %v3858 = vld [vmem:[%s3608 + $0x7f0] sm:%s3601]
                  %3859 = vst [vmem:[%s3609 + $0x1f0] sm:%s3601] %v3858
                  %v3860 = vld [vmem:[%s3608 + $0x7f4] sm:%s3601]
                  %3861 = vst [vmem:[%s3609 + $0x1f4] sm:%s3601] %v3860
                  %v3862 = vld [vmem:[%s3608 + $0x7f8] sm:%s3601]
                  %3863 = vst [vmem:[%s3609 + $0x1f8] sm:%s3601] %v3862
                  %v3864 = vld [vmem:[%s3608 + $0x7fc] sm:%s3601]
                  %3865 = vst [vmem:[%s3609 + $0x1fc] sm:%s3601] %v3864
                  %v3866 = vld [vmem:[%s3608 + $0xe00] sm:%s3601]
                  %3867 = vst [vmem:[%s3609 + $0x200] sm:%s3601] %v3866
                  %v3868 = vld [vmem:[%s3608 + $0xe04] sm:%s3601]
                  %3869 = vst [vmem:[%s3609 + $0x204] sm:%s3601] %v3868
                  %v3870 = vld [vmem:[%s3608 + $0xe08] sm:%s3601]
                  %3871 = vst [vmem:[%s3609 + $0x208] sm:%s3601] %v3870
                  %v3872 = vld [vmem:[%s3608 + $0xe0c] sm:%s3601]
                  %3873 = vst [vmem:[%s3609 + $0x20c] sm:%s3601] %v3872
                  %v3874 = vld [vmem:[%s3608 + $0xe10] sm:%s3601]
                  %3875 = vst [vmem:[%s3609 + $0x210] sm:%s3601] %v3874
                  %v3876 = vld [vmem:[%s3608 + $0xe14] sm:%s3601]
                  %3877 = vst [vmem:[%s3609 + $0x214] sm:%s3601] %v3876
                  %v3878 = vld [vmem:[%s3608 + $0xe18] sm:%s3601]
                  %3879 = vst [vmem:[%s3609 + $0x218] sm:%s3601] %v3878
                  %v3880 = vld [vmem:[%s3608 + $0xe1c] sm:%s3601]
                  %3881 = vst [vmem:[%s3609 + $0x21c] sm:%s3601] %v3880
                  %v3882 = vld [vmem:[%s3608 + $0xe20] sm:%s3601]
                  %3883 = vst [vmem:[%s3609 + $0x220] sm:%s3601] %v3882
                  %v3884 = vld [vmem:[%s3608 + $0xe24] sm:%s3601]
                  %3885 = vst [vmem:[%s3609 + $0x224] sm:%s3601] %v3884
                  %v3886 = vld [vmem:[%s3608 + $0xe28] sm:%s3601]
                  %3887 = vst [vmem:[%s3609 + $0x228] sm:%s3601] %v3886
                  %v3888 = vld [vmem:[%s3608 + $0xe2c] sm:%s3601]
                  %3889 = vst [vmem:[%s3609 + $0x22c] sm:%s3601] %v3888
                  %v3890 = vld [vmem:[%s3608 + $0xe30] sm:%s3601]
                  %3891 = vst [vmem:[%s3609 + $0x230] sm:%s3601] %v3890
                  %v3892 = vld [vmem:[%s3608 + $0xe34] sm:%s3601]
                  %3893 = vst [vmem:[%s3609 + $0x234] sm:%s3601] %v3892
                  %v3894 = vld [vmem:[%s3608 + $0xe38] sm:%s3601]
                  %3895 = vst [vmem:[%s3609 + $0x238] sm:%s3601] %v3894
                  %v3896 = vld [vmem:[%s3608 + $0xe3c] sm:%s3601]
                  %3897 = vst [vmem:[%s3609 + $0x23c] sm:%s3601] %v3896
                  %v3898 = vld [vmem:[%s3608 + $0xe40] sm:%s3601]
                  %3899 = vst [vmem:[%s3609 + $0x240] sm:%s3601] %v3898
                  %v3900 = vld [vmem:[%s3608 + $0xe44] sm:%s3601]
                  %3901 = vst [vmem:[%s3609 + $0x244] sm:%s3601] %v3900
                  %v3902 = vld [vmem:[%s3608 + $0xe48] sm:%s3601]
                  %3903 = vst [vmem:[%s3609 + $0x248] sm:%s3601] %v3902
                  %v3904 = vld [vmem:[%s3608 + $0xe4c] sm:%s3601]
                  %3905 = vst [vmem:[%s3609 + $0x24c] sm:%s3601] %v3904
                  %v3906 = vld [vmem:[%s3608 + $0xe50] sm:%s3601]
                  %3907 = vst [vmem:[%s3609 + $0x250] sm:%s3601] %v3906
                  %v3908 = vld [vmem:[%s3608 + $0xe54] sm:%s3601]
                  %3909 = vst [vmem:[%s3609 + $0x254] sm:%s3601] %v3908
                  %v3910 = vld [vmem:[%s3608 + $0xe58] sm:%s3601]
                  %3911 = vst [vmem:[%s3609 + $0x258] sm:%s3601] %v3910
                  %v3912 = vld [vmem:[%s3608 + $0xe5c] sm:%s3601]
                  %3913 = vst [vmem:[%s3609 + $0x25c] sm:%s3601] %v3912
                  %v3914 = vld [vmem:[%s3608 + $0xe60] sm:%s3601]
                  %3915 = vst [vmem:[%s3609 + $0x260] sm:%s3601] %v3914
                  %v3916 = vld [vmem:[%s3608 + $0xe64] sm:%s3601]
                  %3917 = vst [vmem:[%s3609 + $0x264] sm:%s3601] %v3916
                  %v3918 = vld [vmem:[%s3608 + $0xe68] sm:%s3601]
                  %3919 = vst [vmem:[%s3609 + $0x268] sm:%s3601] %v3918
                  %v3920 = vld [vmem:[%s3608 + $0xe6c] sm:%s3601]
                  %3921 = vst [vmem:[%s3609 + $0x26c] sm:%s3601] %v3920
                  %v3922 = vld [vmem:[%s3608 + $0xe70] sm:%s3601]
                  %3923 = vst [vmem:[%s3609 + $0x270] sm:%s3601] %v3922
                  %v3924 = vld [vmem:[%s3608 + $0xe74] sm:%s3601]
                  %3925 = vst [vmem:[%s3609 + $0x274] sm:%s3601] %v3924
                  %v3926 = vld [vmem:[%s3608 + $0xe78] sm:%s3601]
                  %3927 = vst [vmem:[%s3609 + $0x278] sm:%s3601] %v3926
                  %v3928 = vld [vmem:[%s3608 + $0xe7c] sm:%s3601]
                  %3929 = vst [vmem:[%s3609 + $0x27c] sm:%s3601] %v3928
                  %v3930 = vld [vmem:[%s3608 + $0xe80] sm:%s3601]
                  %3931 = vst [vmem:[%s3609 + $0x280] sm:%s3601] %v3930
                  %v3932 = vld [vmem:[%s3608 + $0xe84] sm:%s3601]
                  %3933 = vst [vmem:[%s3609 + $0x284] sm:%s3601] %v3932
                  %v3934 = vld [vmem:[%s3608 + $0xe88] sm:%s3601]
                  %3935 = vst [vmem:[%s3609 + $0x288] sm:%s3601] %v3934
                  %v3936 = vld [vmem:[%s3608 + $0xe8c] sm:%s3601]
                  %3937 = vst [vmem:[%s3609 + $0x28c] sm:%s3601] %v3936
                  %v3938 = vld [vmem:[%s3608 + $0xe90] sm:%s3601]
                  %3939 = vst [vmem:[%s3609 + $0x290] sm:%s3601] %v3938
                  %v3940 = vld [vmem:[%s3608 + $0xe94] sm:%s3601]
                  %3941 = vst [vmem:[%s3609 + $0x294] sm:%s3601] %v3940
                  %v3942 = vld [vmem:[%s3608 + $0xe98] sm:%s3601]
                  %3943 = vst [vmem:[%s3609 + $0x298] sm:%s3601] %v3942
                  %v3944 = vld [vmem:[%s3608 + $0xe9c] sm:%s3601]
                  %3945 = vst [vmem:[%s3609 + $0x29c] sm:%s3601] %v3944
                  %v3946 = vld [vmem:[%s3608 + $0xea0] sm:%s3601]
                  %3947 = vst [vmem:[%s3609 + $0x2a0] sm:%s3601] %v3946
                  %v3948 = vld [vmem:[%s3608 + $0xea4] sm:%s3601]
                  %3949 = vst [vmem:[%s3609 + $0x2a4] sm:%s3601] %v3948
                  %v3950 = vld [vmem:[%s3608 + $0xea8] sm:%s3601]
                  %3951 = vst [vmem:[%s3609 + $0x2a8] sm:%s3601] %v3950
                  %v3952 = vld [vmem:[%s3608 + $0xeac] sm:%s3601]
                  %3953 = vst [vmem:[%s3609 + $0x2ac] sm:%s3601] %v3952
                  %v3954 = vld [vmem:[%s3608 + $0xeb0] sm:%s3601]
                  %3955 = vst [vmem:[%s3609 + $0x2b0] sm:%s3601] %v3954
                  %v3956 = vld [vmem:[%s3608 + $0xeb4] sm:%s3601]
                  %3957 = vst [vmem:[%s3609 + $0x2b4] sm:%s3601] %v3956
                  %v3958 = vld [vmem:[%s3608 + $0xeb8] sm:%s3601]
                  %3959 = vst [vmem:[%s3609 + $0x2b8] sm:%s3601] %v3958
                  %v3960 = vld [vmem:[%s3608 + $0xebc] sm:%s3601]
                  %3961 = vst [vmem:[%s3609 + $0x2bc] sm:%s3601] %v3960
                  %v3962 = vld [vmem:[%s3608 + $0xec0] sm:%s3601]
                  %3963 = vst [vmem:[%s3609 + $0x2c0] sm:%s3601] %v3962
                  %v3964 = vld [vmem:[%s3608 + $0xec4] sm:%s3601]
                  %3965 = vst [vmem:[%s3609 + $0x2c4] sm:%s3601] %v3964
                  %v3966 = vld [vmem:[%s3608 + $0xec8] sm:%s3601]
                  %3967 = vst [vmem:[%s3609 + $0x2c8] sm:%s3601] %v3966
                  %v3968 = vld [vmem:[%s3608 + $0xecc] sm:%s3601]
                  %3969 = vst [vmem:[%s3609 + $0x2cc] sm:%s3601] %v3968
                  %v3970 = vld [vmem:[%s3608 + $0xed0] sm:%s3601]
                  %3971 = vst [vmem:[%s3609 + $0x2d0] sm:%s3601] %v3970
                  %v3972 = vld [vmem:[%s3608 + $0xed4] sm:%s3601]
                  %3973 = vst [vmem:[%s3609 + $0x2d4] sm:%s3601] %v3972
                  %v3974 = vld [vmem:[%s3608 + $0xed8] sm:%s3601]
                  %3975 = vst [vmem:[%s3609 + $0x2d8] sm:%s3601] %v3974
                  %v3976 = vld [vmem:[%s3608 + $0xedc] sm:%s3601]
                  %3977 = vst [vmem:[%s3609 + $0x2dc] sm:%s3601] %v3976
                  %v3978 = vld [vmem:[%s3608 + $0xee0] sm:%s3601]
                  %3979 = vst [vmem:[%s3609 + $0x2e0] sm:%s3601] %v3978
                  %v3980 = vld [vmem:[%s3608 + $0xee4] sm:%s3601]
                  %3981 = vst [vmem:[%s3609 + $0x2e4] sm:%s3601] %v3980
                  %v3982 = vld [vmem:[%s3608 + $0xee8] sm:%s3601]
                  %3983 = vst [vmem:[%s3609 + $0x2e8] sm:%s3601] %v3982
                  %v3984 = vld [vmem:[%s3608 + $0xeec] sm:%s3601]
                  %3985 = vst [vmem:[%s3609 + $0x2ec] sm:%s3601] %v3984
                  %v3986 = vld [vmem:[%s3608 + $0xef0] sm:%s3601]
                  %3987 = vst [vmem:[%s3609 + $0x2f0] sm:%s3601] %v3986
                  %v3988 = vld [vmem:[%s3608 + $0xef4] sm:%s3601]
                  %3989 = vst [vmem:[%s3609 + $0x2f4] sm:%s3601] %v3988
                  %v3990 = vld [vmem:[%s3608 + $0xef8] sm:%s3601]
                  %3991 = vst [vmem:[%s3609 + $0x2f8] sm:%s3601] %v3990
                  %v3992 = vld [vmem:[%s3608 + $0xefc] sm:%s3601]
                  %3993 = vst [vmem:[%s3609 + $0x2fc] sm:%s3601] %v3992
                  %v3994 = vld [vmem:[%s3608 + $0x1500] sm:%s3601]
                  %3995 = vst [vmem:[%s3609 + $0x300] sm:%s3601] %v3994
                  %v3996 = vld [vmem:[%s3608 + $0x1504] sm:%s3601]
                  %3997 = vst [vmem:[%s3609 + $0x304] sm:%s3601] %v3996
                  %v3998 = vld [vmem:[%s3608 + $0x1508] sm:%s3601]
                  %3999 = vst [vmem:[%s3609 + $0x308] sm:%s3601] %v3998
                  %v4000 = vld [vmem:[%s3608 + $0x150c] sm:%s3601]
                  %4001 = vst [vmem:[%s3609 + $0x30c] sm:%s3601] %v4000
                  %v4002 = vld [vmem:[%s3608 + $0x1510] sm:%s3601]
                  %4003 = vst [vmem:[%s3609 + $0x310] sm:%s3601] %v4002
                  %v4004 = vld [vmem:[%s3608 + $0x1514] sm:%s3601]
                  %4005 = vst [vmem:[%s3609 + $0x314] sm:%s3601] %v4004
                  %v4006 = vld [vmem:[%s3608 + $0x1518] sm:%s3601]
                  %4007 = vst [vmem:[%s3609 + $0x318] sm:%s3601] %v4006
                  %v4008 = vld [vmem:[%s3608 + $0x151c] sm:%s3601]
                  %4009 = vst [vmem:[%s3609 + $0x31c] sm:%s3601] %v4008
                  %v4010 = vld [vmem:[%s3608 + $0x1520] sm:%s3601]
                  %4011 = vst [vmem:[%s3609 + $0x320] sm:%s3601] %v4010
                  %v4012 = vld [vmem:[%s3608 + $0x1524] sm:%s3601]
                  %4013 = vst [vmem:[%s3609 + $0x324] sm:%s3601] %v4012
                  %v4014 = vld [vmem:[%s3608 + $0x1528] sm:%s3601]
                  %4015 = vst [vmem:[%s3609 + $0x328] sm:%s3601] %v4014
                  %v4016 = vld [vmem:[%s3608 + $0x152c] sm:%s3601]
                  %4017 = vst [vmem:[%s3609 + $0x32c] sm:%s3601] %v4016
                  %v4018 = vld [vmem:[%s3608 + $0x1530] sm:%s3601]
                  %4019 = vst [vmem:[%s3609 + $0x330] sm:%s3601] %v4018
                  %v4020 = vld [vmem:[%s3608 + $0x1534] sm:%s3601]
                  %4021 = vst [vmem:[%s3609 + $0x334] sm:%s3601] %v4020
                  %v4022 = vld [vmem:[%s3608 + $0x1538] sm:%s3601]
                  %4023 = vst [vmem:[%s3609 + $0x338] sm:%s3601] %v4022
                  %v4024 = vld [vmem:[%s3608 + $0x153c] sm:%s3601]
                  %4025 = vst [vmem:[%s3609 + $0x33c] sm:%s3601] %v4024
                  %v4026 = vld [vmem:[%s3608 + $0x1540] sm:%s3601]
                  %4027 = vst [vmem:[%s3609 + $0x340] sm:%s3601] %v4026
                  %v4028 = vld [vmem:[%s3608 + $0x1544] sm:%s3601]
                  %4029 = vst [vmem:[%s3609 + $0x344] sm:%s3601] %v4028
                  %v4030 = vld [vmem:[%s3608 + $0x1548] sm:%s3601]
                  %4031 = vst [vmem:[%s3609 + $0x348] sm:%s3601] %v4030
                  %v4032 = vld [vmem:[%s3608 + $0x154c] sm:%s3601]
                  %4033 = vst [vmem:[%s3609 + $0x34c] sm:%s3601] %v4032
                  %v4034 = vld [vmem:[%s3608 + $0x1550] sm:%s3601]
                  %4035 = vst [vmem:[%s3609 + $0x350] sm:%s3601] %v4034
                  %v4036 = vld [vmem:[%s3608 + $0x1554] sm:%s3601]
                  %4037 = vst [vmem:[%s3609 + $0x354] sm:%s3601] %v4036
                  %v4038 = vld [vmem:[%s3608 + $0x1558] sm:%s3601]
                  %4039 = vst [vmem:[%s3609 + $0x358] sm:%s3601] %v4038
                  %v4040 = vld [vmem:[%s3608 + $0x155c] sm:%s3601]
                  %4041 = vst [vmem:[%s3609 + $0x35c] sm:%s3601] %v4040
                  %v4042 = vld [vmem:[%s3608 + $0x1560] sm:%s3601]
                  %4043 = vst [vmem:[%s3609 + $0x360] sm:%s3601] %v4042
                  %v4044 = vld [vmem:[%s3608 + $0x1564] sm:%s3601]
                  %4045 = vst [vmem:[%s3609 + $0x364] sm:%s3601] %v4044
                  %v4046 = vld [vmem:[%s3608 + $0x1568] sm:%s3601]
                  %4047 = vst [vmem:[%s3609 + $0x368] sm:%s3601] %v4046
                  %v4048 = vld [vmem:[%s3608 + $0x156c] sm:%s3601]
                  %4049 = vst [vmem:[%s3609 + $0x36c] sm:%s3601] %v4048
                  %v4050 = vld [vmem:[%s3608 + $0x1570] sm:%s3601]
                  %4051 = vst [vmem:[%s3609 + $0x370] sm:%s3601] %v4050
                  %v4052 = vld [vmem:[%s3608 + $0x1574] sm:%s3601]
                  %4053 = vst [vmem:[%s3609 + $0x374] sm:%s3601] %v4052
                  %v4054 = vld [vmem:[%s3608 + $0x1578] sm:%s3601]
                  %4055 = vst [vmem:[%s3609 + $0x378] sm:%s3601] %v4054
                  %v4056 = vld [vmem:[%s3608 + $0x157c] sm:%s3601]
                  %4057 = vst [vmem:[%s3609 + $0x37c] sm:%s3601] %v4056
                  %v4058 = vld [vmem:[%s3608 + $0x1580] sm:%s3601]
                  %4059 = vst [vmem:[%s3609 + $0x380] sm:%s3601] %v4058
                  %v4060 = vld [vmem:[%s3608 + $0x1584] sm:%s3601]
                  %4061 = vst [vmem:[%s3609 + $0x384] sm:%s3601] %v4060
                  %v4062 = vld [vmem:[%s3608 + $0x1588] sm:%s3601]
                  %4063 = vst [vmem:[%s3609 + $0x388] sm:%s3601] %v4062
                  %v4064 = vld [vmem:[%s3608 + $0x158c] sm:%s3601]
                  %4065 = vst [vmem:[%s3609 + $0x38c] sm:%s3601] %v4064
                  %v4066 = vld [vmem:[%s3608 + $0x1590] sm:%s3601]
                  %4067 = vst [vmem:[%s3609 + $0x390] sm:%s3601] %v4066
                  %v4068 = vld [vmem:[%s3608 + $0x1594] sm:%s3601]
                  %4069 = vst [vmem:[%s3609 + $0x394] sm:%s3601] %v4068
                  %v4070 = vld [vmem:[%s3608 + $0x1598] sm:%s3601]
                  %4071 = vst [vmem:[%s3609 + $0x398] sm:%s3601] %v4070
                  %v4072 = vld [vmem:[%s3608 + $0x159c] sm:%s3601]
                  %4073 = vst [vmem:[%s3609 + $0x39c] sm:%s3601] %v4072
                  %v4074 = vld [vmem:[%s3608 + $0x15a0] sm:%s3601]
                  %4075 = vst [vmem:[%s3609 + $0x3a0] sm:%s3601] %v4074
                  %v4076 = vld [vmem:[%s3608 + $0x15a4] sm:%s3601]
                  %4077 = vst [vmem:[%s3609 + $0x3a4] sm:%s3601] %v4076
                  %v4078 = vld [vmem:[%s3608 + $0x15a8] sm:%s3601]
                  %4079 = vst [vmem:[%s3609 + $0x3a8] sm:%s3601] %v4078
                  %v4080 = vld [vmem:[%s3608 + $0x15ac] sm:%s3601]
                  %4081 = vst [vmem:[%s3609 + $0x3ac] sm:%s3601] %v4080
                  %v4082 = vld [vmem:[%s3608 + $0x15b0] sm:%s3601]
                  %4083 = vst [vmem:[%s3609 + $0x3b0] sm:%s3601] %v4082
                  %v4084 = vld [vmem:[%s3608 + $0x15b4] sm:%s3601]
                  %4085 = vst [vmem:[%s3609 + $0x3b4] sm:%s3601] %v4084
                  %v4086 = vld [vmem:[%s3608 + $0x15b8] sm:%s3601]
                  %4087 = vst [vmem:[%s3609 + $0x3b8] sm:%s3601] %v4086
                  %v4088 = vld [vmem:[%s3608 + $0x15bc] sm:%s3601]
                  %4089 = vst [vmem:[%s3609 + $0x3bc] sm:%s3601] %v4088
                  %v4090 = vld [vmem:[%s3608 + $0x15c0] sm:%s3601]
                  %4091 = vst [vmem:[%s3609 + $0x3c0] sm:%s3601] %v4090
                  %v4092 = vld [vmem:[%s3608 + $0x15c4] sm:%s3601]
                  %4093 = vst [vmem:[%s3609 + $0x3c4] sm:%s3601] %v4092
                  %v4094 = vld [vmem:[%s3608 + $0x15c8] sm:%s3601]
                  %4095 = vst [vmem:[%s3609 + $0x3c8] sm:%s3601] %v4094
                  %v4096 = vld [vmem:[%s3608 + $0x15cc] sm:%s3601]
                  %4097 = vst [vmem:[%s3609 + $0x3cc] sm:%s3601] %v4096
                  %v4098 = vld [vmem:[%s3608 + $0x15d0] sm:%s3601]
                  %4099 = vst [vmem:[%s3609 + $0x3d0] sm:%s3601] %v4098
                  %v4100 = vld [vmem:[%s3608 + $0x15d4] sm:%s3601]
                  %4101 = vst [vmem:[%s3609 + $0x3d4] sm:%s3601] %v4100
                  %v4102 = vld [vmem:[%s3608 + $0x15d8] sm:%s3601]
                  %4103 = vst [vmem:[%s3609 + $0x3d8] sm:%s3601] %v4102
                  %v4104 = vld [vmem:[%s3608 + $0x15dc] sm:%s3601]
                  %4105 = vst [vmem:[%s3609 + $0x3dc] sm:%s3601] %v4104
                  %v4106 = vld [vmem:[%s3608 + $0x15e0] sm:%s3601]
                  %4107 = vst [vmem:[%s3609 + $0x3e0] sm:%s3601] %v4106
                  %v4108 = vld [vmem:[%s3608 + $0x15e4] sm:%s3601]
                  %4109 = vst [vmem:[%s3609 + $0x3e4] sm:%s3601] %v4108
                  %v4110 = vld [vmem:[%s3608 + $0x15e8] sm:%s3601]
                  %4111 = vst [vmem:[%s3609 + $0x3e8] sm:%s3601] %v4110
                  %v4112 = vld [vmem:[%s3608 + $0x15ec] sm:%s3601]
                  %4113 = vst [vmem:[%s3609 + $0x3ec] sm:%s3601] %v4112
                  %v4114 = vld [vmem:[%s3608 + $0x15f0] sm:%s3601]
                  %4115 = vst [vmem:[%s3609 + $0x3f0] sm:%s3601] %v4114
                  %v4116 = vld [vmem:[%s3608 + $0x15f4] sm:%s3601]
                  %4117 = vst [vmem:[%s3609 + $0x3f4] sm:%s3601] %v4116
                  %v4118 = vld [vmem:[%s3608 + $0x15f8] sm:%s3601]
                  %4119 = vst [vmem:[%s3609 + $0x3f8] sm:%s3601] %v4118
                  %v4120 = vld [vmem:[%s3608 + $0x15fc] sm:%s3601]
                  %4121 = vst [vmem:[%s3609 + $0x3fc] sm:%s3601] %v4120
                  %v4122 = vld [vmem:[%s3608 + $0x1c00] sm:%s3601]
                  %4123 = vst [vmem:[%s3609 + $0x400] sm:%s3601] %v4122
                  %v4124 = vld [vmem:[%s3608 + $0x1c04] sm:%s3601]
                  %4125 = vst [vmem:[%s3609 + $0x404] sm:%s3601] %v4124
                  %v4126 = vld [vmem:[%s3608 + $0x1c08] sm:%s3601]
                  %4127 = vst [vmem:[%s3609 + $0x408] sm:%s3601] %v4126
                  %v4128 = vld [vmem:[%s3608 + $0x1c0c] sm:%s3601]
                  %4129 = vst [vmem:[%s3609 + $0x40c] sm:%s3601] %v4128
                  %v4130 = vld [vmem:[%s3608 + $0x1c10] sm:%s3601]
                  %4131 = vst [vmem:[%s3609 + $0x410] sm:%s3601] %v4130
                  %v4132 = vld [vmem:[%s3608 + $0x1c14] sm:%s3601]
                  %4133 = vst [vmem:[%s3609 + $0x414] sm:%s3601] %v4132
                  %v4134 = vld [vmem:[%s3608 + $0x1c18] sm:%s3601]
                  %4135 = vst [vmem:[%s3609 + $0x418] sm:%s3601] %v4134
                  %v4136 = vld [vmem:[%s3608 + $0x1c1c] sm:%s3601]
                  %4137 = vst [vmem:[%s3609 + $0x41c] sm:%s3601] %v4136
                  %v4138 = vld [vmem:[%s3608 + $0x1c20] sm:%s3601]
                  %4139 = vst [vmem:[%s3609 + $0x420] sm:%s3601] %v4138
                  %v4140 = vld [vmem:[%s3608 + $0x1c24] sm:%s3601]
                  %4141 = vst [vmem:[%s3609 + $0x424] sm:%s3601] %v4140
                  %v4142 = vld [vmem:[%s3608 + $0x1c28] sm:%s3601]
                  %4143 = vst [vmem:[%s3609 + $0x428] sm:%s3601] %v4142
                  %v4144 = vld [vmem:[%s3608 + $0x1c2c] sm:%s3601]
                  %4145 = vst [vmem:[%s3609 + $0x42c] sm:%s3601] %v4144
                  %v4146 = vld [vmem:[%s3608 + $0x1c30] sm:%s3601]
                  %4147 = vst [vmem:[%s3609 + $0x430] sm:%s3601] %v4146
                  %v4148 = vld [vmem:[%s3608 + $0x1c34] sm:%s3601]
                  %4149 = vst [vmem:[%s3609 + $0x434] sm:%s3601] %v4148
                  %v4150 = vld [vmem:[%s3608 + $0x1c38] sm:%s3601]
                  %4151 = vst [vmem:[%s3609 + $0x438] sm:%s3601] %v4150
                  %v4152 = vld [vmem:[%s3608 + $0x1c3c] sm:%s3601]
                  %4153 = vst [vmem:[%s3609 + $0x43c] sm:%s3601] %v4152
                  %v4154 = vld [vmem:[%s3608 + $0x1c40] sm:%s3601]
                  %4155 = vst [vmem:[%s3609 + $0x440] sm:%s3601] %v4154
                  %v4156 = vld [vmem:[%s3608 + $0x1c44] sm:%s3601]
                  %4157 = vst [vmem:[%s3609 + $0x444] sm:%s3601] %v4156
                  %v4158 = vld [vmem:[%s3608 + $0x1c48] sm:%s3601]
                  %4159 = vst [vmem:[%s3609 + $0x448] sm:%s3601] %v4158
                  %v4160 = vld [vmem:[%s3608 + $0x1c4c] sm:%s3601]
                  %4161 = vst [vmem:[%s3609 + $0x44c] sm:%s3601] %v4160
                  %v4162 = vld [vmem:[%s3608 + $0x1c50] sm:%s3601]
                  %4163 = vst [vmem:[%s3609 + $0x450] sm:%s3601] %v4162
                  %v4164 = vld [vmem:[%s3608 + $0x1c54] sm:%s3601]
                  %4165 = vst [vmem:[%s3609 + $0x454] sm:%s3601] %v4164
                  %v4166 = vld [vmem:[%s3608 + $0x1c58] sm:%s3601]
                  %4167 = vst [vmem:[%s3609 + $0x458] sm:%s3601] %v4166
                  %v4168 = vld [vmem:[%s3608 + $0x1c5c] sm:%s3601]
                  %4169 = vst [vmem:[%s3609 + $0x45c] sm:%s3601] %v4168
                  %v4170 = vld [vmem:[%s3608 + $0x1c60] sm:%s3601]
                  %4171 = vst [vmem:[%s3609 + $0x460] sm:%s3601] %v4170
                  %v4172 = vld [vmem:[%s3608 + $0x1c64] sm:%s3601]
                  %4173 = vst [vmem:[%s3609 + $0x464] sm:%s3601] %v4172
                  %v4174 = vld [vmem:[%s3608 + $0x1c68] sm:%s3601]
                  %4175 = vst [vmem:[%s3609 + $0x468] sm:%s3601] %v4174
                  %v4176 = vld [vmem:[%s3608 + $0x1c6c] sm:%s3601]
                  %4177 = vst [vmem:[%s3609 + $0x46c] sm:%s3601] %v4176
                  %v4178 = vld [vmem:[%s3608 + $0x1c70] sm:%s3601]
                  %4179 = vst [vmem:[%s3609 + $0x470] sm:%s3601] %v4178
                  %v4180 = vld [vmem:[%s3608 + $0x1c74] sm:%s3601]
                  %4181 = vst [vmem:[%s3609 + $0x474] sm:%s3601] %v4180
                  %v4182 = vld [vmem:[%s3608 + $0x1c78] sm:%s3601]
                  %4183 = vst [vmem:[%s3609 + $0x478] sm:%s3601] %v4182
                  %v4184 = vld [vmem:[%s3608 + $0x1c7c] sm:%s3601]
                  %4185 = vst [vmem:[%s3609 + $0x47c] sm:%s3601] %v4184
                  %v4186 = vld [vmem:[%s3608 + $0x1c80] sm:%s3601]
                  %4187 = vst [vmem:[%s3609 + $0x480] sm:%s3601] %v4186
                  %v4188 = vld [vmem:[%s3608 + $0x1c84] sm:%s3601]
                  %4189 = vst [vmem:[%s3609 + $0x484] sm:%s3601] %v4188
                  %v4190 = vld [vmem:[%s3608 + $0x1c88] sm:%s3601]
                  %4191 = vst [vmem:[%s3609 + $0x488] sm:%s3601] %v4190
                  %v4192 = vld [vmem:[%s3608 + $0x1c8c] sm:%s3601]
                  %4193 = vst [vmem:[%s3609 + $0x48c] sm:%s3601] %v4192
                  %v4194 = vld [vmem:[%s3608 + $0x1c90] sm:%s3601]
                  %4195 = vst [vmem:[%s3609 + $0x490] sm:%s3601] %v4194
                  %v4196 = vld [vmem:[%s3608 + $0x1c94] sm:%s3601]
                  %4197 = vst [vmem:[%s3609 + $0x494] sm:%s3601] %v4196
                  %v4198 = vld [vmem:[%s3608 + $0x1c98] sm:%s3601]
                  %4199 = vst [vmem:[%s3609 + $0x498] sm:%s3601] %v4198
                  %v4200 = vld [vmem:[%s3608 + $0x1c9c] sm:%s3601]
                  %4201 = vst [vmem:[%s3609 + $0x49c] sm:%s3601] %v4200
                  %v4202 = vld [vmem:[%s3608 + $0x1ca0] sm:%s3601]
                  %4203 = vst [vmem:[%s3609 + $0x4a0] sm:%s3601] %v4202
                  %v4204 = vld [vmem:[%s3608 + $0x1ca4] sm:%s3601]
                  %4205 = vst [vmem:[%s3609 + $0x4a4] sm:%s3601] %v4204
                  %v4206 = vld [vmem:[%s3608 + $0x1ca8] sm:%s3601]
                  %4207 = vst [vmem:[%s3609 + $0x4a8] sm:%s3601] %v4206
                  %v4208 = vld [vmem:[%s3608 + $0x1cac] sm:%s3601]
                  %4209 = vst [vmem:[%s3609 + $0x4ac] sm:%s3601] %v4208
                  %v4210 = vld [vmem:[%s3608 + $0x1cb0] sm:%s3601]
                  %4211 = vst [vmem:[%s3609 + $0x4b0] sm:%s3601] %v4210
                  %v4212 = vld [vmem:[%s3608 + $0x1cb4] sm:%s3601]
                  %4213 = vst [vmem:[%s3609 + $0x4b4] sm:%s3601] %v4212
                  %v4214 = vld [vmem:[%s3608 + $0x1cb8] sm:%s3601]
                  %4215 = vst [vmem:[%s3609 + $0x4b8] sm:%s3601] %v4214
                  %v4216 = vld [vmem:[%s3608 + $0x1cbc] sm:%s3601]
                  %4217 = vst [vmem:[%s3609 + $0x4bc] sm:%s3601] %v4216
                  %v4218 = vld [vmem:[%s3608 + $0x1cc0] sm:%s3601]
                  %4219 = vst [vmem:[%s3609 + $0x4c0] sm:%s3601] %v4218
                  %v4220 = vld [vmem:[%s3608 + $0x1cc4] sm:%s3601]
                  %4221 = vst [vmem:[%s3609 + $0x4c4] sm:%s3601] %v4220
                  %v4222 = vld [vmem:[%s3608 + $0x1cc8] sm:%s3601]
                  %4223 = vst [vmem:[%s3609 + $0x4c8] sm:%s3601] %v4222
                  %v4224 = vld [vmem:[%s3608 + $0x1ccc] sm:%s3601]
                  %4225 = vst [vmem:[%s3609 + $0x4cc] sm:%s3601] %v4224
                  %v4226 = vld [vmem:[%s3608 + $0x1cd0] sm:%s3601]
                  %4227 = vst [vmem:[%s3609 + $0x4d0] sm:%s3601] %v4226
                  %v4228 = vld [vmem:[%s3608 + $0x1cd4] sm:%s3601]
                  %4229 = vst [vmem:[%s3609 + $0x4d4] sm:%s3601] %v4228
                  %v4230 = vld [vmem:[%s3608 + $0x1cd8] sm:%s3601]
                  %4231 = vst [vmem:[%s3609 + $0x4d8] sm:%s3601] %v4230
                  %v4232 = vld [vmem:[%s3608 + $0x1cdc] sm:%s3601]
                  %4233 = vst [vmem:[%s3609 + $0x4dc] sm:%s3601] %v4232
                  %v4234 = vld [vmem:[%s3608 + $0x1ce0] sm:%s3601]
                  %4235 = vst [vmem:[%s3609 + $0x4e0] sm:%s3601] %v4234
                  %v4236 = vld [vmem:[%s3608 + $0x1ce4] sm:%s3601]
                  %4237 = vst [vmem:[%s3609 + $0x4e4] sm:%s3601] %v4236
                  %v4238 = vld [vmem:[%s3608 + $0x1ce8] sm:%s3601]
                  %4239 = vst [vmem:[%s3609 + $0x4e8] sm:%s3601] %v4238
                  %v4240 = vld [vmem:[%s3608 + $0x1cec] sm:%s3601]
                  %4241 = vst [vmem:[%s3609 + $0x4ec] sm:%s3601] %v4240
                  %v4242 = vld [vmem:[%s3608 + $0x1cf0] sm:%s3601]
                  %4243 = vst [vmem:[%s3609 + $0x4f0] sm:%s3601] %v4242
                  %v4244 = vld [vmem:[%s3608 + $0x1cf4] sm:%s3601]
                  %4245 = vst [vmem:[%s3609 + $0x4f4] sm:%s3601] %v4244
                  %v4246 = vld [vmem:[%s3608 + $0x1cf8] sm:%s3601]
                  %4247 = vst [vmem:[%s3609 + $0x4f8] sm:%s3601] %v4246
                  %v4248 = vld [vmem:[%s3608 + $0x1cfc] sm:%s3601]
                  %4249 = vst [vmem:[%s3609 + $0x4fc] sm:%s3601] %v4248
                  %v4250 = vld [vmem:[%s3608 + $0x2300] sm:%s3601]
                  %4251 = vst [vmem:[%s3609 + $0x500] sm:%s3601] %v4250
                  %v4252 = vld [vmem:[%s3608 + $0x2304] sm:%s3601]
                  %4253 = vst [vmem:[%s3609 + $0x504] sm:%s3601] %v4252
                  %v4254 = vld [vmem:[%s3608 + $0x2308] sm:%s3601]
                  %4255 = vst [vmem:[%s3609 + $0x508] sm:%s3601] %v4254
                  %v4256 = vld [vmem:[%s3608 + $0x230c] sm:%s3601]
                  %4257 = vst [vmem:[%s3609 + $0x50c] sm:%s3601] %v4256
                  %v4258 = vld [vmem:[%s3608 + $0x2310] sm:%s3601]
                  %4259 = vst [vmem:[%s3609 + $0x510] sm:%s3601] %v4258
                  %v4260 = vld [vmem:[%s3608 + $0x2314] sm:%s3601]
                  %4261 = vst [vmem:[%s3609 + $0x514] sm:%s3601] %v4260
                  %v4262 = vld [vmem:[%s3608 + $0x2318] sm:%s3601]
                  %4263 = vst [vmem:[%s3609 + $0x518] sm:%s3601] %v4262
                  %v4264 = vld [vmem:[%s3608 + $0x231c] sm:%s3601]
                  %4265 = vst [vmem:[%s3609 + $0x51c] sm:%s3601] %v4264
                  %v4266 = vld [vmem:[%s3608 + $0x2320] sm:%s3601]
                  %4267 = vst [vmem:[%s3609 + $0x520] sm:%s3601] %v4266
                  %v4268 = vld [vmem:[%s3608 + $0x2324] sm:%s3601]
                  %4269 = vst [vmem:[%s3609 + $0x524] sm:%s3601] %v4268
                  %v4270 = vld [vmem:[%s3608 + $0x2328] sm:%s3601]
                  %4271 = vst [vmem:[%s3609 + $0x528] sm:%s3601] %v4270
                  %v4272 = vld [vmem:[%s3608 + $0x232c] sm:%s3601]
                  %4273 = vst [vmem:[%s3609 + $0x52c] sm:%s3601] %v4272
                  %v4274 = vld [vmem:[%s3608 + $0x2330] sm:%s3601]
                  %4275 = vst [vmem:[%s3609 + $0x530] sm:%s3601] %v4274
                  %v4276 = vld [vmem:[%s3608 + $0x2334] sm:%s3601]
                  %4277 = vst [vmem:[%s3609 + $0x534] sm:%s3601] %v4276
                  %v4278 = vld [vmem:[%s3608 + $0x2338] sm:%s3601]
                  %4279 = vst [vmem:[%s3609 + $0x538] sm:%s3601] %v4278
                  %v4280 = vld [vmem:[%s3608 + $0x233c] sm:%s3601]
                  %4281 = vst [vmem:[%s3609 + $0x53c] sm:%s3601] %v4280
                  %v4282 = vld [vmem:[%s3608 + $0x2340] sm:%s3601]
                  %4283 = vst [vmem:[%s3609 + $0x540] sm:%s3601] %v4282
                  %v4284 = vld [vmem:[%s3608 + $0x2344] sm:%s3601]
                  %4285 = vst [vmem:[%s3609 + $0x544] sm:%s3601] %v4284
                  %v4286 = vld [vmem:[%s3608 + $0x2348] sm:%s3601]
                  %4287 = vst [vmem:[%s3609 + $0x548] sm:%s3601] %v4286
                  %v4288 = vld [vmem:[%s3608 + $0x234c] sm:%s3601]
                  %4289 = vst [vmem:[%s3609 + $0x54c] sm:%s3601] %v4288
                  %v4290 = vld [vmem:[%s3608 + $0x2350] sm:%s3601]
                  %4291 = vst [vmem:[%s3609 + $0x550] sm:%s3601] %v4290
                  %v4292 = vld [vmem:[%s3608 + $0x2354] sm:%s3601]
                  %4293 = vst [vmem:[%s3609 + $0x554] sm:%s3601] %v4292
                  %v4294 = vld [vmem:[%s3608 + $0x2358] sm:%s3601]
                  %4295 = vst [vmem:[%s3609 + $0x558] sm:%s3601] %v4294
                  %v4296 = vld [vmem:[%s3608 + $0x235c] sm:%s3601]
                  %4297 = vst [vmem:[%s3609 + $0x55c] sm:%s3601] %v4296
                  %v4298 = vld [vmem:[%s3608 + $0x2360] sm:%s3601]
                  %4299 = vst [vmem:[%s3609 + $0x560] sm:%s3601] %v4298
                  %v4300 = vld [vmem:[%s3608 + $0x2364] sm:%s3601]
                  %4301 = vst [vmem:[%s3609 + $0x564] sm:%s3601] %v4300
                  %v4302 = vld [vmem:[%s3608 + $0x2368] sm:%s3601]
                  %4303 = vst [vmem:[%s3609 + $0x568] sm:%s3601] %v4302
                  %v4304 = vld [vmem:[%s3608 + $0x236c] sm:%s3601]
                  %4305 = vst [vmem:[%s3609 + $0x56c] sm:%s3601] %v4304
                  %v4306 = vld [vmem:[%s3608 + $0x2370] sm:%s3601]
                  %4307 = vst [vmem:[%s3609 + $0x570] sm:%s3601] %v4306
                  %v4308 = vld [vmem:[%s3608 + $0x2374] sm:%s3601]
                  %4309 = vst [vmem:[%s3609 + $0x574] sm:%s3601] %v4308
                  %v4310 = vld [vmem:[%s3608 + $0x2378] sm:%s3601]
                  %4311 = vst [vmem:[%s3609 + $0x578] sm:%s3601] %v4310
                  %v4312 = vld [vmem:[%s3608 + $0x237c] sm:%s3601]
                  %4313 = vst [vmem:[%s3609 + $0x57c] sm:%s3601] %v4312
                  %v4314 = vld [vmem:[%s3608 + $0x2380] sm:%s3601]
                  %4315 = vst [vmem:[%s3609 + $0x580] sm:%s3601] %v4314
                  %v4316 = vld [vmem:[%s3608 + $0x2384] sm:%s3601]
                  %4317 = vst [vmem:[%s3609 + $0x584] sm:%s3601] %v4316
                  %v4318 = vld [vmem:[%s3608 + $0x2388] sm:%s3601]
                  %4319 = vst [vmem:[%s3609 + $0x588] sm:%s3601] %v4318
                  %v4320 = vld [vmem:[%s3608 + $0x238c] sm:%s3601]
                  %4321 = vst [vmem:[%s3609 + $0x58c] sm:%s3601] %v4320
                  %v4322 = vld [vmem:[%s3608 + $0x2390] sm:%s3601]
                  %4323 = vst [vmem:[%s3609 + $0x590] sm:%s3601] %v4322
                  %v4324 = vld [vmem:[%s3608 + $0x2394] sm:%s3601]
                  %4325 = vst [vmem:[%s3609 + $0x594] sm:%s3601] %v4324
                  %v4326 = vld [vmem:[%s3608 + $0x2398] sm:%s3601]
                  %4327 = vst [vmem:[%s3609 + $0x598] sm:%s3601] %v4326
                  %v4328 = vld [vmem:[%s3608 + $0x239c] sm:%s3601]
                  %4329 = vst [vmem:[%s3609 + $0x59c] sm:%s3601] %v4328
                  %v4330 = vld [vmem:[%s3608 + $0x23a0] sm:%s3601]
                  %4331 = vst [vmem:[%s3609 + $0x5a0] sm:%s3601] %v4330
                  %v4332 = vld [vmem:[%s3608 + $0x23a4] sm:%s3601]
                  %4333 = vst [vmem:[%s3609 + $0x5a4] sm:%s3601] %v4332
                  %v4334 = vld [vmem:[%s3608 + $0x23a8] sm:%s3601]
                  %4335 = vst [vmem:[%s3609 + $0x5a8] sm:%s3601] %v4334
                  %v4336 = vld [vmem:[%s3608 + $0x23ac] sm:%s3601]
                  %4337 = vst [vmem:[%s3609 + $0x5ac] sm:%s3601] %v4336
                  %v4338 = vld [vmem:[%s3608 + $0x23b0] sm:%s3601]
                  %4339 = vst [vmem:[%s3609 + $0x5b0] sm:%s3601] %v4338
                  %v4340 = vld [vmem:[%s3608 + $0x23b4] sm:%s3601]
                  %4341 = vst [vmem:[%s3609 + $0x5b4] sm:%s3601] %v4340
                  %v4342 = vld [vmem:[%s3608 + $0x23b8] sm:%s3601]
                  %4343 = vst [vmem:[%s3609 + $0x5b8] sm:%s3601] %v4342
                  %v4344 = vld [vmem:[%s3608 + $0x23bc] sm:%s3601]
                  %4345 = vst [vmem:[%s3609 + $0x5bc] sm:%s3601] %v4344
                  %v4346 = vld [vmem:[%s3608 + $0x23c0] sm:%s3601]
                  %4347 = vst [vmem:[%s3609 + $0x5c0] sm:%s3601] %v4346
                  %v4348 = vld [vmem:[%s3608 + $0x23c4] sm:%s3601]
                  %4349 = vst [vmem:[%s3609 + $0x5c4] sm:%s3601] %v4348
                  %v4350 = vld [vmem:[%s3608 + $0x23c8] sm:%s3601]
                  %4351 = vst [vmem:[%s3609 + $0x5c8] sm:%s3601] %v4350
                  %v4352 = vld [vmem:[%s3608 + $0x23cc] sm:%s3601]
                  %4353 = vst [vmem:[%s3609 + $0x5cc] sm:%s3601] %v4352
                  %v4354 = vld [vmem:[%s3608 + $0x23d0] sm:%s3601]
                  %4355 = vst [vmem:[%s3609 + $0x5d0] sm:%s3601] %v4354
                  %v4356 = vld [vmem:[%s3608 + $0x23d4] sm:%s3601]
                  %4357 = vst [vmem:[%s3609 + $0x5d4] sm:%s3601] %v4356
                  %v4358 = vld [vmem:[%s3608 + $0x23d8] sm:%s3601]
                  %4359 = vst [vmem:[%s3609 + $0x5d8] sm:%s3601] %v4358
                  %v4360 = vld [vmem:[%s3608 + $0x23dc] sm:%s3601]
                  %4361 = vst [vmem:[%s3609 + $0x5dc] sm:%s3601] %v4360
                  %v4362 = vld [vmem:[%s3608 + $0x23e0] sm:%s3601]
                  %4363 = vst [vmem:[%s3609 + $0x5e0] sm:%s3601] %v4362
                  %v4364 = vld [vmem:[%s3608 + $0x23e4] sm:%s3601]
                  %4365 = vst [vmem:[%s3609 + $0x5e4] sm:%s3601] %v4364
                  %v4366 = vld [vmem:[%s3608 + $0x23e8] sm:%s3601]
                  %4367 = vst [vmem:[%s3609 + $0x5e8] sm:%s3601] %v4366
                  %v4368 = vld [vmem:[%s3608 + $0x23ec] sm:%s3601]
                  %4369 = vst [vmem:[%s3609 + $0x5ec] sm:%s3601] %v4368
                  %v4370 = vld [vmem:[%s3608 + $0x23f0] sm:%s3601]
                  %4371 = vst [vmem:[%s3609 + $0x5f0] sm:%s3601] %v4370
                  %v4372 = vld [vmem:[%s3608 + $0x23f4] sm:%s3601]
                  %4373 = vst [vmem:[%s3609 + $0x5f4] sm:%s3601] %v4372
                  %v4374 = vld [vmem:[%s3608 + $0x23f8] sm:%s3601]
                  %4375 = vst [vmem:[%s3609 + $0x5f8] sm:%s3601] %v4374
                  %v4376 = vld [vmem:[%s3608 + $0x23fc] sm:%s3601]
                  %4377 = vst [vmem:[%s3609 + $0x5fc] sm:%s3601] %v4376
                  %v4378 = vld [vmem:[%s3608 + $0x2a00] sm:%s3601]
                  %4379 = vst [vmem:[%s3609 + $0x600] sm:%s3601] %v4378
                  %v4380 = vld [vmem:[%s3608 + $0x2a04] sm:%s3601]
                  %4381 = vst [vmem:[%s3609 + $0x604] sm:%s3601] %v4380
                  %v4382 = vld [vmem:[%s3608 + $0x2a08] sm:%s3601]
                  %4383 = vst [vmem:[%s3609 + $0x608] sm:%s3601] %v4382
                  %v4384 = vld [vmem:[%s3608 + $0x2a0c] sm:%s3601]
                  %4385 = vst [vmem:[%s3609 + $0x60c] sm:%s3601] %v4384
                  %v4386 = vld [vmem:[%s3608 + $0x2a10] sm:%s3601]
                  %4387 = vst [vmem:[%s3609 + $0x610] sm:%s3601] %v4386
                  %v4388 = vld [vmem:[%s3608 + $0x2a14] sm:%s3601]
                  %4389 = vst [vmem:[%s3609 + $0x614] sm:%s3601] %v4388
                  %v4390 = vld [vmem:[%s3608 + $0x2a18] sm:%s3601]
                  %4391 = vst [vmem:[%s3609 + $0x618] sm:%s3601] %v4390
                  %v4392 = vld [vmem:[%s3608 + $0x2a1c] sm:%s3601]
                  %4393 = vst [vmem:[%s3609 + $0x61c] sm:%s3601] %v4392
                  %v4394 = vld [vmem:[%s3608 + $0x2a20] sm:%s3601]
                  %4395 = vst [vmem:[%s3609 + $0x620] sm:%s3601] %v4394
                  %v4396 = vld [vmem:[%s3608 + $0x2a24] sm:%s3601]
                  %4397 = vst [vmem:[%s3609 + $0x624] sm:%s3601] %v4396
                  %v4398 = vld [vmem:[%s3608 + $0x2a28] sm:%s3601]
                  %4399 = vst [vmem:[%s3609 + $0x628] sm:%s3601] %v4398
                  %v4400 = vld [vmem:[%s3608 + $0x2a2c] sm:%s3601]
                  %4401 = vst [vmem:[%s3609 + $0x62c] sm:%s3601] %v4400
                  %v4402 = vld [vmem:[%s3608 + $0x2a30] sm:%s3601]
                  %4403 = vst [vmem:[%s3609 + $0x630] sm:%s3601] %v4402
                  %v4404 = vld [vmem:[%s3608 + $0x2a34] sm:%s3601]
                  %4405 = vst [vmem:[%s3609 + $0x634] sm:%s3601] %v4404
                  %v4406 = vld [vmem:[%s3608 + $0x2a38] sm:%s3601]
                  %4407 = vst [vmem:[%s3609 + $0x638] sm:%s3601] %v4406
                  %v4408 = vld [vmem:[%s3608 + $0x2a3c] sm:%s3601]
                  %4409 = vst [vmem:[%s3609 + $0x63c] sm:%s3601] %v4408
                  %v4410 = vld [vmem:[%s3608 + $0x2a40] sm:%s3601]
                  %4411 = vst [vmem:[%s3609 + $0x640] sm:%s3601] %v4410
                  %v4412 = vld [vmem:[%s3608 + $0x2a44] sm:%s3601]
                  %4413 = vst [vmem:[%s3609 + $0x644] sm:%s3601] %v4412
                  %v4414 = vld [vmem:[%s3608 + $0x2a48] sm:%s3601]
                  %4415 = vst [vmem:[%s3609 + $0x648] sm:%s3601] %v4414
                  %v4416 = vld [vmem:[%s3608 + $0x2a4c] sm:%s3601]
                  %4417 = vst [vmem:[%s3609 + $0x64c] sm:%s3601] %v4416
                  %v4418 = vld [vmem:[%s3608 + $0x2a50] sm:%s3601]
                  %4419 = vst [vmem:[%s3609 + $0x650] sm:%s3601] %v4418
                  %v4420 = vld [vmem:[%s3608 + $0x2a54] sm:%s3601]
                  %4421 = vst [vmem:[%s3609 + $0x654] sm:%s3601] %v4420
                  %v4422 = vld [vmem:[%s3608 + $0x2a58] sm:%s3601]
                  %4423 = vst [vmem:[%s3609 + $0x658] sm:%s3601] %v4422
                  %v4424 = vld [vmem:[%s3608 + $0x2a5c] sm:%s3601]
                  %4425 = vst [vmem:[%s3609 + $0x65c] sm:%s3601] %v4424
                  %v4426 = vld [vmem:[%s3608 + $0x2a60] sm:%s3601]
                  %4427 = vst [vmem:[%s3609 + $0x660] sm:%s3601] %v4426
                  %v4428 = vld [vmem:[%s3608 + $0x2a64] sm:%s3601]
                  %4429 = vst [vmem:[%s3609 + $0x664] sm:%s3601] %v4428
                  %v4430 = vld [vmem:[%s3608 + $0x2a68] sm:%s3601]
                  %4431 = vst [vmem:[%s3609 + $0x668] sm:%s3601] %v4430
                  %v4432 = vld [vmem:[%s3608 + $0x2a6c] sm:%s3601]
                  %4433 = vst [vmem:[%s3609 + $0x66c] sm:%s3601] %v4432
                  %v4434 = vld [vmem:[%s3608 + $0x2a70] sm:%s3601]
                  %4435 = vst [vmem:[%s3609 + $0x670] sm:%s3601] %v4434
                  %v4436 = vld [vmem:[%s3608 + $0x2a74] sm:%s3601]
                  %4437 = vst [vmem:[%s3609 + $0x674] sm:%s3601] %v4436
                  %v4438 = vld [vmem:[%s3608 + $0x2a78] sm:%s3601]
                  %4439 = vst [vmem:[%s3609 + $0x678] sm:%s3601] %v4438
                  %v4440 = vld [vmem:[%s3608 + $0x2a7c] sm:%s3601]
                  %4441 = vst [vmem:[%s3609 + $0x67c] sm:%s3601] %v4440
                  %v4442 = vld [vmem:[%s3608 + $0x2a80] sm:%s3601]
                  %4443 = vst [vmem:[%s3609 + $0x680] sm:%s3601] %v4442
                  %v4444 = vld [vmem:[%s3608 + $0x2a84] sm:%s3601]
                  %4445 = vst [vmem:[%s3609 + $0x684] sm:%s3601] %v4444
                  %v4446 = vld [vmem:[%s3608 + $0x2a88] sm:%s3601]
                  %4447 = vst [vmem:[%s3609 + $0x688] sm:%s3601] %v4446
                  %v4448 = vld [vmem:[%s3608 + $0x2a8c] sm:%s3601]
                  %4449 = vst [vmem:[%s3609 + $0x68c] sm:%s3601] %v4448
                  %v4450 = vld [vmem:[%s3608 + $0x2a90] sm:%s3601]
                  %4451 = vst [vmem:[%s3609 + $0x690] sm:%s3601] %v4450
                  %v4452 = vld [vmem:[%s3608 + $0x2a94] sm:%s3601]
                  %4453 = vst [vmem:[%s3609 + $0x694] sm:%s3601] %v4452
                  %v4454 = vld [vmem:[%s3608 + $0x2a98] sm:%s3601]
                  %4455 = vst [vmem:[%s3609 + $0x698] sm:%s3601] %v4454
                  %v4456 = vld [vmem:[%s3608 + $0x2a9c] sm:%s3601]
                  %4457 = vst [vmem:[%s3609 + $0x69c] sm:%s3601] %v4456
                  %v4458 = vld [vmem:[%s3608 + $0x2aa0] sm:%s3601]
                  %4459 = vst [vmem:[%s3609 + $0x6a0] sm:%s3601] %v4458
                  %v4460 = vld [vmem:[%s3608 + $0x2aa4] sm:%s3601]
                  %4461 = vst [vmem:[%s3609 + $0x6a4] sm:%s3601] %v4460
                  %v4462 = vld [vmem:[%s3608 + $0x2aa8] sm:%s3601]
                  %4463 = vst [vmem:[%s3609 + $0x6a8] sm:%s3601] %v4462
                  %v4464 = vld [vmem:[%s3608 + $0x2aac] sm:%s3601]
                  %4465 = vst [vmem:[%s3609 + $0x6ac] sm:%s3601] %v4464
                  %v4466 = vld [vmem:[%s3608 + $0x2ab0] sm:%s3601]
                  %4467 = vst [vmem:[%s3609 + $0x6b0] sm:%s3601] %v4466
                  %v4468 = vld [vmem:[%s3608 + $0x2ab4] sm:%s3601]
                  %4469 = vst [vmem:[%s3609 + $0x6b4] sm:%s3601] %v4468
                  %v4470 = vld [vmem:[%s3608 + $0x2ab8] sm:%s3601]
                  %4471 = vst [vmem:[%s3609 + $0x6b8] sm:%s3601] %v4470
                  %v4472 = vld [vmem:[%s3608 + $0x2abc] sm:%s3601]
                  %4473 = vst [vmem:[%s3609 + $0x6bc] sm:%s3601] %v4472
                  %v4474 = vld [vmem:[%s3608 + $0x2ac0] sm:%s3601]
                  %4475 = vst [vmem:[%s3609 + $0x6c0] sm:%s3601] %v4474
                  %v4476 = vld [vmem:[%s3608 + $0x2ac4] sm:%s3601]
                  %4477 = vst [vmem:[%s3609 + $0x6c4] sm:%s3601] %v4476
                  %v4478 = vld [vmem:[%s3608 + $0x2ac8] sm:%s3601]
                  %4479 = vst [vmem:[%s3609 + $0x6c8] sm:%s3601] %v4478
                  %v4480 = vld [vmem:[%s3608 + $0x2acc] sm:%s3601]
                  %4481 = vst [vmem:[%s3609 + $0x6cc] sm:%s3601] %v4480
                  %v4482 = vld [vmem:[%s3608 + $0x2ad0] sm:%s3601]
                  %4483 = vst [vmem:[%s3609 + $0x6d0] sm:%s3601] %v4482
                  %v4484 = vld [vmem:[%s3608 + $0x2ad4] sm:%s3601]
                  %4485 = vst [vmem:[%s3609 + $0x6d4] sm:%s3601] %v4484
                  %v4486 = vld [vmem:[%s3608 + $0x2ad8] sm:%s3601]
                  %4487 = vst [vmem:[%s3609 + $0x6d8] sm:%s3601] %v4486
                  %v4488 = vld [vmem:[%s3608 + $0x2adc] sm:%s3601]
                  %4489 = vst [vmem:[%s3609 + $0x6dc] sm:%s3601] %v4488
                  %v4490 = vld [vmem:[%s3608 + $0x2ae0] sm:%s3601]
                  %4491 = vst [vmem:[%s3609 + $0x6e0] sm:%s3601] %v4490
                  %v4492 = vld [vmem:[%s3608 + $0x2ae4] sm:%s3601]
                  %4493 = vst [vmem:[%s3609 + $0x6e4] sm:%s3601] %v4492
                  %v4494 = vld [vmem:[%s3608 + $0x2ae8] sm:%s3601]
                  %4495 = vst [vmem:[%s3609 + $0x6e8] sm:%s3601] %v4494
                  %v4496 = vld [vmem:[%s3608 + $0x2aec] sm:%s3601]
                  %4497 = vst [vmem:[%s3609 + $0x6ec] sm:%s3601] %v4496
                  %v4498 = vld [vmem:[%s3608 + $0x2af0] sm:%s3601]
                  %4499 = vst [vmem:[%s3609 + $0x6f0] sm:%s3601] %v4498
                  %v4500 = vld [vmem:[%s3608 + $0x2af4] sm:%s3601]
                  %4501 = vst [vmem:[%s3609 + $0x6f4] sm:%s3601] %v4500
                  %v4502 = vld [vmem:[%s3608 + $0x2af8] sm:%s3601]
                  %4503 = vst [vmem:[%s3609 + $0x6f8] sm:%s3601] %v4502
                  %v4504 = vld [vmem:[%s3608 + $0x2afc] sm:%s3601]
                  %4505 = vst [vmem:[%s3609 + $0x6fc] sm:%s3601] %v4504
                  %v4506 = vld [vmem:[%s3608 + $0x3100] sm:%s3601]
                  %4507 = vst [vmem:[%s3609 + $0x700] sm:%s3601] %v4506
                  %v4508 = vld [vmem:[%s3608 + $0x3104] sm:%s3601]
                  %4509 = vst [vmem:[%s3609 + $0x704] sm:%s3601] %v4508
                  %v4510 = vld [vmem:[%s3608 + $0x3108] sm:%s3601]
                  %4511 = vst [vmem:[%s3609 + $0x708] sm:%s3601] %v4510
                  %v4512 = vld [vmem:[%s3608 + $0x310c] sm:%s3601]
                  %4513 = vst [vmem:[%s3609 + $0x70c] sm:%s3601] %v4512
                  %v4514 = vld [vmem:[%s3608 + $0x3110] sm:%s3601]
                  %4515 = vst [vmem:[%s3609 + $0x710] sm:%s3601] %v4514
                  %v4516 = vld [vmem:[%s3608 + $0x3114] sm:%s3601]
                  %4517 = vst [vmem:[%s3609 + $0x714] sm:%s3601] %v4516
                  %v4518 = vld [vmem:[%s3608 + $0x3118] sm:%s3601]
                  %4519 = vst [vmem:[%s3609 + $0x718] sm:%s3601] %v4518
                  %v4520 = vld [vmem:[%s3608 + $0x311c] sm:%s3601]
                  %4521 = vst [vmem:[%s3609 + $0x71c] sm:%s3601] %v4520
                  %v4522 = vld [vmem:[%s3608 + $0x3120] sm:%s3601]
                  %4523 = vst [vmem:[%s3609 + $0x720] sm:%s3601] %v4522
                  %v4524 = vld [vmem:[%s3608 + $0x3124] sm:%s3601]
                  %4525 = vst [vmem:[%s3609 + $0x724] sm:%s3601] %v4524
                  %v4526 = vld [vmem:[%s3608 + $0x3128] sm:%s3601]
                  %4527 = vst [vmem:[%s3609 + $0x728] sm:%s3601] %v4526
                  %v4528 = vld [vmem:[%s3608 + $0x312c] sm:%s3601]
                  %4529 = vst [vmem:[%s3609 + $0x72c] sm:%s3601] %v4528
                  %v4530 = vld [vmem:[%s3608 + $0x3130] sm:%s3601]
                  %4531 = vst [vmem:[%s3609 + $0x730] sm:%s3601] %v4530
                  %v4532 = vld [vmem:[%s3608 + $0x3134] sm:%s3601]
                  %4533 = vst [vmem:[%s3609 + $0x734] sm:%s3601] %v4532
                  %v4534 = vld [vmem:[%s3608 + $0x3138] sm:%s3601]
                  %4535 = vst [vmem:[%s3609 + $0x738] sm:%s3601] %v4534
                  %v4536 = vld [vmem:[%s3608 + $0x313c] sm:%s3601]
                  %4537 = vst [vmem:[%s3609 + $0x73c] sm:%s3601] %v4536
                  %v4538 = vld [vmem:[%s3608 + $0x3140] sm:%s3601]
                  %4539 = vst [vmem:[%s3609 + $0x740] sm:%s3601] %v4538
                  %v4540 = vld [vmem:[%s3608 + $0x3144] sm:%s3601]
                  %4541 = vst [vmem:[%s3609 + $0x744] sm:%s3601] %v4540
                  %v4542 = vld [vmem:[%s3608 + $0x3148] sm:%s3601]
                  %4543 = vst [vmem:[%s3609 + $0x748] sm:%s3601] %v4542
                  %v4544 = vld [vmem:[%s3608 + $0x314c] sm:%s3601]
                  %4545 = vst [vmem:[%s3609 + $0x74c] sm:%s3601] %v4544
                  %v4546 = vld [vmem:[%s3608 + $0x3150] sm:%s3601]
                  %4547 = vst [vmem:[%s3609 + $0x750] sm:%s3601] %v4546
                  %v4548 = vld [vmem:[%s3608 + $0x3154] sm:%s3601]
                  %4549 = vst [vmem:[%s3609 + $0x754] sm:%s3601] %v4548
                  %v4550 = vld [vmem:[%s3608 + $0x3158] sm:%s3601]
                  %4551 = vst [vmem:[%s3609 + $0x758] sm:%s3601] %v4550
                  %v4552 = vld [vmem:[%s3608 + $0x315c] sm:%s3601]
                  %4553 = vst [vmem:[%s3609 + $0x75c] sm:%s3601] %v4552
                  %v4554 = vld [vmem:[%s3608 + $0x3160] sm:%s3601]
                  %4555 = vst [vmem:[%s3609 + $0x760] sm:%s3601] %v4554
                  %v4556 = vld [vmem:[%s3608 + $0x3164] sm:%s3601]
                  %4557 = vst [vmem:[%s3609 + $0x764] sm:%s3601] %v4556
                  %v4558 = vld [vmem:[%s3608 + $0x3168] sm:%s3601]
                  %4559 = vst [vmem:[%s3609 + $0x768] sm:%s3601] %v4558
                  %v4560 = vld [vmem:[%s3608 + $0x316c] sm:%s3601]
                  %4561 = vst [vmem:[%s3609 + $0x76c] sm:%s3601] %v4560
                  %v4562 = vld [vmem:[%s3608 + $0x3170] sm:%s3601]
                  %4563 = vst [vmem:[%s3609 + $0x770] sm:%s3601] %v4562
                  %v4564 = vld [vmem:[%s3608 + $0x3174] sm:%s3601]
                  %4565 = vst [vmem:[%s3609 + $0x774] sm:%s3601] %v4564
                  %v4566 = vld [vmem:[%s3608 + $0x3178] sm:%s3601]
                  %4567 = vst [vmem:[%s3609 + $0x778] sm:%s3601] %v4566
                  %v4568 = vld [vmem:[%s3608 + $0x317c] sm:%s3601]
                  %4569 = vst [vmem:[%s3609 + $0x77c] sm:%s3601] %v4568
                  %v4570 = vld [vmem:[%s3608 + $0x3180] sm:%s3601]
                  %4571 = vst [vmem:[%s3609 + $0x780] sm:%s3601] %v4570
                  %v4572 = vld [vmem:[%s3608 + $0x3184] sm:%s3601]
                  %4573 = vst [vmem:[%s3609 + $0x784] sm:%s3601] %v4572
                  %v4574 = vld [vmem:[%s3608 + $0x3188] sm:%s3601]
                  %4575 = vst [vmem:[%s3609 + $0x788] sm:%s3601] %v4574
                  %v4576 = vld [vmem:[%s3608 + $0x318c] sm:%s3601]
                  %4577 = vst [vmem:[%s3609 + $0x78c] sm:%s3601] %v4576
                  %v4578 = vld [vmem:[%s3608 + $0x3190] sm:%s3601]
                  %4579 = vst [vmem:[%s3609 + $0x790] sm:%s3601] %v4578
                  %v4580 = vld [vmem:[%s3608 + $0x3194] sm:%s3601]
                  %4581 = vst [vmem:[%s3609 + $0x794] sm:%s3601] %v4580
                  %v4582 = vld [vmem:[%s3608 + $0x3198] sm:%s3601]
                  %4583 = vst [vmem:[%s3609 + $0x798] sm:%s3601] %v4582
                  %v4584 = vld [vmem:[%s3608 + $0x319c] sm:%s3601]
                  %4585 = vst [vmem:[%s3609 + $0x79c] sm:%s3601] %v4584
                  %v4586 = vld [vmem:[%s3608 + $0x31a0] sm:%s3601]
                  %4587 = vst [vmem:[%s3609 + $0x7a0] sm:%s3601] %v4586
                  %v4588 = vld [vmem:[%s3608 + $0x31a4] sm:%s3601]
                  %4589 = vst [vmem:[%s3609 + $0x7a4] sm:%s3601] %v4588
                  %v4590 = vld [vmem:[%s3608 + $0x31a8] sm:%s3601]
                  %4591 = vst [vmem:[%s3609 + $0x7a8] sm:%s3601] %v4590
                  %v4592 = vld [vmem:[%s3608 + $0x31ac] sm:%s3601]
                  %4593 = vst [vmem:[%s3609 + $0x7ac] sm:%s3601] %v4592
                  %v4594 = vld [vmem:[%s3608 + $0x31b0] sm:%s3601]
                  %4595 = vst [vmem:[%s3609 + $0x7b0] sm:%s3601] %v4594
                  %v4596 = vld [vmem:[%s3608 + $0x31b4] sm:%s3601]
                  %4597 = vst [vmem:[%s3609 + $0x7b4] sm:%s3601] %v4596
                  %v4598 = vld [vmem:[%s3608 + $0x31b8] sm:%s3601]
                  %4599 = vst [vmem:[%s3609 + $0x7b8] sm:%s3601] %v4598
                  %v4600 = vld [vmem:[%s3608 + $0x31bc] sm:%s3601]
                  %4601 = vst [vmem:[%s3609 + $0x7bc] sm:%s3601] %v4600
                  %v4602 = vld [vmem:[%s3608 + $0x31c0] sm:%s3601]
                  %4603 = vst [vmem:[%s3609 + $0x7c0] sm:%s3601] %v4602
                  %v4604 = vld [vmem:[%s3608 + $0x31c4] sm:%s3601]
                  %4605 = vst [vmem:[%s3609 + $0x7c4] sm:%s3601] %v4604
                  %v4606 = vld [vmem:[%s3608 + $0x31c8] sm:%s3601]
                  %4607 = vst [vmem:[%s3609 + $0x7c8] sm:%s3601] %v4606
                  %v4608 = vld [vmem:[%s3608 + $0x31cc] sm:%s3601]
                  %4609 = vst [vmem:[%s3609 + $0x7cc] sm:%s3601] %v4608
                  %v4610 = vld [vmem:[%s3608 + $0x31d0] sm:%s3601]
                  %4611 = vst [vmem:[%s3609 + $0x7d0] sm:%s3601] %v4610
                  %v4612 = vld [vmem:[%s3608 + $0x31d4] sm:%s3601]
                  %4613 = vst [vmem:[%s3609 + $0x7d4] sm:%s3601] %v4612
                  %v4614 = vld [vmem:[%s3608 + $0x31d8] sm:%s3601]
                  %4615 = vst [vmem:[%s3609 + $0x7d8] sm:%s3601] %v4614
                  %v4616 = vld [vmem:[%s3608 + $0x31dc] sm:%s3601]
                  %4617 = vst [vmem:[%s3609 + $0x7dc] sm:%s3601] %v4616
                  %v4618 = vld [vmem:[%s3608 + $0x31e0] sm:%s3601]
                  %4619 = vst [vmem:[%s3609 + $0x7e0] sm:%s3601] %v4618
                  %v4620 = vld [vmem:[%s3608 + $0x31e4] sm:%s3601]
                  %4621 = vst [vmem:[%s3609 + $0x7e4] sm:%s3601] %v4620
                  %v4622 = vld [vmem:[%s3608 + $0x31e8] sm:%s3601]
                  %4623 = vst [vmem:[%s3609 + $0x7e8] sm:%s3601] %v4622
                  %v4624 = vld [vmem:[%s3608 + $0x31ec] sm:%s3601]
                  %4625 = vst [vmem:[%s3609 + $0x7ec] sm:%s3601] %v4624
                  %v4626 = vld [vmem:[%s3608 + $0x31f0] sm:%s3601]
                  %4627 = vst [vmem:[%s3609 + $0x7f0] sm:%s3601] %v4626
                  %v4628 = vld [vmem:[%s3608 + $0x31f4] sm:%s3601]
                  %4629 = vst [vmem:[%s3609 + $0x7f4] sm:%s3601] %v4628
                  %v4630 = vld [vmem:[%s3608 + $0x31f8] sm:%s3601]
                  %4631 = vst [vmem:[%s3609 + $0x7f8] sm:%s3601] %v4630
                  %v4632 = vld [vmem:[%s3608 + $0x31fc] sm:%s3601]
                  %4633 = vst [vmem:[%s3609 + $0x7fc] sm:%s3601] %v4632
                  %v4634 = vld [vmem:[%s3608 + $0x3800] sm:%s3601]
                  %4635 = vst [vmem:[%s3609 + $0x800] sm:%s3601] %v4634
                  %v4636 = vld [vmem:[%s3608 + $0x3804] sm:%s3601]
                  %4637 = vst [vmem:[%s3609 + $0x804] sm:%s3601] %v4636
                  %v4638 = vld [vmem:[%s3608 + $0x3808] sm:%s3601]
                  %4639 = vst [vmem:[%s3609 + $0x808] sm:%s3601] %v4638
                  %v4640 = vld [vmem:[%s3608 + $0x380c] sm:%s3601]
                  %4641 = vst [vmem:[%s3609 + $0x80c] sm:%s3601] %v4640
                  %v4642 = vld [vmem:[%s3608 + $0x3810] sm:%s3601]
                  %4643 = vst [vmem:[%s3609 + $0x810] sm:%s3601] %v4642
                  %v4644 = vld [vmem:[%s3608 + $0x3814] sm:%s3601]
                  %4645 = vst [vmem:[%s3609 + $0x814] sm:%s3601] %v4644
                  %v4646 = vld [vmem:[%s3608 + $0x3818] sm:%s3601]
                  %4647 = vst [vmem:[%s3609 + $0x818] sm:%s3601] %v4646
                  %v4648 = vld [vmem:[%s3608 + $0x381c] sm:%s3601]
                  %4649 = vst [vmem:[%s3609 + $0x81c] sm:%s3601] %v4648
                  %v4650 = vld [vmem:[%s3608 + $0x3820] sm:%s3601]
                  %4651 = vst [vmem:[%s3609 + $0x820] sm:%s3601] %v4650
                  %v4652 = vld [vmem:[%s3608 + $0x3824] sm:%s3601]
                  %4653 = vst [vmem:[%s3609 + $0x824] sm:%s3601] %v4652
                  %v4654 = vld [vmem:[%s3608 + $0x3828] sm:%s3601]
                  %4655 = vst [vmem:[%s3609 + $0x828] sm:%s3601] %v4654
                  %v4656 = vld [vmem:[%s3608 + $0x382c] sm:%s3601]
                  %4657 = vst [vmem:[%s3609 + $0x82c] sm:%s3601] %v4656
                  %v4658 = vld [vmem:[%s3608 + $0x3830] sm:%s3601]
                  %4659 = vst [vmem:[%s3609 + $0x830] sm:%s3601] %v4658
                  %v4660 = vld [vmem:[%s3608 + $0x3834] sm:%s3601]
                  %4661 = vst [vmem:[%s3609 + $0x834] sm:%s3601] %v4660
                  %v4662 = vld [vmem:[%s3608 + $0x3838] sm:%s3601]
                  %4663 = vst [vmem:[%s3609 + $0x838] sm:%s3601] %v4662
                  %v4664 = vld [vmem:[%s3608 + $0x383c] sm:%s3601]
                  %4665 = vst [vmem:[%s3609 + $0x83c] sm:%s3601] %v4664
                  %v4666 = vld [vmem:[%s3608 + $0x3840] sm:%s3601]
                  %4667 = vst [vmem:[%s3609 + $0x840] sm:%s3601] %v4666
                  %v4668 = vld [vmem:[%s3608 + $0x3844] sm:%s3601]
                  %4669 = vst [vmem:[%s3609 + $0x844] sm:%s3601] %v4668
                  %v4670 = vld [vmem:[%s3608 + $0x3848] sm:%s3601]
                  %4671 = vst [vmem:[%s3609 + $0x848] sm:%s3601] %v4670
                  %v4672 = vld [vmem:[%s3608 + $0x384c] sm:%s3601]
                  %4673 = vst [vmem:[%s3609 + $0x84c] sm:%s3601] %v4672
                  %v4674 = vld [vmem:[%s3608 + $0x3850] sm:%s3601]
                  %4675 = vst [vmem:[%s3609 + $0x850] sm:%s3601] %v4674
                  %v4676 = vld [vmem:[%s3608 + $0x3854] sm:%s3601]
                  %4677 = vst [vmem:[%s3609 + $0x854] sm:%s3601] %v4676
                  %v4678 = vld [vmem:[%s3608 + $0x3858] sm:%s3601]
                  %4679 = vst [vmem:[%s3609 + $0x858] sm:%s3601] %v4678
                  %v4680 = vld [vmem:[%s3608 + $0x385c] sm:%s3601]
                  %4681 = vst [vmem:[%s3609 + $0x85c] sm:%s3601] %v4680
                  %v4682 = vld [vmem:[%s3608 + $0x3860] sm:%s3601]
                  %4683 = vst [vmem:[%s3609 + $0x860] sm:%s3601] %v4682
                  %v4684 = vld [vmem:[%s3608 + $0x3864] sm:%s3601]
                  %4685 = vst [vmem:[%s3609 + $0x864] sm:%s3601] %v4684
                  %v4686 = vld [vmem:[%s3608 + $0x3868] sm:%s3601]
                  %4687 = vst [vmem:[%s3609 + $0x868] sm:%s3601] %v4686
                  %v4688 = vld [vmem:[%s3608 + $0x386c] sm:%s3601]
                  %4689 = vst [vmem:[%s3609 + $0x86c] sm:%s3601] %v4688
                  %v4690 = vld [vmem:[%s3608 + $0x3870] sm:%s3601]
                  %4691 = vst [vmem:[%s3609 + $0x870] sm:%s3601] %v4690
                  %v4692 = vld [vmem:[%s3608 + $0x3874] sm:%s3601]
                  %4693 = vst [vmem:[%s3609 + $0x874] sm:%s3601] %v4692
                  %v4694 = vld [vmem:[%s3608 + $0x3878] sm:%s3601]
                  %4695 = vst [vmem:[%s3609 + $0x878] sm:%s3601] %v4694
                  %v4696 = vld [vmem:[%s3608 + $0x387c] sm:%s3601]
                  %4697 = vst [vmem:[%s3609 + $0x87c] sm:%s3601] %v4696
                  %v4698 = vld [vmem:[%s3608 + $0x3880] sm:%s3601]
                  %4699 = vst [vmem:[%s3609 + $0x880] sm:%s3601] %v4698
                  %v4700 = vld [vmem:[%s3608 + $0x3884] sm:%s3601]
                  %4701 = vst [vmem:[%s3609 + $0x884] sm:%s3601] %v4700
                  %v4702 = vld [vmem:[%s3608 + $0x3888] sm:%s3601]
                  %4703 = vst [vmem:[%s3609 + $0x888] sm:%s3601] %v4702
                  %v4704 = vld [vmem:[%s3608 + $0x388c] sm:%s3601]
                  %4705 = vst [vmem:[%s3609 + $0x88c] sm:%s3601] %v4704
                  %v4706 = vld [vmem:[%s3608 + $0x3890] sm:%s3601]
                  %4707 = vst [vmem:[%s3609 + $0x890] sm:%s3601] %v4706
                  %v4708 = vld [vmem:[%s3608 + $0x3894] sm:%s3601]
                  %4709 = vst [vmem:[%s3609 + $0x894] sm:%s3601] %v4708
                  %v4710 = vld [vmem:[%s3608 + $0x3898] sm:%s3601]
                  %4711 = vst [vmem:[%s3609 + $0x898] sm:%s3601] %v4710
                  %v4712 = vld [vmem:[%s3608 + $0x389c] sm:%s3601]
                  %4713 = vst [vmem:[%s3609 + $0x89c] sm:%s3601] %v4712
                  %v4714 = vld [vmem:[%s3608 + $0x38a0] sm:%s3601]
                  %4715 = vst [vmem:[%s3609 + $0x8a0] sm:%s3601] %v4714
                  %v4716 = vld [vmem:[%s3608 + $0x38a4] sm:%s3601]
                  %4717 = vst [vmem:[%s3609 + $0x8a4] sm:%s3601] %v4716
                  %v4718 = vld [vmem:[%s3608 + $0x38a8] sm:%s3601]
                  %4719 = vst [vmem:[%s3609 + $0x8a8] sm:%s3601] %v4718
                  %v4720 = vld [vmem:[%s3608 + $0x38ac] sm:%s3601]
                  %4721 = vst [vmem:[%s3609 + $0x8ac] sm:%s3601] %v4720
                  %v4722 = vld [vmem:[%s3608 + $0x38b0] sm:%s3601]
                  %4723 = vst [vmem:[%s3609 + $0x8b0] sm:%s3601] %v4722
                  %v4724 = vld [vmem:[%s3608 + $0x38b4] sm:%s3601]
                  %4725 = vst [vmem:[%s3609 + $0x8b4] sm:%s3601] %v4724
                  %v4726 = vld [vmem:[%s3608 + $0x38b8] sm:%s3601]
                  %4727 = vst [vmem:[%s3609 + $0x8b8] sm:%s3601] %v4726
                  %v4728 = vld [vmem:[%s3608 + $0x38bc] sm:%s3601]
                  %4729 = vst [vmem:[%s3609 + $0x8bc] sm:%s3601] %v4728
                  %v4730 = vld [vmem:[%s3608 + $0x38c0] sm:%s3601]
                  %4731 = vst [vmem:[%s3609 + $0x8c0] sm:%s3601] %v4730
                  %v4732 = vld [vmem:[%s3608 + $0x38c4] sm:%s3601]
                  %4733 = vst [vmem:[%s3609 + $0x8c4] sm:%s3601] %v4732
                  %v4734 = vld [vmem:[%s3608 + $0x38c8] sm:%s3601]
                  %4735 = vst [vmem:[%s3609 + $0x8c8] sm:%s3601] %v4734
                  %v4736 = vld [vmem:[%s3608 + $0x38cc] sm:%s3601]
                  %4737 = vst [vmem:[%s3609 + $0x8cc] sm:%s3601] %v4736
                  %v4738 = vld [vmem:[%s3608 + $0x38d0] sm:%s3601]
                  %4739 = vst [vmem:[%s3609 + $0x8d0] sm:%s3601] %v4738
                  %v4740 = vld [vmem:[%s3608 + $0x38d4] sm:%s3601]
                  %4741 = vst [vmem:[%s3609 + $0x8d4] sm:%s3601] %v4740
                  %v4742 = vld [vmem:[%s3608 + $0x38d8] sm:%s3601]
                  %4743 = vst [vmem:[%s3609 + $0x8d8] sm:%s3601] %v4742
                  %v4744 = vld [vmem:[%s3608 + $0x38dc] sm:%s3601]
                  %4745 = vst [vmem:[%s3609 + $0x8dc] sm:%s3601] %v4744
                  %v4746 = vld [vmem:[%s3608 + $0x38e0] sm:%s3601]
                  %4747 = vst [vmem:[%s3609 + $0x8e0] sm:%s3601] %v4746
                  %v4748 = vld [vmem:[%s3608 + $0x38e4] sm:%s3601]
                  %4749 = vst [vmem:[%s3609 + $0x8e4] sm:%s3601] %v4748
                  %v4750 = vld [vmem:[%s3608 + $0x38e8] sm:%s3601]
                  %4751 = vst [vmem:[%s3609 + $0x8e8] sm:%s3601] %v4750
                  %v4752 = vld [vmem:[%s3608 + $0x38ec] sm:%s3601]
                  %4753 = vst [vmem:[%s3609 + $0x8ec] sm:%s3601] %v4752
                  %v4754 = vld [vmem:[%s3608 + $0x38f0] sm:%s3601]
                  %4755 = vst [vmem:[%s3609 + $0x8f0] sm:%s3601] %v4754
                  %v4756 = vld [vmem:[%s3608 + $0x38f4] sm:%s3601]
                  %4757 = vst [vmem:[%s3609 + $0x8f4] sm:%s3601] %v4756
                  %v4758 = vld [vmem:[%s3608 + $0x38f8] sm:%s3601]
                  %4759 = vst [vmem:[%s3609 + $0x8f8] sm:%s3601] %v4758
                  %v4760 = vld [vmem:[%s3608 + $0x38fc] sm:%s3601]
                  %4761 = vst [vmem:[%s3609 + $0x8fc] sm:%s3601] %v4760
                $region66: #{_stem.3} parent=53 // loop_footer
                  %s3607 = sadd.s32 1, %s3603
                $region67: #{_stem.3} parent=53 // loop_footer_branch
                  %3602 = sbr.rel target = $region63
                $region68: #{_stem.3} parent=53 // loop_exit
                  _
              $region54: #{_stem.3} parent=27 // pred_fallthru
                _
            $region28: #{_stem.3} parent=23 // pred_fallthru
              _
            // Predicated region
            $region29: #{_stem.3} parent=23 // pred_check
              _
            $region30: #{_stem.3} parent=23 // pred_check_branch
              %93 = sbr.rel (0) target = $region32
            $region31: #{_stem.3} parent=23 // pred_region
              %s95 = ssub.s32 16, 1
              loop: start=0, step=1, limit=1
              $region33: #{_stem.3} parent=31 // loop_pre_header
                _
              $region34: #{_stem.3} parent=31 // loop_header
                %s97 = sphi 0, %s101
                %p98 = scmp.ge.s32.totalorder %s97, 1
                %s102 = sphi %s87, %s87
                %s103 = sphi %s84, %s84
              $region35: #{_stem.3} parent=31 // loop_header_branch
                %100 = sbr.rel (%p98) target = $region39
              $region36: #{_stem.3} parent=31 // loop_body
                %v104 = vld [vmem:[%s102] sm:%s95]
                %105 = vst [vmem:[%s103] sm:%s95] %v104
                %v106 = vld [vmem:[%s102 + $0x4] sm:%s95]
                %107 = vst [vmem:[%s103 + $0x4] sm:%s95] %v106
                %v108 = vld [vmem:[%s102 + $0x8] sm:%s95]
                %109 = vst [vmem:[%s103 + $0x8] sm:%s95] %v108
                %v110 = vld [vmem:[%s102 + $0xc] sm:%s95]
                %111 = vst [vmem:[%s103 + $0xc] sm:%s95] %v110
                %v112 = vld [vmem:[%s102 + $0x10] sm:%s95]
                %113 = vst [vmem:[%s103 + $0x10] sm:%s95] %v112
                %v114 = vld [vmem:[%s102 + $0x14] sm:%s95]
                %115 = vst [vmem:[%s103 + $0x14] sm:%s95] %v114
                %v116 = vld [vmem:[%s102 + $0x18] sm:%s95]
                %117 = vst [vmem:[%s103 + $0x18] sm:%s95] %v116
                %v118 = vld [vmem:[%s102 + $0x1c] sm:%s95]
                %119 = vst [vmem:[%s103 + $0x1c] sm:%s95] %v118
                %v120 = vld [vmem:[%s102 + $0x20] sm:%s95]
                %121 = vst [vmem:[%s103 + $0x20] sm:%s95] %v120
                %v122 = vld [vmem:[%s102 + $0x24] sm:%s95]
                %123 = vst [vmem:[%s103 + $0x24] sm:%s95] %v122
                %v124 = vld [vmem:[%s102 + $0x28] sm:%s95]
                %125 = vst [vmem:[%s103 + $0x28] sm:%s95] %v124
                %v126 = vld [vmem:[%s102 + $0x2c] sm:%s95]
                %127 = vst [vmem:[%s103 + $0x2c] sm:%s95] %v126
                %v128 = vld [vmem:[%s102 + $0x30] sm:%s95]
                %129 = vst [vmem:[%s103 + $0x30] sm:%s95] %v128
                %v130 = vld [vmem:[%s102 + $0x34] sm:%s95]
                %131 = vst [vmem:[%s103 + $0x34] sm:%s95] %v130
                %v132 = vld [vmem:[%s102 + $0x38] sm:%s95]
                %133 = vst [vmem:[%s103 + $0x38] sm:%s95] %v132
                %v134 = vld [vmem:[%s102 + $0x3c] sm:%s95]
                %135 = vst [vmem:[%s103 + $0x3c] sm:%s95] %v134
                %v136 = vld [vmem:[%s102 + $0x40] sm:%s95]
                %137 = vst [vmem:[%s103 + $0x40] sm:%s95] %v136
                %v138 = vld [vmem:[%s102 + $0x44] sm:%s95]
                %139 = vst [vmem:[%s103 + $0x44] sm:%s95] %v138
                %v140 = vld [vmem:[%s102 + $0x48] sm:%s95]
                %141 = vst [vmem:[%s103 + $0x48] sm:%s95] %v140
                %v142 = vld [vmem:[%s102 + $0x4c] sm:%s95]
                %143 = vst [vmem:[%s103 + $0x4c] sm:%s95] %v142
                %v144 = vld [vmem:[%s102 + $0x50] sm:%s95]
                %145 = vst [vmem:[%s103 + $0x50] sm:%s95] %v144
                %v146 = vld [vmem:[%s102 + $0x54] sm:%s95]
                %147 = vst [vmem:[%s103 + $0x54] sm:%s95] %v146
                %v148 = vld [vmem:[%s102 + $0x58] sm:%s95]
                %149 = vst [vmem:[%s103 + $0x58] sm:%s95] %v148
                %v150 = vld [vmem:[%s102 + $0x5c] sm:%s95]
                %151 = vst [vmem:[%s103 + $0x5c] sm:%s95] %v150
                %v152 = vld [vmem:[%s102 + $0x60] sm:%s95]
                %153 = vst [vmem:[%s103 + $0x60] sm:%s95] %v152
                %v154 = vld [vmem:[%s102 + $0x64] sm:%s95]
                %155 = vst [vmem:[%s103 + $0x64] sm:%s95] %v154
                %v156 = vld [vmem:[%s102 + $0x68] sm:%s95]
                %157 = vst [vmem:[%s103 + $0x68] sm:%s95] %v156
                %v158 = vld [vmem:[%s102 + $0x6c] sm:%s95]
                %159 = vst [vmem:[%s103 + $0x6c] sm:%s95] %v158
                %v160 = vld [vmem:[%s102 + $0x70] sm:%s95]
                %161 = vst [vmem:[%s103 + $0x70] sm:%s95] %v160
                %v162 = vld [vmem:[%s102 + $0x74] sm:%s95]
                %163 = vst [vmem:[%s103 + $0x74] sm:%s95] %v162
                %v164 = vld [vmem:[%s102 + $0x78] sm:%s95]
                %165 = vst [vmem:[%s103 + $0x78] sm:%s95] %v164
                %v166 = vld [vmem:[%s102 + $0x7c] sm:%s95]
                %167 = vst [vmem:[%s103 + $0x7c] sm:%s95] %v166
                %v168 = vld [vmem:[%s102 + $0x80] sm:%s95]
                %169 = vst [vmem:[%s103 + $0x80] sm:%s95] %v168
                %v170 = vld [vmem:[%s102 + $0x84] sm:%s95]
                %171 = vst [vmem:[%s103 + $0x84] sm:%s95] %v170
                %v172 = vld [vmem:[%s102 + $0x88] sm:%s95]
                %173 = vst [vmem:[%s103 + $0x88] sm:%s95] %v172
                %v174 = vld [vmem:[%s102 + $0x8c] sm:%s95]
                %175 = vst [vmem:[%s103 + $0x8c] sm:%s95] %v174
                %v176 = vld [vmem:[%s102 + $0x90] sm:%s95]
                %177 = vst [vmem:[%s103 + $0x90] sm:%s95] %v176
                %v178 = vld [vmem:[%s102 + $0x94] sm:%s95]
                %179 = vst [vmem:[%s103 + $0x94] sm:%s95] %v178
                %v180 = vld [vmem:[%s102 + $0x98] sm:%s95]
                %181 = vst [vmem:[%s103 + $0x98] sm:%s95] %v180
                %v182 = vld [vmem:[%s102 + $0x9c] sm:%s95]
                %183 = vst [vmem:[%s103 + $0x9c] sm:%s95] %v182
                %v184 = vld [vmem:[%s102 + $0xa0] sm:%s95]
                %185 = vst [vmem:[%s103 + $0xa0] sm:%s95] %v184
                %v186 = vld [vmem:[%s102 + $0xa4] sm:%s95]
                %187 = vst [vmem:[%s103 + $0xa4] sm:%s95] %v186
                %v188 = vld [vmem:[%s102 + $0xa8] sm:%s95]
                %189 = vst [vmem:[%s103 + $0xa8] sm:%s95] %v188
                %v190 = vld [vmem:[%s102 + $0xac] sm:%s95]
                %191 = vst [vmem:[%s103 + $0xac] sm:%s95] %v190
                %v192 = vld [vmem:[%s102 + $0xb0] sm:%s95]
                %193 = vst [vmem:[%s103 + $0xb0] sm:%s95] %v192
                %v194 = vld [vmem:[%s102 + $0xb4] sm:%s95]
                %195 = vst [vmem:[%s103 + $0xb4] sm:%s95] %v194
                %v196 = vld [vmem:[%s102 + $0xb8] sm:%s95]
                %197 = vst [vmem:[%s103 + $0xb8] sm:%s95] %v196
                %v198 = vld [vmem:[%s102 + $0xbc] sm:%s95]
                %199 = vst [vmem:[%s103 + $0xbc] sm:%s95] %v198
                %v200 = vld [vmem:[%s102 + $0xc0] sm:%s95]
                %201 = vst [vmem:[%s103 + $0xc0] sm:%s95] %v200
                %v202 = vld [vmem:[%s102 + $0xc4] sm:%s95]
                %203 = vst [vmem:[%s103 + $0xc4] sm:%s95] %v202
                %v204 = vld [vmem:[%s102 + $0xc8] sm:%s95]
                %205 = vst [vmem:[%s103 + $0xc8] sm:%s95] %v204
                %v206 = vld [vmem:[%s102 + $0xcc] sm:%s95]
                %207 = vst [vmem:[%s103 + $0xcc] sm:%s95] %v206
                %v208 = vld [vmem:[%s102 + $0xd0] sm:%s95]
                %209 = vst [vmem:[%s103 + $0xd0] sm:%s95] %v208
                %v210 = vld [vmem:[%s102 + $0xd4] sm:%s95]
                %211 = vst [vmem:[%s103 + $0xd4] sm:%s95] %v210
                %v212 = vld [vmem:[%s102 + $0xd8] sm:%s95]
                %213 = vst [vmem:[%s103 + $0xd8] sm:%s95] %v212
                %v214 = vld [vmem:[%s102 + $0xdc] sm:%s95]
                %215 = vst [vmem:[%s103 + $0xdc] sm:%s95] %v214
                %v216 = vld [vmem:[%s102 + $0xe0] sm:%s95]
                %217 = vst [vmem:[%s103 + $0xe0] sm:%s95] %v216
                %v218 = vld [vmem:[%s102 + $0xe4] sm:%s95]
                %219 = vst [vmem:[%s103 + $0xe4] sm:%s95] %v218
                %v220 = vld [vmem:[%s102 + $0xe8] sm:%s95]
                %221 = vst [vmem:[%s103 + $0xe8] sm:%s95] %v220
                %v222 = vld [vmem:[%s102 + $0xec] sm:%s95]
                %223 = vst [vmem:[%s103 + $0xec] sm:%s95] %v222
                %v224 = vld [vmem:[%s102 + $0xf0] sm:%s95]
                %225 = vst [vmem:[%s103 + $0xf0] sm:%s95] %v224
                %v226 = vld [vmem:[%s102 + $0xf4] sm:%s95]
                %227 = vst [vmem:[%s103 + $0xf4] sm:%s95] %v226
                %v228 = vld [vmem:[%s102 + $0xf8] sm:%s95]
                %229 = vst [vmem:[%s103 + $0xf8] sm:%s95] %v228
                %v230 = vld [vmem:[%s102 + $0xfc] sm:%s95]
                %231 = vst [vmem:[%s103 + $0xfc] sm:%s95] %v230
                %v232 = vld [vmem:[%s102 + $0x700] sm:%s95]
                %233 = vst [vmem:[%s103 + $0x100] sm:%s95] %v232
                %v234 = vld [vmem:[%s102 + $0x704] sm:%s95]
                %235 = vst [vmem:[%s103 + $0x104] sm:%s95] %v234
                %v236 = vld [vmem:[%s102 + $0x708] sm:%s95]
                %237 = vst [vmem:[%s103 + $0x108] sm:%s95] %v236
                %v238 = vld [vmem:[%s102 + $0x70c] sm:%s95]
                %239 = vst [vmem:[%s103 + $0x10c] sm:%s95] %v238
                %v240 = vld [vmem:[%s102 + $0x710] sm:%s95]
                %241 = vst [vmem:[%s103 + $0x110] sm:%s95] %v240
                %v242 = vld [vmem:[%s102 + $0x714] sm:%s95]
                %243 = vst [vmem:[%s103 + $0x114] sm:%s95] %v242
                %v244 = vld [vmem:[%s102 + $0x718] sm:%s95]
                %245 = vst [vmem:[%s103 + $0x118] sm:%s95] %v244
                %v246 = vld [vmem:[%s102 + $0x71c] sm:%s95]
                %247 = vst [vmem:[%s103 + $0x11c] sm:%s95] %v246
                %v248 = vld [vmem:[%s102 + $0x720] sm:%s95]
                %249 = vst [vmem:[%s103 + $0x120] sm:%s95] %v248
                %v250 = vld [vmem:[%s102 + $0x724] sm:%s95]
                %251 = vst [vmem:[%s103 + $0x124] sm:%s95] %v250
                %v252 = vld [vmem:[%s102 + $0x728] sm:%s95]
                %253 = vst [vmem:[%s103 + $0x128] sm:%s95] %v252
                %v254 = vld [vmem:[%s102 + $0x72c] sm:%s95]
                %255 = vst [vmem:[%s103 + $0x12c] sm:%s95] %v254
                %v256 = vld [vmem:[%s102 + $0x730] sm:%s95]
                %257 = vst [vmem:[%s103 + $0x130] sm:%s95] %v256
                %v258 = vld [vmem:[%s102 + $0x734] sm:%s95]
                %259 = vst [vmem:[%s103 + $0x134] sm:%s95] %v258
                %v260 = vld [vmem:[%s102 + $0x738] sm:%s95]
                %261 = vst [vmem:[%s103 + $0x138] sm:%s95] %v260
                %v262 = vld [vmem:[%s102 + $0x73c] sm:%s95]
                %263 = vst [vmem:[%s103 + $0x13c] sm:%s95] %v262
                %v264 = vld [vmem:[%s102 + $0x740] sm:%s95]
                %265 = vst [vmem:[%s103 + $0x140] sm:%s95] %v264
                %v266 = vld [vmem:[%s102 + $0x744] sm:%s95]
                %267 = vst [vmem:[%s103 + $0x144] sm:%s95] %v266
                %v268 = vld [vmem:[%s102 + $0x748] sm:%s95]
                %269 = vst [vmem:[%s103 + $0x148] sm:%s95] %v268
                %v270 = vld [vmem:[%s102 + $0x74c] sm:%s95]
                %271 = vst [vmem:[%s103 + $0x14c] sm:%s95] %v270
                %v272 = vld [vmem:[%s102 + $0x750] sm:%s95]
                %273 = vst [vmem:[%s103 + $0x150] sm:%s95] %v272
                %v274 = vld [vmem:[%s102 + $0x754] sm:%s95]
                %275 = vst [vmem:[%s103 + $0x154] sm:%s95] %v274
                %v276 = vld [vmem:[%s102 + $0x758] sm:%s95]
                %277 = vst [vmem:[%s103 + $0x158] sm:%s95] %v276
                %v278 = vld [vmem:[%s102 + $0x75c] sm:%s95]
                %279 = vst [vmem:[%s103 + $0x15c] sm:%s95] %v278
                %v280 = vld [vmem:[%s102 + $0x760] sm:%s95]
                %281 = vst [vmem:[%s103 + $0x160] sm:%s95] %v280
                %v282 = vld [vmem:[%s102 + $0x764] sm:%s95]
                %283 = vst [vmem:[%s103 + $0x164] sm:%s95] %v282
                %v284 = vld [vmem:[%s102 + $0x768] sm:%s95]
                %285 = vst [vmem:[%s103 + $0x168] sm:%s95] %v284
                %v286 = vld [vmem:[%s102 + $0x76c] sm:%s95]
                %287 = vst [vmem:[%s103 + $0x16c] sm:%s95] %v286
                %v288 = vld [vmem:[%s102 + $0x770] sm:%s95]
                %289 = vst [vmem:[%s103 + $0x170] sm:%s95] %v288
                %v290 = vld [vmem:[%s102 + $0x774] sm:%s95]
                %291 = vst [vmem:[%s103 + $0x174] sm:%s95] %v290
                %v292 = vld [vmem:[%s102 + $0x778] sm:%s95]
                %293 = vst [vmem:[%s103 + $0x178] sm:%s95] %v292
                %v294 = vld [vmem:[%s102 + $0x77c] sm:%s95]
                %295 = vst [vmem:[%s103 + $0x17c] sm:%s95] %v294
                %v296 = vld [vmem:[%s102 + $0x780] sm:%s95]
                %297 = vst [vmem:[%s103 + $0x180] sm:%s95] %v296
                %v298 = vld [vmem:[%s102 + $0x784] sm:%s95]
                %299 = vst [vmem:[%s103 + $0x184] sm:%s95] %v298
                %v300 = vld [vmem:[%s102 + $0x788] sm:%s95]
                %301 = vst [vmem:[%s103 + $0x188] sm:%s95] %v300
                %v302 = vld [vmem:[%s102 + $0x78c] sm:%s95]
                %303 = vst [vmem:[%s103 + $0x18c] sm:%s95] %v302
                %v304 = vld [vmem:[%s102 + $0x790] sm:%s95]
                %305 = vst [vmem:[%s103 + $0x190] sm:%s95] %v304
                %v306 = vld [vmem:[%s102 + $0x794] sm:%s95]
                %307 = vst [vmem:[%s103 + $0x194] sm:%s95] %v306
                %v308 = vld [vmem:[%s102 + $0x798] sm:%s95]
                %309 = vst [vmem:[%s103 + $0x198] sm:%s95] %v308
                %v310 = vld [vmem:[%s102 + $0x79c] sm:%s95]
                %311 = vst [vmem:[%s103 + $0x19c] sm:%s95] %v310
                %v312 = vld [vmem:[%s102 + $0x7a0] sm:%s95]
                %313 = vst [vmem:[%s103 + $0x1a0] sm:%s95] %v312
                %v314 = vld [vmem:[%s102 + $0x7a4] sm:%s95]
                %315 = vst [vmem:[%s103 + $0x1a4] sm:%s95] %v314
                %v316 = vld [vmem:[%s102 + $0x7a8] sm:%s95]
                %317 = vst [vmem:[%s103 + $0x1a8] sm:%s95] %v316
                %v318 = vld [vmem:[%s102 + $0x7ac] sm:%s95]
                %319 = vst [vmem:[%s103 + $0x1ac] sm:%s95] %v318
                %v320 = vld [vmem:[%s102 + $0x7b0] sm:%s95]
                %321 = vst [vmem:[%s103 + $0x1b0] sm:%s95] %v320
                %v322 = vld [vmem:[%s102 + $0x7b4] sm:%s95]
                %323 = vst [vmem:[%s103 + $0x1b4] sm:%s95] %v322
                %v324 = vld [vmem:[%s102 + $0x7b8] sm:%s95]
                %325 = vst [vmem:[%s103 + $0x1b8] sm:%s95] %v324
                %v326 = vld [vmem:[%s102 + $0x7bc] sm:%s95]
                %327 = vst [vmem:[%s103 + $0x1bc] sm:%s95] %v326
                %v328 = vld [vmem:[%s102 + $0x7c0] sm:%s95]
                %329 = vst [vmem:[%s103 + $0x1c0] sm:%s95] %v328
                %v330 = vld [vmem:[%s102 + $0x7c4] sm:%s95]
                %331 = vst [vmem:[%s103 + $0x1c4] sm:%s95] %v330
                %v332 = vld [vmem:[%s102 + $0x7c8] sm:%s95]
                %333 = vst [vmem:[%s103 + $0x1c8] sm:%s95] %v332
                %v334 = vld [vmem:[%s102 + $0x7cc] sm:%s95]
                %335 = vst [vmem:[%s103 + $0x1cc] sm:%s95] %v334
                %v336 = vld [vmem:[%s102 + $0x7d0] sm:%s95]
                %337 = vst [vmem:[%s103 + $0x1d0] sm:%s95] %v336
                %v338 = vld [vmem:[%s102 + $0x7d4] sm:%s95]
                %339 = vst [vmem:[%s103 + $0x1d4] sm:%s95] %v338
                %v340 = vld [vmem:[%s102 + $0x7d8] sm:%s95]
                %341 = vst [vmem:[%s103 + $0x1d8] sm:%s95] %v340
                %v342 = vld [vmem:[%s102 + $0x7dc] sm:%s95]
                %343 = vst [vmem:[%s103 + $0x1dc] sm:%s95] %v342
                %v344 = vld [vmem:[%s102 + $0x7e0] sm:%s95]
                %345 = vst [vmem:[%s103 + $0x1e0] sm:%s95] %v344
                %v346 = vld [vmem:[%s102 + $0x7e4] sm:%s95]
                %347 = vst [vmem:[%s103 + $0x1e4] sm:%s95] %v346
                %v348 = vld [vmem:[%s102 + $0x7e8] sm:%s95]
                %349 = vst [vmem:[%s103 + $0x1e8] sm:%s95] %v348
                %v350 = vld [vmem:[%s102 + $0x7ec] sm:%s95]
                %351 = vst [vmem:[%s103 + $0x1ec] sm:%s95] %v350
                %v352 = vld [vmem:[%s102 + $0x7f0] sm:%s95]
                %353 = vst [vmem:[%s103 + $0x1f0] sm:%s95] %v352
                %v354 = vld [vmem:[%s102 + $0x7f4] sm:%s95]
                %355 = vst [vmem:[%s103 + $0x1f4] sm:%s95] %v354
                %v356 = vld [vmem:[%s102 + $0x7f8] sm:%s95]
                %357 = vst [vmem:[%s103 + $0x1f8] sm:%s95] %v356
                %v358 = vld [vmem:[%s102 + $0x7fc] sm:%s95]
                %359 = vst [vmem:[%s103 + $0x1fc] sm:%s95] %v358
                %v360 = vld [vmem:[%s102 + $0xe00] sm:%s95]
                %361 = vst [vmem:[%s103 + $0x200] sm:%s95] %v360
                %v362 = vld [vmem:[%s102 + $0xe04] sm:%s95]
                %363 = vst [vmem:[%s103 + $0x204] sm:%s95] %v362
                %v364 = vld [vmem:[%s102 + $0xe08] sm:%s95]
                %365 = vst [vmem:[%s103 + $0x208] sm:%s95] %v364
                %v366 = vld [vmem:[%s102 + $0xe0c] sm:%s95]
                %367 = vst [vmem:[%s103 + $0x20c] sm:%s95] %v366
                %v368 = vld [vmem:[%s102 + $0xe10] sm:%s95]
                %369 = vst [vmem:[%s103 + $0x210] sm:%s95] %v368
                %v370 = vld [vmem:[%s102 + $0xe14] sm:%s95]
                %371 = vst [vmem:[%s103 + $0x214] sm:%s95] %v370
                %v372 = vld [vmem:[%s102 + $0xe18] sm:%s95]
                %373 = vst [vmem:[%s103 + $0x218] sm:%s95] %v372
                %v374 = vld [vmem:[%s102 + $0xe1c] sm:%s95]
                %375 = vst [vmem:[%s103 + $0x21c] sm:%s95] %v374
                %v376 = vld [vmem:[%s102 + $0xe20] sm:%s95]
                %377 = vst [vmem:[%s103 + $0x220] sm:%s95] %v376
                %v378 = vld [vmem:[%s102 + $0xe24] sm:%s95]
                %379 = vst [vmem:[%s103 + $0x224] sm:%s95] %v378
                %v380 = vld [vmem:[%s102 + $0xe28] sm:%s95]
                %381 = vst [vmem:[%s103 + $0x228] sm:%s95] %v380
                %v382 = vld [vmem:[%s102 + $0xe2c] sm:%s95]
                %383 = vst [vmem:[%s103 + $0x22c] sm:%s95] %v382
                %v384 = vld [vmem:[%s102 + $0xe30] sm:%s95]
                %385 = vst [vmem:[%s103 + $0x230] sm:%s95] %v384
                %v386 = vld [vmem:[%s102 + $0xe34] sm:%s95]
                %387 = vst [vmem:[%s103 + $0x234] sm:%s95] %v386
                %v388 = vld [vmem:[%s102 + $0xe38] sm:%s95]
                %389 = vst [vmem:[%s103 + $0x238] sm:%s95] %v388
                %v390 = vld [vmem:[%s102 + $0xe3c] sm:%s95]
                %391 = vst [vmem:[%s103 + $0x23c] sm:%s95] %v390
                %v392 = vld [vmem:[%s102 + $0xe40] sm:%s95]
                %393 = vst [vmem:[%s103 + $0x240] sm:%s95] %v392
                %v394 = vld [vmem:[%s102 + $0xe44] sm:%s95]
                %395 = vst [vmem:[%s103 + $0x244] sm:%s95] %v394
                %v396 = vld [vmem:[%s102 + $0xe48] sm:%s95]
                %397 = vst [vmem:[%s103 + $0x248] sm:%s95] %v396
                %v398 = vld [vmem:[%s102 + $0xe4c] sm:%s95]
                %399 = vst [vmem:[%s103 + $0x24c] sm:%s95] %v398
                %v400 = vld [vmem:[%s102 + $0xe50] sm:%s95]
                %401 = vst [vmem:[%s103 + $0x250] sm:%s95] %v400
                %v402 = vld [vmem:[%s102 + $0xe54] sm:%s95]
                %403 = vst [vmem:[%s103 + $0x254] sm:%s95] %v402
                %v404 = vld [vmem:[%s102 + $0xe58] sm:%s95]
                %405 = vst [vmem:[%s103 + $0x258] sm:%s95] %v404
                %v406 = vld [vmem:[%s102 + $0xe5c] sm:%s95]
                %407 = vst [vmem:[%s103 + $0x25c] sm:%s95] %v406
                %v408 = vld [vmem:[%s102 + $0xe60] sm:%s95]
                %409 = vst [vmem:[%s103 + $0x260] sm:%s95] %v408
                %v410 = vld [vmem:[%s102 + $0xe64] sm:%s95]
                %411 = vst [vmem:[%s103 + $0x264] sm:%s95] %v410
                %v412 = vld [vmem:[%s102 + $0xe68] sm:%s95]
                %413 = vst [vmem:[%s103 + $0x268] sm:%s95] %v412
                %v414 = vld [vmem:[%s102 + $0xe6c] sm:%s95]
                %415 = vst [vmem:[%s103 + $0x26c] sm:%s95] %v414
                %v416 = vld [vmem:[%s102 + $0xe70] sm:%s95]
                %417 = vst [vmem:[%s103 + $0x270] sm:%s95] %v416
                %v418 = vld [vmem:[%s102 + $0xe74] sm:%s95]
                %419 = vst [vmem:[%s103 + $0x274] sm:%s95] %v418
                %v420 = vld [vmem:[%s102 + $0xe78] sm:%s95]
                %421 = vst [vmem:[%s103 + $0x278] sm:%s95] %v420
                %v422 = vld [vmem:[%s102 + $0xe7c] sm:%s95]
                %423 = vst [vmem:[%s103 + $0x27c] sm:%s95] %v422
                %v424 = vld [vmem:[%s102 + $0xe80] sm:%s95]
                %425 = vst [vmem:[%s103 + $0x280] sm:%s95] %v424
                %v426 = vld [vmem:[%s102 + $0xe84] sm:%s95]
                %427 = vst [vmem:[%s103 + $0x284] sm:%s95] %v426
                %v428 = vld [vmem:[%s102 + $0xe88] sm:%s95]
                %429 = vst [vmem:[%s103 + $0x288] sm:%s95] %v428
                %v430 = vld [vmem:[%s102 + $0xe8c] sm:%s95]
                %431 = vst [vmem:[%s103 + $0x28c] sm:%s95] %v430
                %v432 = vld [vmem:[%s102 + $0xe90] sm:%s95]
                %433 = vst [vmem:[%s103 + $0x290] sm:%s95] %v432
                %v434 = vld [vmem:[%s102 + $0xe94] sm:%s95]
                %435 = vst [vmem:[%s103 + $0x294] sm:%s95] %v434
                %v436 = vld [vmem:[%s102 + $0xe98] sm:%s95]
                %437 = vst [vmem:[%s103 + $0x298] sm:%s95] %v436
                %v438 = vld [vmem:[%s102 + $0xe9c] sm:%s95]
                %439 = vst [vmem:[%s103 + $0x29c] sm:%s95] %v438
                %v440 = vld [vmem:[%s102 + $0xea0] sm:%s95]
                %441 = vst [vmem:[%s103 + $0x2a0] sm:%s95] %v440
                %v442 = vld [vmem:[%s102 + $0xea4] sm:%s95]
                %443 = vst [vmem:[%s103 + $0x2a4] sm:%s95] %v442
                %v444 = vld [vmem:[%s102 + $0xea8] sm:%s95]
                %445 = vst [vmem:[%s103 + $0x2a8] sm:%s95] %v444
                %v446 = vld [vmem:[%s102 + $0xeac] sm:%s95]
                %447 = vst [vmem:[%s103 + $0x2ac] sm:%s95] %v446
                %v448 = vld [vmem:[%s102 + $0xeb0] sm:%s95]
                %449 = vst [vmem:[%s103 + $0x2b0] sm:%s95] %v448
                %v450 = vld [vmem:[%s102 + $0xeb4] sm:%s95]
                %451 = vst [vmem:[%s103 + $0x2b4] sm:%s95] %v450
                %v452 = vld [vmem:[%s102 + $0xeb8] sm:%s95]
                %453 = vst [vmem:[%s103 + $0x2b8] sm:%s95] %v452
                %v454 = vld [vmem:[%s102 + $0xebc] sm:%s95]
                %455 = vst [vmem:[%s103 + $0x2bc] sm:%s95] %v454
                %v456 = vld [vmem:[%s102 + $0xec0] sm:%s95]
                %457 = vst [vmem:[%s103 + $0x2c0] sm:%s95] %v456
                %v458 = vld [vmem:[%s102 + $0xec4] sm:%s95]
                %459 = vst [vmem:[%s103 + $0x2c4] sm:%s95] %v458
                %v460 = vld [vmem:[%s102 + $0xec8] sm:%s95]
                %461 = vst [vmem:[%s103 + $0x2c8] sm:%s95] %v460
                %v462 = vld [vmem:[%s102 + $0xecc] sm:%s95]
                %463 = vst [vmem:[%s103 + $0x2cc] sm:%s95] %v462
                %v464 = vld [vmem:[%s102 + $0xed0] sm:%s95]
                %465 = vst [vmem:[%s103 + $0x2d0] sm:%s95] %v464
                %v466 = vld [vmem:[%s102 + $0xed4] sm:%s95]
                %467 = vst [vmem:[%s103 + $0x2d4] sm:%s95] %v466
                %v468 = vld [vmem:[%s102 + $0xed8] sm:%s95]
                %469 = vst [vmem:[%s103 + $0x2d8] sm:%s95] %v468
                %v470 = vld [vmem:[%s102 + $0xedc] sm:%s95]
                %471 = vst [vmem:[%s103 + $0x2dc] sm:%s95] %v470
                %v472 = vld [vmem:[%s102 + $0xee0] sm:%s95]
                %473 = vst [vmem:[%s103 + $0x2e0] sm:%s95] %v472
                %v474 = vld [vmem:[%s102 + $0xee4] sm:%s95]
                %475 = vst [vmem:[%s103 + $0x2e4] sm:%s95] %v474
                %v476 = vld [vmem:[%s102 + $0xee8] sm:%s95]
                %477 = vst [vmem:[%s103 + $0x2e8] sm:%s95] %v476
                %v478 = vld [vmem:[%s102 + $0xeec] sm:%s95]
                %479 = vst [vmem:[%s103 + $0x2ec] sm:%s95] %v478
                %v480 = vld [vmem:[%s102 + $0xef0] sm:%s95]
                %481 = vst [vmem:[%s103 + $0x2f0] sm:%s95] %v480
                %v482 = vld [vmem:[%s102 + $0xef4] sm:%s95]
                %483 = vst [vmem:[%s103 + $0x2f4] sm:%s95] %v482
                %v484 = vld [vmem:[%s102 + $0xef8] sm:%s95]
                %485 = vst [vmem:[%s103 + $0x2f8] sm:%s95] %v484
                %v486 = vld [vmem:[%s102 + $0xefc] sm:%s95]
                %487 = vst [vmem:[%s103 + $0x2fc] sm:%s95] %v486
                %v488 = vld [vmem:[%s102 + $0x1500] sm:%s95]
                %489 = vst [vmem:[%s103 + $0x300] sm:%s95] %v488
                %v490 = vld [vmem:[%s102 + $0x1504] sm:%s95]
                %491 = vst [vmem:[%s103 + $0x304] sm:%s95] %v490
                %v492 = vld [vmem:[%s102 + $0x1508] sm:%s95]
                %493 = vst [vmem:[%s103 + $0x308] sm:%s95] %v492
                %v494 = vld [vmem:[%s102 + $0x150c] sm:%s95]
                %495 = vst [vmem:[%s103 + $0x30c] sm:%s95] %v494
                %v496 = vld [vmem:[%s102 + $0x1510] sm:%s95]
                %497 = vst [vmem:[%s103 + $0x310] sm:%s95] %v496
                %v498 = vld [vmem:[%s102 + $0x1514] sm:%s95]
                %499 = vst [vmem:[%s103 + $0x314] sm:%s95] %v498
                %v500 = vld [vmem:[%s102 + $0x1518] sm:%s95]
                %501 = vst [vmem:[%s103 + $0x318] sm:%s95] %v500
                %v502 = vld [vmem:[%s102 + $0x151c] sm:%s95]
                %503 = vst [vmem:[%s103 + $0x31c] sm:%s95] %v502
                %v504 = vld [vmem:[%s102 + $0x1520] sm:%s95]
                %505 = vst [vmem:[%s103 + $0x320] sm:%s95] %v504
                %v506 = vld [vmem:[%s102 + $0x1524] sm:%s95]
                %507 = vst [vmem:[%s103 + $0x324] sm:%s95] %v506
                %v508 = vld [vmem:[%s102 + $0x1528] sm:%s95]
                %509 = vst [vmem:[%s103 + $0x328] sm:%s95] %v508
                %v510 = vld [vmem:[%s102 + $0x152c] sm:%s95]
                %511 = vst [vmem:[%s103 + $0x32c] sm:%s95] %v510
                %v512 = vld [vmem:[%s102 + $0x1530] sm:%s95]
                %513 = vst [vmem:[%s103 + $0x330] sm:%s95] %v512
                %v514 = vld [vmem:[%s102 + $0x1534] sm:%s95]
                %515 = vst [vmem:[%s103 + $0x334] sm:%s95] %v514
                %v516 = vld [vmem:[%s102 + $0x1538] sm:%s95]
                %517 = vst [vmem:[%s103 + $0x338] sm:%s95] %v516
                %v518 = vld [vmem:[%s102 + $0x153c] sm:%s95]
                %519 = vst [vmem:[%s103 + $0x33c] sm:%s95] %v518
                %v520 = vld [vmem:[%s102 + $0x1540] sm:%s95]
                %521 = vst [vmem:[%s103 + $0x340] sm:%s95] %v520
                %v522 = vld [vmem:[%s102 + $0x1544] sm:%s95]
                %523 = vst [vmem:[%s103 + $0x344] sm:%s95] %v522
                %v524 = vld [vmem:[%s102 + $0x1548] sm:%s95]
                %525 = vst [vmem:[%s103 + $0x348] sm:%s95] %v524
                %v526 = vld [vmem:[%s102 + $0x154c] sm:%s95]
                %527 = vst [vmem:[%s103 + $0x34c] sm:%s95] %v526
                %v528 = vld [vmem:[%s102 + $0x1550] sm:%s95]
                %529 = vst [vmem:[%s103 + $0x350] sm:%s95] %v528
                %v530 = vld [vmem:[%s102 + $0x1554] sm:%s95]
                %531 = vst [vmem:[%s103 + $0x354] sm:%s95] %v530
                %v532 = vld [vmem:[%s102 + $0x1558] sm:%s95]
                %533 = vst [vmem:[%s103 + $0x358] sm:%s95] %v532
                %v534 = vld [vmem:[%s102 + $0x155c] sm:%s95]
                %535 = vst [vmem:[%s103 + $0x35c] sm:%s95] %v534
                %v536 = vld [vmem:[%s102 + $0x1560] sm:%s95]
                %537 = vst [vmem:[%s103 + $0x360] sm:%s95] %v536
                %v538 = vld [vmem:[%s102 + $0x1564] sm:%s95]
                %539 = vst [vmem:[%s103 + $0x364] sm:%s95] %v538
                %v540 = vld [vmem:[%s102 + $0x1568] sm:%s95]
                %541 = vst [vmem:[%s103 + $0x368] sm:%s95] %v540
                %v542 = vld [vmem:[%s102 + $0x156c] sm:%s95]
                %543 = vst [vmem:[%s103 + $0x36c] sm:%s95] %v542
                %v544 = vld [vmem:[%s102 + $0x1570] sm:%s95]
                %545 = vst [vmem:[%s103 + $0x370] sm:%s95] %v544
                %v546 = vld [vmem:[%s102 + $0x1574] sm:%s95]
                %547 = vst [vmem:[%s103 + $0x374] sm:%s95] %v546
                %v548 = vld [vmem:[%s102 + $0x1578] sm:%s95]
                %549 = vst [vmem:[%s103 + $0x378] sm:%s95] %v548
                %v550 = vld [vmem:[%s102 + $0x157c] sm:%s95]
                %551 = vst [vmem:[%s103 + $0x37c] sm:%s95] %v550
                %v552 = vld [vmem:[%s102 + $0x1580] sm:%s95]
                %553 = vst [vmem:[%s103 + $0x380] sm:%s95] %v552
                %v554 = vld [vmem:[%s102 + $0x1584] sm:%s95]
                %555 = vst [vmem:[%s103 + $0x384] sm:%s95] %v554
                %v556 = vld [vmem:[%s102 + $0x1588] sm:%s95]
                %557 = vst [vmem:[%s103 + $0x388] sm:%s95] %v556
                %v558 = vld [vmem:[%s102 + $0x158c] sm:%s95]
                %559 = vst [vmem:[%s103 + $0x38c] sm:%s95] %v558
                %v560 = vld [vmem:[%s102 + $0x1590] sm:%s95]
                %561 = vst [vmem:[%s103 + $0x390] sm:%s95] %v560
                %v562 = vld [vmem:[%s102 + $0x1594] sm:%s95]
                %563 = vst [vmem:[%s103 + $0x394] sm:%s95] %v562
                %v564 = vld [vmem:[%s102 + $0x1598] sm:%s95]
                %565 = vst [vmem:[%s103 + $0x398] sm:%s95] %v564
                %v566 = vld [vmem:[%s102 + $0x159c] sm:%s95]
                %567 = vst [vmem:[%s103 + $0x39c] sm:%s95] %v566
                %v568 = vld [vmem:[%s102 + $0x15a0] sm:%s95]
                %569 = vst [vmem:[%s103 + $0x3a0] sm:%s95] %v568
                %v570 = vld [vmem:[%s102 + $0x15a4] sm:%s95]
                %571 = vst [vmem:[%s103 + $0x3a4] sm:%s95] %v570
                %v572 = vld [vmem:[%s102 + $0x15a8] sm:%s95]
                %573 = vst [vmem:[%s103 + $0x3a8] sm:%s95] %v572
                %v574 = vld [vmem:[%s102 + $0x15ac] sm:%s95]
                %575 = vst [vmem:[%s103 + $0x3ac] sm:%s95] %v574
                %v576 = vld [vmem:[%s102 + $0x15b0] sm:%s95]
                %577 = vst [vmem:[%s103 + $0x3b0] sm:%s95] %v576
                %v578 = vld [vmem:[%s102 + $0x15b4] sm:%s95]
                %579 = vst [vmem:[%s103 + $0x3b4] sm:%s95] %v578
                %v580 = vld [vmem:[%s102 + $0x15b8] sm:%s95]
                %581 = vst [vmem:[%s103 + $0x3b8] sm:%s95] %v580
                %v582 = vld [vmem:[%s102 + $0x15bc] sm:%s95]
                %583 = vst [vmem:[%s103 + $0x3bc] sm:%s95] %v582
                %v584 = vld [vmem:[%s102 + $0x15c0] sm:%s95]
                %585 = vst [vmem:[%s103 + $0x3c0] sm:%s95] %v584
                %v586 = vld [vmem:[%s102 + $0x15c4] sm:%s95]
                %587 = vst [vmem:[%s103 + $0x3c4] sm:%s95] %v586
                %v588 = vld [vmem:[%s102 + $0x15c8] sm:%s95]
                %589 = vst [vmem:[%s103 + $0x3c8] sm:%s95] %v588
                %v590 = vld [vmem:[%s102 + $0x15cc] sm:%s95]
                %591 = vst [vmem:[%s103 + $0x3cc] sm:%s95] %v590
                %v592 = vld [vmem:[%s102 + $0x15d0] sm:%s95]
                %593 = vst [vmem:[%s103 + $0x3d0] sm:%s95] %v592
                %v594 = vld [vmem:[%s102 + $0x15d4] sm:%s95]
                %595 = vst [vmem:[%s103 + $0x3d4] sm:%s95] %v594
                %v596 = vld [vmem:[%s102 + $0x15d8] sm:%s95]
                %597 = vst [vmem:[%s103 + $0x3d8] sm:%s95] %v596
                %v598 = vld [vmem:[%s102 + $0x15dc] sm:%s95]
                %599 = vst [vmem:[%s103 + $0x3dc] sm:%s95] %v598
                %v600 = vld [vmem:[%s102 + $0x15e0] sm:%s95]
                %601 = vst [vmem:[%s103 + $0x3e0] sm:%s95] %v600
                %v602 = vld [vmem:[%s102 + $0x15e4] sm:%s95]
                %603 = vst [vmem:[%s103 + $0x3e4] sm:%s95] %v602
                %v604 = vld [vmem:[%s102 + $0x15e8] sm:%s95]
                %605 = vst [vmem:[%s103 + $0x3e8] sm:%s95] %v604
                %v606 = vld [vmem:[%s102 + $0x15ec] sm:%s95]
                %607 = vst [vmem:[%s103 + $0x3ec] sm:%s95] %v606
                %v608 = vld [vmem:[%s102 + $0x15f0] sm:%s95]
                %609 = vst [vmem:[%s103 + $0x3f0] sm:%s95] %v608
                %v610 = vld [vmem:[%s102 + $0x15f4] sm:%s95]
                %611 = vst [vmem:[%s103 + $0x3f4] sm:%s95] %v610
                %v612 = vld [vmem:[%s102 + $0x15f8] sm:%s95]
                %613 = vst [vmem:[%s103 + $0x3f8] sm:%s95] %v612
                %v614 = vld [vmem:[%s102 + $0x15fc] sm:%s95]
                %615 = vst [vmem:[%s103 + $0x3fc] sm:%s95] %v614
                %v616 = vld [vmem:[%s102 + $0x1c00] sm:%s95]
                %617 = vst [vmem:[%s103 + $0x400] sm:%s95] %v616
                %v618 = vld [vmem:[%s102 + $0x1c04] sm:%s95]
                %619 = vst [vmem:[%s103 + $0x404] sm:%s95] %v618
                %v620 = vld [vmem:[%s102 + $0x1c08] sm:%s95]
                %621 = vst [vmem:[%s103 + $0x408] sm:%s95] %v620
                %v622 = vld [vmem:[%s102 + $0x1c0c] sm:%s95]
                %623 = vst [vmem:[%s103 + $0x40c] sm:%s95] %v622
                %v624 = vld [vmem:[%s102 + $0x1c10] sm:%s95]
                %625 = vst [vmem:[%s103 + $0x410] sm:%s95] %v624
                %v626 = vld [vmem:[%s102 + $0x1c14] sm:%s95]
                %627 = vst [vmem:[%s103 + $0x414] sm:%s95] %v626
                %v628 = vld [vmem:[%s102 + $0x1c18] sm:%s95]
                %629 = vst [vmem:[%s103 + $0x418] sm:%s95] %v628
                %v630 = vld [vmem:[%s102 + $0x1c1c] sm:%s95]
                %631 = vst [vmem:[%s103 + $0x41c] sm:%s95] %v630
                %v632 = vld [vmem:[%s102 + $0x1c20] sm:%s95]
                %633 = vst [vmem:[%s103 + $0x420] sm:%s95] %v632
                %v634 = vld [vmem:[%s102 + $0x1c24] sm:%s95]
                %635 = vst [vmem:[%s103 + $0x424] sm:%s95] %v634
                %v636 = vld [vmem:[%s102 + $0x1c28] sm:%s95]
                %637 = vst [vmem:[%s103 + $0x428] sm:%s95] %v636
                %v638 = vld [vmem:[%s102 + $0x1c2c] sm:%s95]
                %639 = vst [vmem:[%s103 + $0x42c] sm:%s95] %v638
                %v640 = vld [vmem:[%s102 + $0x1c30] sm:%s95]
                %641 = vst [vmem:[%s103 + $0x430] sm:%s95] %v640
                %v642 = vld [vmem:[%s102 + $0x1c34] sm:%s95]
                %643 = vst [vmem:[%s103 + $0x434] sm:%s95] %v642
                %v644 = vld [vmem:[%s102 + $0x1c38] sm:%s95]
                %645 = vst [vmem:[%s103 + $0x438] sm:%s95] %v644
                %v646 = vld [vmem:[%s102 + $0x1c3c] sm:%s95]
                %647 = vst [vmem:[%s103 + $0x43c] sm:%s95] %v646
                %v648 = vld [vmem:[%s102 + $0x1c40] sm:%s95]
                %649 = vst [vmem:[%s103 + $0x440] sm:%s95] %v648
                %v650 = vld [vmem:[%s102 + $0x1c44] sm:%s95]
                %651 = vst [vmem:[%s103 + $0x444] sm:%s95] %v650
                %v652 = vld [vmem:[%s102 + $0x1c48] sm:%s95]
                %653 = vst [vmem:[%s103 + $0x448] sm:%s95] %v652
                %v654 = vld [vmem:[%s102 + $0x1c4c] sm:%s95]
                %655 = vst [vmem:[%s103 + $0x44c] sm:%s95] %v654
                %v656 = vld [vmem:[%s102 + $0x1c50] sm:%s95]
                %657 = vst [vmem:[%s103 + $0x450] sm:%s95] %v656
                %v658 = vld [vmem:[%s102 + $0x1c54] sm:%s95]
                %659 = vst [vmem:[%s103 + $0x454] sm:%s95] %v658
                %v660 = vld [vmem:[%s102 + $0x1c58] sm:%s95]
                %661 = vst [vmem:[%s103 + $0x458] sm:%s95] %v660
                %v662 = vld [vmem:[%s102 + $0x1c5c] sm:%s95]
                %663 = vst [vmem:[%s103 + $0x45c] sm:%s95] %v662
                %v664 = vld [vmem:[%s102 + $0x1c60] sm:%s95]
                %665 = vst [vmem:[%s103 + $0x460] sm:%s95] %v664
                %v666 = vld [vmem:[%s102 + $0x1c64] sm:%s95]
                %667 = vst [vmem:[%s103 + $0x464] sm:%s95] %v666
                %v668 = vld [vmem:[%s102 + $0x1c68] sm:%s95]
                %669 = vst [vmem:[%s103 + $0x468] sm:%s95] %v668
                %v670 = vld [vmem:[%s102 + $0x1c6c] sm:%s95]
                %671 = vst [vmem:[%s103 + $0x46c] sm:%s95] %v670
                %v672 = vld [vmem:[%s102 + $0x1c70] sm:%s95]
                %673 = vst [vmem:[%s103 + $0x470] sm:%s95] %v672
                %v674 = vld [vmem:[%s102 + $0x1c74] sm:%s95]
                %675 = vst [vmem:[%s103 + $0x474] sm:%s95] %v674
                %v676 = vld [vmem:[%s102 + $0x1c78] sm:%s95]
                %677 = vst [vmem:[%s103 + $0x478] sm:%s95] %v676
                %v678 = vld [vmem:[%s102 + $0x1c7c] sm:%s95]
                %679 = vst [vmem:[%s103 + $0x47c] sm:%s95] %v678
                %v680 = vld [vmem:[%s102 + $0x1c80] sm:%s95]
                %681 = vst [vmem:[%s103 + $0x480] sm:%s95] %v680
                %v682 = vld [vmem:[%s102 + $0x1c84] sm:%s95]
                %683 = vst [vmem:[%s103 + $0x484] sm:%s95] %v682
                %v684 = vld [vmem:[%s102 + $0x1c88] sm:%s95]
                %685 = vst [vmem:[%s103 + $0x488] sm:%s95] %v684
                %v686 = vld [vmem:[%s102 + $0x1c8c] sm:%s95]
                %687 = vst [vmem:[%s103 + $0x48c] sm:%s95] %v686
                %v688 = vld [vmem:[%s102 + $0x1c90] sm:%s95]
                %689 = vst [vmem:[%s103 + $0x490] sm:%s95] %v688
                %v690 = vld [vmem:[%s102 + $0x1c94] sm:%s95]
                %691 = vst [vmem:[%s103 + $0x494] sm:%s95] %v690
                %v692 = vld [vmem:[%s102 + $0x1c98] sm:%s95]
                %693 = vst [vmem:[%s103 + $0x498] sm:%s95] %v692
                %v694 = vld [vmem:[%s102 + $0x1c9c] sm:%s95]
                %695 = vst [vmem:[%s103 + $0x49c] sm:%s95] %v694
                %v696 = vld [vmem:[%s102 + $0x1ca0] sm:%s95]
                %697 = vst [vmem:[%s103 + $0x4a0] sm:%s95] %v696
                %v698 = vld [vmem:[%s102 + $0x1ca4] sm:%s95]
                %699 = vst [vmem:[%s103 + $0x4a4] sm:%s95] %v698
                %v700 = vld [vmem:[%s102 + $0x1ca8] sm:%s95]
                %701 = vst [vmem:[%s103 + $0x4a8] sm:%s95] %v700
                %v702 = vld [vmem:[%s102 + $0x1cac] sm:%s95]
                %703 = vst [vmem:[%s103 + $0x4ac] sm:%s95] %v702
                %v704 = vld [vmem:[%s102 + $0x1cb0] sm:%s95]
                %705 = vst [vmem:[%s103 + $0x4b0] sm:%s95] %v704
                %v706 = vld [vmem:[%s102 + $0x1cb4] sm:%s95]
                %707 = vst [vmem:[%s103 + $0x4b4] sm:%s95] %v706
                %v708 = vld [vmem:[%s102 + $0x1cb8] sm:%s95]
                %709 = vst [vmem:[%s103 + $0x4b8] sm:%s95] %v708
                %v710 = vld [vmem:[%s102 + $0x1cbc] sm:%s95]
                %711 = vst [vmem:[%s103 + $0x4bc] sm:%s95] %v710
                %v712 = vld [vmem:[%s102 + $0x1cc0] sm:%s95]
                %713 = vst [vmem:[%s103 + $0x4c0] sm:%s95] %v712
                %v714 = vld [vmem:[%s102 + $0x1cc4] sm:%s95]
                %715 = vst [vmem:[%s103 + $0x4c4] sm:%s95] %v714
                %v716 = vld [vmem:[%s102 + $0x1cc8] sm:%s95]
                %717 = vst [vmem:[%s103 + $0x4c8] sm:%s95] %v716
                %v718 = vld [vmem:[%s102 + $0x1ccc] sm:%s95]
                %719 = vst [vmem:[%s103 + $0x4cc] sm:%s95] %v718
                %v720 = vld [vmem:[%s102 + $0x1cd0] sm:%s95]
                %721 = vst [vmem:[%s103 + $0x4d0] sm:%s95] %v720
                %v722 = vld [vmem:[%s102 + $0x1cd4] sm:%s95]
                %723 = vst [vmem:[%s103 + $0x4d4] sm:%s95] %v722
                %v724 = vld [vmem:[%s102 + $0x1cd8] sm:%s95]
                %725 = vst [vmem:[%s103 + $0x4d8] sm:%s95] %v724
                %v726 = vld [vmem:[%s102 + $0x1cdc] sm:%s95]
                %727 = vst [vmem:[%s103 + $0x4dc] sm:%s95] %v726
                %v728 = vld [vmem:[%s102 + $0x1ce0] sm:%s95]
                %729 = vst [vmem:[%s103 + $0x4e0] sm:%s95] %v728
                %v730 = vld [vmem:[%s102 + $0x1ce4] sm:%s95]
                %731 = vst [vmem:[%s103 + $0x4e4] sm:%s95] %v730
                %v732 = vld [vmem:[%s102 + $0x1ce8] sm:%s95]
                %733 = vst [vmem:[%s103 + $0x4e8] sm:%s95] %v732
                %v734 = vld [vmem:[%s102 + $0x1cec] sm:%s95]
                %735 = vst [vmem:[%s103 + $0x4ec] sm:%s95] %v734
                %v736 = vld [vmem:[%s102 + $0x1cf0] sm:%s95]
                %737 = vst [vmem:[%s103 + $0x4f0] sm:%s95] %v736
                %v738 = vld [vmem:[%s102 + $0x1cf4] sm:%s95]
                %739 = vst [vmem:[%s103 + $0x4f4] sm:%s95] %v738
                %v740 = vld [vmem:[%s102 + $0x1cf8] sm:%s95]
                %741 = vst [vmem:[%s103 + $0x4f8] sm:%s95] %v740
                %v742 = vld [vmem:[%s102 + $0x1cfc] sm:%s95]
                %743 = vst [vmem:[%s103 + $0x4fc] sm:%s95] %v742
                %v744 = vld [vmem:[%s102 + $0x2300] sm:%s95]
                %745 = vst [vmem:[%s103 + $0x500] sm:%s95] %v744
                %v746 = vld [vmem:[%s102 + $0x2304] sm:%s95]
                %747 = vst [vmem:[%s103 + $0x504] sm:%s95] %v746
                %v748 = vld [vmem:[%s102 + $0x2308] sm:%s95]
                %749 = vst [vmem:[%s103 + $0x508] sm:%s95] %v748
                %v750 = vld [vmem:[%s102 + $0x230c] sm:%s95]
                %751 = vst [vmem:[%s103 + $0x50c] sm:%s95] %v750
                %v752 = vld [vmem:[%s102 + $0x2310] sm:%s95]
                %753 = vst [vmem:[%s103 + $0x510] sm:%s95] %v752
                %v754 = vld [vmem:[%s102 + $0x2314] sm:%s95]
                %755 = vst [vmem:[%s103 + $0x514] sm:%s95] %v754
                %v756 = vld [vmem:[%s102 + $0x2318] sm:%s95]
                %757 = vst [vmem:[%s103 + $0x518] sm:%s95] %v756
                %v758 = vld [vmem:[%s102 + $0x231c] sm:%s95]
                %759 = vst [vmem:[%s103 + $0x51c] sm:%s95] %v758
                %v760 = vld [vmem:[%s102 + $0x2320] sm:%s95]
                %761 = vst [vmem:[%s103 + $0x520] sm:%s95] %v760
                %v762 = vld [vmem:[%s102 + $0x2324] sm:%s95]
                %763 = vst [vmem:[%s103 + $0x524] sm:%s95] %v762
                %v764 = vld [vmem:[%s102 + $0x2328] sm:%s95]
                %765 = vst [vmem:[%s103 + $0x528] sm:%s95] %v764
                %v766 = vld [vmem:[%s102 + $0x232c] sm:%s95]
                %767 = vst [vmem:[%s103 + $0x52c] sm:%s95] %v766
                %v768 = vld [vmem:[%s102 + $0x2330] sm:%s95]
                %769 = vst [vmem:[%s103 + $0x530] sm:%s95] %v768
                %v770 = vld [vmem:[%s102 + $0x2334] sm:%s95]
                %771 = vst [vmem:[%s103 + $0x534] sm:%s95] %v770
                %v772 = vld [vmem:[%s102 + $0x2338] sm:%s95]
                %773 = vst [vmem:[%s103 + $0x538] sm:%s95] %v772
                %v774 = vld [vmem:[%s102 + $0x233c] sm:%s95]
                %775 = vst [vmem:[%s103 + $0x53c] sm:%s95] %v774
                %v776 = vld [vmem:[%s102 + $0x2340] sm:%s95]
                %777 = vst [vmem:[%s103 + $0x540] sm:%s95] %v776
                %v778 = vld [vmem:[%s102 + $0x2344] sm:%s95]
                %779 = vst [vmem:[%s103 + $0x544] sm:%s95] %v778
                %v780 = vld [vmem:[%s102 + $0x2348] sm:%s95]
                %781 = vst [vmem:[%s103 + $0x548] sm:%s95] %v780
                %v782 = vld [vmem:[%s102 + $0x234c] sm:%s95]
                %783 = vst [vmem:[%s103 + $0x54c] sm:%s95] %v782
                %v784 = vld [vmem:[%s102 + $0x2350] sm:%s95]
                %785 = vst [vmem:[%s103 + $0x550] sm:%s95] %v784
                %v786 = vld [vmem:[%s102 + $0x2354] sm:%s95]
                %787 = vst [vmem:[%s103 + $0x554] sm:%s95] %v786
                %v788 = vld [vmem:[%s102 + $0x2358] sm:%s95]
                %789 = vst [vmem:[%s103 + $0x558] sm:%s95] %v788
                %v790 = vld [vmem:[%s102 + $0x235c] sm:%s95]
                %791 = vst [vmem:[%s103 + $0x55c] sm:%s95] %v790
                %v792 = vld [vmem:[%s102 + $0x2360] sm:%s95]
                %793 = vst [vmem:[%s103 + $0x560] sm:%s95] %v792
                %v794 = vld [vmem:[%s102 + $0x2364] sm:%s95]
                %795 = vst [vmem:[%s103 + $0x564] sm:%s95] %v794
                %v796 = vld [vmem:[%s102 + $0x2368] sm:%s95]
                %797 = vst [vmem:[%s103 + $0x568] sm:%s95] %v796
                %v798 = vld [vmem:[%s102 + $0x236c] sm:%s95]
                %799 = vst [vmem:[%s103 + $0x56c] sm:%s95] %v798
                %v800 = vld [vmem:[%s102 + $0x2370] sm:%s95]
                %801 = vst [vmem:[%s103 + $0x570] sm:%s95] %v800
                %v802 = vld [vmem:[%s102 + $0x2374] sm:%s95]
                %803 = vst [vmem:[%s103 + $0x574] sm:%s95] %v802
                %v804 = vld [vmem:[%s102 + $0x2378] sm:%s95]
                %805 = vst [vmem:[%s103 + $0x578] sm:%s95] %v804
                %v806 = vld [vmem:[%s102 + $0x237c] sm:%s95]
                %807 = vst [vmem:[%s103 + $0x57c] sm:%s95] %v806
                %v808 = vld [vmem:[%s102 + $0x2380] sm:%s95]
                %809 = vst [vmem:[%s103 + $0x580] sm:%s95] %v808
                %v810 = vld [vmem:[%s102 + $0x2384] sm:%s95]
                %811 = vst [vmem:[%s103 + $0x584] sm:%s95] %v810
                %v812 = vld [vmem:[%s102 + $0x2388] sm:%s95]
                %813 = vst [vmem:[%s103 + $0x588] sm:%s95] %v812
                %v814 = vld [vmem:[%s102 + $0x238c] sm:%s95]
                %815 = vst [vmem:[%s103 + $0x58c] sm:%s95] %v814
                %v816 = vld [vmem:[%s102 + $0x2390] sm:%s95]
                %817 = vst [vmem:[%s103 + $0x590] sm:%s95] %v816
                %v818 = vld [vmem:[%s102 + $0x2394] sm:%s95]
                %819 = vst [vmem:[%s103 + $0x594] sm:%s95] %v818
                %v820 = vld [vmem:[%s102 + $0x2398] sm:%s95]
                %821 = vst [vmem:[%s103 + $0x598] sm:%s95] %v820
                %v822 = vld [vmem:[%s102 + $0x239c] sm:%s95]
                %823 = vst [vmem:[%s103 + $0x59c] sm:%s95] %v822
                %v824 = vld [vmem:[%s102 + $0x23a0] sm:%s95]
                %825 = vst [vmem:[%s103 + $0x5a0] sm:%s95] %v824
                %v826 = vld [vmem:[%s102 + $0x23a4] sm:%s95]
                %827 = vst [vmem:[%s103 + $0x5a4] sm:%s95] %v826
                %v828 = vld [vmem:[%s102 + $0x23a8] sm:%s95]
                %829 = vst [vmem:[%s103 + $0x5a8] sm:%s95] %v828
                %v830 = vld [vmem:[%s102 + $0x23ac] sm:%s95]
                %831 = vst [vmem:[%s103 + $0x5ac] sm:%s95] %v830
                %v832 = vld [vmem:[%s102 + $0x23b0] sm:%s95]
                %833 = vst [vmem:[%s103 + $0x5b0] sm:%s95] %v832
                %v834 = vld [vmem:[%s102 + $0x23b4] sm:%s95]
                %835 = vst [vmem:[%s103 + $0x5b4] sm:%s95] %v834
                %v836 = vld [vmem:[%s102 + $0x23b8] sm:%s95]
                %837 = vst [vmem:[%s103 + $0x5b8] sm:%s95] %v836
                %v838 = vld [vmem:[%s102 + $0x23bc] sm:%s95]
                %839 = vst [vmem:[%s103 + $0x5bc] sm:%s95] %v838
                %v840 = vld [vmem:[%s102 + $0x23c0] sm:%s95]
                %841 = vst [vmem:[%s103 + $0x5c0] sm:%s95] %v840
                %v842 = vld [vmem:[%s102 + $0x23c4] sm:%s95]
                %843 = vst [vmem:[%s103 + $0x5c4] sm:%s95] %v842
                %v844 = vld [vmem:[%s102 + $0x23c8] sm:%s95]
                %845 = vst [vmem:[%s103 + $0x5c8] sm:%s95] %v844
                %v846 = vld [vmem:[%s102 + $0x23cc] sm:%s95]
                %847 = vst [vmem:[%s103 + $0x5cc] sm:%s95] %v846
                %v848 = vld [vmem:[%s102 + $0x23d0] sm:%s95]
                %849 = vst [vmem:[%s103 + $0x5d0] sm:%s95] %v848
                %v850 = vld [vmem:[%s102 + $0x23d4] sm:%s95]
                %851 = vst [vmem:[%s103 + $0x5d4] sm:%s95] %v850
                %v852 = vld [vmem:[%s102 + $0x23d8] sm:%s95]
                %853 = vst [vmem:[%s103 + $0x5d8] sm:%s95] %v852
                %v854 = vld [vmem:[%s102 + $0x23dc] sm:%s95]
                %855 = vst [vmem:[%s103 + $0x5dc] sm:%s95] %v854
                %v856 = vld [vmem:[%s102 + $0x23e0] sm:%s95]
                %857 = vst [vmem:[%s103 + $0x5e0] sm:%s95] %v856
                %v858 = vld [vmem:[%s102 + $0x23e4] sm:%s95]
                %859 = vst [vmem:[%s103 + $0x5e4] sm:%s95] %v858
                %v860 = vld [vmem:[%s102 + $0x23e8] sm:%s95]
                %861 = vst [vmem:[%s103 + $0x5e8] sm:%s95] %v860
                %v862 = vld [vmem:[%s102 + $0x23ec] sm:%s95]
                %863 = vst [vmem:[%s103 + $0x5ec] sm:%s95] %v862
                %v864 = vld [vmem:[%s102 + $0x23f0] sm:%s95]
                %865 = vst [vmem:[%s103 + $0x5f0] sm:%s95] %v864
                %v866 = vld [vmem:[%s102 + $0x23f4] sm:%s95]
                %867 = vst [vmem:[%s103 + $0x5f4] sm:%s95] %v866
                %v868 = vld [vmem:[%s102 + $0x23f8] sm:%s95]
                %869 = vst [vmem:[%s103 + $0x5f8] sm:%s95] %v868
                %v870 = vld [vmem:[%s102 + $0x23fc] sm:%s95]
                %871 = vst [vmem:[%s103 + $0x5fc] sm:%s95] %v870
                %v872 = vld [vmem:[%s102 + $0x2a00] sm:%s95]
                %873 = vst [vmem:[%s103 + $0x600] sm:%s95] %v872
                %v874 = vld [vmem:[%s102 + $0x2a04] sm:%s95]
                %875 = vst [vmem:[%s103 + $0x604] sm:%s95] %v874
                %v876 = vld [vmem:[%s102 + $0x2a08] sm:%s95]
                %877 = vst [vmem:[%s103 + $0x608] sm:%s95] %v876
                %v878 = vld [vmem:[%s102 + $0x2a0c] sm:%s95]
                %879 = vst [vmem:[%s103 + $0x60c] sm:%s95] %v878
                %v880 = vld [vmem:[%s102 + $0x2a10] sm:%s95]
                %881 = vst [vmem:[%s103 + $0x610] sm:%s95] %v880
                %v882 = vld [vmem:[%s102 + $0x2a14] sm:%s95]
                %883 = vst [vmem:[%s103 + $0x614] sm:%s95] %v882
                %v884 = vld [vmem:[%s102 + $0x2a18] sm:%s95]
                %885 = vst [vmem:[%s103 + $0x618] sm:%s95] %v884
                %v886 = vld [vmem:[%s102 + $0x2a1c] sm:%s95]
                %887 = vst [vmem:[%s103 + $0x61c] sm:%s95] %v886
                %v888 = vld [vmem:[%s102 + $0x2a20] sm:%s95]
                %889 = vst [vmem:[%s103 + $0x620] sm:%s95] %v888
                %v890 = vld [vmem:[%s102 + $0x2a24] sm:%s95]
                %891 = vst [vmem:[%s103 + $0x624] sm:%s95] %v890
                %v892 = vld [vmem:[%s102 + $0x2a28] sm:%s95]
                %893 = vst [vmem:[%s103 + $0x628] sm:%s95] %v892
                %v894 = vld [vmem:[%s102 + $0x2a2c] sm:%s95]
                %895 = vst [vmem:[%s103 + $0x62c] sm:%s95] %v894
                %v896 = vld [vmem:[%s102 + $0x2a30] sm:%s95]
                %897 = vst [vmem:[%s103 + $0x630] sm:%s95] %v896
                %v898 = vld [vmem:[%s102 + $0x2a34] sm:%s95]
                %899 = vst [vmem:[%s103 + $0x634] sm:%s95] %v898
                %v900 = vld [vmem:[%s102 + $0x2a38] sm:%s95]
                %901 = vst [vmem:[%s103 + $0x638] sm:%s95] %v900
                %v902 = vld [vmem:[%s102 + $0x2a3c] sm:%s95]
                %903 = vst [vmem:[%s103 + $0x63c] sm:%s95] %v902
                %v904 = vld [vmem:[%s102 + $0x2a40] sm:%s95]
                %905 = vst [vmem:[%s103 + $0x640] sm:%s95] %v904
                %v906 = vld [vmem:[%s102 + $0x2a44] sm:%s95]
                %907 = vst [vmem:[%s103 + $0x644] sm:%s95] %v906
                %v908 = vld [vmem:[%s102 + $0x2a48] sm:%s95]
                %909 = vst [vmem:[%s103 + $0x648] sm:%s95] %v908
                %v910 = vld [vmem:[%s102 + $0x2a4c] sm:%s95]
                %911 = vst [vmem:[%s103 + $0x64c] sm:%s95] %v910
                %v912 = vld [vmem:[%s102 + $0x2a50] sm:%s95]
                %913 = vst [vmem:[%s103 + $0x650] sm:%s95] %v912
                %v914 = vld [vmem:[%s102 + $0x2a54] sm:%s95]
                %915 = vst [vmem:[%s103 + $0x654] sm:%s95] %v914
                %v916 = vld [vmem:[%s102 + $0x2a58] sm:%s95]
                %917 = vst [vmem:[%s103 + $0x658] sm:%s95] %v916
                %v918 = vld [vmem:[%s102 + $0x2a5c] sm:%s95]
                %919 = vst [vmem:[%s103 + $0x65c] sm:%s95] %v918
                %v920 = vld [vmem:[%s102 + $0x2a60] sm:%s95]
                %921 = vst [vmem:[%s103 + $0x660] sm:%s95] %v920
                %v922 = vld [vmem:[%s102 + $0x2a64] sm:%s95]
                %923 = vst [vmem:[%s103 + $0x664] sm:%s95] %v922
                %v924 = vld [vmem:[%s102 + $0x2a68] sm:%s95]
                %925 = vst [vmem:[%s103 + $0x668] sm:%s95] %v924
                %v926 = vld [vmem:[%s102 + $0x2a6c] sm:%s95]
                %927 = vst [vmem:[%s103 + $0x66c] sm:%s95] %v926
                %v928 = vld [vmem:[%s102 + $0x2a70] sm:%s95]
                %929 = vst [vmem:[%s103 + $0x670] sm:%s95] %v928
                %v930 = vld [vmem:[%s102 + $0x2a74] sm:%s95]
                %931 = vst [vmem:[%s103 + $0x674] sm:%s95] %v930
                %v932 = vld [vmem:[%s102 + $0x2a78] sm:%s95]
                %933 = vst [vmem:[%s103 + $0x678] sm:%s95] %v932
                %v934 = vld [vmem:[%s102 + $0x2a7c] sm:%s95]
                %935 = vst [vmem:[%s103 + $0x67c] sm:%s95] %v934
                %v936 = vld [vmem:[%s102 + $0x2a80] sm:%s95]
                %937 = vst [vmem:[%s103 + $0x680] sm:%s95] %v936
                %v938 = vld [vmem:[%s102 + $0x2a84] sm:%s95]
                %939 = vst [vmem:[%s103 + $0x684] sm:%s95] %v938
                %v940 = vld [vmem:[%s102 + $0x2a88] sm:%s95]
                %941 = vst [vmem:[%s103 + $0x688] sm:%s95] %v940
                %v942 = vld [vmem:[%s102 + $0x2a8c] sm:%s95]
                %943 = vst [vmem:[%s103 + $0x68c] sm:%s95] %v942
                %v944 = vld [vmem:[%s102 + $0x2a90] sm:%s95]
                %945 = vst [vmem:[%s103 + $0x690] sm:%s95] %v944
                %v946 = vld [vmem:[%s102 + $0x2a94] sm:%s95]
                %947 = vst [vmem:[%s103 + $0x694] sm:%s95] %v946
                %v948 = vld [vmem:[%s102 + $0x2a98] sm:%s95]
                %949 = vst [vmem:[%s103 + $0x698] sm:%s95] %v948
                %v950 = vld [vmem:[%s102 + $0x2a9c] sm:%s95]
                %951 = vst [vmem:[%s103 + $0x69c] sm:%s95] %v950
                %v952 = vld [vmem:[%s102 + $0x2aa0] sm:%s95]
                %953 = vst [vmem:[%s103 + $0x6a0] sm:%s95] %v952
                %v954 = vld [vmem:[%s102 + $0x2aa4] sm:%s95]
                %955 = vst [vmem:[%s103 + $0x6a4] sm:%s95] %v954
                %v956 = vld [vmem:[%s102 + $0x2aa8] sm:%s95]
                %957 = vst [vmem:[%s103 + $0x6a8] sm:%s95] %v956
                %v958 = vld [vmem:[%s102 + $0x2aac] sm:%s95]
                %959 = vst [vmem:[%s103 + $0x6ac] sm:%s95] %v958
                %v960 = vld [vmem:[%s102 + $0x2ab0] sm:%s95]
                %961 = vst [vmem:[%s103 + $0x6b0] sm:%s95] %v960
                %v962 = vld [vmem:[%s102 + $0x2ab4] sm:%s95]
                %963 = vst [vmem:[%s103 + $0x6b4] sm:%s95] %v962
                %v964 = vld [vmem:[%s102 + $0x2ab8] sm:%s95]
                %965 = vst [vmem:[%s103 + $0x6b8] sm:%s95] %v964
                %v966 = vld [vmem:[%s102 + $0x2abc] sm:%s95]
                %967 = vst [vmem:[%s103 + $0x6bc] sm:%s95] %v966
                %v968 = vld [vmem:[%s102 + $0x2ac0] sm:%s95]
                %969 = vst [vmem:[%s103 + $0x6c0] sm:%s95] %v968
                %v970 = vld [vmem:[%s102 + $0x2ac4] sm:%s95]
                %971 = vst [vmem:[%s103 + $0x6c4] sm:%s95] %v970
                %v972 = vld [vmem:[%s102 + $0x2ac8] sm:%s95]
                %973 = vst [vmem:[%s103 + $0x6c8] sm:%s95] %v972
                %v974 = vld [vmem:[%s102 + $0x2acc] sm:%s95]
                %975 = vst [vmem:[%s103 + $0x6cc] sm:%s95] %v974
                %v976 = vld [vmem:[%s102 + $0x2ad0] sm:%s95]
                %977 = vst [vmem:[%s103 + $0x6d0] sm:%s95] %v976
                %v978 = vld [vmem:[%s102 + $0x2ad4] sm:%s95]
                %979 = vst [vmem:[%s103 + $0x6d4] sm:%s95] %v978
                %v980 = vld [vmem:[%s102 + $0x2ad8] sm:%s95]
                %981 = vst [vmem:[%s103 + $0x6d8] sm:%s95] %v980
                %v982 = vld [vmem:[%s102 + $0x2adc] sm:%s95]
                %983 = vst [vmem:[%s103 + $0x6dc] sm:%s95] %v982
                %v984 = vld [vmem:[%s102 + $0x2ae0] sm:%s95]
                %985 = vst [vmem:[%s103 + $0x6e0] sm:%s95] %v984
                %v986 = vld [vmem:[%s102 + $0x2ae4] sm:%s95]
                %987 = vst [vmem:[%s103 + $0x6e4] sm:%s95] %v986
                %v988 = vld [vmem:[%s102 + $0x2ae8] sm:%s95]
                %989 = vst [vmem:[%s103 + $0x6e8] sm:%s95] %v988
                %v990 = vld [vmem:[%s102 + $0x2aec] sm:%s95]
                %991 = vst [vmem:[%s103 + $0x6ec] sm:%s95] %v990
                %v992 = vld [vmem:[%s102 + $0x2af0] sm:%s95]
                %993 = vst [vmem:[%s103 + $0x6f0] sm:%s95] %v992
                %v994 = vld [vmem:[%s102 + $0x2af4] sm:%s95]
                %995 = vst [vmem:[%s103 + $0x6f4] sm:%s95] %v994
                %v996 = vld [vmem:[%s102 + $0x2af8] sm:%s95]
                %997 = vst [vmem:[%s103 + $0x6f8] sm:%s95] %v996
                %v998 = vld [vmem:[%s102 + $0x2afc] sm:%s95]
                %999 = vst [vmem:[%s103 + $0x6fc] sm:%s95] %v998
                %v1000 = vld [vmem:[%s102 + $0x3100] sm:%s95]
                %1001 = vst [vmem:[%s103 + $0x700] sm:%s95] %v1000
                %v1002 = vld [vmem:[%s102 + $0x3104] sm:%s95]
                %1003 = vst [vmem:[%s103 + $0x704] sm:%s95] %v1002
                %v1004 = vld [vmem:[%s102 + $0x3108] sm:%s95]
                %1005 = vst [vmem:[%s103 + $0x708] sm:%s95] %v1004
                %v1006 = vld [vmem:[%s102 + $0x310c] sm:%s95]
                %1007 = vst [vmem:[%s103 + $0x70c] sm:%s95] %v1006
                %v1008 = vld [vmem:[%s102 + $0x3110] sm:%s95]
                %1009 = vst [vmem:[%s103 + $0x710] sm:%s95] %v1008
                %v1010 = vld [vmem:[%s102 + $0x3114] sm:%s95]
                %1011 = vst [vmem:[%s103 + $0x714] sm:%s95] %v1010
                %v1012 = vld [vmem:[%s102 + $0x3118] sm:%s95]
                %1013 = vst [vmem:[%s103 + $0x718] sm:%s95] %v1012
                %v1014 = vld [vmem:[%s102 + $0x311c] sm:%s95]
                %1015 = vst [vmem:[%s103 + $0x71c] sm:%s95] %v1014
                %v1016 = vld [vmem:[%s102 + $0x3120] sm:%s95]
                %1017 = vst [vmem:[%s103 + $0x720] sm:%s95] %v1016
                %v1018 = vld [vmem:[%s102 + $0x3124] sm:%s95]
                %1019 = vst [vmem:[%s103 + $0x724] sm:%s95] %v1018
                %v1020 = vld [vmem:[%s102 + $0x3128] sm:%s95]
                %1021 = vst [vmem:[%s103 + $0x728] sm:%s95] %v1020
                %v1022 = vld [vmem:[%s102 + $0x312c] sm:%s95]
                %1023 = vst [vmem:[%s103 + $0x72c] sm:%s95] %v1022
                %v1024 = vld [vmem:[%s102 + $0x3130] sm:%s95]
                %1025 = vst [vmem:[%s103 + $0x730] sm:%s95] %v1024
                %v1026 = vld [vmem:[%s102 + $0x3134] sm:%s95]
                %1027 = vst [vmem:[%s103 + $0x734] sm:%s95] %v1026
                %v1028 = vld [vmem:[%s102 + $0x3138] sm:%s95]
                %1029 = vst [vmem:[%s103 + $0x738] sm:%s95] %v1028
                %v1030 = vld [vmem:[%s102 + $0x313c] sm:%s95]
                %1031 = vst [vmem:[%s103 + $0x73c] sm:%s95] %v1030
                %v1032 = vld [vmem:[%s102 + $0x3140] sm:%s95]
                %1033 = vst [vmem:[%s103 + $0x740] sm:%s95] %v1032
                %v1034 = vld [vmem:[%s102 + $0x3144] sm:%s95]
                %1035 = vst [vmem:[%s103 + $0x744] sm:%s95] %v1034
                %v1036 = vld [vmem:[%s102 + $0x3148] sm:%s95]
                %1037 = vst [vmem:[%s103 + $0x748] sm:%s95] %v1036
                %v1038 = vld [vmem:[%s102 + $0x314c] sm:%s95]
                %1039 = vst [vmem:[%s103 + $0x74c] sm:%s95] %v1038
                %v1040 = vld [vmem:[%s102 + $0x3150] sm:%s95]
                %1041 = vst [vmem:[%s103 + $0x750] sm:%s95] %v1040
                %v1042 = vld [vmem:[%s102 + $0x3154] sm:%s95]
                %1043 = vst [vmem:[%s103 + $0x754] sm:%s95] %v1042
                %v1044 = vld [vmem:[%s102 + $0x3158] sm:%s95]
                %1045 = vst [vmem:[%s103 + $0x758] sm:%s95] %v1044
                %v1046 = vld [vmem:[%s102 + $0x315c] sm:%s95]
                %1047 = vst [vmem:[%s103 + $0x75c] sm:%s95] %v1046
                %v1048 = vld [vmem:[%s102 + $0x3160] sm:%s95]
                %1049 = vst [vmem:[%s103 + $0x760] sm:%s95] %v1048
                %v1050 = vld [vmem:[%s102 + $0x3164] sm:%s95]
                %1051 = vst [vmem:[%s103 + $0x764] sm:%s95] %v1050
                %v1052 = vld [vmem:[%s102 + $0x3168] sm:%s95]
                %1053 = vst [vmem:[%s103 + $0x768] sm:%s95] %v1052
                %v1054 = vld [vmem:[%s102 + $0x316c] sm:%s95]
                %1055 = vst [vmem:[%s103 + $0x76c] sm:%s95] %v1054
                %v1056 = vld [vmem:[%s102 + $0x3170] sm:%s95]
                %1057 = vst [vmem:[%s103 + $0x770] sm:%s95] %v1056
                %v1058 = vld [vmem:[%s102 + $0x3174] sm:%s95]
                %1059 = vst [vmem:[%s103 + $0x774] sm:%s95] %v1058
                %v1060 = vld [vmem:[%s102 + $0x3178] sm:%s95]
                %1061 = vst [vmem:[%s103 + $0x778] sm:%s95] %v1060
                %v1062 = vld [vmem:[%s102 + $0x317c] sm:%s95]
                %1063 = vst [vmem:[%s103 + $0x77c] sm:%s95] %v1062
                %v1064 = vld [vmem:[%s102 + $0x3180] sm:%s95]
                %1065 = vst [vmem:[%s103 + $0x780] sm:%s95] %v1064
                %v1066 = vld [vmem:[%s102 + $0x3184] sm:%s95]
                %1067 = vst [vmem:[%s103 + $0x784] sm:%s95] %v1066
                %v1068 = vld [vmem:[%s102 + $0x3188] sm:%s95]
                %1069 = vst [vmem:[%s103 + $0x788] sm:%s95] %v1068
                %v1070 = vld [vmem:[%s102 + $0x318c] sm:%s95]
                %1071 = vst [vmem:[%s103 + $0x78c] sm:%s95] %v1070
                %v1072 = vld [vmem:[%s102 + $0x3190] sm:%s95]
                %1073 = vst [vmem:[%s103 + $0x790] sm:%s95] %v1072
                %v1074 = vld [vmem:[%s102 + $0x3194] sm:%s95]
                %1075 = vst [vmem:[%s103 + $0x794] sm:%s95] %v1074
                %v1076 = vld [vmem:[%s102 + $0x3198] sm:%s95]
                %1077 = vst [vmem:[%s103 + $0x798] sm:%s95] %v1076
                %v1078 = vld [vmem:[%s102 + $0x319c] sm:%s95]
                %1079 = vst [vmem:[%s103 + $0x79c] sm:%s95] %v1078
                %v1080 = vld [vmem:[%s102 + $0x31a0] sm:%s95]
                %1081 = vst [vmem:[%s103 + $0x7a0] sm:%s95] %v1080
                %v1082 = vld [vmem:[%s102 + $0x31a4] sm:%s95]
                %1083 = vst [vmem:[%s103 + $0x7a4] sm:%s95] %v1082
                %v1084 = vld [vmem:[%s102 + $0x31a8] sm:%s95]
                %1085 = vst [vmem:[%s103 + $0x7a8] sm:%s95] %v1084
                %v1086 = vld [vmem:[%s102 + $0x31ac] sm:%s95]
                %1087 = vst [vmem:[%s103 + $0x7ac] sm:%s95] %v1086
                %v1088 = vld [vmem:[%s102 + $0x31b0] sm:%s95]
                %1089 = vst [vmem:[%s103 + $0x7b0] sm:%s95] %v1088
                %v1090 = vld [vmem:[%s102 + $0x31b4] sm:%s95]
                %1091 = vst [vmem:[%s103 + $0x7b4] sm:%s95] %v1090
                %v1092 = vld [vmem:[%s102 + $0x31b8] sm:%s95]
                %1093 = vst [vmem:[%s103 + $0x7b8] sm:%s95] %v1092
                %v1094 = vld [vmem:[%s102 + $0x31bc] sm:%s95]
                %1095 = vst [vmem:[%s103 + $0x7bc] sm:%s95] %v1094
                %v1096 = vld [vmem:[%s102 + $0x31c0] sm:%s95]
                %1097 = vst [vmem:[%s103 + $0x7c0] sm:%s95] %v1096
                %v1098 = vld [vmem:[%s102 + $0x31c4] sm:%s95]
                %1099 = vst [vmem:[%s103 + $0x7c4] sm:%s95] %v1098
                %v1100 = vld [vmem:[%s102 + $0x31c8] sm:%s95]
                %1101 = vst [vmem:[%s103 + $0x7c8] sm:%s95] %v1100
                %v1102 = vld [vmem:[%s102 + $0x31cc] sm:%s95]
                %1103 = vst [vmem:[%s103 + $0x7cc] sm:%s95] %v1102
                %v1104 = vld [vmem:[%s102 + $0x31d0] sm:%s95]
                %1105 = vst [vmem:[%s103 + $0x7d0] sm:%s95] %v1104
                %v1106 = vld [vmem:[%s102 + $0x31d4] sm:%s95]
                %1107 = vst [vmem:[%s103 + $0x7d4] sm:%s95] %v1106
                %v1108 = vld [vmem:[%s102 + $0x31d8] sm:%s95]
                %1109 = vst [vmem:[%s103 + $0x7d8] sm:%s95] %v1108
                %v1110 = vld [vmem:[%s102 + $0x31dc] sm:%s95]
                %1111 = vst [vmem:[%s103 + $0x7dc] sm:%s95] %v1110
                %v1112 = vld [vmem:[%s102 + $0x31e0] sm:%s95]
                %1113 = vst [vmem:[%s103 + $0x7e0] sm:%s95] %v1112
                %v1114 = vld [vmem:[%s102 + $0x31e4] sm:%s95]
                %1115 = vst [vmem:[%s103 + $0x7e4] sm:%s95] %v1114
                %v1116 = vld [vmem:[%s102 + $0x31e8] sm:%s95]
                %1117 = vst [vmem:[%s103 + $0x7e8] sm:%s95] %v1116
                %v1118 = vld [vmem:[%s102 + $0x31ec] sm:%s95]
                %1119 = vst [vmem:[%s103 + $0x7ec] sm:%s95] %v1118
                %v1120 = vld [vmem:[%s102 + $0x31f0] sm:%s95]
                %1121 = vst [vmem:[%s103 + $0x7f0] sm:%s95] %v1120
                %v1122 = vld [vmem:[%s102 + $0x31f4] sm:%s95]
                %1123 = vst [vmem:[%s103 + $0x7f4] sm:%s95] %v1122
                %v1124 = vld [vmem:[%s102 + $0x31f8] sm:%s95]
                %1125 = vst [vmem:[%s103 + $0x7f8] sm:%s95] %v1124
                %v1126 = vld [vmem:[%s102 + $0x31fc] sm:%s95]
                %1127 = vst [vmem:[%s103 + $0x7fc] sm:%s95] %v1126
                %v1128 = vld [vmem:[%s102 + $0x3800] sm:%s95]
                %1129 = vst [vmem:[%s103 + $0x800] sm:%s95] %v1128
                %v1130 = vld [vmem:[%s102 + $0x3804] sm:%s95]
                %1131 = vst [vmem:[%s103 + $0x804] sm:%s95] %v1130
                %v1132 = vld [vmem:[%s102 + $0x3808] sm:%s95]
                %1133 = vst [vmem:[%s103 + $0x808] sm:%s95] %v1132
                %v1134 = vld [vmem:[%s102 + $0x380c] sm:%s95]
                %1135 = vst [vmem:[%s103 + $0x80c] sm:%s95] %v1134
                %v1136 = vld [vmem:[%s102 + $0x3810] sm:%s95]
                %1137 = vst [vmem:[%s103 + $0x810] sm:%s95] %v1136
                %v1138 = vld [vmem:[%s102 + $0x3814] sm:%s95]
                %1139 = vst [vmem:[%s103 + $0x814] sm:%s95] %v1138
                %v1140 = vld [vmem:[%s102 + $0x3818] sm:%s95]
                %1141 = vst [vmem:[%s103 + $0x818] sm:%s95] %v1140
                %v1142 = vld [vmem:[%s102 + $0x381c] sm:%s95]
                %1143 = vst [vmem:[%s103 + $0x81c] sm:%s95] %v1142
                %v1144 = vld [vmem:[%s102 + $0x3820] sm:%s95]
                %1145 = vst [vmem:[%s103 + $0x820] sm:%s95] %v1144
                %v1146 = vld [vmem:[%s102 + $0x3824] sm:%s95]
                %1147 = vst [vmem:[%s103 + $0x824] sm:%s95] %v1146
                %v1148 = vld [vmem:[%s102 + $0x3828] sm:%s95]
                %1149 = vst [vmem:[%s103 + $0x828] sm:%s95] %v1148
                %v1150 = vld [vmem:[%s102 + $0x382c] sm:%s95]
                %1151 = vst [vmem:[%s103 + $0x82c] sm:%s95] %v1150
                %v1152 = vld [vmem:[%s102 + $0x3830] sm:%s95]
                %1153 = vst [vmem:[%s103 + $0x830] sm:%s95] %v1152
                %v1154 = vld [vmem:[%s102 + $0x3834] sm:%s95]
                %1155 = vst [vmem:[%s103 + $0x834] sm:%s95] %v1154
                %v1156 = vld [vmem:[%s102 + $0x3838] sm:%s95]
                %1157 = vst [vmem:[%s103 + $0x838] sm:%s95] %v1156
                %v1158 = vld [vmem:[%s102 + $0x383c] sm:%s95]
                %1159 = vst [vmem:[%s103 + $0x83c] sm:%s95] %v1158
                %v1160 = vld [vmem:[%s102 + $0x3840] sm:%s95]
                %1161 = vst [vmem:[%s103 + $0x840] sm:%s95] %v1160
                %v1162 = vld [vmem:[%s102 + $0x3844] sm:%s95]
                %1163 = vst [vmem:[%s103 + $0x844] sm:%s95] %v1162
                %v1164 = vld [vmem:[%s102 + $0x3848] sm:%s95]
                %1165 = vst [vmem:[%s103 + $0x848] sm:%s95] %v1164
                %v1166 = vld [vmem:[%s102 + $0x384c] sm:%s95]
                %1167 = vst [vmem:[%s103 + $0x84c] sm:%s95] %v1166
                %v1168 = vld [vmem:[%s102 + $0x3850] sm:%s95]
                %1169 = vst [vmem:[%s103 + $0x850] sm:%s95] %v1168
                %v1170 = vld [vmem:[%s102 + $0x3854] sm:%s95]
                %1171 = vst [vmem:[%s103 + $0x854] sm:%s95] %v1170
                %v1172 = vld [vmem:[%s102 + $0x3858] sm:%s95]
                %1173 = vst [vmem:[%s103 + $0x858] sm:%s95] %v1172
                %v1174 = vld [vmem:[%s102 + $0x385c] sm:%s95]
                %1175 = vst [vmem:[%s103 + $0x85c] sm:%s95] %v1174
                %v1176 = vld [vmem:[%s102 + $0x3860] sm:%s95]
                %1177 = vst [vmem:[%s103 + $0x860] sm:%s95] %v1176
                %v1178 = vld [vmem:[%s102 + $0x3864] sm:%s95]
                %1179 = vst [vmem:[%s103 + $0x864] sm:%s95] %v1178
                %v1180 = vld [vmem:[%s102 + $0x3868] sm:%s95]
                %1181 = vst [vmem:[%s103 + $0x868] sm:%s95] %v1180
                %v1182 = vld [vmem:[%s102 + $0x386c] sm:%s95]
                %1183 = vst [vmem:[%s103 + $0x86c] sm:%s95] %v1182
                %v1184 = vld [vmem:[%s102 + $0x3870] sm:%s95]
                %1185 = vst [vmem:[%s103 + $0x870] sm:%s95] %v1184
                %v1186 = vld [vmem:[%s102 + $0x3874] sm:%s95]
                %1187 = vst [vmem:[%s103 + $0x874] sm:%s95] %v1186
                %v1188 = vld [vmem:[%s102 + $0x3878] sm:%s95]
                %1189 = vst [vmem:[%s103 + $0x878] sm:%s95] %v1188
                %v1190 = vld [vmem:[%s102 + $0x387c] sm:%s95]
                %1191 = vst [vmem:[%s103 + $0x87c] sm:%s95] %v1190
                %v1192 = vld [vmem:[%s102 + $0x3880] sm:%s95]
                %1193 = vst [vmem:[%s103 + $0x880] sm:%s95] %v1192
                %v1194 = vld [vmem:[%s102 + $0x3884] sm:%s95]
                %1195 = vst [vmem:[%s103 + $0x884] sm:%s95] %v1194
                %v1196 = vld [vmem:[%s102 + $0x3888] sm:%s95]
                %1197 = vst [vmem:[%s103 + $0x888] sm:%s95] %v1196
                %v1198 = vld [vmem:[%s102 + $0x388c] sm:%s95]
                %1199 = vst [vmem:[%s103 + $0x88c] sm:%s95] %v1198
                %v1200 = vld [vmem:[%s102 + $0x3890] sm:%s95]
                %1201 = vst [vmem:[%s103 + $0x890] sm:%s95] %v1200
                %v1202 = vld [vmem:[%s102 + $0x3894] sm:%s95]
                %1203 = vst [vmem:[%s103 + $0x894] sm:%s95] %v1202
                %v1204 = vld [vmem:[%s102 + $0x3898] sm:%s95]
                %1205 = vst [vmem:[%s103 + $0x898] sm:%s95] %v1204
                %v1206 = vld [vmem:[%s102 + $0x389c] sm:%s95]
                %1207 = vst [vmem:[%s103 + $0x89c] sm:%s95] %v1206
                %v1208 = vld [vmem:[%s102 + $0x38a0] sm:%s95]
                %1209 = vst [vmem:[%s103 + $0x8a0] sm:%s95] %v1208
                %v1210 = vld [vmem:[%s102 + $0x38a4] sm:%s95]
                %1211 = vst [vmem:[%s103 + $0x8a4] sm:%s95] %v1210
                %v1212 = vld [vmem:[%s102 + $0x38a8] sm:%s95]
                %1213 = vst [vmem:[%s103 + $0x8a8] sm:%s95] %v1212
                %v1214 = vld [vmem:[%s102 + $0x38ac] sm:%s95]
                %1215 = vst [vmem:[%s103 + $0x8ac] sm:%s95] %v1214
                %v1216 = vld [vmem:[%s102 + $0x38b0] sm:%s95]
                %1217 = vst [vmem:[%s103 + $0x8b0] sm:%s95] %v1216
                %v1218 = vld [vmem:[%s102 + $0x38b4] sm:%s95]
                %1219 = vst [vmem:[%s103 + $0x8b4] sm:%s95] %v1218
                %v1220 = vld [vmem:[%s102 + $0x38b8] sm:%s95]
                %1221 = vst [vmem:[%s103 + $0x8b8] sm:%s95] %v1220
                %v1222 = vld [vmem:[%s102 + $0x38bc] sm:%s95]
                %1223 = vst [vmem:[%s103 + $0x8bc] sm:%s95] %v1222
                %v1224 = vld [vmem:[%s102 + $0x38c0] sm:%s95]
                %1225 = vst [vmem:[%s103 + $0x8c0] sm:%s95] %v1224
                %v1226 = vld [vmem:[%s102 + $0x38c4] sm:%s95]
                %1227 = vst [vmem:[%s103 + $0x8c4] sm:%s95] %v1226
                %v1228 = vld [vmem:[%s102 + $0x38c8] sm:%s95]
                %1229 = vst [vmem:[%s103 + $0x8c8] sm:%s95] %v1228
                %v1230 = vld [vmem:[%s102 + $0x38cc] sm:%s95]
                %1231 = vst [vmem:[%s103 + $0x8cc] sm:%s95] %v1230
                %v1232 = vld [vmem:[%s102 + $0x38d0] sm:%s95]
                %1233 = vst [vmem:[%s103 + $0x8d0] sm:%s95] %v1232
                %v1234 = vld [vmem:[%s102 + $0x38d4] sm:%s95]
                %1235 = vst [vmem:[%s103 + $0x8d4] sm:%s95] %v1234
                %v1236 = vld [vmem:[%s102 + $0x38d8] sm:%s95]
                %1237 = vst [vmem:[%s103 + $0x8d8] sm:%s95] %v1236
                %v1238 = vld [vmem:[%s102 + $0x38dc] sm:%s95]
                %1239 = vst [vmem:[%s103 + $0x8dc] sm:%s95] %v1238
                %v1240 = vld [vmem:[%s102 + $0x38e0] sm:%s95]
                %1241 = vst [vmem:[%s103 + $0x8e0] sm:%s95] %v1240
                %v1242 = vld [vmem:[%s102 + $0x38e4] sm:%s95]
                %1243 = vst [vmem:[%s103 + $0x8e4] sm:%s95] %v1242
                %v1244 = vld [vmem:[%s102 + $0x38e8] sm:%s95]
                %1245 = vst [vmem:[%s103 + $0x8e8] sm:%s95] %v1244
                %v1246 = vld [vmem:[%s102 + $0x38ec] sm:%s95]
                %1247 = vst [vmem:[%s103 + $0x8ec] sm:%s95] %v1246
                %v1248 = vld [vmem:[%s102 + $0x38f0] sm:%s95]
                %1249 = vst [vmem:[%s103 + $0x8f0] sm:%s95] %v1248
                %v1250 = vld [vmem:[%s102 + $0x38f4] sm:%s95]
                %1251 = vst [vmem:[%s103 + $0x8f4] sm:%s95] %v1250
                %v1252 = vld [vmem:[%s102 + $0x38f8] sm:%s95]
                %1253 = vst [vmem:[%s103 + $0x8f8] sm:%s95] %v1252
                %v1254 = vld [vmem:[%s102 + $0x38fc] sm:%s95]
                %1255 = vst [vmem:[%s103 + $0x8fc] sm:%s95] %v1254
              $region37: #{_stem.3} parent=31 // loop_footer
                %s101 = sadd.s32 1, %s97
              $region38: #{_stem.3} parent=31 // loop_footer_branch
                %96 = sbr.rel target = $region34
              $region39: #{_stem.3} parent=31 // loop_exit
                _
            $region32: #{_stem.3} parent=23 // pred_fallthru
              _
          $region24: #{_stem.3} parent=19 // pred_fallthru
            _
          %4762 = vnop
        $region20: #{_stem.3} parent=15 // pred_fallthru
          _
      $region16: #{_stem.3} parent=5 // pred_fallthru
        _
      %p4763 = scmp.le.s32.totalorder 1, %s7
      %p4764 = scmp.lt.s32.totalorder %s7, 8
      %p4765 = pnand %p4763, %p4764
      %p4766 = pneg %p4765
      // Predicated region
      $region69: #{_stem.3} parent=5 // pred_check
        _
      $region70: #{_stem.3} parent=5 // pred_check_branch
        %4768 = sbr.rel (%p4765) target = $region72
      $region71: #{_stem.3} parent=5 // pred_region
        %s4769 = ssub.s32 %s7, 1
        %s4770 = sand.u32 %s20, 1
        %s4771 = sand.u32 %s20, 1
        %s4772 = smul.addr %s4771, 2304
        %s4773 = scalar_lea.vmem [#allocation2], %s4772
        // Predicated region
        $region73: #{_stem.3} parent=71 // pred_check
          %p4774 = pneg %p33
        $region74: #{_stem.3} parent=71 // pred_check_branch
          %4776 = sbr.rel (%p4774) target = $region76
        $region75: #{_stem.3} parent=71 // pred_region
          _
        $region76: #{_stem.3} parent=71 // pred_fallthru
          _
        %s4777 = sand.u32 %s20, 1
        %s4778 = sand.u32 %s20, 1
        %s4779 = smul.addr %s4778, 2304
        %s4780 = scalar_lea.vmem [#allocation2], %s4779
        %p4781 = pneg %p33
        %p4782 = pneg %p30
        %p4783 = pneg %p59
        %p4784 = pneg %p56
        %s4785 = smul.u32 64, %s12
        %p4786 = scmp.lt.s32.totalorder %s4785, 447
        %s4787 = scalar_select %p4786, %s4785, 447
        %s4788 = smul.addr %s4787, 4
        %s4789 = scalar_lea.vmem %s1, %s4788
        %s4790 = smul.u32 64, %s12
        %s4791 = smul.u32 64, %s12
        %p4792 = scmp.lt.s32.totalorder %s4791, 447
        %s4793 = scalar_select %p4792, %s4791, 447
        %s4794 = smul.addr %s4793, 4
        %s4795 = scalar_lea.vmem %s1, %s4794
        %s4796 = smul.u32 64, %s12
        %v4798 = vld [vmem:[%s4773] sm:$0xf]
        %v4799 = vld [vmem:[%s4773 + $0x4] sm:$0xf]
        %v4800 = vld [vmem:[%s4773 + $0x8] sm:$0xf]
        %v4801 = vld [vmem:[%s4773 + $0xc] sm:$0xf]
        %v4802 = vld [vmem:[%s4773 + $0x10] sm:$0xf]
        %v4803 = vld [vmem:[%s4773 + $0x14] sm:$0xf]
        %v4804 = vld [vmem:[%s4773 + $0x18] sm:$0xf]
        %v4805 = vld [vmem:[%s4773 + $0x1c] sm:$0xf]
        %v4806 = vld [vmem:[%s4773 + $0x20] sm:$0xf]
        %v4807 = vld [vmem:[%s4773 + $0x24] sm:$0xf]
        %v4808 = vld [vmem:[%s4773 + $0x28] sm:$0xf]
        %v4809 = vld [vmem:[%s4773 + $0x2c] sm:$0xf]
        %v4810 = vld [vmem:[%s4773 + $0x30] sm:$0xf]
        %v4811 = vld [vmem:[%s4773 + $0x34] sm:$0xf]
        %v4812 = vld [vmem:[%s4773 + $0x38] sm:$0xf]
        %v4813 = vld [vmem:[%s4773 + $0x3c] sm:$0xf]
        %v4814 = vld [vmem:[%s4773 + $0x40] sm:$0xf]
        %v4815 = vld [vmem:[%s4773 + $0x44] sm:$0xf]
        %v4816 = vld [vmem:[%s4773 + $0x48] sm:$0xf]
        %v4817 = vld [vmem:[%s4773 + $0x4c] sm:$0xf]
        %v4818 = vld [vmem:[%s4773 + $0x50] sm:$0xf]
        %v4819 = vld [vmem:[%s4773 + $0x54] sm:$0xf]
        %v4820 = vld [vmem:[%s4773 + $0x58] sm:$0xf]
        %v4821 = vld [vmem:[%s4773 + $0x5c] sm:$0xf]
        %v4822 = vld [vmem:[%s4773 + $0x60] sm:$0xf]
        %v4823 = vld [vmem:[%s4773 + $0x64] sm:$0xf]
        %v4824 = vld [vmem:[%s4773 + $0x68] sm:$0xf]
        %v4825 = vld [vmem:[%s4773 + $0x6c] sm:$0xf]
        %v4826 = vld [vmem:[%s4773 + $0x70] sm:$0xf]
        %v4827 = vld [vmem:[%s4773 + $0x74] sm:$0xf]
        %v4828 = vld [vmem:[%s4773 + $0x78] sm:$0xf]
        %v4829 = vld [vmem:[%s4773 + $0x7c] sm:$0xf]
        %v4830 = vld [vmem:[%s4773 + $0x80] sm:$0xf]
        %v4831 = vld [vmem:[%s4773 + $0x84] sm:$0xf]
        %v4832 = vld [vmem:[%s4773 + $0x88] sm:$0xf]
        %v4833 = vld [vmem:[%s4773 + $0x8c] sm:$0xf]
        %v4834 = vld [vmem:[%s4773 + $0x90] sm:$0xf]
        %v4835 = vld [vmem:[%s4773 + $0x94] sm:$0xf]
        %v4836 = vld [vmem:[%s4773 + $0x98] sm:$0xf]
        %v4837 = vld [vmem:[%s4773 + $0x9c] sm:$0xf]
        %v4838 = vld [vmem:[%s4773 + $0xa0] sm:$0xf]
        %v4839 = vld [vmem:[%s4773 + $0xa4] sm:$0xf]
        %v4840 = vld [vmem:[%s4773 + $0xa8] sm:$0xf]
        %v4841 = vld [vmem:[%s4773 + $0xac] sm:$0xf]
        %v4842 = vld [vmem:[%s4773 + $0xb0] sm:$0xf]
        %v4843 = vld [vmem:[%s4773 + $0xb4] sm:$0xf]
        %v4844 = vld [vmem:[%s4773 + $0xb8] sm:$0xf]
        %v4845 = vld [vmem:[%s4773 + $0xbc] sm:$0xf]
        %v4846 = vld [vmem:[%s4773 + $0xc0] sm:$0xf]
        %v4847 = vld [vmem:[%s4773 + $0xc4] sm:$0xf]
        %v4848 = vld [vmem:[%s4773 + $0xc8] sm:$0xf]
        %v4849 = vld [vmem:[%s4773 + $0xcc] sm:$0xf]
        %v4850 = vld [vmem:[%s4773 + $0xd0] sm:$0xf]
        %v4851 = vld [vmem:[%s4773 + $0xd4] sm:$0xf]
        %v4852 = vld [vmem:[%s4773 + $0xd8] sm:$0xf]
        %v4853 = vld [vmem:[%s4773 + $0xdc] sm:$0xf]
        %v4854 = vld [vmem:[%s4773 + $0xe0] sm:$0xf]
        %v4855 = vld [vmem:[%s4773 + $0xe4] sm:$0xf]
        %v4856 = vld [vmem:[%s4773 + $0xe8] sm:$0xf]
        %v4857 = vld [vmem:[%s4773 + $0xec] sm:$0xf]
        %v4858 = vld [vmem:[%s4773 + $0xf0] sm:$0xf]
        %v4859 = vld [vmem:[%s4773 + $0xf4] sm:$0xf]
        %v4860 = vld [vmem:[%s4773 + $0xf8] sm:$0xf]
        %v4861 = vld [vmem:[%s4773 + $0xfc] sm:$0xf]
        %v4862 = vld [vmem:[%s4773 + $0x100] sm:$0xf]
        %v4863 = vld [vmem:[%s4773 + $0x104] sm:$0xf]
        %v4864 = vld [vmem:[%s4773 + $0x108] sm:$0xf]
        %v4865 = vld [vmem:[%s4773 + $0x10c] sm:$0xf]
        %v4866 = vld [vmem:[%s4773 + $0x110] sm:$0xf]
        %v4867 = vld [vmem:[%s4773 + $0x114] sm:$0xf]
        %v4868 = vld [vmem:[%s4773 + $0x118] sm:$0xf]
        %v4869 = vld [vmem:[%s4773 + $0x11c] sm:$0xf]
        %v4870 = vld [vmem:[%s4773 + $0x120] sm:$0xf]
        %v4871 = vld [vmem:[%s4773 + $0x124] sm:$0xf]
        %v4872 = vld [vmem:[%s4773 + $0x128] sm:$0xf]
        %v4873 = vld [vmem:[%s4773 + $0x12c] sm:$0xf]
        %v4874 = vld [vmem:[%s4773 + $0x130] sm:$0xf]
        %v4875 = vld [vmem:[%s4773 + $0x134] sm:$0xf]
        %v4876 = vld [vmem:[%s4773 + $0x138] sm:$0xf]
        %v4877 = vld [vmem:[%s4773 + $0x13c] sm:$0xf]
        %v4878 = vld [vmem:[%s4773 + $0x140] sm:$0xf]
        %v4879 = vld [vmem:[%s4773 + $0x144] sm:$0xf]
        %v4880 = vld [vmem:[%s4773 + $0x148] sm:$0xf]
        %v4881 = vld [vmem:[%s4773 + $0x14c] sm:$0xf]
        %v4882 = vld [vmem:[%s4773 + $0x150] sm:$0xf]
        %v4883 = vld [vmem:[%s4773 + $0x154] sm:$0xf]
        %v4884 = vld [vmem:[%s4773 + $0x158] sm:$0xf]
        %v4885 = vld [vmem:[%s4773 + $0x15c] sm:$0xf]
        %v4886 = vld [vmem:[%s4773 + $0x160] sm:$0xf]
        %v4887 = vld [vmem:[%s4773 + $0x164] sm:$0xf]
        %v4888 = vld [vmem:[%s4773 + $0x168] sm:$0xf]
        %v4889 = vld [vmem:[%s4773 + $0x16c] sm:$0xf]
        %v4890 = vld [vmem:[%s4773 + $0x170] sm:$0xf]
        %v4891 = vld [vmem:[%s4773 + $0x174] sm:$0xf]
        %v4892 = vld [vmem:[%s4773 + $0x178] sm:$0xf]
        %v4893 = vld [vmem:[%s4773 + $0x17c] sm:$0xf]
        %v4894 = vld [vmem:[%s4773 + $0x180] sm:$0xf]
        %v4895 = vld [vmem:[%s4773 + $0x184] sm:$0xf]
        %v4896 = vld [vmem:[%s4773 + $0x188] sm:$0xf]
        %v4897 = vld [vmem:[%s4773 + $0x18c] sm:$0xf]
        %v4898 = vld [vmem:[%s4773 + $0x190] sm:$0xf]
        %v4899 = vld [vmem:[%s4773 + $0x194] sm:$0xf]
        %v4900 = vld [vmem:[%s4773 + $0x198] sm:$0xf]
        %v4901 = vld [vmem:[%s4773 + $0x19c] sm:$0xf]
        %v4902 = vld [vmem:[%s4773 + $0x1a0] sm:$0xf]
        %v4903 = vld [vmem:[%s4773 + $0x1a4] sm:$0xf]
        %v4904 = vld [vmem:[%s4773 + $0x1a8] sm:$0xf]
        %v4905 = vld [vmem:[%s4773 + $0x1ac] sm:$0xf]
        %v4906 = vld [vmem:[%s4773 + $0x1b0] sm:$0xf]
        %v4907 = vld [vmem:[%s4773 + $0x1b4] sm:$0xf]
        %v4908 = vld [vmem:[%s4773 + $0x1b8] sm:$0xf]
        %v4909 = vld [vmem:[%s4773 + $0x1bc] sm:$0xf]
        %v4910 = vld [vmem:[%s4773 + $0x1c0] sm:$0xf]
        %v4911 = vld [vmem:[%s4773 + $0x1c4] sm:$0xf]
        %v4912 = vld [vmem:[%s4773 + $0x1c8] sm:$0xf]
        %v4913 = vld [vmem:[%s4773 + $0x1cc] sm:$0xf]
        %v4914 = vld [vmem:[%s4773 + $0x1d0] sm:$0xf]
        %v4915 = vld [vmem:[%s4773 + $0x1d4] sm:$0xf]
        %v4916 = vld [vmem:[%s4773 + $0x1d8] sm:$0xf]
        %v4917 = vld [vmem:[%s4773 + $0x1dc] sm:$0xf]
        %v4918 = vld [vmem:[%s4773 + $0x1e0] sm:$0xf]
        %v4919 = vld [vmem:[%s4773 + $0x1e4] sm:$0xf]
        %v4920 = vld [vmem:[%s4773 + $0x1e8] sm:$0xf]
        %v4921 = vld [vmem:[%s4773 + $0x1ec] sm:$0xf]
        %v4922 = vld [vmem:[%s4773 + $0x1f0] sm:$0xf]
        %v4923 = vld [vmem:[%s4773 + $0x1f4] sm:$0xf]
        %v4924 = vld [vmem:[%s4773 + $0x1f8] sm:$0xf]
        %v4925 = vld [vmem:[%s4773 + $0x1fc] sm:$0xf]
        %v4926 = vld [vmem:[%s4773 + $0x200] sm:$0xf]
        %v4927 = vld [vmem:[%s4773 + $0x204] sm:$0xf]
        %v4928 = vld [vmem:[%s4773 + $0x208] sm:$0xf]
        %v4929 = vld [vmem:[%s4773 + $0x20c] sm:$0xf]
        %v4930 = vld [vmem:[%s4773 + $0x210] sm:$0xf]
        %v4931 = vld [vmem:[%s4773 + $0x214] sm:$0xf]
        %v4932 = vld [vmem:[%s4773 + $0x218] sm:$0xf]
        %v4933 = vld [vmem:[%s4773 + $0x21c] sm:$0xf]
        %v4934 = vld [vmem:[%s4773 + $0x220] sm:$0xf]
        %v4935 = vld [vmem:[%s4773 + $0x224] sm:$0xf]
        %v4936 = vld [vmem:[%s4773 + $0x228] sm:$0xf]
        %v4937 = vld [vmem:[%s4773 + $0x22c] sm:$0xf]
        %v4938 = vld [vmem:[%s4773 + $0x230] sm:$0xf]
        %v4939 = vld [vmem:[%s4773 + $0x234] sm:$0xf]
        %v4940 = vld [vmem:[%s4773 + $0x238] sm:$0xf]
        %v4941 = vld [vmem:[%s4773 + $0x23c] sm:$0xf]
        %v4942 = vld [vmem:[%s4773 + $0x240] sm:$0xf]
        %v4943 = vld [vmem:[%s4773 + $0x244] sm:$0xf]
        %v4944 = vld [vmem:[%s4773 + $0x248] sm:$0xf]
        %v4945 = vld [vmem:[%s4773 + $0x24c] sm:$0xf]
        %v4946 = vld [vmem:[%s4773 + $0x250] sm:$0xf]
        %v4947 = vld [vmem:[%s4773 + $0x254] sm:$0xf]
        %v4948 = vld [vmem:[%s4773 + $0x258] sm:$0xf]
        %v4949 = vld [vmem:[%s4773 + $0x25c] sm:$0xf]
        %v4950 = vld [vmem:[%s4773 + $0x260] sm:$0xf]
        %v4951 = vld [vmem:[%s4773 + $0x264] sm:$0xf]
        %v4952 = vld [vmem:[%s4773 + $0x268] sm:$0xf]
        %v4953 = vld [vmem:[%s4773 + $0x26c] sm:$0xf]
        %v4954 = vld [vmem:[%s4773 + $0x270] sm:$0xf]
        %v4955 = vld [vmem:[%s4773 + $0x274] sm:$0xf]
        %v4956 = vld [vmem:[%s4773 + $0x278] sm:$0xf]
        %v4957 = vld [vmem:[%s4773 + $0x27c] sm:$0xf]
        %v4958 = vld [vmem:[%s4773 + $0x280] sm:$0xf]
        %v4959 = vld [vmem:[%s4773 + $0x284] sm:$0xf]
        %v4960 = vld [vmem:[%s4773 + $0x288] sm:$0xf]
        %v4961 = vld [vmem:[%s4773 + $0x28c] sm:$0xf]
        %v4962 = vld [vmem:[%s4773 + $0x290] sm:$0xf]
        %v4963 = vld [vmem:[%s4773 + $0x294] sm:$0xf]
        %v4964 = vld [vmem:[%s4773 + $0x298] sm:$0xf]
        %v4965 = vld [vmem:[%s4773 + $0x29c] sm:$0xf]
        %v4966 = vld [vmem:[%s4773 + $0x2a0] sm:$0xf]
        %v4967 = vld [vmem:[%s4773 + $0x2a4] sm:$0xf]
        %v4968 = vld [vmem:[%s4773 + $0x2a8] sm:$0xf]
        %v4969 = vld [vmem:[%s4773 + $0x2ac] sm:$0xf]
        %v4970 = vld [vmem:[%s4773 + $0x2b0] sm:$0xf]
        %v4971 = vld [vmem:[%s4773 + $0x2b4] sm:$0xf]
        %v4972 = vld [vmem:[%s4773 + $0x2b8] sm:$0xf]
        %v4973 = vld [vmem:[%s4773 + $0x2bc] sm:$0xf]
        %v4974 = vld [vmem:[%s4773 + $0x2c0] sm:$0xf]
        %v4975 = vld [vmem:[%s4773 + $0x2c4] sm:$0xf]
        %v4976 = vld [vmem:[%s4773 + $0x2c8] sm:$0xf]
        %v4977 = vld [vmem:[%s4773 + $0x2cc] sm:$0xf]
        %v4978 = vld [vmem:[%s4773 + $0x2d0] sm:$0xf]
        %v4979 = vld [vmem:[%s4773 + $0x2d4] sm:$0xf]
        %v4980 = vld [vmem:[%s4773 + $0x2d8] sm:$0xf]
        %v4981 = vld [vmem:[%s4773 + $0x2dc] sm:$0xf]
        %v4982 = vld [vmem:[%s4773 + $0x2e0] sm:$0xf]
        %v4983 = vld [vmem:[%s4773 + $0x2e4] sm:$0xf]
        %v4984 = vld [vmem:[%s4773 + $0x2e8] sm:$0xf]
        %v4985 = vld [vmem:[%s4773 + $0x2ec] sm:$0xf]
        %v4986 = vld [vmem:[%s4773 + $0x2f0] sm:$0xf]
        %v4987 = vld [vmem:[%s4773 + $0x2f4] sm:$0xf]
        %v4988 = vld [vmem:[%s4773 + $0x2f8] sm:$0xf]
        %v4989 = vld [vmem:[%s4773 + $0x2fc] sm:$0xf]
        %v4990 = vld [vmem:[%s4773 + $0x300] sm:$0xf]
        %v4991 = vld [vmem:[%s4773 + $0x304] sm:$0xf]
        %v4992 = vld [vmem:[%s4773 + $0x308] sm:$0xf]
        %v4993 = vld [vmem:[%s4773 + $0x30c] sm:$0xf]
        %v4994 = vld [vmem:[%s4773 + $0x310] sm:$0xf]
        %v4995 = vld [vmem:[%s4773 + $0x314] sm:$0xf]
        %v4996 = vld [vmem:[%s4773 + $0x318] sm:$0xf]
        %v4997 = vld [vmem:[%s4773 + $0x31c] sm:$0xf]
        %v4998 = vld [vmem:[%s4773 + $0x320] sm:$0xf]
        %v4999 = vld [vmem:[%s4773 + $0x324] sm:$0xf]
        %v5000 = vld [vmem:[%s4773 + $0x328] sm:$0xf]
        %v5001 = vld [vmem:[%s4773 + $0x32c] sm:$0xf]
        %v5002 = vld [vmem:[%s4773 + $0x330] sm:$0xf]
        %v5003 = vld [vmem:[%s4773 + $0x334] sm:$0xf]
        %v5004 = vld [vmem:[%s4773 + $0x338] sm:$0xf]
        %v5005 = vld [vmem:[%s4773 + $0x33c] sm:$0xf]
        %v5006 = vld [vmem:[%s4773 + $0x340] sm:$0xf]
        %v5007 = vld [vmem:[%s4773 + $0x344] sm:$0xf]
        %v5008 = vld [vmem:[%s4773 + $0x348] sm:$0xf]
        %v5009 = vld [vmem:[%s4773 + $0x34c] sm:$0xf]
        %v5010 = vld [vmem:[%s4773 + $0x350] sm:$0xf]
        %v5011 = vld [vmem:[%s4773 + $0x354] sm:$0xf]
        %v5012 = vld [vmem:[%s4773 + $0x358] sm:$0xf]
        %v5013 = vld [vmem:[%s4773 + $0x35c] sm:$0xf]
        %v5014 = vld [vmem:[%s4773 + $0x360] sm:$0xf]
        %v5015 = vld [vmem:[%s4773 + $0x364] sm:$0xf]
        %v5016 = vld [vmem:[%s4773 + $0x368] sm:$0xf]
        %v5017 = vld [vmem:[%s4773 + $0x36c] sm:$0xf]
        %v5018 = vld [vmem:[%s4773 + $0x370] sm:$0xf]
        %v5019 = vld [vmem:[%s4773 + $0x374] sm:$0xf]
        %v5020 = vld [vmem:[%s4773 + $0x378] sm:$0xf]
        %v5021 = vld [vmem:[%s4773 + $0x37c] sm:$0xf]
        %v5022 = vld [vmem:[%s4773 + $0x380] sm:$0xf]
        %v5023 = vld [vmem:[%s4773 + $0x384] sm:$0xf]
        %v5024 = vld [vmem:[%s4773 + $0x388] sm:$0xf]
        %v5025 = vld [vmem:[%s4773 + $0x38c] sm:$0xf]
        %v5026 = vld [vmem:[%s4773 + $0x390] sm:$0xf]
        %v5027 = vld [vmem:[%s4773 + $0x394] sm:$0xf]
        %v5028 = vld [vmem:[%s4773 + $0x398] sm:$0xf]
        %v5029 = vld [vmem:[%s4773 + $0x39c] sm:$0xf]
        %v5030 = vld [vmem:[%s4773 + $0x3a0] sm:$0xf]
        %v5031 = vld [vmem:[%s4773 + $0x3a4] sm:$0xf]
        %v5032 = vld [vmem:[%s4773 + $0x3a8] sm:$0xf]
        %v5033 = vld [vmem:[%s4773 + $0x3ac] sm:$0xf]
        %v5034 = vld [vmem:[%s4773 + $0x3b0] sm:$0xf]
        %v5035 = vld [vmem:[%s4773 + $0x3b4] sm:$0xf]
        %v5036 = vld [vmem:[%s4773 + $0x3b8] sm:$0xf]
        %v5037 = vld [vmem:[%s4773 + $0x3bc] sm:$0xf]
        %v5038 = vld [vmem:[%s4773 + $0x3c0] sm:$0xf]
        %v5039 = vld [vmem:[%s4773 + $0x3c4] sm:$0xf]
        %v5040 = vld [vmem:[%s4773 + $0x3c8] sm:$0xf]
        %v5041 = vld [vmem:[%s4773 + $0x3cc] sm:$0xf]
        %v5042 = vld [vmem:[%s4773 + $0x3d0] sm:$0xf]
        %v5043 = vld [vmem:[%s4773 + $0x3d4] sm:$0xf]
        %v5044 = vld [vmem:[%s4773 + $0x3d8] sm:$0xf]
        %v5045 = vld [vmem:[%s4773 + $0x3dc] sm:$0xf]
        %v5046 = vld [vmem:[%s4773 + $0x3e0] sm:$0xf]
        %v5047 = vld [vmem:[%s4773 + $0x3e4] sm:$0xf]
        %v5048 = vld [vmem:[%s4773 + $0x3e8] sm:$0xf]
        %v5049 = vld [vmem:[%s4773 + $0x3ec] sm:$0xf]
        %v5050 = vld [vmem:[%s4773 + $0x3f0] sm:$0xf]
        %v5051 = vld [vmem:[%s4773 + $0x3f4] sm:$0xf]
        %v5052 = vld [vmem:[%s4773 + $0x3f8] sm:$0xf]
        %v5053 = vld [vmem:[%s4773 + $0x3fc] sm:$0xf]
        %v5054 = vld [vmem:[%s4773 + $0x400] sm:$0xf]
        %v5055 = vld [vmem:[%s4773 + $0x404] sm:$0xf]
        %v5056 = vld [vmem:[%s4773 + $0x408] sm:$0xf]
        %v5057 = vld [vmem:[%s4773 + $0x40c] sm:$0xf]
        %v5058 = vld [vmem:[%s4773 + $0x410] sm:$0xf]
        %v5059 = vld [vmem:[%s4773 + $0x414] sm:$0xf]
        %v5060 = vld [vmem:[%s4773 + $0x418] sm:$0xf]
        %v5061 = vld [vmem:[%s4773 + $0x41c] sm:$0xf]
        %v5062 = vld [vmem:[%s4773 + $0x420] sm:$0xf]
        %v5063 = vld [vmem:[%s4773 + $0x424] sm:$0xf]
        %v5064 = vld [vmem:[%s4773 + $0x428] sm:$0xf]
        %v5065 = vld [vmem:[%s4773 + $0x42c] sm:$0xf]
        %v5066 = vld [vmem:[%s4773 + $0x430] sm:$0xf]
        %v5067 = vld [vmem:[%s4773 + $0x434] sm:$0xf]
        %v5068 = vld [vmem:[%s4773 + $0x438] sm:$0xf]
        %v5069 = vld [vmem:[%s4773 + $0x43c] sm:$0xf]
        %v5070 = vld [vmem:[%s4773 + $0x440] sm:$0xf]
        %v5071 = vld [vmem:[%s4773 + $0x444] sm:$0xf]
        %v5072 = vld [vmem:[%s4773 + $0x448] sm:$0xf]
        %v5073 = vld [vmem:[%s4773 + $0x44c] sm:$0xf]
        %v5074 = vld [vmem:[%s4773 + $0x450] sm:$0xf]
        %v5075 = vld [vmem:[%s4773 + $0x454] sm:$0xf]
        %v5076 = vld [vmem:[%s4773 + $0x458] sm:$0xf]
        %v5077 = vld [vmem:[%s4773 + $0x45c] sm:$0xf]
        %v5078 = vld [vmem:[%s4773 + $0x460] sm:$0xf]
        %v5079 = vld [vmem:[%s4773 + $0x464] sm:$0xf]
        %v5080 = vld [vmem:[%s4773 + $0x468] sm:$0xf]
        %v5081 = vld [vmem:[%s4773 + $0x46c] sm:$0xf]
        %v5082 = vld [vmem:[%s4773 + $0x470] sm:$0xf]
        %v5083 = vld [vmem:[%s4773 + $0x474] sm:$0xf]
        %v5084 = vld [vmem:[%s4773 + $0x478] sm:$0xf]
        %v5085 = vld [vmem:[%s4773 + $0x47c] sm:$0xf]
        %v5086 = vld [vmem:[%s4773 + $0x480] sm:$0xf]
        %v5087 = vld [vmem:[%s4773 + $0x484] sm:$0xf]
        %v5088 = vld [vmem:[%s4773 + $0x488] sm:$0xf]
        %v5089 = vld [vmem:[%s4773 + $0x48c] sm:$0xf]
        %v5090 = vld [vmem:[%s4773 + $0x490] sm:$0xf]
        %v5091 = vld [vmem:[%s4773 + $0x494] sm:$0xf]
        %v5092 = vld [vmem:[%s4773 + $0x498] sm:$0xf]
        %v5093 = vld [vmem:[%s4773 + $0x49c] sm:$0xf]
        %v5094 = vld [vmem:[%s4773 + $0x4a0] sm:$0xf]
        %v5095 = vld [vmem:[%s4773 + $0x4a4] sm:$0xf]
        %v5096 = vld [vmem:[%s4773 + $0x4a8] sm:$0xf]
        %v5097 = vld [vmem:[%s4773 + $0x4ac] sm:$0xf]
        %v5098 = vld [vmem:[%s4773 + $0x4b0] sm:$0xf]
        %v5099 = vld [vmem:[%s4773 + $0x4b4] sm:$0xf]
        %v5100 = vld [vmem:[%s4773 + $0x4b8] sm:$0xf]
        %v5101 = vld [vmem:[%s4773 + $0x4bc] sm:$0xf]
        %v5102 = vld [vmem:[%s4773 + $0x4c0] sm:$0xf]
        %v5103 = vld [vmem:[%s4773 + $0x4c4] sm:$0xf]
        %v5104 = vld [vmem:[%s4773 + $0x4c8] sm:$0xf]
        %v5105 = vld [vmem:[%s4773 + $0x4cc] sm:$0xf]
        %v5106 = vld [vmem:[%s4773 + $0x4d0] sm:$0xf]
        %v5107 = vld [vmem:[%s4773 + $0x4d4] sm:$0xf]
        %v5108 = vld [vmem:[%s4773 + $0x4d8] sm:$0xf]
        %v5109 = vld [vmem:[%s4773 + $0x4dc] sm:$0xf]
        %v5110 = vld [vmem:[%s4773 + $0x4e0] sm:$0xf]
        %v5111 = vld [vmem:[%s4773 + $0x4e4] sm:$0xf]
        %v5112 = vld [vmem:[%s4773 + $0x4e8] sm:$0xf]
        %v5113 = vld [vmem:[%s4773 + $0x4ec] sm:$0xf]
        %v5114 = vld [vmem:[%s4773 + $0x4f0] sm:$0xf]
        %v5115 = vld [vmem:[%s4773 + $0x4f4] sm:$0xf]
        %v5116 = vld [vmem:[%s4773 + $0x4f8] sm:$0xf]
        %v5117 = vld [vmem:[%s4773 + $0x4fc] sm:$0xf]
        %v5118 = vld [vmem:[%s4773 + $0x500] sm:$0xf]
        %v5119 = vld [vmem:[%s4773 + $0x504] sm:$0xf]
        %v5120 = vld [vmem:[%s4773 + $0x508] sm:$0xf]
        %v5121 = vld [vmem:[%s4773 + $0x50c] sm:$0xf]
        %v5122 = vld [vmem:[%s4773 + $0x510] sm:$0xf]
        %v5123 = vld [vmem:[%s4773 + $0x514] sm:$0xf]
        %v5124 = vld [vmem:[%s4773 + $0x518] sm:$0xf]
        %v5125 = vld [vmem:[%s4773 + $0x51c] sm:$0xf]
        %v5126 = vld [vmem:[%s4773 + $0x520] sm:$0xf]
        %v5127 = vld [vmem:[%s4773 + $0x524] sm:$0xf]
        %v5128 = vld [vmem:[%s4773 + $0x528] sm:$0xf]
        %v5129 = vld [vmem:[%s4773 + $0x52c] sm:$0xf]
        %v5130 = vld [vmem:[%s4773 + $0x530] sm:$0xf]
        %v5131 = vld [vmem:[%s4773 + $0x534] sm:$0xf]
        %v5132 = vld [vmem:[%s4773 + $0x538] sm:$0xf]
        %v5133 = vld [vmem:[%s4773 + $0x53c] sm:$0xf]
        %v5134 = vld [vmem:[%s4773 + $0x540] sm:$0xf]
        %v5135 = vld [vmem:[%s4773 + $0x544] sm:$0xf]
        %v5136 = vld [vmem:[%s4773 + $0x548] sm:$0xf]
        %v5137 = vld [vmem:[%s4773 + $0x54c] sm:$0xf]
        %v5138 = vld [vmem:[%s4773 + $0x550] sm:$0xf]
        %v5139 = vld [vmem:[%s4773 + $0x554] sm:$0xf]
        %v5140 = vld [vmem:[%s4773 + $0x558] sm:$0xf]
        %v5141 = vld [vmem:[%s4773 + $0x55c] sm:$0xf]
        %v5142 = vld [vmem:[%s4773 + $0x560] sm:$0xf]
        %v5143 = vld [vmem:[%s4773 + $0x564] sm:$0xf]
        %v5144 = vld [vmem:[%s4773 + $0x568] sm:$0xf]
        %v5145 = vld [vmem:[%s4773 + $0x56c] sm:$0xf]
        %v5146 = vld [vmem:[%s4773 + $0x570] sm:$0xf]
        %v5147 = vld [vmem:[%s4773 + $0x574] sm:$0xf]
        %v5148 = vld [vmem:[%s4773 + $0x578] sm:$0xf]
        %v5149 = vld [vmem:[%s4773 + $0x57c] sm:$0xf]
        %v5150 = vld [vmem:[%s4773 + $0x580] sm:$0xf]
        %v5151 = vld [vmem:[%s4773 + $0x584] sm:$0xf]
        %v5152 = vld [vmem:[%s4773 + $0x588] sm:$0xf]
        %v5153 = vld [vmem:[%s4773 + $0x58c] sm:$0xf]
        %v5154 = vld [vmem:[%s4773 + $0x590] sm:$0xf]
        %v5155 = vld [vmem:[%s4773 + $0x594] sm:$0xf]
        %v5156 = vld [vmem:[%s4773 + $0x598] sm:$0xf]
        %v5157 = vld [vmem:[%s4773 + $0x59c] sm:$0xf]
        %v5158 = vld [vmem:[%s4773 + $0x5a0] sm:$0xf]
        %v5159 = vld [vmem:[%s4773 + $0x5a4] sm:$0xf]
        %v5160 = vld [vmem:[%s4773 + $0x5a8] sm:$0xf]
        %v5161 = vld [vmem:[%s4773 + $0x5ac] sm:$0xf]
        %v5162 = vld [vmem:[%s4773 + $0x5b0] sm:$0xf]
        %v5163 = vld [vmem:[%s4773 + $0x5b4] sm:$0xf]
        %v5164 = vld [vmem:[%s4773 + $0x5b8] sm:$0xf]
        %v5165 = vld [vmem:[%s4773 + $0x5bc] sm:$0xf]
        %v5166 = vld [vmem:[%s4773 + $0x5c0] sm:$0xf]
        %v5167 = vld [vmem:[%s4773 + $0x5c4] sm:$0xf]
        %v5168 = vld [vmem:[%s4773 + $0x5c8] sm:$0xf]
        %v5169 = vld [vmem:[%s4773 + $0x5cc] sm:$0xf]
        %v5170 = vld [vmem:[%s4773 + $0x5d0] sm:$0xf]
        %v5171 = vld [vmem:[%s4773 + $0x5d4] sm:$0xf]
        %v5172 = vld [vmem:[%s4773 + $0x5d8] sm:$0xf]
        %v5173 = vld [vmem:[%s4773 + $0x5dc] sm:$0xf]
        %v5174 = vld [vmem:[%s4773 + $0x5e0] sm:$0xf]
        %v5175 = vld [vmem:[%s4773 + $0x5e4] sm:$0xf]
        %v5176 = vld [vmem:[%s4773 + $0x5e8] sm:$0xf]
        %v5177 = vld [vmem:[%s4773 + $0x5ec] sm:$0xf]
        %v5178 = vld [vmem:[%s4773 + $0x5f0] sm:$0xf]
        %v5179 = vld [vmem:[%s4773 + $0x5f4] sm:$0xf]
        %v5180 = vld [vmem:[%s4773 + $0x5f8] sm:$0xf]
        %v5181 = vld [vmem:[%s4773 + $0x5fc] sm:$0xf]
        %v5182 = vld [vmem:[%s4773 + $0x600] sm:$0xf]
        %v5183 = vld [vmem:[%s4773 + $0x604] sm:$0xf]
        %v5184 = vld [vmem:[%s4773 + $0x608] sm:$0xf]
        %v5185 = vld [vmem:[%s4773 + $0x60c] sm:$0xf]
        %v5186 = vld [vmem:[%s4773 + $0x610] sm:$0xf]
        %v5187 = vld [vmem:[%s4773 + $0x614] sm:$0xf]
        %v5188 = vld [vmem:[%s4773 + $0x618] sm:$0xf]
        %v5189 = vld [vmem:[%s4773 + $0x61c] sm:$0xf]
        %v5190 = vld [vmem:[%s4773 + $0x620] sm:$0xf]
        %v5191 = vld [vmem:[%s4773 + $0x624] sm:$0xf]
        %v5192 = vld [vmem:[%s4773 + $0x628] sm:$0xf]
        %v5193 = vld [vmem:[%s4773 + $0x62c] sm:$0xf]
        %v5194 = vld [vmem:[%s4773 + $0x630] sm:$0xf]
        %v5195 = vld [vmem:[%s4773 + $0x634] sm:$0xf]
        %v5196 = vld [vmem:[%s4773 + $0x638] sm:$0xf]
        %v5197 = vld [vmem:[%s4773 + $0x63c] sm:$0xf]
        %v5198 = vld [vmem:[%s4773 + $0x640] sm:$0xf]
        %v5199 = vld [vmem:[%s4773 + $0x644] sm:$0xf]
        %v5200 = vld [vmem:[%s4773 + $0x648] sm:$0xf]
        %v5201 = vld [vmem:[%s4773 + $0x64c] sm:$0xf]
        %v5202 = vld [vmem:[%s4773 + $0x650] sm:$0xf]
        %v5203 = vld [vmem:[%s4773 + $0x654] sm:$0xf]
        %v5204 = vld [vmem:[%s4773 + $0x658] sm:$0xf]
        %v5205 = vld [vmem:[%s4773 + $0x65c] sm:$0xf]
        %v5206 = vld [vmem:[%s4773 + $0x660] sm:$0xf]
        %v5207 = vld [vmem:[%s4773 + $0x664] sm:$0xf]
        %v5208 = vld [vmem:[%s4773 + $0x668] sm:$0xf]
        %v5209 = vld [vmem:[%s4773 + $0x66c] sm:$0xf]
        %v5210 = vld [vmem:[%s4773 + $0x670] sm:$0xf]
        %v5211 = vld [vmem:[%s4773 + $0x674] sm:$0xf]
        %v5212 = vld [vmem:[%s4773 + $0x678] sm:$0xf]
        %v5213 = vld [vmem:[%s4773 + $0x67c] sm:$0xf]
        %v5214 = vld [vmem:[%s4773 + $0x680] sm:$0xf]
        %v5215 = vld [vmem:[%s4773 + $0x684] sm:$0xf]
        %v5216 = vld [vmem:[%s4773 + $0x688] sm:$0xf]
        %v5217 = vld [vmem:[%s4773 + $0x68c] sm:$0xf]
        %v5218 = vld [vmem:[%s4773 + $0x690] sm:$0xf]
        %v5219 = vld [vmem:[%s4773 + $0x694] sm:$0xf]
        %v5220 = vld [vmem:[%s4773 + $0x698] sm:$0xf]
        %v5221 = vld [vmem:[%s4773 + $0x69c] sm:$0xf]
        %v5222 = vld [vmem:[%s4773 + $0x6a0] sm:$0xf]
        %v5223 = vld [vmem:[%s4773 + $0x6a4] sm:$0xf]
        %v5224 = vld [vmem:[%s4773 + $0x6a8] sm:$0xf]
        %v5225 = vld [vmem:[%s4773 + $0x6ac] sm:$0xf]
        %v5226 = vld [vmem:[%s4773 + $0x6b0] sm:$0xf]
        %v5227 = vld [vmem:[%s4773 + $0x6b4] sm:$0xf]
        %v5228 = vld [vmem:[%s4773 + $0x6b8] sm:$0xf]
        %v5229 = vld [vmem:[%s4773 + $0x6bc] sm:$0xf]
        %v5230 = vld [vmem:[%s4773 + $0x6c0] sm:$0xf]
        %v5231 = vld [vmem:[%s4773 + $0x6c4] sm:$0xf]
        %v5232 = vld [vmem:[%s4773 + $0x6c8] sm:$0xf]
        %v5233 = vld [vmem:[%s4773 + $0x6cc] sm:$0xf]
        %v5234 = vld [vmem:[%s4773 + $0x6d0] sm:$0xf]
        %v5235 = vld [vmem:[%s4773 + $0x6d4] sm:$0xf]
        %v5236 = vld [vmem:[%s4773 + $0x6d8] sm:$0xf]
        %v5237 = vld [vmem:[%s4773 + $0x6dc] sm:$0xf]
        %v5238 = vld [vmem:[%s4773 + $0x6e0] sm:$0xf]
        %v5239 = vld [vmem:[%s4773 + $0x6e4] sm:$0xf]
        %v5240 = vld [vmem:[%s4773 + $0x6e8] sm:$0xf]
        %v5241 = vld [vmem:[%s4773 + $0x6ec] sm:$0xf]
        %v5242 = vld [vmem:[%s4773 + $0x6f0] sm:$0xf]
        %v5243 = vld [vmem:[%s4773 + $0x6f4] sm:$0xf]
        %v5244 = vld [vmem:[%s4773 + $0x6f8] sm:$0xf]
        %v5245 = vld [vmem:[%s4773 + $0x6fc] sm:$0xf]
        %v5246 = vld [vmem:[%s4773 + $0x700] sm:$0xf]
        %v5247 = vld [vmem:[%s4773 + $0x704] sm:$0xf]
        %v5248 = vld [vmem:[%s4773 + $0x708] sm:$0xf]
        %v5249 = vld [vmem:[%s4773 + $0x70c] sm:$0xf]
        %v5250 = vld [vmem:[%s4773 + $0x710] sm:$0xf]
        %v5251 = vld [vmem:[%s4773 + $0x714] sm:$0xf]
        %v5252 = vld [vmem:[%s4773 + $0x718] sm:$0xf]
        %v5253 = vld [vmem:[%s4773 + $0x71c] sm:$0xf]
        %v5254 = vld [vmem:[%s4773 + $0x720] sm:$0xf]
        %v5255 = vld [vmem:[%s4773 + $0x724] sm:$0xf]
        %v5256 = vld [vmem:[%s4773 + $0x728] sm:$0xf]
        %v5257 = vld [vmem:[%s4773 + $0x72c] sm:$0xf]
        %v5258 = vld [vmem:[%s4773 + $0x730] sm:$0xf]
        %v5259 = vld [vmem:[%s4773 + $0x734] sm:$0xf]
        %v5260 = vld [vmem:[%s4773 + $0x738] sm:$0xf]
        %v5261 = vld [vmem:[%s4773 + $0x73c] sm:$0xf]
        %v5262 = vld [vmem:[%s4773 + $0x740] sm:$0xf]
        %v5263 = vld [vmem:[%s4773 + $0x744] sm:$0xf]
        %v5264 = vld [vmem:[%s4773 + $0x748] sm:$0xf]
        %v5265 = vld [vmem:[%s4773 + $0x74c] sm:$0xf]
        %v5266 = vld [vmem:[%s4773 + $0x750] sm:$0xf]
        %v5267 = vld [vmem:[%s4773 + $0x754] sm:$0xf]
        %v5268 = vld [vmem:[%s4773 + $0x758] sm:$0xf]
        %v5269 = vld [vmem:[%s4773 + $0x75c] sm:$0xf]
        %v5270 = vld [vmem:[%s4773 + $0x760] sm:$0xf]
        %v5271 = vld [vmem:[%s4773 + $0x764] sm:$0xf]
        %v5272 = vld [vmem:[%s4773 + $0x768] sm:$0xf]
        %v5273 = vld [vmem:[%s4773 + $0x76c] sm:$0xf]
        %v5274 = vld [vmem:[%s4773 + $0x770] sm:$0xf]
        %v5275 = vld [vmem:[%s4773 + $0x774] sm:$0xf]
        %v5276 = vld [vmem:[%s4773 + $0x778] sm:$0xf]
        %v5277 = vld [vmem:[%s4773 + $0x77c] sm:$0xf]
        %v5278 = vld [vmem:[%s4773 + $0x780] sm:$0xf]
        %v5279 = vld [vmem:[%s4773 + $0x784] sm:$0xf]
        %v5280 = vld [vmem:[%s4773 + $0x788] sm:$0xf]
        %v5281 = vld [vmem:[%s4773 + $0x78c] sm:$0xf]
        %v5282 = vld [vmem:[%s4773 + $0x790] sm:$0xf]
        %v5283 = vld [vmem:[%s4773 + $0x794] sm:$0xf]
        %v5284 = vld [vmem:[%s4773 + $0x798] sm:$0xf]
        %v5285 = vld [vmem:[%s4773 + $0x79c] sm:$0xf]
        %v5286 = vld [vmem:[%s4773 + $0x7a0] sm:$0xf]
        %v5287 = vld [vmem:[%s4773 + $0x7a4] sm:$0xf]
        %v5288 = vld [vmem:[%s4773 + $0x7a8] sm:$0xf]
        %v5289 = vld [vmem:[%s4773 + $0x7ac] sm:$0xf]
        %v5290 = vld [vmem:[%s4773 + $0x7b0] sm:$0xf]
        %v5291 = vld [vmem:[%s4773 + $0x7b4] sm:$0xf]
        %v5292 = vld [vmem:[%s4773 + $0x7b8] sm:$0xf]
        %v5293 = vld [vmem:[%s4773 + $0x7bc] sm:$0xf]
        %v5294 = vld [vmem:[%s4773 + $0x7c0] sm:$0xf]
        %v5295 = vld [vmem:[%s4773 + $0x7c4] sm:$0xf]
        %v5296 = vld [vmem:[%s4773 + $0x7c8] sm:$0xf]
        %v5297 = vld [vmem:[%s4773 + $0x7cc] sm:$0xf]
        %v5298 = vld [vmem:[%s4773 + $0x7d0] sm:$0xf]
        %v5299 = vld [vmem:[%s4773 + $0x7d4] sm:$0xf]
        %v5300 = vld [vmem:[%s4773 + $0x7d8] sm:$0xf]
        %v5301 = vld [vmem:[%s4773 + $0x7dc] sm:$0xf]
        %v5302 = vld [vmem:[%s4773 + $0x7e0] sm:$0xf]
        %v5303 = vld [vmem:[%s4773 + $0x7e4] sm:$0xf]
        %v5304 = vld [vmem:[%s4773 + $0x7e8] sm:$0xf]
        %v5305 = vld [vmem:[%s4773 + $0x7ec] sm:$0xf]
        %v5306 = vld [vmem:[%s4773 + $0x7f0] sm:$0xf]
        %v5307 = vld [vmem:[%s4773 + $0x7f4] sm:$0xf]
        %v5308 = vld [vmem:[%s4773 + $0x7f8] sm:$0xf]
        %v5309 = vld [vmem:[%s4773 + $0x7fc] sm:$0xf]
        %v5310 = vld [vmem:[%s4773 + $0x800] sm:$0xf]
        %v5311 = vld [vmem:[%s4773 + $0x804] sm:$0xf]
        %v5312 = vld [vmem:[%s4773 + $0x808] sm:$0xf]
        %v5313 = vld [vmem:[%s4773 + $0x80c] sm:$0xf]
        %v5314 = vld [vmem:[%s4773 + $0x810] sm:$0xf]
        %v5315 = vld [vmem:[%s4773 + $0x814] sm:$0xf]
        %v5316 = vld [vmem:[%s4773 + $0x818] sm:$0xf]
        %v5317 = vld [vmem:[%s4773 + $0x81c] sm:$0xf]
        %v5318 = vld [vmem:[%s4773 + $0x820] sm:$0xf]
        %v5319 = vld [vmem:[%s4773 + $0x824] sm:$0xf]
        %v5320 = vld [vmem:[%s4773 + $0x828] sm:$0xf]
        %v5321 = vld [vmem:[%s4773 + $0x82c] sm:$0xf]
        %v5322 = vld [vmem:[%s4773 + $0x830] sm:$0xf]
        %v5323 = vld [vmem:[%s4773 + $0x834] sm:$0xf]
        %v5324 = vld [vmem:[%s4773 + $0x838] sm:$0xf]
        %v5325 = vld [vmem:[%s4773 + $0x83c] sm:$0xf]
        %v5326 = vld [vmem:[%s4773 + $0x840] sm:$0xf]
        %v5327 = vld [vmem:[%s4773 + $0x844] sm:$0xf]
        %v5328 = vld [vmem:[%s4773 + $0x848] sm:$0xf]
        %v5329 = vld [vmem:[%s4773 + $0x84c] sm:$0xf]
        %v5330 = vld [vmem:[%s4773 + $0x850] sm:$0xf]
        %v5331 = vld [vmem:[%s4773 + $0x854] sm:$0xf]
        %v5332 = vld [vmem:[%s4773 + $0x858] sm:$0xf]
        %v5333 = vld [vmem:[%s4773 + $0x85c] sm:$0xf]
        %v5334 = vld [vmem:[%s4773 + $0x860] sm:$0xf]
        %v5335 = vld [vmem:[%s4773 + $0x864] sm:$0xf]
        %v5336 = vld [vmem:[%s4773 + $0x868] sm:$0xf]
        %v5337 = vld [vmem:[%s4773 + $0x86c] sm:$0xf]
        %v5338 = vld [vmem:[%s4773 + $0x870] sm:$0xf]
        %v5339 = vld [vmem:[%s4773 + $0x874] sm:$0xf]
        %v5340 = vld [vmem:[%s4773 + $0x878] sm:$0xf]
        %v5341 = vld [vmem:[%s4773 + $0x87c] sm:$0xf]
        %v5342 = vld [vmem:[%s4773 + $0x880] sm:$0xf]
        %v5343 = vld [vmem:[%s4773 + $0x884] sm:$0xf]
        %v5344 = vld [vmem:[%s4773 + $0x888] sm:$0xf]
        %v5345 = vld [vmem:[%s4773 + $0x88c] sm:$0xf]
        %v5346 = vld [vmem:[%s4773 + $0x890] sm:$0xf]
        %v5347 = vld [vmem:[%s4773 + $0x894] sm:$0xf]
        %v5348 = vld [vmem:[%s4773 + $0x898] sm:$0xf]
        %v5349 = vld [vmem:[%s4773 + $0x89c] sm:$0xf]
        %v5350 = vld [vmem:[%s4773 + $0x8a0] sm:$0xf]
        %v5351 = vld [vmem:[%s4773 + $0x8a4] sm:$0xf]
        %v5352 = vld [vmem:[%s4773 + $0x8a8] sm:$0xf]
        %v5353 = vld [vmem:[%s4773 + $0x8ac] sm:$0xf]
        %v5354 = vld [vmem:[%s4773 + $0x8b0] sm:$0xf]
        %v5355 = vld [vmem:[%s4773 + $0x8b4] sm:$0xf]
        %v5356 = vld [vmem:[%s4773 + $0x8b8] sm:$0xf]
        %v5357 = vld [vmem:[%s4773 + $0x8bc] sm:$0xf]
        %v5358 = vld [vmem:[%s4773 + $0x8c0] sm:$0xf]
        %v5359 = vld [vmem:[%s4773 + $0x8c4] sm:$0xf]
        %v5360 = vld [vmem:[%s4773 + $0x8c8] sm:$0xf]
        %v5361 = vld [vmem:[%s4773 + $0x8cc] sm:$0xf]
        %v5362 = vld [vmem:[%s4773 + $0x8d0] sm:$0xf]
        %v5363 = vld [vmem:[%s4773 + $0x8d4] sm:$0xf]
        %v5364 = vld [vmem:[%s4773 + $0x8d8] sm:$0xf]
        %v5365 = vld [vmem:[%s4773 + $0x8dc] sm:$0xf]
        %v5366 = vld [vmem:[%s4773 + $0x8e0] sm:$0xf]
        %v5367 = vld [vmem:[%s4773 + $0x8e4] sm:$0xf]
        %v5368 = vld [vmem:[%s4773 + $0x8e8] sm:$0xf]
        %v5369 = vld [vmem:[%s4773 + $0x8ec] sm:$0xf]
        %v5370 = vld [vmem:[%s4773 + $0x8f0] sm:$0xf]
        %v5371 = vld [vmem:[%s4773 + $0x8f4] sm:$0xf]
        %v5372 = vld [vmem:[%s4773 + $0x8f8] sm:$0xf]
        %v5373 = vld [vmem:[%s4773 + $0x8fc] sm:$0xf]
        %vm5374 = vcmask 1043456
        %v5377 = vsel %vm5374, %v4798, 4286644096
        %v5380 = vsel %vm5374, %v4862, 4286644096
        %v5382 = vmax.bf16 %v5377, %v5380
        %v5384 = vsel %vm5374, %v4926, 4286644096
        %v5386 = vmax.bf16 %v5382, %v5384
        %v5388 = vsel %vm5374, %v4990, 4286644096
        %v5390 = vmax.bf16 %v5386, %v5388
        %v5392 = vsel %vm5374, %v5054, 4286644096
        %v5394 = vmax.bf16 %v5390, %v5392
        %v5396 = vsel %vm5374, %v5118, 4286644096
        %v5398 = vmax.bf16 %v5394, %v5396
        %v5400 = vsel %vm5374, %v5182, 4286644096
        %v5402 = vmax.bf16 %v5398, %v5400
        %v5404 = vsel %vm5374, %v5246, 4286644096
        %v5406 = vmax.bf16 %v5402, %v5404
        %v5408 = vsel %vm5374, %v5310, 4286644096
        %v5410 = vmax.bf16 %v5406, %v5408
        %v5412 = vsel %vm5374, %v4799, 4286644096
        %v5415 = vsel %vm5374, %v4863, 4286644096
        %v5417 = vmax.bf16 %v5412, %v5415
        %v5419 = vsel %vm5374, %v4927, 4286644096
        %v5421 = vmax.bf16 %v5417, %v5419
        %v5423 = vsel %vm5374, %v4991, 4286644096
        %v5425 = vmax.bf16 %v5421, %v5423
        %v5427 = vsel %vm5374, %v5055, 4286644096
        %v5429 = vmax.bf16 %v5425, %v5427
        %v5431 = vsel %vm5374, %v5119, 4286644096
        %v5433 = vmax.bf16 %v5429, %v5431
        %v5435 = vsel %vm5374, %v5183, 4286644096
        %v5437 = vmax.bf16 %v5433, %v5435
        %v5439 = vsel %vm5374, %v5247, 4286644096
        %v5441 = vmax.bf16 %v5437, %v5439
        %v5443 = vsel %vm5374, %v5311, 4286644096
        %v5445 = vmax.bf16 %v5441, %v5443
        %v5447 = vsel %vm5374, %v4800, 4286644096
        %v5450 = vsel %vm5374, %v4864, 4286644096
        %v5452 = vmax.bf16 %v5447, %v5450
        %v5454 = vsel %vm5374, %v4928, 4286644096
        %v5456 = vmax.bf16 %v5452, %v5454
        %v5458 = vsel %vm5374, %v4992, 4286644096
        %v5460 = vmax.bf16 %v5456, %v5458
        %v5462 = vsel %vm5374, %v5056, 4286644096
        %v5464 = vmax.bf16 %v5460, %v5462
        %v5466 = vsel %vm5374, %v5120, 4286644096
        %v5468 = vmax.bf16 %v5464, %v5466
        %v5470 = vsel %vm5374, %v5184, 4286644096
        %v5472 = vmax.bf16 %v5468, %v5470
        %v5474 = vsel %vm5374, %v5248, 4286644096
        %v5476 = vmax.bf16 %v5472, %v5474
        %v5478 = vsel %vm5374, %v5312, 4286644096
        %v5480 = vmax.bf16 %v5476, %v5478
        %v5482 = vsel %vm5374, %v4801, 4286644096
        %v5485 = vsel %vm5374, %v4865, 4286644096
        %v5487 = vmax.bf16 %v5482, %v5485
        %v5489 = vsel %vm5374, %v4929, 4286644096
        %v5491 = vmax.bf16 %v5487, %v5489
        %v5493 = vsel %vm5374, %v4993, 4286644096
        %v5495 = vmax.bf16 %v5491, %v5493
        %v5497 = vsel %vm5374, %v5057, 4286644096
        %v5499 = vmax.bf16 %v5495, %v5497
        %v5501 = vsel %vm5374, %v5121, 4286644096
        %v5503 = vmax.bf16 %v5499, %v5501
        %v5505 = vsel %vm5374, %v5185, 4286644096
        %v5507 = vmax.bf16 %v5503, %v5505
        %v5509 = vsel %vm5374, %v5249, 4286644096
        %v5511 = vmax.bf16 %v5507, %v5509
        %v5513 = vsel %vm5374, %v5313, 4286644096
        %v5515 = vmax.bf16 %v5511, %v5513
        %v5517 = vsel %vm5374, %v4802, 4286644096
        %v5520 = vsel %vm5374, %v4866, 4286644096
        %v5522 = vmax.bf16 %v5517, %v5520
        %v5524 = vsel %vm5374, %v4930, 4286644096
        %v5526 = vmax.bf16 %v5522, %v5524
        %v5528 = vsel %vm5374, %v4994, 4286644096
        %v5530 = vmax.bf16 %v5526, %v5528
        %v5532 = vsel %vm5374, %v5058, 4286644096
        %v5534 = vmax.bf16 %v5530, %v5532
        %v5536 = vsel %vm5374, %v5122, 4286644096
        %v5538 = vmax.bf16 %v5534, %v5536
        %v5540 = vsel %vm5374, %v5186, 4286644096
        %v5542 = vmax.bf16 %v5538, %v5540
        %v5544 = vsel %vm5374, %v5250, 4286644096
        %v5546 = vmax.bf16 %v5542, %v5544
        %v5548 = vsel %vm5374, %v5314, 4286644096
        %v5550 = vmax.bf16 %v5546, %v5548
        %v5552 = vsel %vm5374, %v4803, 4286644096
        %v5555 = vsel %vm5374, %v4867, 4286644096
        %v5557 = vmax.bf16 %v5552, %v5555
        %v5559 = vsel %vm5374, %v4931, 4286644096
        %v5561 = vmax.bf16 %v5557, %v5559
        %v5563 = vsel %vm5374, %v4995, 4286644096
        %v5565 = vmax.bf16 %v5561, %v5563
        %v5567 = vsel %vm5374, %v5059, 4286644096
        %v5569 = vmax.bf16 %v5565, %v5567
        %v5571 = vsel %vm5374, %v5123, 4286644096
        %v5573 = vmax.bf16 %v5569, %v5571
        %v5575 = vsel %vm5374, %v5187, 4286644096
        %v5577 = vmax.bf16 %v5573, %v5575
        %v5579 = vsel %vm5374, %v5251, 4286644096
        %v5581 = vmax.bf16 %v5577, %v5579
        %v5583 = vsel %vm5374, %v5315, 4286644096
        %v5585 = vmax.bf16 %v5581, %v5583
        %v5587 = vsel %vm5374, %v4804, 4286644096
        %v5590 = vsel %vm5374, %v4868, 4286644096
        %v5592 = vmax.bf16 %v5587, %v5590
        %v5594 = vsel %vm5374, %v4932, 4286644096
        %v5596 = vmax.bf16 %v5592, %v5594
        %v5598 = vsel %vm5374, %v4996, 4286644096
        %v5600 = vmax.bf16 %v5596, %v5598
        %v5602 = vsel %vm5374, %v5060, 4286644096
        %v5604 = vmax.bf16 %v5600, %v5602
        %v5606 = vsel %vm5374, %v5124, 4286644096
        %v5608 = vmax.bf16 %v5604, %v5606
        %v5610 = vsel %vm5374, %v5188, 4286644096
        %v5612 = vmax.bf16 %v5608, %v5610
        %v5614 = vsel %vm5374, %v5252, 4286644096
        %v5616 = vmax.bf16 %v5612, %v5614
        %v5618 = vsel %vm5374, %v5316, 4286644096
        %v5620 = vmax.bf16 %v5616, %v5618
        %v5622 = vsel %vm5374, %v4805, 4286644096
        %v5625 = vsel %vm5374, %v4869, 4286644096
        %v5627 = vmax.bf16 %v5622, %v5625
        %v5629 = vsel %vm5374, %v4933, 4286644096
        %v5631 = vmax.bf16 %v5627, %v5629
        %v5633 = vsel %vm5374, %v4997, 4286644096
        %v5635 = vmax.bf16 %v5631, %v5633
        %v5637 = vsel %vm5374, %v5061, 4286644096
        %v5639 = vmax.bf16 %v5635, %v5637
        %v5641 = vsel %vm5374, %v5125, 4286644096
        %v5643 = vmax.bf16 %v5639, %v5641
        %v5645 = vsel %vm5374, %v5189, 4286644096
        %v5647 = vmax.bf16 %v5643, %v5645
        %v5649 = vsel %vm5374, %v5253, 4286644096
        %v5651 = vmax.bf16 %v5647, %v5649
        %v5653 = vsel %vm5374, %v5317, 4286644096
        %v5655 = vmax.bf16 %v5651, %v5653
        %v5657 = vsel %vm5374, %v4806, 4286644096
        %v5660 = vsel %vm5374, %v4870, 4286644096
        %v5662 = vmax.bf16 %v5657, %v5660
        %v5664 = vsel %vm5374, %v4934, 4286644096
        %v5666 = vmax.bf16 %v5662, %v5664
        %v5668 = vsel %vm5374, %v4998, 4286644096
        %v5670 = vmax.bf16 %v5666, %v5668
        %v5672 = vsel %vm5374, %v5062, 4286644096
        %v5674 = vmax.bf16 %v5670, %v5672
        %v5676 = vsel %vm5374, %v5126, 4286644096
        %v5678 = vmax.bf16 %v5674, %v5676
        %v5680 = vsel %vm5374, %v5190, 4286644096
        %v5682 = vmax.bf16 %v5678, %v5680
        %v5684 = vsel %vm5374, %v5254, 4286644096
        %v5686 = vmax.bf16 %v5682, %v5684
        %v5688 = vsel %vm5374, %v5318, 4286644096
        %v5690 = vmax.bf16 %v5686, %v5688
        %v5692 = vsel %vm5374, %v4807, 4286644096
        %v5695 = vsel %vm5374, %v4871, 4286644096
        %v5697 = vmax.bf16 %v5692, %v5695
        %v5699 = vsel %vm5374, %v4935, 4286644096
        %v5701 = vmax.bf16 %v5697, %v5699
        %v5703 = vsel %vm5374, %v4999, 4286644096
        %v5705 = vmax.bf16 %v5701, %v5703
        %v5707 = vsel %vm5374, %v5063, 4286644096
        %v5709 = vmax.bf16 %v5705, %v5707
        %v5711 = vsel %vm5374, %v5127, 4286644096
        %v5713 = vmax.bf16 %v5709, %v5711
        %v5715 = vsel %vm5374, %v5191, 4286644096
        %v5717 = vmax.bf16 %v5713, %v5715
        %v5719 = vsel %vm5374, %v5255, 4286644096
        %v5721 = vmax.bf16 %v5717, %v5719
        %v5723 = vsel %vm5374, %v5319, 4286644096
        %v5725 = vmax.bf16 %v5721, %v5723
        %v5727 = vsel %vm5374, %v4808, 4286644096
        %v5730 = vsel %vm5374, %v4872, 4286644096
        %v5732 = vmax.bf16 %v5727, %v5730
        %v5734 = vsel %vm5374, %v4936, 4286644096
        %v5736 = vmax.bf16 %v5732, %v5734
        %v5738 = vsel %vm5374, %v5000, 4286644096
        %v5740 = vmax.bf16 %v5736, %v5738
        %v5742 = vsel %vm5374, %v5064, 4286644096
        %v5744 = vmax.bf16 %v5740, %v5742
        %v5746 = vsel %vm5374, %v5128, 4286644096
        %v5748 = vmax.bf16 %v5744, %v5746
        %v5750 = vsel %vm5374, %v5192, 4286644096
        %v5752 = vmax.bf16 %v5748, %v5750
        %v5754 = vsel %vm5374, %v5256, 4286644096
        %v5756 = vmax.bf16 %v5752, %v5754
        %v5758 = vsel %vm5374, %v5320, 4286644096
        %v5760 = vmax.bf16 %v5756, %v5758
        %v5762 = vsel %vm5374, %v4809, 4286644096
        %v5765 = vsel %vm5374, %v4873, 4286644096
        %v5767 = vmax.bf16 %v5762, %v5765
        %v5769 = vsel %vm5374, %v4937, 4286644096
        %v5771 = vmax.bf16 %v5767, %v5769
        %v5773 = vsel %vm5374, %v5001, 4286644096
        %v5775 = vmax.bf16 %v5771, %v5773
        %v5777 = vsel %vm5374, %v5065, 4286644096
        %v5779 = vmax.bf16 %v5775, %v5777
        %v5781 = vsel %vm5374, %v5129, 4286644096
        %v5783 = vmax.bf16 %v5779, %v5781
        %v5785 = vsel %vm5374, %v5193, 4286644096
        %v5787 = vmax.bf16 %v5783, %v5785
        %v5789 = vsel %vm5374, %v5257, 4286644096
        %v5791 = vmax.bf16 %v5787, %v5789
        %v5793 = vsel %vm5374, %v5321, 4286644096
        %v5795 = vmax.bf16 %v5791, %v5793
        %v5797 = vsel %vm5374, %v4810, 4286644096
        %v5800 = vsel %vm5374, %v4874, 4286644096
        %v5802 = vmax.bf16 %v5797, %v5800
        %v5804 = vsel %vm5374, %v4938, 4286644096
        %v5806 = vmax.bf16 %v5802, %v5804
        %v5808 = vsel %vm5374, %v5002, 4286644096
        %v5810 = vmax.bf16 %v5806, %v5808
        %v5812 = vsel %vm5374, %v5066, 4286644096
        %v5814 = vmax.bf16 %v5810, %v5812
        %v5816 = vsel %vm5374, %v5130, 4286644096
        %v5818 = vmax.bf16 %v5814, %v5816
        %v5820 = vsel %vm5374, %v5194, 4286644096
        %v5822 = vmax.bf16 %v5818, %v5820
        %v5824 = vsel %vm5374, %v5258, 4286644096
        %v5826 = vmax.bf16 %v5822, %v5824
        %v5828 = vsel %vm5374, %v5322, 4286644096
        %v5830 = vmax.bf16 %v5826, %v5828
        %v5832 = vsel %vm5374, %v4811, 4286644096
        %v5835 = vsel %vm5374, %v4875, 4286644096
        %v5837 = vmax.bf16 %v5832, %v5835
        %v5839 = vsel %vm5374, %v4939, 4286644096
        %v5841 = vmax.bf16 %v5837, %v5839
        %v5843 = vsel %vm5374, %v5003, 4286644096
        %v5845 = vmax.bf16 %v5841, %v5843
        %v5847 = vsel %vm5374, %v5067, 4286644096
        %v5849 = vmax.bf16 %v5845, %v5847
        %v5851 = vsel %vm5374, %v5131, 4286644096
        %v5853 = vmax.bf16 %v5849, %v5851
        %v5855 = vsel %vm5374, %v5195, 4286644096
        %v5857 = vmax.bf16 %v5853, %v5855
        %v5859 = vsel %vm5374, %v5259, 4286644096
        %v5861 = vmax.bf16 %v5857, %v5859
        %v5863 = vsel %vm5374, %v5323, 4286644096
        %v5865 = vmax.bf16 %v5861, %v5863
        %v5867 = vsel %vm5374, %v4812, 4286644096
        %v5870 = vsel %vm5374, %v4876, 4286644096
        %v5872 = vmax.bf16 %v5867, %v5870
        %v5874 = vsel %vm5374, %v4940, 4286644096
        %v5876 = vmax.bf16 %v5872, %v5874
        %v5878 = vsel %vm5374, %v5004, 4286644096
        %v5880 = vmax.bf16 %v5876, %v5878
        %v5882 = vsel %vm5374, %v5068, 4286644096
        %v5884 = vmax.bf16 %v5880, %v5882
        %v5886 = vsel %vm5374, %v5132, 4286644096
        %v5888 = vmax.bf16 %v5884, %v5886
        %v5890 = vsel %vm5374, %v5196, 4286644096
        %v5892 = vmax.bf16 %v5888, %v5890
        %v5894 = vsel %vm5374, %v5260, 4286644096
        %v5896 = vmax.bf16 %v5892, %v5894
        %v5898 = vsel %vm5374, %v5324, 4286644096
        %v5900 = vmax.bf16 %v5896, %v5898
        %v5902 = vsel %vm5374, %v4813, 4286644096
        %v5905 = vsel %vm5374, %v4877, 4286644096
        %v5907 = vmax.bf16 %v5902, %v5905
        %v5909 = vsel %vm5374, %v4941, 4286644096
        %v5911 = vmax.bf16 %v5907, %v5909
        %v5913 = vsel %vm5374, %v5005, 4286644096
        %v5915 = vmax.bf16 %v5911, %v5913
        %v5917 = vsel %vm5374, %v5069, 4286644096
        %v5919 = vmax.bf16 %v5915, %v5917
        %v5921 = vsel %vm5374, %v5133, 4286644096
        %v5923 = vmax.bf16 %v5919, %v5921
        %v5925 = vsel %vm5374, %v5197, 4286644096
        %v5927 = vmax.bf16 %v5923, %v5925
        %v5929 = vsel %vm5374, %v5261, 4286644096
        %v5931 = vmax.bf16 %v5927, %v5929
        %v5933 = vsel %vm5374, %v5325, 4286644096
        %v5935 = vmax.bf16 %v5931, %v5933
        %v5937 = vsel %vm5374, %v4814, 4286644096
        %v5940 = vsel %vm5374, %v4878, 4286644096
        %v5942 = vmax.bf16 %v5937, %v5940
        %v5944 = vsel %vm5374, %v4942, 4286644096
        %v5946 = vmax.bf16 %v5942, %v5944
        %v5948 = vsel %vm5374, %v5006, 4286644096
        %v5950 = vmax.bf16 %v5946, %v5948
        %v5952 = vsel %vm5374, %v5070, 4286644096
        %v5954 = vmax.bf16 %v5950, %v5952
        %v5956 = vsel %vm5374, %v5134, 4286644096
        %v5958 = vmax.bf16 %v5954, %v5956
        %v5960 = vsel %vm5374, %v5198, 4286644096
        %v5962 = vmax.bf16 %v5958, %v5960
        %v5964 = vsel %vm5374, %v5262, 4286644096
        %v5966 = vmax.bf16 %v5962, %v5964
        %v5968 = vsel %vm5374, %v5326, 4286644096
        %v5970 = vmax.bf16 %v5966, %v5968
        %v5972 = vsel %vm5374, %v4815, 4286644096
        %v5975 = vsel %vm5374, %v4879, 4286644096
        %v5977 = vmax.bf16 %v5972, %v5975
        %v5979 = vsel %vm5374, %v4943, 4286644096
        %v5981 = vmax.bf16 %v5977, %v5979
        %v5983 = vsel %vm5374, %v5007, 4286644096
        %v5985 = vmax.bf16 %v5981, %v5983
        %v5987 = vsel %vm5374, %v5071, 4286644096
        %v5989 = vmax.bf16 %v5985, %v5987
        %v5991 = vsel %vm5374, %v5135, 4286644096
        %v5993 = vmax.bf16 %v5989, %v5991
        %v5995 = vsel %vm5374, %v5199, 4286644096
        %v5997 = vmax.bf16 %v5993, %v5995
        %v5999 = vsel %vm5374, %v5263, 4286644096
        %v6001 = vmax.bf16 %v5997, %v5999
        %v6003 = vsel %vm5374, %v5327, 4286644096
        %v6005 = vmax.bf16 %v6001, %v6003
        %v6007 = vsel %vm5374, %v4816, 4286644096
        %v6010 = vsel %vm5374, %v4880, 4286644096
        %v6012 = vmax.bf16 %v6007, %v6010
        %v6014 = vsel %vm5374, %v4944, 4286644096
        %v6016 = vmax.bf16 %v6012, %v6014
        %v6018 = vsel %vm5374, %v5008, 4286644096
        %v6020 = vmax.bf16 %v6016, %v6018
        %v6022 = vsel %vm5374, %v5072, 4286644096
        %v6024 = vmax.bf16 %v6020, %v6022
        %v6026 = vsel %vm5374, %v5136, 4286644096
        %v6028 = vmax.bf16 %v6024, %v6026
        %v6030 = vsel %vm5374, %v5200, 4286644096
        %v6032 = vmax.bf16 %v6028, %v6030
        %v6034 = vsel %vm5374, %v5264, 4286644096
        %v6036 = vmax.bf16 %v6032, %v6034
        %v6038 = vsel %vm5374, %v5328, 4286644096
        %v6040 = vmax.bf16 %v6036, %v6038
        %v6042 = vsel %vm5374, %v4817, 4286644096
        %v6045 = vsel %vm5374, %v4881, 4286644096
        %v6047 = vmax.bf16 %v6042, %v6045
        %v6049 = vsel %vm5374, %v4945, 4286644096
        %v6051 = vmax.bf16 %v6047, %v6049
        %v6053 = vsel %vm5374, %v5009, 4286644096
        %v6055 = vmax.bf16 %v6051, %v6053
        %v6057 = vsel %vm5374, %v5073, 4286644096
        %v6059 = vmax.bf16 %v6055, %v6057
        %v6061 = vsel %vm5374, %v5137, 4286644096
        %v6063 = vmax.bf16 %v6059, %v6061
        %v6065 = vsel %vm5374, %v5201, 4286644096
        %v6067 = vmax.bf16 %v6063, %v6065
        %v6069 = vsel %vm5374, %v5265, 4286644096
        %v6071 = vmax.bf16 %v6067, %v6069
        %v6073 = vsel %vm5374, %v5329, 4286644096
        %v6075 = vmax.bf16 %v6071, %v6073
        %v6077 = vsel %vm5374, %v4818, 4286644096
        %v6080 = vsel %vm5374, %v4882, 4286644096
        %v6082 = vmax.bf16 %v6077, %v6080
        %v6084 = vsel %vm5374, %v4946, 4286644096
        %v6086 = vmax.bf16 %v6082, %v6084
        %v6088 = vsel %vm5374, %v5010, 4286644096
        %v6090 = vmax.bf16 %v6086, %v6088
        %v6092 = vsel %vm5374, %v5074, 4286644096
        %v6094 = vmax.bf16 %v6090, %v6092
        %v6096 = vsel %vm5374, %v5138, 4286644096
        %v6098 = vmax.bf16 %v6094, %v6096
        %v6100 = vsel %vm5374, %v5202, 4286644096
        %v6102 = vmax.bf16 %v6098, %v6100
        %v6104 = vsel %vm5374, %v5266, 4286644096
        %v6106 = vmax.bf16 %v6102, %v6104
        %v6108 = vsel %vm5374, %v5330, 4286644096
        %v6110 = vmax.bf16 %v6106, %v6108
        %v6112 = vsel %vm5374, %v4819, 4286644096
        %v6115 = vsel %vm5374, %v4883, 4286644096
        %v6117 = vmax.bf16 %v6112, %v6115
        %v6119 = vsel %vm5374, %v4947, 4286644096
        %v6121 = vmax.bf16 %v6117, %v6119
        %v6123 = vsel %vm5374, %v5011, 4286644096
        %v6125 = vmax.bf16 %v6121, %v6123
        %v6127 = vsel %vm5374, %v5075, 4286644096
        %v6129 = vmax.bf16 %v6125, %v6127
        %v6131 = vsel %vm5374, %v5139, 4286644096
        %v6133 = vmax.bf16 %v6129, %v6131
        %v6135 = vsel %vm5374, %v5203, 4286644096
        %v6137 = vmax.bf16 %v6133, %v6135
        %v6139 = vsel %vm5374, %v5267, 4286644096
        %v6141 = vmax.bf16 %v6137, %v6139
        %v6143 = vsel %vm5374, %v5331, 4286644096
        %v6145 = vmax.bf16 %v6141, %v6143
        %v6147 = vsel %vm5374, %v4820, 4286644096
        %v6150 = vsel %vm5374, %v4884, 4286644096
        %v6152 = vmax.bf16 %v6147, %v6150
        %v6154 = vsel %vm5374, %v4948, 4286644096
        %v6156 = vmax.bf16 %v6152, %v6154
        %v6158 = vsel %vm5374, %v5012, 4286644096
        %v6160 = vmax.bf16 %v6156, %v6158
        %v6162 = vsel %vm5374, %v5076, 4286644096
        %v6164 = vmax.bf16 %v6160, %v6162
        %v6166 = vsel %vm5374, %v5140, 4286644096
        %v6168 = vmax.bf16 %v6164, %v6166
        %v6170 = vsel %vm5374, %v5204, 4286644096
        %v6172 = vmax.bf16 %v6168, %v6170
        %v6174 = vsel %vm5374, %v5268, 4286644096
        %v6176 = vmax.bf16 %v6172, %v6174
        %v6178 = vsel %vm5374, %v5332, 4286644096
        %v6180 = vmax.bf16 %v6176, %v6178
        %v6182 = vsel %vm5374, %v4821, 4286644096
        %v6185 = vsel %vm5374, %v4885, 4286644096
        %v6187 = vmax.bf16 %v6182, %v6185
        %v6189 = vsel %vm5374, %v4949, 4286644096
        %v6191 = vmax.bf16 %v6187, %v6189
        %v6193 = vsel %vm5374, %v5013, 4286644096
        %v6195 = vmax.bf16 %v6191, %v6193
        %v6197 = vsel %vm5374, %v5077, 4286644096
        %v6199 = vmax.bf16 %v6195, %v6197
        %v6201 = vsel %vm5374, %v5141, 4286644096
        %v6203 = vmax.bf16 %v6199, %v6201
        %v6205 = vsel %vm5374, %v5205, 4286644096
        %v6207 = vmax.bf16 %v6203, %v6205
        %v6209 = vsel %vm5374, %v5269, 4286644096
        %v6211 = vmax.bf16 %v6207, %v6209
        %v6213 = vsel %vm5374, %v5333, 4286644096
        %v6215 = vmax.bf16 %v6211, %v6213
        %v6217 = vsel %vm5374, %v4822, 4286644096
        %v6220 = vsel %vm5374, %v4886, 4286644096
        %v6222 = vmax.bf16 %v6217, %v6220
        %v6224 = vsel %vm5374, %v4950, 4286644096
        %v6226 = vmax.bf16 %v6222, %v6224
        %v6228 = vsel %vm5374, %v5014, 4286644096
        %v6230 = vmax.bf16 %v6226, %v6228
        %v6232 = vsel %vm5374, %v5078, 4286644096
        %v6234 = vmax.bf16 %v6230, %v6232
        %v6236 = vsel %vm5374, %v5142, 4286644096
        %v6238 = vmax.bf16 %v6234, %v6236
        %v6240 = vsel %vm5374, %v5206, 4286644096
        %v6242 = vmax.bf16 %v6238, %v6240
        %v6244 = vsel %vm5374, %v5270, 4286644096
        %v6246 = vmax.bf16 %v6242, %v6244
        %v6248 = vsel %vm5374, %v5334, 4286644096
        %v6250 = vmax.bf16 %v6246, %v6248
        %v6252 = vsel %vm5374, %v4823, 4286644096
        %v6255 = vsel %vm5374, %v4887, 4286644096
        %v6257 = vmax.bf16 %v6252, %v6255
        %v6259 = vsel %vm5374, %v4951, 4286644096
        %v6261 = vmax.bf16 %v6257, %v6259
        %v6263 = vsel %vm5374, %v5015, 4286644096
        %v6265 = vmax.bf16 %v6261, %v6263
        %v6267 = vsel %vm5374, %v5079, 4286644096
        %v6269 = vmax.bf16 %v6265, %v6267
        %v6271 = vsel %vm5374, %v5143, 4286644096
        %v6273 = vmax.bf16 %v6269, %v6271
        %v6275 = vsel %vm5374, %v5207, 4286644096
        %v6277 = vmax.bf16 %v6273, %v6275
        %v6279 = vsel %vm5374, %v5271, 4286644096
        %v6281 = vmax.bf16 %v6277, %v6279
        %v6283 = vsel %vm5374, %v5335, 4286644096
        %v6285 = vmax.bf16 %v6281, %v6283
        %v6287 = vsel %vm5374, %v4824, 4286644096
        %v6290 = vsel %vm5374, %v4888, 4286644096
        %v6292 = vmax.bf16 %v6287, %v6290
        %v6294 = vsel %vm5374, %v4952, 4286644096
        %v6296 = vmax.bf16 %v6292, %v6294
        %v6298 = vsel %vm5374, %v5016, 4286644096
        %v6300 = vmax.bf16 %v6296, %v6298
        %v6302 = vsel %vm5374, %v5080, 4286644096
        %v6304 = vmax.bf16 %v6300, %v6302
        %v6306 = vsel %vm5374, %v5144, 4286644096
        %v6308 = vmax.bf16 %v6304, %v6306
        %v6310 = vsel %vm5374, %v5208, 4286644096
        %v6312 = vmax.bf16 %v6308, %v6310
        %v6314 = vsel %vm5374, %v5272, 4286644096
        %v6316 = vmax.bf16 %v6312, %v6314
        %v6318 = vsel %vm5374, %v5336, 4286644096
        %v6320 = vmax.bf16 %v6316, %v6318
        %v6322 = vsel %vm5374, %v4825, 4286644096
        %v6325 = vsel %vm5374, %v4889, 4286644096
        %v6327 = vmax.bf16 %v6322, %v6325
        %v6329 = vsel %vm5374, %v4953, 4286644096
        %v6331 = vmax.bf16 %v6327, %v6329
        %v6333 = vsel %vm5374, %v5017, 4286644096
        %v6335 = vmax.bf16 %v6331, %v6333
        %v6337 = vsel %vm5374, %v5081, 4286644096
        %v6339 = vmax.bf16 %v6335, %v6337
        %v6341 = vsel %vm5374, %v5145, 4286644096
        %v6343 = vmax.bf16 %v6339, %v6341
        %v6345 = vsel %vm5374, %v5209, 4286644096
        %v6347 = vmax.bf16 %v6343, %v6345
        %v6349 = vsel %vm5374, %v5273, 4286644096
        %v6351 = vmax.bf16 %v6347, %v6349
        %v6353 = vsel %vm5374, %v5337, 4286644096
        %v6355 = vmax.bf16 %v6351, %v6353
        %v6357 = vsel %vm5374, %v4826, 4286644096
        %v6360 = vsel %vm5374, %v4890, 4286644096
        %v6362 = vmax.bf16 %v6357, %v6360
        %v6364 = vsel %vm5374, %v4954, 4286644096
        %v6366 = vmax.bf16 %v6362, %v6364
        %v6368 = vsel %vm5374, %v5018, 4286644096
        %v6370 = vmax.bf16 %v6366, %v6368
        %v6372 = vsel %vm5374, %v5082, 4286644096
        %v6374 = vmax.bf16 %v6370, %v6372
        %v6376 = vsel %vm5374, %v5146, 4286644096
        %v6378 = vmax.bf16 %v6374, %v6376
        %v6380 = vsel %vm5374, %v5210, 4286644096
        %v6382 = vmax.bf16 %v6378, %v6380
        %v6384 = vsel %vm5374, %v5274, 4286644096
        %v6386 = vmax.bf16 %v6382, %v6384
        %v6388 = vsel %vm5374, %v5338, 4286644096
        %v6390 = vmax.bf16 %v6386, %v6388
        %v6392 = vsel %vm5374, %v4827, 4286644096
        %v6395 = vsel %vm5374, %v4891, 4286644096
        %v6397 = vmax.bf16 %v6392, %v6395
        %v6399 = vsel %vm5374, %v4955, 4286644096
        %v6401 = vmax.bf16 %v6397, %v6399
        %v6403 = vsel %vm5374, %v5019, 4286644096
        %v6405 = vmax.bf16 %v6401, %v6403
        %v6407 = vsel %vm5374, %v5083, 4286644096
        %v6409 = vmax.bf16 %v6405, %v6407
        %v6411 = vsel %vm5374, %v5147, 4286644096
        %v6413 = vmax.bf16 %v6409, %v6411
        %v6415 = vsel %vm5374, %v5211, 4286644096
        %v6417 = vmax.bf16 %v6413, %v6415
        %v6419 = vsel %vm5374, %v5275, 4286644096
        %v6421 = vmax.bf16 %v6417, %v6419
        %v6423 = vsel %vm5374, %v5339, 4286644096
        %v6425 = vmax.bf16 %v6421, %v6423
        %v6427 = vsel %vm5374, %v4828, 4286644096
        %v6430 = vsel %vm5374, %v4892, 4286644096
        %v6432 = vmax.bf16 %v6427, %v6430
        %v6434 = vsel %vm5374, %v4956, 4286644096
        %v6436 = vmax.bf16 %v6432, %v6434
        %v6438 = vsel %vm5374, %v5020, 4286644096
        %v6440 = vmax.bf16 %v6436, %v6438
        %v6442 = vsel %vm5374, %v5084, 4286644096
        %v6444 = vmax.bf16 %v6440, %v6442
        %v6446 = vsel %vm5374, %v5148, 4286644096
        %v6448 = vmax.bf16 %v6444, %v6446
        %v6450 = vsel %vm5374, %v5212, 4286644096
        %v6452 = vmax.bf16 %v6448, %v6450
        %v6454 = vsel %vm5374, %v5276, 4286644096
        %v6456 = vmax.bf16 %v6452, %v6454
        %v6458 = vsel %vm5374, %v5340, 4286644096
        %v6460 = vmax.bf16 %v6456, %v6458
        %v6462 = vsel %vm5374, %v4829, 4286644096
        %v6465 = vsel %vm5374, %v4893, 4286644096
        %v6467 = vmax.bf16 %v6462, %v6465
        %v6469 = vsel %vm5374, %v4957, 4286644096
        %v6471 = vmax.bf16 %v6467, %v6469
        %v6473 = vsel %vm5374, %v5021, 4286644096
        %v6475 = vmax.bf16 %v6471, %v6473
        %v6477 = vsel %vm5374, %v5085, 4286644096
        %v6479 = vmax.bf16 %v6475, %v6477
        %v6481 = vsel %vm5374, %v5149, 4286644096
        %v6483 = vmax.bf16 %v6479, %v6481
        %v6485 = vsel %vm5374, %v5213, 4286644096
        %v6487 = vmax.bf16 %v6483, %v6485
        %v6489 = vsel %vm5374, %v5277, 4286644096
        %v6491 = vmax.bf16 %v6487, %v6489
        %v6493 = vsel %vm5374, %v5341, 4286644096
        %v6495 = vmax.bf16 %v6491, %v6493
        %v6497 = vsel %vm5374, %v4830, 4286644096
        %v6500 = vsel %vm5374, %v4894, 4286644096
        %v6502 = vmax.bf16 %v6497, %v6500
        %v6504 = vsel %vm5374, %v4958, 4286644096
        %v6506 = vmax.bf16 %v6502, %v6504
        %v6508 = vsel %vm5374, %v5022, 4286644096
        %v6510 = vmax.bf16 %v6506, %v6508
        %v6512 = vsel %vm5374, %v5086, 4286644096
        %v6514 = vmax.bf16 %v6510, %v6512
        %v6516 = vsel %vm5374, %v5150, 4286644096
        %v6518 = vmax.bf16 %v6514, %v6516
        %v6520 = vsel %vm5374, %v5214, 4286644096
        %v6522 = vmax.bf16 %v6518, %v6520
        %v6524 = vsel %vm5374, %v5278, 4286644096
        %v6526 = vmax.bf16 %v6522, %v6524
        %v6528 = vsel %vm5374, %v5342, 4286644096
        %v6530 = vmax.bf16 %v6526, %v6528
        %v6532 = vsel %vm5374, %v4831, 4286644096
        %v6535 = vsel %vm5374, %v4895, 4286644096
        %v6537 = vmax.bf16 %v6532, %v6535
        %v6539 = vsel %vm5374, %v4959, 4286644096
        %v6541 = vmax.bf16 %v6537, %v6539
        %v6543 = vsel %vm5374, %v5023, 4286644096
        %v6545 = vmax.bf16 %v6541, %v6543
        %v6547 = vsel %vm5374, %v5087, 4286644096
        %v6549 = vmax.bf16 %v6545, %v6547
        %v6551 = vsel %vm5374, %v5151, 4286644096
        %v6553 = vmax.bf16 %v6549, %v6551
        %v6555 = vsel %vm5374, %v5215, 4286644096
        %v6557 = vmax.bf16 %v6553, %v6555
        %v6559 = vsel %vm5374, %v5279, 4286644096
        %v6561 = vmax.bf16 %v6557, %v6559
        %v6563 = vsel %vm5374, %v5343, 4286644096
        %v6565 = vmax.bf16 %v6561, %v6563
        %v6567 = vsel %vm5374, %v4832, 4286644096
        %v6570 = vsel %vm5374, %v4896, 4286644096
        %v6572 = vmax.bf16 %v6567, %v6570
        %v6574 = vsel %vm5374, %v4960, 4286644096
        %v6576 = vmax.bf16 %v6572, %v6574
        %v6578 = vsel %vm5374, %v5024, 4286644096
        %v6580 = vmax.bf16 %v6576, %v6578
        %v6582 = vsel %vm5374, %v5088, 4286644096
        %v6584 = vmax.bf16 %v6580, %v6582
        %v6586 = vsel %vm5374, %v5152, 4286644096
        %v6588 = vmax.bf16 %v6584, %v6586
        %v6590 = vsel %vm5374, %v5216, 4286644096
        %v6592 = vmax.bf16 %v6588, %v6590
        %v6594 = vsel %vm5374, %v5280, 4286644096
        %v6596 = vmax.bf16 %v6592, %v6594
        %v6598 = vsel %vm5374, %v5344, 4286644096
        %v6600 = vmax.bf16 %v6596, %v6598
        %v6602 = vsel %vm5374, %v4833, 4286644096
        %v6605 = vsel %vm5374, %v4897, 4286644096
        %v6607 = vmax.bf16 %v6602, %v6605
        %v6609 = vsel %vm5374, %v4961, 4286644096
        %v6611 = vmax.bf16 %v6607, %v6609
        %v6613 = vsel %vm5374, %v5025, 4286644096
        %v6615 = vmax.bf16 %v6611, %v6613
        %v6617 = vsel %vm5374, %v5089, 4286644096
        %v6619 = vmax.bf16 %v6615, %v6617
        %v6621 = vsel %vm5374, %v5153, 4286644096
        %v6623 = vmax.bf16 %v6619, %v6621
        %v6625 = vsel %vm5374, %v5217, 4286644096
        %v6627 = vmax.bf16 %v6623, %v6625
        %v6629 = vsel %vm5374, %v5281, 4286644096
        %v6631 = vmax.bf16 %v6627, %v6629
        %v6633 = vsel %vm5374, %v5345, 4286644096
        %v6635 = vmax.bf16 %v6631, %v6633
        %v6637 = vsel %vm5374, %v4834, 4286644096
        %v6640 = vsel %vm5374, %v4898, 4286644096
        %v6642 = vmax.bf16 %v6637, %v6640
        %v6644 = vsel %vm5374, %v4962, 4286644096
        %v6646 = vmax.bf16 %v6642, %v6644
        %v6648 = vsel %vm5374, %v5026, 4286644096
        %v6650 = vmax.bf16 %v6646, %v6648
        %v6652 = vsel %vm5374, %v5090, 4286644096
        %v6654 = vmax.bf16 %v6650, %v6652
        %v6656 = vsel %vm5374, %v5154, 4286644096
        %v6658 = vmax.bf16 %v6654, %v6656
        %v6660 = vsel %vm5374, %v5218, 4286644096
        %v6662 = vmax.bf16 %v6658, %v6660
        %v6664 = vsel %vm5374, %v5282, 4286644096
        %v6666 = vmax.bf16 %v6662, %v6664
        %v6668 = vsel %vm5374, %v5346, 4286644096
        %v6670 = vmax.bf16 %v6666, %v6668
        %v6672 = vsel %vm5374, %v4835, 4286644096
        %v6675 = vsel %vm5374, %v4899, 4286644096
        %v6677 = vmax.bf16 %v6672, %v6675
        %v6679 = vsel %vm5374, %v4963, 4286644096
        %v6681 = vmax.bf16 %v6677, %v6679
        %v6683 = vsel %vm5374, %v5027, 4286644096
        %v6685 = vmax.bf16 %v6681, %v6683
        %v6687 = vsel %vm5374, %v5091, 4286644096
        %v6689 = vmax.bf16 %v6685, %v6687
        %v6691 = vsel %vm5374, %v5155, 4286644096
        %v6693 = vmax.bf16 %v6689, %v6691
        %v6695 = vsel %vm5374, %v5219, 4286644096
        %v6697 = vmax.bf16 %v6693, %v6695
        %v6699 = vsel %vm5374, %v5283, 4286644096
        %v6701 = vmax.bf16 %v6697, %v6699
        %v6703 = vsel %vm5374, %v5347, 4286644096
        %v6705 = vmax.bf16 %v6701, %v6703
        %v6707 = vsel %vm5374, %v4836, 4286644096
        %v6710 = vsel %vm5374, %v4900, 4286644096
        %v6712 = vmax.bf16 %v6707, %v6710
        %v6714 = vsel %vm5374, %v4964, 4286644096
        %v6716 = vmax.bf16 %v6712, %v6714
        %v6718 = vsel %vm5374, %v5028, 4286644096
        %v6720 = vmax.bf16 %v6716, %v6718
        %v6722 = vsel %vm5374, %v5092, 4286644096
        %v6724 = vmax.bf16 %v6720, %v6722
        %v6726 = vsel %vm5374, %v5156, 4286644096
        %v6728 = vmax.bf16 %v6724, %v6726
        %v6730 = vsel %vm5374, %v5220, 4286644096
        %v6732 = vmax.bf16 %v6728, %v6730
        %v6734 = vsel %vm5374, %v5284, 4286644096
        %v6736 = vmax.bf16 %v6732, %v6734
        %v6738 = vsel %vm5374, %v5348, 4286644096
        %v6740 = vmax.bf16 %v6736, %v6738
        %v6742 = vsel %vm5374, %v4837, 4286644096
        %v6745 = vsel %vm5374, %v4901, 4286644096
        %v6747 = vmax.bf16 %v6742, %v6745
        %v6749 = vsel %vm5374, %v4965, 4286644096
        %v6751 = vmax.bf16 %v6747, %v6749
        %v6753 = vsel %vm5374, %v5029, 4286644096
        %v6755 = vmax.bf16 %v6751, %v6753
        %v6757 = vsel %vm5374, %v5093, 4286644096
        %v6759 = vmax.bf16 %v6755, %v6757
        %v6761 = vsel %vm5374, %v5157, 4286644096
        %v6763 = vmax.bf16 %v6759, %v6761
        %v6765 = vsel %vm5374, %v5221, 4286644096
        %v6767 = vmax.bf16 %v6763, %v6765
        %v6769 = vsel %vm5374, %v5285, 4286644096
        %v6771 = vmax.bf16 %v6767, %v6769
        %v6773 = vsel %vm5374, %v5349, 4286644096
        %v6775 = vmax.bf16 %v6771, %v6773
        %v6777 = vsel %vm5374, %v4838, 4286644096
        %v6780 = vsel %vm5374, %v4902, 4286644096
        %v6782 = vmax.bf16 %v6777, %v6780
        %v6784 = vsel %vm5374, %v4966, 4286644096
        %v6786 = vmax.bf16 %v6782, %v6784
        %v6788 = vsel %vm5374, %v5030, 4286644096
        %v6790 = vmax.bf16 %v6786, %v6788
        %v6792 = vsel %vm5374, %v5094, 4286644096
        %v6794 = vmax.bf16 %v6790, %v6792
        %v6796 = vsel %vm5374, %v5158, 4286644096
        %v6798 = vmax.bf16 %v6794, %v6796
        %v6800 = vsel %vm5374, %v5222, 4286644096
        %v6802 = vmax.bf16 %v6798, %v6800
        %v6804 = vsel %vm5374, %v5286, 4286644096
        %v6806 = vmax.bf16 %v6802, %v6804
        %v6808 = vsel %vm5374, %v5350, 4286644096
        %v6810 = vmax.bf16 %v6806, %v6808
        %v6812 = vsel %vm5374, %v4839, 4286644096
        %v6815 = vsel %vm5374, %v4903, 4286644096
        %v6817 = vmax.bf16 %v6812, %v6815
        %v6819 = vsel %vm5374, %v4967, 4286644096
        %v6821 = vmax.bf16 %v6817, %v6819
        %v6823 = vsel %vm5374, %v5031, 4286644096
        %v6825 = vmax.bf16 %v6821, %v6823
        %v6827 = vsel %vm5374, %v5095, 4286644096
        %v6829 = vmax.bf16 %v6825, %v6827
        %v6831 = vsel %vm5374, %v5159, 4286644096
        %v6833 = vmax.bf16 %v6829, %v6831
        %v6835 = vsel %vm5374, %v5223, 4286644096
        %v6837 = vmax.bf16 %v6833, %v6835
        %v6839 = vsel %vm5374, %v5287, 4286644096
        %v6841 = vmax.bf16 %v6837, %v6839
        %v6843 = vsel %vm5374, %v5351, 4286644096
        %v6845 = vmax.bf16 %v6841, %v6843
        %v6847 = vsel %vm5374, %v4840, 4286644096
        %v6850 = vsel %vm5374, %v4904, 4286644096
        %v6852 = vmax.bf16 %v6847, %v6850
        %v6854 = vsel %vm5374, %v4968, 4286644096
        %v6856 = vmax.bf16 %v6852, %v6854
        %v6858 = vsel %vm5374, %v5032, 4286644096
        %v6860 = vmax.bf16 %v6856, %v6858
        %v6862 = vsel %vm5374, %v5096, 4286644096
        %v6864 = vmax.bf16 %v6860, %v6862
        %v6866 = vsel %vm5374, %v5160, 4286644096
        %v6868 = vmax.bf16 %v6864, %v6866
        %v6870 = vsel %vm5374, %v5224, 4286644096
        %v6872 = vmax.bf16 %v6868, %v6870
        %v6874 = vsel %vm5374, %v5288, 4286644096
        %v6876 = vmax.bf16 %v6872, %v6874
        %v6878 = vsel %vm5374, %v5352, 4286644096
        %v6880 = vmax.bf16 %v6876, %v6878
        %v6882 = vsel %vm5374, %v4841, 4286644096
        %v6885 = vsel %vm5374, %v4905, 4286644096
        %v6887 = vmax.bf16 %v6882, %v6885
        %v6889 = vsel %vm5374, %v4969, 4286644096
        %v6891 = vmax.bf16 %v6887, %v6889
        %v6893 = vsel %vm5374, %v5033, 4286644096
        %v6895 = vmax.bf16 %v6891, %v6893
        %v6897 = vsel %vm5374, %v5097, 4286644096
        %v6899 = vmax.bf16 %v6895, %v6897
        %v6901 = vsel %vm5374, %v5161, 4286644096
        %v6903 = vmax.bf16 %v6899, %v6901
        %v6905 = vsel %vm5374, %v5225, 4286644096
        %v6907 = vmax.bf16 %v6903, %v6905
        %v6909 = vsel %vm5374, %v5289, 4286644096
        %v6911 = vmax.bf16 %v6907, %v6909
        %v6913 = vsel %vm5374, %v5353, 4286644096
        %v6915 = vmax.bf16 %v6911, %v6913
        %v6917 = vsel %vm5374, %v4842, 4286644096
        %v6920 = vsel %vm5374, %v4906, 4286644096
        %v6922 = vmax.bf16 %v6917, %v6920
        %v6924 = vsel %vm5374, %v4970, 4286644096
        %v6926 = vmax.bf16 %v6922, %v6924
        %v6928 = vsel %vm5374, %v5034, 4286644096
        %v6930 = vmax.bf16 %v6926, %v6928
        %v6932 = vsel %vm5374, %v5098, 4286644096
        %v6934 = vmax.bf16 %v6930, %v6932
        %v6936 = vsel %vm5374, %v5162, 4286644096
        %v6938 = vmax.bf16 %v6934, %v6936
        %v6940 = vsel %vm5374, %v5226, 4286644096
        %v6942 = vmax.bf16 %v6938, %v6940
        %v6944 = vsel %vm5374, %v5290, 4286644096
        %v6946 = vmax.bf16 %v6942, %v6944
        %v6948 = vsel %vm5374, %v5354, 4286644096
        %v6950 = vmax.bf16 %v6946, %v6948
        %v6952 = vsel %vm5374, %v4843, 4286644096
        %v6955 = vsel %vm5374, %v4907, 4286644096
        %v6957 = vmax.bf16 %v6952, %v6955
        %v6959 = vsel %vm5374, %v4971, 4286644096
        %v6961 = vmax.bf16 %v6957, %v6959
        %v6963 = vsel %vm5374, %v5035, 4286644096
        %v6965 = vmax.bf16 %v6961, %v6963
        %v6967 = vsel %vm5374, %v5099, 4286644096
        %v6969 = vmax.bf16 %v6965, %v6967
        %v6971 = vsel %vm5374, %v5163, 4286644096
        %v6973 = vmax.bf16 %v6969, %v6971
        %v6975 = vsel %vm5374, %v5227, 4286644096
        %v6977 = vmax.bf16 %v6973, %v6975
        %v6979 = vsel %vm5374, %v5291, 4286644096
        %v6981 = vmax.bf16 %v6977, %v6979
        %v6983 = vsel %vm5374, %v5355, 4286644096
        %v6985 = vmax.bf16 %v6981, %v6983
        %v6987 = vsel %vm5374, %v4844, 4286644096
        %v6990 = vsel %vm5374, %v4908, 4286644096
        %v6992 = vmax.bf16 %v6987, %v6990
        %v6994 = vsel %vm5374, %v4972, 4286644096
        %v6996 = vmax.bf16 %v6992, %v6994
        %v6998 = vsel %vm5374, %v5036, 4286644096
        %v7000 = vmax.bf16 %v6996, %v6998
        %v7002 = vsel %vm5374, %v5100, 4286644096
        %v7004 = vmax.bf16 %v7000, %v7002
        %v7006 = vsel %vm5374, %v5164, 4286644096
        %v7008 = vmax.bf16 %v7004, %v7006
        %v7010 = vsel %vm5374, %v5228, 4286644096
        %v7012 = vmax.bf16 %v7008, %v7010
        %v7014 = vsel %vm5374, %v5292, 4286644096
        %v7016 = vmax.bf16 %v7012, %v7014
        %v7018 = vsel %vm5374, %v5356, 4286644096
        %v7020 = vmax.bf16 %v7016, %v7018
        %v7022 = vsel %vm5374, %v4845, 4286644096
        %v7025 = vsel %vm5374, %v4909, 4286644096
        %v7027 = vmax.bf16 %v7022, %v7025
        %v7029 = vsel %vm5374, %v4973, 4286644096
        %v7031 = vmax.bf16 %v7027, %v7029
        %v7033 = vsel %vm5374, %v5037, 4286644096
        %v7035 = vmax.bf16 %v7031, %v7033
        %v7037 = vsel %vm5374, %v5101, 4286644096
        %v7039 = vmax.bf16 %v7035, %v7037
        %v7041 = vsel %vm5374, %v5165, 4286644096
        %v7043 = vmax.bf16 %v7039, %v7041
        %v7045 = vsel %vm5374, %v5229, 4286644096
        %v7047 = vmax.bf16 %v7043, %v7045
        %v7049 = vsel %vm5374, %v5293, 4286644096
        %v7051 = vmax.bf16 %v7047, %v7049
        %v7053 = vsel %vm5374, %v5357, 4286644096
        %v7055 = vmax.bf16 %v7051, %v7053
        %v7057 = vsel %vm5374, %v4846, 4286644096
        %v7060 = vsel %vm5374, %v4910, 4286644096
        %v7062 = vmax.bf16 %v7057, %v7060
        %v7064 = vsel %vm5374, %v4974, 4286644096
        %v7066 = vmax.bf16 %v7062, %v7064
        %v7068 = vsel %vm5374, %v5038, 4286644096
        %v7070 = vmax.bf16 %v7066, %v7068
        %v7072 = vsel %vm5374, %v5102, 4286644096
        %v7074 = vmax.bf16 %v7070, %v7072
        %v7076 = vsel %vm5374, %v5166, 4286644096
        %v7078 = vmax.bf16 %v7074, %v7076
        %v7080 = vsel %vm5374, %v5230, 4286644096
        %v7082 = vmax.bf16 %v7078, %v7080
        %v7084 = vsel %vm5374, %v5294, 4286644096
        %v7086 = vmax.bf16 %v7082, %v7084
        %v7088 = vsel %vm5374, %v5358, 4286644096
        %v7090 = vmax.bf16 %v7086, %v7088
        %v7092 = vsel %vm5374, %v4847, 4286644096
        %v7095 = vsel %vm5374, %v4911, 4286644096
        %v7097 = vmax.bf16 %v7092, %v7095
        %v7099 = vsel %vm5374, %v4975, 4286644096
        %v7101 = vmax.bf16 %v7097, %v7099
        %v7103 = vsel %vm5374, %v5039, 4286644096
        %v7105 = vmax.bf16 %v7101, %v7103
        %v7107 = vsel %vm5374, %v5103, 4286644096
        %v7109 = vmax.bf16 %v7105, %v7107
        %v7111 = vsel %vm5374, %v5167, 4286644096
        %v7113 = vmax.bf16 %v7109, %v7111
        %v7115 = vsel %vm5374, %v5231, 4286644096
        %v7117 = vmax.bf16 %v7113, %v7115
        %v7119 = vsel %vm5374, %v5295, 4286644096
        %v7121 = vmax.bf16 %v7117, %v7119
        %v7123 = vsel %vm5374, %v5359, 4286644096
        %v7125 = vmax.bf16 %v7121, %v7123
        %v7127 = vsel %vm5374, %v4848, 4286644096
        %v7130 = vsel %vm5374, %v4912, 4286644096
        %v7132 = vmax.bf16 %v7127, %v7130
        %v7134 = vsel %vm5374, %v4976, 4286644096
        %v7136 = vmax.bf16 %v7132, %v7134
        %v7138 = vsel %vm5374, %v5040, 4286644096
        %v7140 = vmax.bf16 %v7136, %v7138
        %v7142 = vsel %vm5374, %v5104, 4286644096
        %v7144 = vmax.bf16 %v7140, %v7142
        %v7146 = vsel %vm5374, %v5168, 4286644096
        %v7148 = vmax.bf16 %v7144, %v7146
        %v7150 = vsel %vm5374, %v5232, 4286644096
        %v7152 = vmax.bf16 %v7148, %v7150
        %v7154 = vsel %vm5374, %v5296, 4286644096
        %v7156 = vmax.bf16 %v7152, %v7154
        %v7158 = vsel %vm5374, %v5360, 4286644096
        %v7160 = vmax.bf16 %v7156, %v7158
        %v7162 = vsel %vm5374, %v4849, 4286644096
        %v7165 = vsel %vm5374, %v4913, 4286644096
        %v7167 = vmax.bf16 %v7162, %v7165
        %v7169 = vsel %vm5374, %v4977, 4286644096
        %v7171 = vmax.bf16 %v7167, %v7169
        %v7173 = vsel %vm5374, %v5041, 4286644096
        %v7175 = vmax.bf16 %v7171, %v7173
        %v7177 = vsel %vm5374, %v5105, 4286644096
        %v7179 = vmax.bf16 %v7175, %v7177
        %v7181 = vsel %vm5374, %v5169, 4286644096
        %v7183 = vmax.bf16 %v7179, %v7181
        %v7185 = vsel %vm5374, %v5233, 4286644096
        %v7187 = vmax.bf16 %v7183, %v7185
        %v7189 = vsel %vm5374, %v5297, 4286644096
        %v7191 = vmax.bf16 %v7187, %v7189
        %v7193 = vsel %vm5374, %v5361, 4286644096
        %v7195 = vmax.bf16 %v7191, %v7193
        %v7197 = vsel %vm5374, %v4850, 4286644096
        %v7200 = vsel %vm5374, %v4914, 4286644096
        %v7202 = vmax.bf16 %v7197, %v7200
        %v7204 = vsel %vm5374, %v4978, 4286644096
        %v7206 = vmax.bf16 %v7202, %v7204
        %v7208 = vsel %vm5374, %v5042, 4286644096
        %v7210 = vmax.bf16 %v7206, %v7208
        %v7212 = vsel %vm5374, %v5106, 4286644096
        %v7214 = vmax.bf16 %v7210, %v7212
        %v7216 = vsel %vm5374, %v5170, 4286644096
        %v7218 = vmax.bf16 %v7214, %v7216
        %v7220 = vsel %vm5374, %v5234, 4286644096
        %v7222 = vmax.bf16 %v7218, %v7220
        %v7224 = vsel %vm5374, %v5298, 4286644096
        %v7226 = vmax.bf16 %v7222, %v7224
        %v7228 = vsel %vm5374, %v5362, 4286644096
        %v7230 = vmax.bf16 %v7226, %v7228
        %v7232 = vsel %vm5374, %v4851, 4286644096
        %v7235 = vsel %vm5374, %v4915, 4286644096
        %v7237 = vmax.bf16 %v7232, %v7235
        %v7239 = vsel %vm5374, %v4979, 4286644096
        %v7241 = vmax.bf16 %v7237, %v7239
        %v7243 = vsel %vm5374, %v5043, 4286644096
        %v7245 = vmax.bf16 %v7241, %v7243
        %v7247 = vsel %vm5374, %v5107, 4286644096
        %v7249 = vmax.bf16 %v7245, %v7247
        %v7251 = vsel %vm5374, %v5171, 4286644096
        %v7253 = vmax.bf16 %v7249, %v7251
        %v7255 = vsel %vm5374, %v5235, 4286644096
        %v7257 = vmax.bf16 %v7253, %v7255
        %v7259 = vsel %vm5374, %v5299, 4286644096
        %v7261 = vmax.bf16 %v7257, %v7259
        %v7263 = vsel %vm5374, %v5363, 4286644096
        %v7265 = vmax.bf16 %v7261, %v7263
        %v7267 = vsel %vm5374, %v4852, 4286644096
        %v7270 = vsel %vm5374, %v4916, 4286644096
        %v7272 = vmax.bf16 %v7267, %v7270
        %v7274 = vsel %vm5374, %v4980, 4286644096
        %v7276 = vmax.bf16 %v7272, %v7274
        %v7278 = vsel %vm5374, %v5044, 4286644096
        %v7280 = vmax.bf16 %v7276, %v7278
        %v7282 = vsel %vm5374, %v5108, 4286644096
        %v7284 = vmax.bf16 %v7280, %v7282
        %v7286 = vsel %vm5374, %v5172, 4286644096
        %v7288 = vmax.bf16 %v7284, %v7286
        %v7290 = vsel %vm5374, %v5236, 4286644096
        %v7292 = vmax.bf16 %v7288, %v7290
        %v7294 = vsel %vm5374, %v5300, 4286644096
        %v7296 = vmax.bf16 %v7292, %v7294
        %v7298 = vsel %vm5374, %v5364, 4286644096
        %v7300 = vmax.bf16 %v7296, %v7298
        %v7302 = vsel %vm5374, %v4853, 4286644096
        %v7305 = vsel %vm5374, %v4917, 4286644096
        %v7307 = vmax.bf16 %v7302, %v7305
        %v7309 = vsel %vm5374, %v4981, 4286644096
        %v7311 = vmax.bf16 %v7307, %v7309
        %v7313 = vsel %vm5374, %v5045, 4286644096
        %v7315 = vmax.bf16 %v7311, %v7313
        %v7317 = vsel %vm5374, %v5109, 4286644096
        %v7319 = vmax.bf16 %v7315, %v7317
        %v7321 = vsel %vm5374, %v5173, 4286644096
        %v7323 = vmax.bf16 %v7319, %v7321
        %v7325 = vsel %vm5374, %v5237, 4286644096
        %v7327 = vmax.bf16 %v7323, %v7325
        %v7329 = vsel %vm5374, %v5301, 4286644096
        %v7331 = vmax.bf16 %v7327, %v7329
        %v7333 = vsel %vm5374, %v5365, 4286644096
        %v7335 = vmax.bf16 %v7331, %v7333
        %v7337 = vsel %vm5374, %v4854, 4286644096
        %v7340 = vsel %vm5374, %v4918, 4286644096
        %v7342 = vmax.bf16 %v7337, %v7340
        %v7344 = vsel %vm5374, %v4982, 4286644096
        %v7346 = vmax.bf16 %v7342, %v7344
        %v7348 = vsel %vm5374, %v5046, 4286644096
        %v7350 = vmax.bf16 %v7346, %v7348
        %v7352 = vsel %vm5374, %v5110, 4286644096
        %v7354 = vmax.bf16 %v7350, %v7352
        %v7356 = vsel %vm5374, %v5174, 4286644096
        %v7358 = vmax.bf16 %v7354, %v7356
        %v7360 = vsel %vm5374, %v5238, 4286644096
        %v7362 = vmax.bf16 %v7358, %v7360
        %v7364 = vsel %vm5374, %v5302, 4286644096
        %v7366 = vmax.bf16 %v7362, %v7364
        %v7368 = vsel %vm5374, %v5366, 4286644096
        %v7370 = vmax.bf16 %v7366, %v7368
        %v7372 = vsel %vm5374, %v4855, 4286644096
        %v7375 = vsel %vm5374, %v4919, 4286644096
        %v7377 = vmax.bf16 %v7372, %v7375
        %v7379 = vsel %vm5374, %v4983, 4286644096
        %v7381 = vmax.bf16 %v7377, %v7379
        %v7383 = vsel %vm5374, %v5047, 4286644096
        %v7385 = vmax.bf16 %v7381, %v7383
        %v7387 = vsel %vm5374, %v5111, 4286644096
        %v7389 = vmax.bf16 %v7385, %v7387
        %v7391 = vsel %vm5374, %v5175, 4286644096
        %v7393 = vmax.bf16 %v7389, %v7391
        %v7395 = vsel %vm5374, %v5239, 4286644096
        %v7397 = vmax.bf16 %v7393, %v7395
        %v7399 = vsel %vm5374, %v5303, 4286644096
        %v7401 = vmax.bf16 %v7397, %v7399
        %v7403 = vsel %vm5374, %v5367, 4286644096
        %v7405 = vmax.bf16 %v7401, %v7403
        %v7407 = vsel %vm5374, %v4856, 4286644096
        %v7410 = vsel %vm5374, %v4920, 4286644096
        %v7412 = vmax.bf16 %v7407, %v7410
        %v7414 = vsel %vm5374, %v4984, 4286644096
        %v7416 = vmax.bf16 %v7412, %v7414
        %v7418 = vsel %vm5374, %v5048, 4286644096
        %v7420 = vmax.bf16 %v7416, %v7418
        %v7422 = vsel %vm5374, %v5112, 4286644096
        %v7424 = vmax.bf16 %v7420, %v7422
        %v7426 = vsel %vm5374, %v5176, 4286644096
        %v7428 = vmax.bf16 %v7424, %v7426
        %v7430 = vsel %vm5374, %v5240, 4286644096
        %v7432 = vmax.bf16 %v7428, %v7430
        %v7434 = vsel %vm5374, %v5304, 4286644096
        %v7436 = vmax.bf16 %v7432, %v7434
        %v7438 = vsel %vm5374, %v5368, 4286644096
        %v7440 = vmax.bf16 %v7436, %v7438
        %v7442 = vsel %vm5374, %v4857, 4286644096
        %v7445 = vsel %vm5374, %v4921, 4286644096
        %v7447 = vmax.bf16 %v7442, %v7445
        %v7449 = vsel %vm5374, %v4985, 4286644096
        %v7451 = vmax.bf16 %v7447, %v7449
        %v7453 = vsel %vm5374, %v5049, 4286644096
        %v7455 = vmax.bf16 %v7451, %v7453
        %v7457 = vsel %vm5374, %v5113, 4286644096
        %v7459 = vmax.bf16 %v7455, %v7457
        %v7461 = vsel %vm5374, %v5177, 4286644096
        %v7463 = vmax.bf16 %v7459, %v7461
        %v7465 = vsel %vm5374, %v5241, 4286644096
        %v7467 = vmax.bf16 %v7463, %v7465
        %v7469 = vsel %vm5374, %v5305, 4286644096
        %v7471 = vmax.bf16 %v7467, %v7469
        %v7473 = vsel %vm5374, %v5369, 4286644096
        %v7475 = vmax.bf16 %v7471, %v7473
        %v7477 = vsel %vm5374, %v4858, 4286644096
        %v7480 = vsel %vm5374, %v4922, 4286644096
        %v7482 = vmax.bf16 %v7477, %v7480
        %v7484 = vsel %vm5374, %v4986, 4286644096
        %v7486 = vmax.bf16 %v7482, %v7484
        %v7488 = vsel %vm5374, %v5050, 4286644096
        %v7490 = vmax.bf16 %v7486, %v7488
        %v7492 = vsel %vm5374, %v5114, 4286644096
        %v7494 = vmax.bf16 %v7490, %v7492
        %v7496 = vsel %vm5374, %v5178, 4286644096
        %v7498 = vmax.bf16 %v7494, %v7496
        %v7500 = vsel %vm5374, %v5242, 4286644096
        %v7502 = vmax.bf16 %v7498, %v7500
        %v7504 = vsel %vm5374, %v5306, 4286644096
        %v7506 = vmax.bf16 %v7502, %v7504
        %v7508 = vsel %vm5374, %v5370, 4286644096
        %v7510 = vmax.bf16 %v7506, %v7508
        %v7512 = vsel %vm5374, %v4859, 4286644096
        %v7515 = vsel %vm5374, %v4923, 4286644096
        %v7517 = vmax.bf16 %v7512, %v7515
        %v7519 = vsel %vm5374, %v4987, 4286644096
        %v7521 = vmax.bf16 %v7517, %v7519
        %v7523 = vsel %vm5374, %v5051, 4286644096
        %v7525 = vmax.bf16 %v7521, %v7523
        %v7527 = vsel %vm5374, %v5115, 4286644096
        %v7529 = vmax.bf16 %v7525, %v7527
        %v7531 = vsel %vm5374, %v5179, 4286644096
        %v7533 = vmax.bf16 %v7529, %v7531
        %v7535 = vsel %vm5374, %v5243, 4286644096
        %v7537 = vmax.bf16 %v7533, %v7535
        %v7539 = vsel %vm5374, %v5307, 4286644096
        %v7541 = vmax.bf16 %v7537, %v7539
        %v7543 = vsel %vm5374, %v5371, 4286644096
        %v7545 = vmax.bf16 %v7541, %v7543
        %v7547 = vsel %vm5374, %v4860, 4286644096
        %v7550 = vsel %vm5374, %v4924, 4286644096
        %v7552 = vmax.bf16 %v7547, %v7550
        %v7554 = vsel %vm5374, %v4988, 4286644096
        %v7556 = vmax.bf16 %v7552, %v7554
        %v7558 = vsel %vm5374, %v5052, 4286644096
        %v7560 = vmax.bf16 %v7556, %v7558
        %v7562 = vsel %vm5374, %v5116, 4286644096
        %v7564 = vmax.bf16 %v7560, %v7562
        %v7566 = vsel %vm5374, %v5180, 4286644096
        %v7568 = vmax.bf16 %v7564, %v7566
        %v7570 = vsel %vm5374, %v5244, 4286644096
        %v7572 = vmax.bf16 %v7568, %v7570
        %v7574 = vsel %vm5374, %v5308, 4286644096
        %v7576 = vmax.bf16 %v7572, %v7574
        %v7578 = vsel %vm5374, %v5372, 4286644096
        %v7580 = vmax.bf16 %v7576, %v7578
        %v7582 = vsel %vm5374, %v4861, 4286644096
        %v7585 = vsel %vm5374, %v4925, 4286644096
        %v7587 = vmax.bf16 %v7582, %v7585
        %v7589 = vsel %vm5374, %v4989, 4286644096
        %v7591 = vmax.bf16 %v7587, %v7589
        %v7593 = vsel %vm5374, %v5053, 4286644096
        %v7595 = vmax.bf16 %v7591, %v7593
        %v7597 = vsel %vm5374, %v5117, 4286644096
        %v7599 = vmax.bf16 %v7595, %v7597
        %v7601 = vsel %vm5374, %v5181, 4286644096
        %v7603 = vmax.bf16 %v7599, %v7601
        %v7605 = vsel %vm5374, %v5245, 4286644096
        %v7607 = vmax.bf16 %v7603, %v7605
        %v7609 = vsel %vm5374, %v5309, 4286644096
        %v7611 = vmax.bf16 %v7607, %v7609
        %v7613 = vsel %vm5374, %v5373, 4286644096
        %v7615 = vmax.bf16 %v7611, %v7613
        %7616 = vst [vmem:[%s4795] sm:$0xf] %v5410
        %7617 = vst [vmem:[%s4795 + $0x4] sm:$0xf] %v5445
        %7618 = vst [vmem:[%s4795 + $0x8] sm:$0xf] %v5480
        %7619 = vst [vmem:[%s4795 + $0xc] sm:$0xf] %v5515
        %7620 = vst [vmem:[%s4795 + $0x10] sm:$0xf] %v5550
        %7621 = vst [vmem:[%s4795 + $0x14] sm:$0xf] %v5585
        %7622 = vst [vmem:[%s4795 + $0x18] sm:$0xf] %v5620
        %7623 = vst [vmem:[%s4795 + $0x1c] sm:$0xf] %v5655
        %7624 = vst [vmem:[%s4795 + $0x20] sm:$0xf] %v5690
        %7625 = vst [vmem:[%s4795 + $0x24] sm:$0xf] %v5725
        %7626 = vst [vmem:[%s4795 + $0x28] sm:$0xf] %v5760
        %7627 = vst [vmem:[%s4795 + $0x2c] sm:$0xf] %v5795
        %7628 = vst [vmem:[%s4795 + $0x30] sm:$0xf] %v5830
        %7629 = vst [vmem:[%s4795 + $0x34] sm:$0xf] %v5865
        %7630 = vst [vmem:[%s4795 + $0x38] sm:$0xf] %v5900
        %7631 = vst [vmem:[%s4795 + $0x3c] sm:$0xf] %v5935
        %7632 = vst [vmem:[%s4795 + $0x40] sm:$0xf] %v5970
        %7633 = vst [vmem:[%s4795 + $0x44] sm:$0xf] %v6005
        %7634 = vst [vmem:[%s4795 + $0x48] sm:$0xf] %v6040
        %7635 = vst [vmem:[%s4795 + $0x4c] sm:$0xf] %v6075
        %7636 = vst [vmem:[%s4795 + $0x50] sm:$0xf] %v6110
        %7637 = vst [vmem:[%s4795 + $0x54] sm:$0xf] %v6145
        %7638 = vst [vmem:[%s4795 + $0x58] sm:$0xf] %v6180
        %7639 = vst [vmem:[%s4795 + $0x5c] sm:$0xf] %v6215
        %7640 = vst [vmem:[%s4795 + $0x60] sm:$0xf] %v6250
        %7641 = vst [vmem:[%s4795 + $0x64] sm:$0xf] %v6285
        %7642 = vst [vmem:[%s4795 + $0x68] sm:$0xf] %v6320
        %7643 = vst [vmem:[%s4795 + $0x6c] sm:$0xf] %v6355
        %7644 = vst [vmem:[%s4795 + $0x70] sm:$0xf] %v6390
        %7645 = vst [vmem:[%s4795 + $0x74] sm:$0xf] %v6425
        %7646 = vst [vmem:[%s4795 + $0x78] sm:$0xf] %v6460
        %7647 = vst [vmem:[%s4795 + $0x7c] sm:$0xf] %v6495
        %7648 = vst [vmem:[%s4795 + $0x80] sm:$0xf] %v6530
        %7649 = vst [vmem:[%s4795 + $0x84] sm:$0xf] %v6565
        %7650 = vst [vmem:[%s4795 + $0x88] sm:$0xf] %v6600
        %7651 = vst [vmem:[%s4795 + $0x8c] sm:$0xf] %v6635
        %7652 = vst [vmem:[%s4795 + $0x90] sm:$0xf] %v6670
        %7653 = vst [vmem:[%s4795 + $0x94] sm:$0xf] %v6705
        %7654 = vst [vmem:[%s4795 + $0x98] sm:$0xf] %v6740
        %7655 = vst [vmem:[%s4795 + $0x9c] sm:$0xf] %v6775
        %7656 = vst [vmem:[%s4795 + $0xa0] sm:$0xf] %v6810
        %7657 = vst [vmem:[%s4795 + $0xa4] sm:$0xf] %v6845
        %7658 = vst [vmem:[%s4795 + $0xa8] sm:$0xf] %v6880
        %7659 = vst [vmem:[%s4795 + $0xac] sm:$0xf] %v6915
        %7660 = vst [vmem:[%s4795 + $0xb0] sm:$0xf] %v6950
        %7661 = vst [vmem:[%s4795 + $0xb4] sm:$0xf] %v6985
        %7662 = vst [vmem:[%s4795 + $0xb8] sm:$0xf] %v7020
        %7663 = vst [vmem:[%s4795 + $0xbc] sm:$0xf] %v7055
        %7664 = vst [vmem:[%s4795 + $0xc0] sm:$0xf] %v7090
        %7665 = vst [vmem:[%s4795 + $0xc4] sm:$0xf] %v7125
        %7666 = vst [vmem:[%s4795 + $0xc8] sm:$0xf] %v7160
        %7667 = vst [vmem:[%s4795 + $0xcc] sm:$0xf] %v7195
        %7668 = vst [vmem:[%s4795 + $0xd0] sm:$0xf] %v7230
        %7669 = vst [vmem:[%s4795 + $0xd4] sm:$0xf] %v7265
        %7670 = vst [vmem:[%s4795 + $0xd8] sm:$0xf] %v7300
        %7671 = vst [vmem:[%s4795 + $0xdc] sm:$0xf] %v7335
        %7672 = vst [vmem:[%s4795 + $0xe0] sm:$0xf] %v7370
        %7673 = vst [vmem:[%s4795 + $0xe4] sm:$0xf] %v7405
        %7674 = vst [vmem:[%s4795 + $0xe8] sm:$0xf] %v7440
        %7675 = vst [vmem:[%s4795 + $0xec] sm:$0xf] %v7475
        %7676 = vst [vmem:[%s4795 + $0xf0] sm:$0xf] %v7510
        %7677 = vst [vmem:[%s4795 + $0xf4] sm:$0xf] %v7545
        %7678 = vst [vmem:[%s4795 + $0xf8] sm:$0xf] %v7580
        %7679 = vst [vmem:[%s4795 + $0xfc] sm:$0xf] %v7615
        %s7680 = smul.u32 64, %s12
        %p7681 = scmp.lt.s32.totalorder %s7680, 447
        %s7682 = scalar_select %p7681, %s7680, 447
        %s7683 = smul.addr %s7682, 4
        %s7684 = scalar_lea.vmem %s1, %s7683
        // Predicated region
        $region77: #{_stem.3} parent=71 // pred_check
          %p7685 = pneg %p56
        $region78: #{_stem.3} parent=71 // pred_check_branch
          %7687 = sbr.rel (%p7685) target = $region80
        $region79: #{_stem.3} parent=71 // pred_region
          %s7688 = smul.u32 64, %s12
        $region80: #{_stem.3} parent=71 // pred_fallthru
          _
      $region72: #{_stem.3} parent=5 // pred_fallthru
        _
      %p7689 = scmp.le.s32.totalorder 2, %s7
      // Predicated region
      $region81: #{_stem.3} parent=5 // pred_check
        %p7690 = pneg %p7689
      $region82: #{_stem.3} parent=5 // pred_check_branch
        %7692 = sbr.rel (%p7690) target = $region84
      $region83: #{_stem.3} parent=5 // pred_region
        %s7693 = ssub.s32 %s7, 2
        // Predicated region
        $region85: #{_stem.3} parent=83 // pred_check
          %p7694 = pneg %p62
        $region86: #{_stem.3} parent=83 // pred_check_branch
          %7696 = sbr.rel (%p7694) target = $region88
        $region87: #{_stem.3} parent=83 // pred_region
          %s7697 = smul.u32 64, %s13
          %p7698 = scmp.lt.s32.totalorder %s7697, 447
          %s7699 = scalar_select %p7698, %s7697, 447
          %s7700 = smul.addr %s7699, 4
          %s7701 = scalar_lea.vmem %s1, %s7700
        $region88: #{_stem.3} parent=83 // pred_fallthru
          _
      $region84: #{_stem.3} parent=5 // pred_fallthru
        _
    $region6: #{_stem.3} parent=1 // loop_footer
      %s11 = sadd.s32 1, %s7
    $region7: #{_stem.3} parent=1 // loop_footer_branch
      %6 = sbr.rel target = $region3
    $region8: #{_stem.3} parent=1 // loop_exit
      _

</llo_original>
